<compile_context>
chip_gen: v5e
topology: v5e:2x2
jax: 0.10.0
libtpu: 0.0.40
codegen_flags: <defaults>
</compile_context>

<pallas_src>
import functools

import jax
import jax.numpy as jnp
from jax.experimental import pallas as pl
from jax.experimental.pallas import tpu as pltpu

_LN_EPS = 1e-5          # torch.nn.LayerNorm default
_NEG_BIG = -1e30        # additive mask value (exp underflows to exactly 0)


# ----------------------------- in-kernel helpers ----------------------------

def _layernorm(x, g, b):
    """LayerNorm over the last axis (biased variance, matches torch)."""
    x = x.astype(jnp.float32)
    mean = jnp.mean(x, axis=-1, keepdims=True)
    var = jnp.mean(jnp.square(x - mean), axis=-1, keepdims=True)
    return (x - mean) * jax.lax.rsqrt(var + _LN_EPS) * g + b


def _gelu_exact(x):
    # exact (erf-based) GELU, matching torch.nn.GELU default
    return 0.5 * x * (1.0 + jax.lax.erf(x * (2.0 ** -0.5)))


def _attn_block(x, g, b, wqkv_ref, wo_ref, bo, bias, heads, dim_head):
    """x + Wo(softmax(q k^T * scale + bias) v), pre-LN.

    x:    (BN, D)  - all tokens of the whole batch folded into one slab
    bias: (BN, BN) - additive block mask restricting attention within a sample
    wqkv_ref: (3, heads, D, dh) ref;  wo_ref: (heads, dh, D) ref
    """
    scale = dim_head ** -0.5
    xn = _layernorm(x, g, b)
    y = bo                                                     # (1, D), broadcasts
    for h in range(heads):                                     # static unroll
        q = jnp.dot(xn, wqkv_ref[0, h], preferred_element_type=jnp.float32) * scale
        k = jnp.dot(xn, wqkv_ref[1, h], preferred_element_type=jnp.float32)
        v = jnp.dot(xn, wqkv_ref[2, h], preferred_element_type=jnp.float32)
        s = jax.lax.dot_general(q, k, (((1,), (1,)), ((), ())),
                                preferred_element_type=jnp.float32) + bias
        s = s - jnp.max(s, axis=-1, keepdims=True)
        p = jnp.exp(s)
        p = p / jnp.sum(p, axis=-1, keepdims=True)             # exact softmax
        oh = jnp.dot(p, v, preferred_element_type=jnp.float32)
        y = y + jnp.dot(oh, wo_ref[h], preferred_element_type=jnp.float32)
    return x + y


def _ff_block(x, g, b, w1, b1, w2, b2):
    """x + W2(GELU(W1(LN(x)))) on a folded (BN, D) slab."""
    xn = _layernorm(x, g, b)
    h = jnp.dot(xn, w1, preferred_element_type=jnp.float32) + b1
    h = _gelu_exact(h)
    return x + jnp.dot(h, w2, preferred_element_type=jnp.float32) + b2


# ----------------------------- fused forward kernel -------------------------

def _tit_fused_kernel(*refs, depth, bsz, n, npix,
                      inner_heads, dim_head_inner, outer_heads, dim_head_outer):
    it = iter(refs)

    def take(k):
        return [next(it) for _ in range(k)]

    (xp_ref, pixw_ref, pixb_ref, pixpos_ref, pixbias_ref,
     pat0_ref, patbias_ref) = take(7)
    layer_refs = [take(26) for _ in range(depth)]
    hg_ref, hb_ref, hw_ref, hbias_ref = take(4)
    o_ref = next(it)

    f32 = jnp.float32
    Bp = bsz * n                                               # patches across batch

    pix_bias = pixbias_ref[...]                                # (npix*Bp, npix*Bp)
    pat_bias = patbias_ref[...]                                # (bsz*(n+1), bsz*(n+1))

    # pixel tokens: Linear(unfolded pixel columns) + pixel_pos_emb, one matmul
    pix = (jnp.dot(xp_ref[...].astype(f32), pixw_ref[...],
                   preferred_element_type=f32)
           + pixb_ref[...] + pixpos_ref[...])                  # (npix*Bp, pixel_dim)

    pat = pat0_ref[...].astype(f32)                            # (bsz*(n+1), patch_dim)

    for lr in layer_refs:                                      # depth: static unroll
        (pa_g, pa_b, pa_wqkv, pa_wo, pa_bo,
         pf_g, pf_b, pf_w1, pf_b1, pf_w2, pf_b2,
         pp_g, pp_b, pp_w, pp_bias,
         qa_g, qa_b, qa_wqkv, qa_wo, qa_bo,
         qf_g, qf_b, qf_w1, qf_b1, qf_w2, qf_b2) = lr

        pix = _attn_block(pix, pa_g[...], pa_b[...], pa_wqkv, pa_wo, pa_bo[...],
                          pix_bias, inner_heads, dim_head_inner)
        pix = _ff_block(pix, pf_g[...], pf_b[...], pf_w1[...], pf_b1[...],
                        pf_w2[...], pf_b2[...])

        # pixel -> patch residual: LN + row-major flatten + Linear, expressed as
        # an MXU accumulation over the npix sublane-aligned pixel row slabs.
        xn = _layernorm(pix, pp_g[...], pp_b[...])             # (npix*Bp, pixel_dim)
        res = jnp.dot(xn[0:Bp, :], pp_w[0], preferred_element_type=f32)
        for j in range(1, npix):
            res = res + jnp.dot(xn[j * Bp:(j + 1) * Bp, :], pp_w[j],
                                preferred_element_type=f32)
        res = res + pp_bias[...]                               # (Bp, patch_dim)

        # pad a zero cls-row per batch element, then one dense residual add
        pieces = []
        for bi in range(bsz):
            pieces.append(jnp.zeros((1, res.shape[-1]), f32))
            pieces.append(res[bi * n:(bi + 1) * n, :])
        pat = pat + jnp.concatenate(pieces, axis=0)

        pat = _attn_block(pat, qa_g[...], qa_b[...], qa_wqkv, qa_wo, qa_bo[...],
                          pat_bias, outer_heads, dim_head_outer)
        pat = _ff_block(pat, qf_g[...], qf_b[...], qf_w1[...], qf_b1[...],
                        qf_w2[...], qf_b2[...])

    # mlp head on the cls token of every batch element (fused epilogue)
    cls = jnp.concatenate([pat[bi * (n + 1):bi * (n + 1) + 1, :]
                           for bi in range(bsz)], axis=0)      # (bsz, patch_dim)
    clsn = _layernorm(cls, hg_ref[...], hb_ref[...])
    o_ref[...] = (jnp.dot(clsn, hw_ref[...], preferred_element_type=f32)
                  + hbias_ref[...]).astype(o_ref.dtype)


# ----------------------------- Pallas wrapper --------------------------------

def _row(v):
    return v.reshape(1, v.shape[-1])


def tit_forward(x, params, cfg):
    bsz, c, H, W = x.shape
    ps, pxs = cfg["patch_size"], cfg["pixel_size"]
    nh, nw = H // ps, W // ps
    n = nh * nw
    pw = ps // pxs
    npix = pw * pw
    Bp = bsz * n
    pd = cfg["pixel_dim"]
    PD = cfg["patch_dim"]
    C = cfg["num_classes"]
    ih, dhi = cfg["inner_heads"], cfg["dim_head_inner"]
    oh, dho = cfg["outer_heads"], cfg["dim_head_outer"]

    # Rearrange 'b c (h p1) (w p2) -> (b h w) c p1 p2' + nn.Unfold(pxs, stride=pxs)
    # + '... c n -> ... n c', emitted in PIXEL-MAJOR row order
    # (row = pixel_idx * Bp + patch_idx) so the in-kernel pixel->patch flatten
    # becomes npix contiguous, 8-sublane-aligned row slabs.
    xp = x.reshape(bsz, c, nh, pw, pxs, nw, pw, pxs)
    xp = xp.transpose(3, 6, 0, 2, 5, 1, 4, 7)   # (pwh, pww, b, nh, nw, c, pxh, pxw)
    xp = xp.reshape(npix * Bp, c * pxs * pxs)

    # pixel positional embedding pre-tiled to the pixel-major row order
    pix_pos = jnp.repeat(params["pixel_pos_emb"], Bp, axis=0)  # (npix*Bp, pd)

    # additive block masks: tokens only attend within their own patch / sample
    pix_ids = jnp.arange(npix * Bp, dtype=jnp.int32) % Bp
    pix_bias = jnp.where(pix_ids[:, None] == pix_ids[None, :],
                         0.0, _NEG_BIG).astype(jnp.float32)
    pat_ids = jnp.arange(bsz * (n + 1), dtype=jnp.int32) // (n + 1)
    pat_bias = jnp.where(pat_ids[:, None] == pat_ids[None, :],
                         0.0, _NEG_BIG).astype(jnp.float32)

    # patch tokens + positional embedding, folded to (bsz*(n+1), PD)
    patches0 = jnp.tile(params["patch_tokens"][: n + 1]
                        + params["patch_pos_emb"][: n + 1], (bsz, 1))

    args = [xp, params["pix_w"], _row(params["pix_b"]), pix_pos, pix_bias,
            patches0, pat_bias]
    for lp in params["layers"]:
        pa, pf, qa, qf = lp["pix_attn"], lp["pix_ff"], lp["pat_attn"], lp["pat_ff"]
        args += [
            _row(pa["ln_g"]), _row(pa["ln_b"]),
            pa["wqkv"].reshape(pd, 3, ih, dhi).transpose(1, 2, 0, 3),  # (3,ih,pd,dhi)
            pa["wo"].reshape(ih, dhi, pd),                             # (ih,dhi,pd)
            _row(pa["bo"]),
            _row(pf["ln_g"]), _row(pf["ln_b"]),
            pf["w1"], _row(pf["b1"]), pf["w2"], _row(pf["b2"]),
            _row(lp["p2p_g"]), _row(lp["p2p_b"]),
            lp["p2p_w"].reshape(npix, pd, PD),                         # (npix,pd,PD)
            _row(lp["p2p_bias"]),
            _row(qa["ln_g"]), _row(qa["ln_b"]),
            qa["wqkv"].reshape(PD, 3, oh, dho).transpose(1, 2, 0, 3),  # (3,oh,PD,dho)
            qa["wo"].reshape(oh, dho, PD),                             # (oh,dho,PD)
            _row(qa["bo"]),
            _row(qf["ln_g"]), _row(qf["ln_b"]),
            qf["w1"], _row(qf["b1"]), qf["w2"], _row(qf["b2"]),
        ]
    args += [_row(params["head_g"]), _row(params["head_b"]),
             params["head_w"], _row(params["head_bias"])]

    kernel = functools.partial(
        _tit_fused_kernel, depth=cfg["depth"], bsz=bsz, n=n, npix=npix,
        inner_heads=ih, dim_head_inner=dhi, outer_heads=oh, dim_head_outer=dho)

    # Single launch, no grid: every array is passed whole and lives in VMEM for
    # the entire forward (total << vmem_limit on every chip generation).
    return pl.pallas_call(
        kernel,
        out_shape=jax.ShapeDtypeStruct((bsz, C), x.dtype),
        compiler_params=pltpu.CompilerParams(vmem_limit_bytes=32 * 1024 * 1024),
    )(*args)


# ----------------------------- parameter init -------------------------------

def init_params(key, cfg):
    ks = iter(jax.random.split(key, 1024))

    def W(*shape, scale=0.02):
        return (scale * jax.random.normal(next(ks), shape)).astype(jnp.float32)

    def zeros(*shape):
        return jnp.zeros(shape, jnp.float32)

    def ones(*shape):
        return jnp.ones(shape, jnp.float32)

    ps, pxs = cfg["patch_size"], cfg["pixel_size"]
    n_tok = (cfg["image_size"] // ps) ** 2
    num_pixels = (ps // pxs) ** 2
    pixel_dim, patch_dim = cfg["pixel_dim"], cfg["patch_dim"]

    def attn_p(dim, heads, dim_head):
        inner = heads * dim_head
        return dict(ln_g=ones(dim), ln_b=zeros(dim),
                    wqkv=W(dim, 3 * inner), wo=W(inner, dim), bo=zeros(dim))

    def ff_p(dim, mult=4):
        return dict(ln_g=ones(dim), ln_b=zeros(dim),
                    w1=W(dim, dim * mult), b1=zeros(dim * mult),
                    w2=W(dim * mult, dim), b2=zeros(dim))

    layers = []
    for _ in range(cfg["depth"]):
        layers.append(dict(
            pix_attn=attn_p(pixel_dim, cfg["inner_heads"], cfg["dim_head_inner"]),
            pix_ff=ff_p(pixel_dim),
            p2p_g=ones(pixel_dim), p2p_b=zeros(pixel_dim),
            p2p_w=W(pixel_dim * num_pixels, patch_dim), p2p_bias=zeros(patch_dim),
            pat_attn=attn_p(patch_dim, cfg["outer_heads"], cfg["dim_head_outer"]),
            pat_ff=ff_p(patch_dim),
        ))

    return dict(
        pix_w=W(3 * pxs * pxs, pixel_dim), pix_b=zeros(pixel_dim),
        patch_tokens=W(n_tok + 1, patch_dim, scale=1.0),
        patch_pos_emb=W(n_tok + 1, patch_dim, scale=1.0),
        pixel_pos_emb=W(num_pixels, pixel_dim, scale=1.0),
        layers=layers,
        head_g=ones(patch_dim), head_b=zeros(patch_dim),
        head_w=W(patch_dim, cfg["num_classes"]), head_bias=zeros(cfg["num_classes"]),
    )


# ----------------------------- main ------------------------------------------

if __name__ == "__main__":
    cfg = dict(
        image_size=16, patch_size=8, pixel_size=4,
        patch_dim=32, pixel_dim=16, depth=2, num_classes=10,
        inner_heads=4, outer_heads=6, dim_head_inner=24, dim_head_outer=64,
    )
    key = jax.random.PRNGKey(0)
    pkey, xkey = jax.random.split(key)
    params = init_params(pkey, cfg)
    x = jax.random.normal(xkey, (2, 3, cfg["image_size"], cfg["image_size"]),
                          jnp.float32)

    fwd = jax.jit(lambda xx, pp: tit_forward(xx, pp, cfg))
    out = fwd(x, params)
    jax.block_until_ready(out)
    assert out.shape == (2, cfg["num_classes"]) and out.dtype == jnp.float32
    assert bool(jnp.all(jnp.isfinite(out)))
    print("KERNEL_OK")
</pallas_src>

<mosaic_0001>
module attributes {stable_mosaic.version = 11 : i64} {
  func.func @_tit_fused_kernel(%arg0: memref<32x48xf32, #tpu.memory_space<vmem>>, %arg1: memref<48x16xf32, #tpu.memory_space<vmem>>, %arg2: memref<1x16xf32, #tpu.memory_space<vmem>>, %arg3: memref<32x16xf32, #tpu.memory_space<vmem>>, %arg4: memref<32x32xf32, #tpu.memory_space<vmem>>, %arg5: memref<10x32xf32, #tpu.memory_space<vmem>>, %arg6: memref<10x10xf32, #tpu.memory_space<vmem>>, %arg7: memref<1x16xf32, #tpu.memory_space<vmem>>, %arg8: memref<1x16xf32, #tpu.memory_space<vmem>>, %arg9: memref<3x4x16x24xf32, #tpu.memory_space<vmem>>, %arg10: memref<4x24x16xf32, #tpu.memory_space<vmem>>, %arg11: memref<1x16xf32, #tpu.memory_space<vmem>>, %arg12: memref<1x16xf32, #tpu.memory_space<vmem>>, %arg13: memref<1x16xf32, #tpu.memory_space<vmem>>, %arg14: memref<16x64xf32, #tpu.memory_space<vmem>>, %arg15: memref<1x64xf32, #tpu.memory_space<vmem>>, %arg16: memref<64x16xf32, #tpu.memory_space<vmem>>, %arg17: memref<1x16xf32, #tpu.memory_space<vmem>>, %arg18: memref<1x16xf32, #tpu.memory_space<vmem>>, %arg19: memref<1x16xf32, #tpu.memory_space<vmem>>, %arg20: memref<4x16x32xf32, #tpu.memory_space<vmem>>, %arg21: memref<1x32xf32, #tpu.memory_space<vmem>>, %arg22: memref<1x32xf32, #tpu.memory_space<vmem>>, %arg23: memref<1x32xf32, #tpu.memory_space<vmem>>, %arg24: memref<3x6x32x64xf32, #tpu.memory_space<vmem>>, %arg25: memref<6x64x32xf32, #tpu.memory_space<vmem>>, %arg26: memref<1x32xf32, #tpu.memory_space<vmem>>, %arg27: memref<1x32xf32, #tpu.memory_space<vmem>>, %arg28: memref<1x32xf32, #tpu.memory_space<vmem>>, %arg29: memref<32x128xf32, #tpu.memory_space<vmem>>, %arg30: memref<1x128xf32, #tpu.memory_space<vmem>>, %arg31: memref<128x32xf32, #tpu.memory_space<vmem>>, %arg32: memref<1x32xf32, #tpu.memory_space<vmem>>, %arg33: memref<1x16xf32, #tpu.memory_space<vmem>>, %arg34: memref<1x16xf32, #tpu.memory_space<vmem>>, %arg35: memref<3x4x16x24xf32, #tpu.memory_space<vmem>>, %arg36: memref<4x24x16xf32, #tpu.memory_space<vmem>>, %arg37: memref<1x16xf32, #tpu.memory_space<vmem>>, %arg38: memref<1x16xf32, #tpu.memory_space<vmem>>, %arg39: memref<1x16xf32, #tpu.memory_space<vmem>>, %arg40: memref<16x64xf32, #tpu.memory_space<vmem>>, %arg41: memref<1x64xf32, #tpu.memory_space<vmem>>, %arg42: memref<64x16xf32, #tpu.memory_space<vmem>>, %arg43: memref<1x16xf32, #tpu.memory_space<vmem>>, %arg44: memref<1x16xf32, #tpu.memory_space<vmem>>, %arg45: memref<1x16xf32, #tpu.memory_space<vmem>>, %arg46: memref<4x16x32xf32, #tpu.memory_space<vmem>>, %arg47: memref<1x32xf32, #tpu.memory_space<vmem>>, %arg48: memref<1x32xf32, #tpu.memory_space<vmem>>, %arg49: memref<1x32xf32, #tpu.memory_space<vmem>>, %arg50: memref<3x6x32x64xf32, #tpu.memory_space<vmem>>, %arg51: memref<6x64x32xf32, #tpu.memory_space<vmem>>, %arg52: memref<1x32xf32, #tpu.memory_space<vmem>>, %arg53: memref<1x32xf32, #tpu.memory_space<vmem>>, %arg54: memref<1x32xf32, #tpu.memory_space<vmem>>, %arg55: memref<32x128xf32, #tpu.memory_space<vmem>>, %arg56: memref<1x128xf32, #tpu.memory_space<vmem>>, %arg57: memref<128x32xf32, #tpu.memory_space<vmem>>, %arg58: memref<1x32xf32, #tpu.memory_space<vmem>>, %arg59: memref<1x32xf32, #tpu.memory_space<vmem>>, %arg60: memref<1x32xf32, #tpu.memory_space<vmem>>, %arg61: memref<32x10xf32, #tpu.memory_space<vmem>>, %arg62: memref<1x10xf32, #tpu.memory_space<vmem>>, %arg63: memref<2x10xf32, #tpu.memory_space<vmem>>) attributes {dimension_semantics = [], scalar_prefetch = 0 : i64, scratch_operands = 0 : i64, tpu.core_type = #tpu.core_type<tc>} {
    %c0 = arith.constant 0 : index
    %c0_0 = arith.constant 0 : index
    %0 = vector.load %arg4[%c0, %c0_0] : memref<32x32xf32, #tpu.memory_space<vmem>>, vector<32x32xf32>
    %c0_1 = arith.constant 0 : index
    %c0_2 = arith.constant 0 : index
    %1 = vector.load %arg6[%c0_1, %c0_2] : memref<10x10xf32, #tpu.memory_space<vmem>>, vector<10x10xf32>
    %c0_3 = arith.constant 0 : index
    %c0_4 = arith.constant 0 : index
    %2 = vector.load %arg0[%c0_3, %c0_4] : memref<32x48xf32, #tpu.memory_space<vmem>>, vector<32x48xf32>
    %c0_5 = arith.constant 0 : index
    %c0_6 = arith.constant 0 : index
    %3 = vector.load %arg1[%c0_5, %c0_6] : memref<48x16xf32, #tpu.memory_space<vmem>>, vector<48x16xf32>
    %cst = arith.constant dense<0.000000e+00> : vector<32x16xf32>
    %4 = tpu.matmul %2, %3, %cst {dimension_numbers = #tpu.dot_dimension_numbers<[1], [0], [0], [1], [0, 0, 1, 1], [], []>} : vector<32x48xf32>, vector<48x16xf32>, vector<32x16xf32> -> vector<32x16xf32>
    %c0_7 = arith.constant 0 : index
    %c0_8 = arith.constant 0 : index
    %5 = vector.load %arg2[%c0_7, %c0_8] : memref<1x16xf32, #tpu.memory_space<vmem>>, vector<1x16xf32>
    %6 = vector.broadcast %5 : vector<1x16xf32> to vector<32x16xf32>
    %7 = arith.addf %4, %6 : vector<32x16xf32>
    %c0_9 = arith.constant 0 : index
    %c0_10 = arith.constant 0 : index
    %8 = vector.load %arg3[%c0_9, %c0_10] : memref<32x16xf32, #tpu.memory_space<vmem>>, vector<32x16xf32>
    %9 = arith.addf %7, %8 : vector<32x16xf32>
    %c0_11 = arith.constant 0 : index
    %c0_12 = arith.constant 0 : index
    %10 = vector.load %arg5[%c0_11, %c0_12] : memref<10x32xf32, #tpu.memory_space<vmem>>, vector<10x32xf32>
    %c0_13 = arith.constant 0 : index
    %c0_14 = arith.constant 0 : index
    %11 = vector.load %arg7[%c0_13, %c0_14] : memref<1x16xf32, #tpu.memory_space<vmem>>, vector<1x16xf32>
    %c0_15 = arith.constant 0 : index
    %c0_16 = arith.constant 0 : index
    %12 = vector.load %arg8[%c0_15, %c0_16] : memref<1x16xf32, #tpu.memory_space<vmem>>, vector<1x16xf32>
    %c0_17 = arith.constant 0 : index
    %c0_18 = arith.constant 0 : index
    %13 = vector.load %arg11[%c0_17, %c0_18] : memref<1x16xf32, #tpu.memory_space<vmem>>, vector<1x16xf32>
    %cst_19 = arith.constant dense<0.000000e+00> : vector<32xf32>
    %14 = vector.multi_reduction <add>, %9, %cst_19 [1] : vector<32x16xf32> to vector<32xf32>
    %15 = vector.shape_cast %14 : vector<32xf32> to vector<32x1xf32>
    %cst_20 = arith.constant 1.600000e+01 : f32
    %16 = vector.broadcast %cst_20 : f32 to vector<32x1xf32>
    %17 = arith.divf %15, %16 : vector<32x1xf32>
    %18 = vector.broadcast %17 : vector<32x1xf32> to vector<32x16xf32>
    %19 = arith.subf %9, %18 : vector<32x16xf32>
    %20 = arith.mulf %19, %19 : vector<32x16xf32>
    %cst_21 = arith.constant dense<0.000000e+00> : vector<32xf32>
    %21 = vector.multi_reduction <add>, %20, %cst_21 [1] : vector<32x16xf32> to vector<32xf32>
    %22 = vector.shape_cast %21 : vector<32xf32> to vector<32x1xf32>
    %cst_22 = arith.constant 1.600000e+01 : f32
    %23 = vector.broadcast %cst_22 : f32 to vector<32x1xf32>
    %24 = arith.divf %22, %23 : vector<32x1xf32>
    %25 = vector.broadcast %17 : vector<32x1xf32> to vector<32x16xf32>
    %26 = arith.subf %9, %25 : vector<32x16xf32>
    %cst_23 = arith.constant 9.99999974E-6 : f32
    %27 = vector.broadcast %cst_23 : f32 to vector<32x1xf32>
    %28 = arith.addf %24, %27 : vector<32x1xf32>
    %29 = math.rsqrt %28 : vector<32x1xf32>
    %30 = vector.broadcast %29 : vector<32x1xf32> to vector<32x16xf32>
    %31 = arith.mulf %26, %30 : vector<32x16xf32>
    %32 = vector.broadcast %11 : vector<1x16xf32> to vector<32x16xf32>
    %33 = arith.mulf %31, %32 : vector<32x16xf32>
    %34 = vector.broadcast %12 : vector<1x16xf32> to vector<32x16xf32>
    %35 = arith.addf %33, %34 : vector<32x16xf32>
    %c0_24 = arith.constant 0 : index
    %c0_25 = arith.constant 0 : index
    %c0_26 = arith.constant 0 : index
    %c0_27 = arith.constant 0 : index
    %36 = vector.load %arg9[%c0_24, %c0_25, %c0_26, %c0_27] : memref<3x4x16x24xf32, #tpu.memory_space<vmem>>, vector<1x1x16x24xf32>
    %37 = vector.shape_cast %36 : vector<1x1x16x24xf32> to vector<16x24xf32>
    %cst_28 = arith.constant dense<0.000000e+00> : vector<32x24xf32>
    %38 = tpu.matmul %35, %37, %cst_28 {dimension_numbers = #tpu.dot_dimension_numbers<[1], [0], [0], [1], [0, 0, 1, 1], [], []>} : vector<32x16xf32>, vector<16x24xf32>, vector<32x24xf32> -> vector<32x24xf32>
    %cst_29 = arith.constant 0.204124153 : f32
    %39 = vector.broadcast %cst_29 : f32 to vector<32x24xf32>
    %40 = arith.mulf %38, %39 : vector<32x24xf32>
    %c1 = arith.constant 1 : index
    %c0_30 = arith.constant 0 : index
    %c0_31 = arith.constant 0 : index
    %c0_32 = arith.constant 0 : index
    %41 = vector.load %arg9[%c1, %c0_30, %c0_31, %c0_32] : memref<3x4x16x24xf32, #tpu.memory_space<vmem>>, vector<1x1x16x24xf32>
    %42 = vector.shape_cast %41 : vector<1x1x16x24xf32> to vector<16x24xf32>
    %cst_33 = arith.constant dense<0.000000e+00> : vector<32x24xf32>
    %43 = tpu.matmul %35, %42, %cst_33 {dimension_numbers = #tpu.dot_dimension_numbers<[1], [0], [0], [1], [0, 0, 1, 1], [], []>} : vector<32x16xf32>, vector<16x24xf32>, vector<32x24xf32> -> vector<32x24xf32>
    %c2 = arith.constant 2 : index
    %c0_34 = arith.constant 0 : index
    %c0_35 = arith.constant 0 : index
    %c0_36 = arith.constant 0 : index
    %44 = vector.load %arg9[%c2, %c0_34, %c0_35, %c0_36] : memref<3x4x16x24xf32, #tpu.memory_space<vmem>>, vector<1x1x16x24xf32>
    %45 = vector.shape_cast %44 : vector<1x1x16x24xf32> to vector<16x24xf32>
    %cst_37 = arith.constant dense<0.000000e+00> : vector<32x24xf32>
    %46 = tpu.matmul %35, %45, %cst_37 {dimension_numbers = #tpu.dot_dimension_numbers<[1], [0], [0], [1], [0, 0, 1, 1], [], []>} : vector<32x16xf32>, vector<16x24xf32>, vector<32x24xf32> -> vector<32x24xf32>
    %cst_38 = arith.constant dense<0.000000e+00> : vector<32x32xf32>
    %47 = tpu.matmul %40, %43, %cst_38 {dimension_numbers = #tpu.dot_dimension_numbers<[1], [1], [0], [0], [0, 0, 1, 0], [], []>} : vector<32x24xf32>, vector<32x24xf32>, vector<32x32xf32> -> vector<32x32xf32>
    %48 = arith.addf %47, %0 : vector<32x32xf32>
    %cst_39 = arith.constant dense<0xFF800000> : vector<32xf32>
    %49 = vector.multi_reduction <maximumf>, %48, %cst_39 [1] : vector<32x32xf32> to vector<32xf32>
    %50 = vector.shape_cast %49 : vector<32xf32> to vector<32x1xf32>
    %51 = vector.broadcast %50 : vector<32x1xf32> to vector<32x32xf32>
    %52 = arith.subf %48, %51 : vector<32x32xf32>
    %53 = math.exp %52 : vector<32x32xf32>
    %cst_40 = arith.constant dense<0.000000e+00> : vector<32xf32>
    %54 = vector.multi_reduction <add>, %53, %cst_40 [1] : vector<32x32xf32> to vector<32xf32>
    %55 = vector.shape_cast %54 : vector<32xf32> to vector<32x1xf32>
    %56 = vector.broadcast %55 : vector<32x1xf32> to vector<32x32xf32>
    %57 = arith.divf %53, %56 : vector<32x32xf32>
    %cst_41 = arith.constant dense<0.000000e+00> : vector<32x24xf32>
    %58 = tpu.matmul %57, %46, %cst_41 {dimension_numbers = #tpu.dot_dimension_numbers<[1], [0], [0], [1], [0, 0, 1, 1], [], []>} : vector<32x32xf32>, vector<32x24xf32>, vector<32x24xf32> -> vector<32x24xf32>
    %c0_42 = arith.constant 0 : index
    %c0_43 = arith.constant 0 : index
    %c0_44 = arith.constant 0 : index
    %59 = vector.load %arg10[%c0_42, %c0_43, %c0_44] : memref<4x24x16xf32, #tpu.memory_space<vmem>>, vector<1x24x16xf32>
    %60 = vector.shape_cast %59 : vector<1x24x16xf32> to vector<24x16xf32>
    %cst_45 = arith.constant dense<0.000000e+00> : vector<32x16xf32>
    %61 = tpu.matmul %58, %60, %cst_45 {dimension_numbers = #tpu.dot_dimension_numbers<[1], [0], [0], [1], [0, 0, 1, 1], [], []>} : vector<32x24xf32>, vector<24x16xf32>, vector<32x16xf32> -> vector<32x16xf32>
    %62 = vector.broadcast %13 : vector<1x16xf32> to vector<32x16xf32>
    %63 = arith.addf %62, %61 : vector<32x16xf32>
    %c0_46 = arith.constant 0 : index
    %c1_47 = arith.constant 1 : index
    %c0_48 = arith.constant 0 : index
    %c0_49 = arith.constant 0 : index
    %64 = vector.load %arg9[%c0_46, %c1_47, %c0_48, %c0_49] : memref<3x4x16x24xf32, #tpu.memory_space<vmem>>, vector<1x1x16x24xf32>
    %65 = vector.shape_cast %64 : vector<1x1x16x24xf32> to vector<16x24xf32>
    %cst_50 = arith.constant dense<0.000000e+00> : vector<32x24xf32>
    %66 = tpu.matmul %35, %65, %cst_50 {dimension_numbers = #tpu.dot_dimension_numbers<[1], [0], [0], [1], [0, 0, 1, 1], [], []>} : vector<32x16xf32>, vector<16x24xf32>, vector<32x24xf32> -> vector<32x24xf32>
    %cst_51 = arith.constant 0.204124153 : f32
    %67 = vector.broadcast %cst_51 : f32 to vector<32x24xf32>
    %68 = arith.mulf %66, %67 : vector<32x24xf32>
    %c1_52 = arith.constant 1 : index
    %c1_53 = arith.constant 1 : index
    %c0_54 = arith.constant 0 : index
    %c0_55 = arith.constant 0 : index
    %69 = vector.load %arg9[%c1_52, %c1_53, %c0_54, %c0_55] : memref<3x4x16x24xf32, #tpu.memory_space<vmem>>, vector<1x1x16x24xf32>
    %70 = vector.shape_cast %69 : vector<1x1x16x24xf32> to vector<16x24xf32>
    %cst_56 = arith.constant dense<0.000000e+00> : vector<32x24xf32>
    %71 = tpu.matmul %35, %70, %cst_56 {dimension_numbers = #tpu.dot_dimension_numbers<[1], [0], [0], [1], [0, 0, 1, 1], [], []>} : vector<32x16xf32>, vector<16x24xf32>, vector<32x24xf32> -> vector<32x24xf32>
    %c2_57 = arith.constant 2 : index
    %c1_58 = arith.constant 1 : index
    %c0_59 = arith.constant 0 : index
    %c0_60 = arith.constant 0 : index
    %72 = vector.load %arg9[%c2_57, %c1_58, %c0_59, %c0_60] : memref<3x4x16x24xf32, #tpu.memory_space<vmem>>, vector<1x1x16x24xf32>
    %73 = vector.shape_cast %72 : vector<1x1x16x24xf32> to vector<16x24xf32>
    %cst_61 = arith.constant dense<0.000000e+00> : vector<32x24xf32>
    %74 = tpu.matmul %35, %73, %cst_61 {dimension_numbers = #tpu.dot_dimension_numbers<[1], [0], [0], [1], [0, 0, 1, 1], [], []>} : vector<32x16xf32>, vector<16x24xf32>, vector<32x24xf32> -> vector<32x24xf32>
    %cst_62 = arith.constant dense<0.000000e+00> : vector<32x32xf32>
    %75 = tpu.matmul %68, %71, %cst_62 {dimension_numbers = #tpu.dot_dimension_numbers<[1], [1], [0], [0], [0, 0, 1, 0], [], []>} : vector<32x24xf32>, vector<32x24xf32>, vector<32x32xf32> -> vector<32x32xf32>
    %76 = arith.addf %75, %0 : vector<32x32xf32>
    %cst_63 = arith.constant dense<0xFF800000> : vector<32xf32>
    %77 = vector.multi_reduction <maximumf>, %76, %cst_63 [1] : vector<32x32xf32> to vector<32xf32>
    %78 = vector.shape_cast %77 : vector<32xf32> to vector<32x1xf32>
    %79 = vector.broadcast %78 : vector<32x1xf32> to vector<32x32xf32>
    %80 = arith.subf %76, %79 : vector<32x32xf32>
    %81 = math.exp %80 : vector<32x32xf32>
    %cst_64 = arith.constant dense<0.000000e+00> : vector<32xf32>
    %82 = vector.multi_reduction <add>, %81, %cst_64 [1] : vector<32x32xf32> to vector<32xf32>
    %83 = vector.shape_cast %82 : vector<32xf32> to vector<32x1xf32>
    %84 = vector.broadcast %83 : vector<32x1xf32> to vector<32x32xf32>
    %85 = arith.divf %81, %84 : vector<32x32xf32>
    %cst_65 = arith.constant dense<0.000000e+00> : vector<32x24xf32>
    %86 = tpu.matmul %85, %74, %cst_65 {dimension_numbers = #tpu.dot_dimension_numbers<[1], [0], [0], [1], [0, 0, 1, 1], [], []>} : vector<32x32xf32>, vector<32x24xf32>, vector<32x24xf32> -> vector<32x24xf32>
    %c1_66 = arith.constant 1 : index
    %c0_67 = arith.constant 0 : index
    %c0_68 = arith.constant 0 : index
    %87 = vector.load %arg10[%c1_66, %c0_67, %c0_68] : memref<4x24x16xf32, #tpu.memory_space<vmem>>, vector<1x24x16xf32>
    %88 = vector.shape_cast %87 : vector<1x24x16xf32> to vector<24x16xf32>
    %cst_69 = arith.constant dense<0.000000e+00> : vector<32x16xf32>
    %89 = tpu.matmul %86, %88, %cst_69 {dimension_numbers = #tpu.dot_dimension_numbers<[1], [0], [0], [1], [0, 0, 1, 1], [], []>} : vector<32x24xf32>, vector<24x16xf32>, vector<32x16xf32> -> vector<32x16xf32>
    %90 = arith.addf %63, %89 : vector<32x16xf32>
    %c0_70 = arith.constant 0 : index
    %c2_71 = arith.constant 2 : index
    %c0_72 = arith.constant 0 : index
    %c0_73 = arith.constant 0 : index
    %91 = vector.load %arg9[%c0_70, %c2_71, %c0_72, %c0_73] : memref<3x4x16x24xf32, #tpu.memory_space<vmem>>, vector<1x1x16x24xf32>
    %92 = vector.shape_cast %91 : vector<1x1x16x24xf32> to vector<16x24xf32>
    %cst_74 = arith.constant dense<0.000000e+00> : vector<32x24xf32>
    %93 = tpu.matmul %35, %92, %cst_74 {dimension_numbers = #tpu.dot_dimension_numbers<[1], [0], [0], [1], [0, 0, 1, 1], [], []>} : vector<32x16xf32>, vector<16x24xf32>, vector<32x24xf32> -> vector<32x24xf32>
    %cst_75 = arith.constant 0.204124153 : f32
    %94 = vector.broadcast %cst_75 : f32 to vector<32x24xf32>
    %95 = arith.mulf %93, %94 : vector<32x24xf32>
    %c1_76 = arith.constant 1 : index
    %c2_77 = arith.constant 2 : index
    %c0_78 = arith.constant 0 : index
    %c0_79 = arith.constant 0 : index
    %96 = vector.load %arg9[%c1_76, %c2_77, %c0_78, %c0_79] : memref<3x4x16x24xf32, #tpu.memory_space<vmem>>, vector<1x1x16x24xf32>
    %97 = vector.shape_cast %96 : vector<1x1x16x24xf32> to vector<16x24xf32>
    %cst_80 = arith.constant dense<0.000000e+00> : vector<32x24xf32>
    %98 = tpu.matmul %35, %97, %cst_80 {dimension_numbers = #tpu.dot_dimension_numbers<[1], [0], [0], [1], [0, 0, 1, 1], [], []>} : vector<32x16xf32>, vector<16x24xf32>, vector<32x24xf32> -> vector<32x24xf32>
    %c2_81 = arith.constant 2 : index
    %c2_82 = arith.constant 2 : index
    %c0_83 = arith.constant 0 : index
    %c0_84 = arith.constant 0 : index
    %99 = vector.load %arg9[%c2_81, %c2_82, %c0_83, %c0_84] : memref<3x4x16x24xf32, #tpu.memory_space<vmem>>, vector<1x1x16x24xf32>
    %100 = vector.shape_cast %99 : vector<1x1x16x24xf32> to vector<16x24xf32>
    %cst_85 = arith.constant dense<0.000000e+00> : vector<32x24xf32>
    %101 = tpu.matmul %35, %100, %cst_85 {dimension_numbers = #tpu.dot_dimension_numbers<[1], [0], [0], [1], [0, 0, 1, 1], [], []>} : vector<32x16xf32>, vector<16x24xf32>, vector<32x24xf32> -> vector<32x24xf32>
    %cst_86 = arith.constant dense<0.000000e+00> : vector<32x32xf32>
    %102 = tpu.matmul %95, %98, %cst_86 {dimension_numbers = #tpu.dot_dimension_numbers<[1], [1], [0], [0], [0, 0, 1, 0], [], []>} : vector<32x24xf32>, vector<32x24xf32>, vector<32x32xf32> -> vector<32x32xf32>
    %103 = arith.addf %102, %0 : vector<32x32xf32>
    %cst_87 = arith.constant dense<0xFF800000> : vector<32xf32>
    %104 = vector.multi_reduction <maximumf>, %103, %cst_87 [1] : vector<32x32xf32> to vector<32xf32>
    %105 = vector.shape_cast %104 : vector<32xf32> to vector<32x1xf32>
    %106 = vector.broadcast %105 : vector<32x1xf32> to vector<32x32xf32>
    %107 = arith.subf %103, %106 : vector<32x32xf32>
    %108 = math.exp %107 : vector<32x32xf32>
    %cst_88 = arith.constant dense<0.000000e+00> : vector<32xf32>
    %109 = vector.multi_reduction <add>, %108, %cst_88 [1] : vector<32x32xf32> to vector<32xf32>
    %110 = vector.shape_cast %109 : vector<32xf32> to vector<32x1xf32>
    %111 = vector.broadcast %110 : vector<32x1xf32> to vector<32x32xf32>
    %112 = arith.divf %108, %111 : vector<32x32xf32>
    %cst_89 = arith.constant dense<0.000000e+00> : vector<32x24xf32>
    %113 = tpu.matmul %112, %101, %cst_89 {dimension_numbers = #tpu.dot_dimension_numbers<[1], [0], [0], [1], [0, 0, 1, 1], [], []>} : vector<32x32xf32>, vector<32x24xf32>, vector<32x24xf32> -> vector<32x24xf32>
    %c2_90 = arith.constant 2 : index
    %c0_91 = arith.constant 0 : index
    %c0_92 = arith.constant 0 : index
    %114 = vector.load %arg10[%c2_90, %c0_91, %c0_92] : memref<4x24x16xf32, #tpu.memory_space<vmem>>, vector<1x24x16xf32>
    %115 = vector.shape_cast %114 : vector<1x24x16xf32> to vector<24x16xf32>
    %cst_93 = arith.constant dense<0.000000e+00> : vector<32x16xf32>
    %116 = tpu.matmul %113, %115, %cst_93 {dimension_numbers = #tpu.dot_dimension_numbers<[1], [0], [0], [1], [0, 0, 1, 1], [], []>} : vector<32x24xf32>, vector<24x16xf32>, vector<32x16xf32> -> vector<32x16xf32>
    %117 = arith.addf %90, %116 : vector<32x16xf32>
    %c0_94 = arith.constant 0 : index
    %c3 = arith.constant 3 : index
    %c0_95 = arith.constant 0 : index
    %c0_96 = arith.constant 0 : index
    %118 = vector.load %arg9[%c0_94, %c3, %c0_95, %c0_96] : memref<3x4x16x24xf32, #tpu.memory_space<vmem>>, vector<1x1x16x24xf32>
    %119 = vector.shape_cast %118 : vector<1x1x16x24xf32> to vector<16x24xf32>
    %cst_97 = arith.constant dense<0.000000e+00> : vector<32x24xf32>
    %120 = tpu.matmul %35, %119, %cst_97 {dimension_numbers = #tpu.dot_dimension_numbers<[1], [0], [0], [1], [0, 0, 1, 1], [], []>} : vector<32x16xf32>, vector<16x24xf32>, vector<32x24xf32> -> vector<32x24xf32>
    %cst_98 = arith.constant 0.204124153 : f32
    %121 = vector.broadcast %cst_98 : f32 to vector<32x24xf32>
    %122 = arith.mulf %120, %121 : vector<32x24xf32>
    %c1_99 = arith.constant 1 : index
    %c3_100 = arith.constant 3 : index
    %c0_101 = arith.constant 0 : index
    %c0_102 = arith.constant 0 : index
    %123 = vector.load %arg9[%c1_99, %c3_100, %c0_101, %c0_102] : memref<3x4x16x24xf32, #tpu.memory_space<vmem>>, vector<1x1x16x24xf32>
    %124 = vector.shape_cast %123 : vector<1x1x16x24xf32> to vector<16x24xf32>
    %cst_103 = arith.constant dense<0.000000e+00> : vector<32x24xf32>
    %125 = tpu.matmul %35, %124, %cst_103 {dimension_numbers = #tpu.dot_dimension_numbers<[1], [0], [0], [1], [0, 0, 1, 1], [], []>} : vector<32x16xf32>, vector<16x24xf32>, vector<32x24xf32> -> vector<32x24xf32>
    %c2_104 = arith.constant 2 : index
    %c3_105 = arith.constant 3 : index
    %c0_106 = arith.constant 0 : index
    %c0_107 = arith.constant 0 : index
    %126 = vector.load %arg9[%c2_104, %c3_105, %c0_106, %c0_107] : memref<3x4x16x24xf32, #tpu.memory_space<vmem>>, vector<1x1x16x24xf32>
    %127 = vector.shape_cast %126 : vector<1x1x16x24xf32> to vector<16x24xf32>
    %cst_108 = arith.constant dense<0.000000e+00> : vector<32x24xf32>
    %128 = tpu.matmul %35, %127, %cst_108 {dimension_numbers = #tpu.dot_dimension_numbers<[1], [0], [0], [1], [0, 0, 1, 1], [], []>} : vector<32x16xf32>, vector<16x24xf32>, vector<32x24xf32> -> vector<32x24xf32>
    %cst_109 = arith.constant dense<0.000000e+00> : vector<32x32xf32>
    %129 = tpu.matmul %122, %125, %cst_109 {dimension_numbers = #tpu.dot_dimension_numbers<[1], [1], [0], [0], [0, 0, 1, 0], [], []>} : vector<32x24xf32>, vector<32x24xf32>, vector<32x32xf32> -> vector<32x32xf32>
    %130 = arith.addf %129, %0 : vector<32x32xf32>
    %cst_110 = arith.constant dense<0xFF800000> : vector<32xf32>
    %131 = vector.multi_reduction <maximumf>, %130, %cst_110 [1] : vector<32x32xf32> to vector<32xf32>
    %132 = vector.shape_cast %131 : vector<32xf32> to vector<32x1xf32>
    %133 = vector.broadcast %132 : vector<32x1xf32> to vector<32x32xf32>
    %134 = arith.subf %130, %133 : vector<32x32xf32>
    %135 = math.exp %134 : vector<32x32xf32>
    %cst_111 = arith.constant dense<0.000000e+00> : vector<32xf32>
    %136 = vector.multi_reduction <add>, %135, %cst_111 [1] : vector<32x32xf32> to vector<32xf32>
    %137 = vector.shape_cast %136 : vector<32xf32> to vector<32x1xf32>
    %138 = vector.broadcast %137 : vector<32x1xf32> to vector<32x32xf32>
    %139 = arith.divf %135, %138 : vector<32x32xf32>
    %cst_112 = arith.constant dense<0.000000e+00> : vector<32x24xf32>
    %140 = tpu.matmul %139, %128, %cst_112 {dimension_numbers = #tpu.dot_dimension_numbers<[1], [0], [0], [1], [0, 0, 1, 1], [], []>} : vector<32x32xf32>, vector<32x24xf32>, vector<32x24xf32> -> vector<32x24xf32>
    %c3_113 = arith.constant 3 : index
    %c0_114 = arith.constant 0 : index
    %c0_115 = arith.constant 0 : index
    %141 = vector.load %arg10[%c3_113, %c0_114, %c0_115] : memref<4x24x16xf32, #tpu.memory_space<vmem>>, vector<1x24x16xf32>
    %142 = vector.shape_cast %141 : vector<1x24x16xf32> to vector<24x16xf32>
    %cst_116 = arith.constant dense<0.000000e+00> : vector<32x16xf32>
    %143 = tpu.matmul %140, %142, %cst_116 {dimension_numbers = #tpu.dot_dimension_numbers<[1], [0], [0], [1], [0, 0, 1, 1], [], []>} : vector<32x24xf32>, vector<24x16xf32>, vector<32x16xf32> -> vector<32x16xf32>
    %144 = arith.addf %117, %143 : vector<32x16xf32>
    %145 = arith.addf %9, %144 : vector<32x16xf32>
    %c0_117 = arith.constant 0 : index
    %c0_118 = arith.constant 0 : index
    %146 = vector.load %arg12[%c0_117, %c0_118] : memref<1x16xf32, #tpu.memory_space<vmem>>, vector<1x16xf32>
    %c0_119 = arith.constant 0 : index
    %c0_120 = arith.constant 0 : index
    %147 = vector.load %arg13[%c0_119, %c0_120] : memref<1x16xf32, #tpu.memory_space<vmem>>, vector<1x16xf32>
    %c0_121 = arith.constant 0 : index
    %c0_122 = arith.constant 0 : index
    %148 = vector.load %arg14[%c0_121, %c0_122] : memref<16x64xf32, #tpu.memory_space<vmem>>, vector<16x64xf32>
    %c0_123 = arith.constant 0 : index
    %c0_124 = arith.constant 0 : index
    %149 = vector.load %arg15[%c0_123, %c0_124] : memref<1x64xf32, #tpu.memory_space<vmem>>, vector<1x64xf32>
    %c0_125 = arith.constant 0 : index
    %c0_126 = arith.constant 0 : index
    %150 = vector.load %arg16[%c0_125, %c0_126] : memref<64x16xf32, #tpu.memory_space<vmem>>, vector<64x16xf32>
    %c0_127 = arith.constant 0 : index
    %c0_128 = arith.constant 0 : index
    %151 = vector.load %arg17[%c0_127, %c0_128] : memref<1x16xf32, #tpu.memory_space<vmem>>, vector<1x16xf32>
    %cst_129 = arith.constant dense<0.000000e+00> : vector<32xf32>
    %152 = vector.multi_reduction <add>, %145, %cst_129 [1] : vector<32x16xf32> to vector<32xf32>
    %153 = vector.shape_cast %152 : vector<32xf32> to vector<32x1xf32>
    %cst_130 = arith.constant 1.600000e+01 : f32
    %154 = vector.broadcast %cst_130 : f32 to vector<32x1xf32>
    %155 = arith.divf %153, %154 : vector<32x1xf32>
    %156 = vector.broadcast %155 : vector<32x1xf32> to vector<32x16xf32>
    %157 = arith.subf %145, %156 : vector<32x16xf32>
    %158 = arith.mulf %157, %157 : vector<32x16xf32>
    %cst_131 = arith.constant dense<0.000000e+00> : vector<32xf32>
    %159 = vector.multi_reduction <add>, %158, %cst_131 [1] : vector<32x16xf32> to vector<32xf32>
    %160 = vector.shape_cast %159 : vector<32xf32> to vector<32x1xf32>
    %cst_132 = arith.constant 1.600000e+01 : f32
    %161 = vector.broadcast %cst_132 : f32 to vector<32x1xf32>
    %162 = arith.divf %160, %161 : vector<32x1xf32>
    %163 = vector.broadcast %155 : vector<32x1xf32> to vector<32x16xf32>
    %164 = arith.subf %145, %163 : vector<32x16xf32>
    %cst_133 = arith.constant 9.99999974E-6 : f32
    %165 = vector.broadcast %cst_133 : f32 to vector<32x1xf32>
    %166 = arith.addf %162, %165 : vector<32x1xf32>
    %167 = math.rsqrt %166 : vector<32x1xf32>
    %168 = vector.broadcast %167 : vector<32x1xf32> to vector<32x16xf32>
    %169 = arith.mulf %164, %168 : vector<32x16xf32>
    %170 = vector.broadcast %146 : vector<1x16xf32> to vector<32x16xf32>
    %171 = arith.mulf %169, %170 : vector<32x16xf32>
    %172 = vector.broadcast %147 : vector<1x16xf32> to vector<32x16xf32>
    %173 = arith.addf %171, %172 : vector<32x16xf32>
    %cst_134 = arith.constant dense<0.000000e+00> : vector<32x64xf32>
    %174 = tpu.matmul %173, %148, %cst_134 {dimension_numbers = #tpu.dot_dimension_numbers<[1], [0], [0], [1], [0, 0, 1, 1], [], []>} : vector<32x16xf32>, vector<16x64xf32>, vector<32x64xf32> -> vector<32x64xf32>
    %175 = vector.broadcast %149 : vector<1x64xf32> to vector<32x64xf32>
    %176 = arith.addf %174, %175 : vector<32x64xf32>
    %cst_135 = arith.constant 5.000000e-01 : f32
    %177 = vector.broadcast %cst_135 : f32 to vector<32x64xf32>
    %178 = arith.mulf %177, %176 : vector<32x64xf32>
    %cst_136 = arith.constant 0.707106769 : f32
    %179 = vector.broadcast %cst_136 : f32 to vector<32x64xf32>
    %180 = arith.mulf %176, %179 : vector<32x64xf32>
    %181 = math.erf %180 : vector<32x64xf32>
    %cst_137 = arith.constant 1.000000e+00 : f32
    %182 = vector.broadcast %cst_137 : f32 to vector<32x64xf32>
    %183 = arith.addf %182, %181 : vector<32x64xf32>
    %184 = arith.mulf %178, %183 : vector<32x64xf32>
    %cst_138 = arith.constant dense<0.000000e+00> : vector<32x16xf32>
    %185 = tpu.matmul %184, %150, %cst_138 {dimension_numbers = #tpu.dot_dimension_numbers<[1], [0], [0], [1], [0, 0, 1, 1], [], []>} : vector<32x64xf32>, vector<64x16xf32>, vector<32x16xf32> -> vector<32x16xf32>
    %186 = arith.addf %145, %185 : vector<32x16xf32>
    %187 = vector.broadcast %151 : vector<1x16xf32> to vector<32x16xf32>
    %188 = arith.addf %186, %187 : vector<32x16xf32>
    %c0_139 = arith.constant 0 : index
    %c0_140 = arith.constant 0 : index
    %189 = vector.load %arg18[%c0_139, %c0_140] : memref<1x16xf32, #tpu.memory_space<vmem>>, vector<1x16xf32>
    %c0_141 = arith.constant 0 : index
    %c0_142 = arith.constant 0 : index
    %190 = vector.load %arg19[%c0_141, %c0_142] : memref<1x16xf32, #tpu.memory_space<vmem>>, vector<1x16xf32>
    %cst_143 = arith.constant dense<0.000000e+00> : vector<32xf32>
    %191 = vector.multi_reduction <add>, %188, %cst_143 [1] : vector<32x16xf32> to vector<32xf32>
    %192 = vector.shape_cast %191 : vector<32xf32> to vector<32x1xf32>
    %cst_144 = arith.constant 1.600000e+01 : f32
    %193 = vector.broadcast %cst_144 : f32 to vector<32x1xf32>
    %194 = arith.divf %192, %193 : vector<32x1xf32>
    %195 = vector.broadcast %194 : vector<32x1xf32> to vector<32x16xf32>
    %196 = arith.subf %188, %195 : vector<32x16xf32>
    %197 = arith.mulf %196, %196 : vector<32x16xf32>
    %cst_145 = arith.constant dense<0.000000e+00> : vector<32xf32>
    %198 = vector.multi_reduction <add>, %197, %cst_145 [1] : vector<32x16xf32> to vector<32xf32>
    %199 = vector.shape_cast %198 : vector<32xf32> to vector<32x1xf32>
    %cst_146 = arith.constant 1.600000e+01 : f32
    %200 = vector.broadcast %cst_146 : f32 to vector<32x1xf32>
    %201 = arith.divf %199, %200 : vector<32x1xf32>
    %202 = vector.broadcast %194 : vector<32x1xf32> to vector<32x16xf32>
    %203 = arith.subf %188, %202 : vector<32x16xf32>
    %cst_147 = arith.constant 9.99999974E-6 : f32
    %204 = vector.broadcast %cst_147 : f32 to vector<32x1xf32>
    %205 = arith.addf %201, %204 : vector<32x1xf32>
    %206 = math.rsqrt %205 : vector<32x1xf32>
    %207 = vector.broadcast %206 : vector<32x1xf32> to vector<32x16xf32>
    %208 = arith.mulf %203, %207 : vector<32x16xf32>
    %209 = vector.broadcast %189 : vector<1x16xf32> to vector<32x16xf32>
    %210 = arith.mulf %208, %209 : vector<32x16xf32>
    %211 = vector.broadcast %190 : vector<1x16xf32> to vector<32x16xf32>
    %212 = arith.addf %210, %211 : vector<32x16xf32>
    %213 = vector.extract_strided_slice %212 {offsets = [0, 0], sizes = [8, 16], strides = [1, 1]} : vector<32x16xf32> to vector<8x16xf32>
    %c0_148 = arith.constant 0 : index
    %c0_149 = arith.constant 0 : index
    %c0_150 = arith.constant 0 : index
    %214 = vector.load %arg20[%c0_148, %c0_149, %c0_150] : memref<4x16x32xf32, #tpu.memory_space<vmem>>, vector<1x16x32xf32>
    %215 = vector.shape_cast %214 : vector<1x16x32xf32> to vector<16x32xf32>
    %cst_151 = arith.constant dense<0.000000e+00> : vector<8x32xf32>
    %216 = tpu.matmul %213, %215, %cst_151 {dimension_numbers = #tpu.dot_dimension_numbers<[1], [0], [0], [1], [0, 0, 1, 1], [], []>} : vector<8x16xf32>, vector<16x32xf32>, vector<8x32xf32> -> vector<8x32xf32>
    %217 = vector.extract_strided_slice %212 {offsets = [8, 0], sizes = [8, 16], strides = [1, 1]} : vector<32x16xf32> to vector<8x16xf32>
    %c1_152 = arith.constant 1 : index
    %c0_153 = arith.constant 0 : index
    %c0_154 = arith.constant 0 : index
    %218 = vector.load %arg20[%c1_152, %c0_153, %c0_154] : memref<4x16x32xf32, #tpu.memory_space<vmem>>, vector<1x16x32xf32>
    %219 = vector.shape_cast %218 : vector<1x16x32xf32> to vector<16x32xf32>
    %cst_155 = arith.constant dense<0.000000e+00> : vector<8x32xf32>
    %220 = tpu.matmul %217, %219, %cst_155 {dimension_numbers = #tpu.dot_dimension_numbers<[1], [0], [0], [1], [0, 0, 1, 1], [], []>} : vector<8x16xf32>, vector<16x32xf32>, vector<8x32xf32> -> vector<8x32xf32>
    %221 = arith.addf %216, %220 : vector<8x32xf32>
    %222 = vector.extract_strided_slice %212 {offsets = [16, 0], sizes = [8, 16], strides = [1, 1]} : vector<32x16xf32> to vector<8x16xf32>
    %c2_156 = arith.constant 2 : index
    %c0_157 = arith.constant 0 : index
    %c0_158 = arith.constant 0 : index
    %223 = vector.load %arg20[%c2_156, %c0_157, %c0_158] : memref<4x16x32xf32, #tpu.memory_space<vmem>>, vector<1x16x32xf32>
    %224 = vector.shape_cast %223 : vector<1x16x32xf32> to vector<16x32xf32>
    %cst_159 = arith.constant dense<0.000000e+00> : vector<8x32xf32>
    %225 = tpu.matmul %222, %224, %cst_159 {dimension_numbers = #tpu.dot_dimension_numbers<[1], [0], [0], [1], [0, 0, 1, 1], [], []>} : vector<8x16xf32>, vector<16x32xf32>, vector<8x32xf32> -> vector<8x32xf32>
    %226 = arith.addf %221, %225 : vector<8x32xf32>
    %227 = vector.extract_strided_slice %212 {offsets = [24, 0], sizes = [8, 16], strides = [1, 1]} : vector<32x16xf32> to vector<8x16xf32>
    %c3_160 = arith.constant 3 : index
    %c0_161 = arith.constant 0 : index
    %c0_162 = arith.constant 0 : index
    %228 = vector.load %arg20[%c3_160, %c0_161, %c0_162] : memref<4x16x32xf32, #tpu.memory_space<vmem>>, vector<1x16x32xf32>
    %229 = vector.shape_cast %228 : vector<1x16x32xf32> to vector<16x32xf32>
    %cst_163 = arith.constant dense<0.000000e+00> : vector<8x32xf32>
    %230 = tpu.matmul %227, %229, %cst_163 {dimension_numbers = #tpu.dot_dimension_numbers<[1], [0], [0], [1], [0, 0, 1, 1], [], []>} : vector<8x16xf32>, vector<16x32xf32>, vector<8x32xf32> -> vector<8x32xf32>
    %231 = arith.addf %226, %230 : vector<8x32xf32>
    %c0_164 = arith.constant 0 : index
    %c0_165 = arith.constant 0 : index
    %232 = vector.load %arg21[%c0_164, %c0_165] : memref<1x32xf32, #tpu.memory_space<vmem>>, vector<1x32xf32>
    %233 = vector.broadcast %232 : vector<1x32xf32> to vector<8x32xf32>
    %234 = arith.addf %231, %233 : vector<8x32xf32>
    %cst_166 = arith.constant 0.000000e+00 : f32
    %235 = vector.broadcast %cst_166 : f32 to vector<1x32xf32>
    %236 = vector.extract_strided_slice %234 {offsets = [0, 0], sizes = [4, 32], strides = [1, 1]} : vector<8x32xf32> to vector<4x32xf32>
    %cst_167 = arith.constant 0.000000e+00 : f32
    %237 = vector.broadcast %cst_167 : f32 to vector<1x32xf32>
    %238 = vector.extract_strided_slice %234 {offsets = [4, 0], sizes = [4, 32], strides = [1, 1]} : vector<8x32xf32> to vector<4x32xf32>
    %239 = tpu.concatenate %235, %236, %237, %238 in 0 : vector<1x32xf32>, vector<4x32xf32>, vector<1x32xf32>, vector<4x32xf32> -> vector<10x32xf32>
    %240 = arith.addf %10, %239 : vector<10x32xf32>
    %c0_168 = arith.constant 0 : index
    %c0_169 = arith.constant 0 : index
    %241 = vector.load %arg22[%c0_168, %c0_169] : memref<1x32xf32, #tpu.memory_space<vmem>>, vector<1x32xf32>
    %c0_170 = arith.constant 0 : index
    %c0_171 = arith.constant 0 : index
    %242 = vector.load %arg23[%c0_170, %c0_171] : memref<1x32xf32, #tpu.memory_space<vmem>>, vector<1x32xf32>
    %c0_172 = arith.constant 0 : index
    %c0_173 = arith.constant 0 : index
    %243 = vector.load %arg26[%c0_172, %c0_173] : memref<1x32xf32, #tpu.memory_space<vmem>>, vector<1x32xf32>
    %cst_174 = arith.constant dense<0.000000e+00> : vector<10xf32>
    %244 = vector.multi_reduction <add>, %240, %cst_174 [1] : vector<10x32xf32> to vector<10xf32>
    %245 = vector.shape_cast %244 : vector<10xf32> to vector<10x1xf32>
    %cst_175 = arith.constant 3.200000e+01 : f32
    %246 = vector.broadcast %cst_175 : f32 to vector<10x1xf32>
    %247 = arith.divf %245, %246 : vector<10x1xf32>
    %248 = vector.broadcast %247 : vector<10x1xf32> to vector<10x32xf32>
    %249 = arith.subf %240, %248 : vector<10x32xf32>
    %250 = arith.mulf %249, %249 : vector<10x32xf32>
    %cst_176 = arith.constant dense<0.000000e+00> : vector<10xf32>
    %251 = vector.multi_reduction <add>, %250, %cst_176 [1] : vector<10x32xf32> to vector<10xf32>
    %252 = vector.shape_cast %251 : vector<10xf32> to vector<10x1xf32>
    %cst_177 = arith.constant 3.200000e+01 : f32
    %253 = vector.broadcast %cst_177 : f32 to vector<10x1xf32>
    %254 = arith.divf %252, %253 : vector<10x1xf32>
    %255 = vector.broadcast %247 : vector<10x1xf32> to vector<10x32xf32>
    %256 = arith.subf %240, %255 : vector<10x32xf32>
    %cst_178 = arith.constant 9.99999974E-6 : f32
    %257 = vector.broadcast %cst_178 : f32 to vector<10x1xf32>
    %258 = arith.addf %254, %257 : vector<10x1xf32>
    %259 = math.rsqrt %258 : vector<10x1xf32>
    %260 = vector.broadcast %259 : vector<10x1xf32> to vector<10x32xf32>
    %261 = arith.mulf %256, %260 : vector<10x32xf32>
    %262 = vector.broadcast %241 : vector<1x32xf32> to vector<10x32xf32>
    %263 = arith.mulf %261, %262 : vector<10x32xf32>
    %264 = vector.broadcast %242 : vector<1x32xf32> to vector<10x32xf32>
    %265 = arith.addf %263, %264 : vector<10x32xf32>
    %c0_179 = arith.constant 0 : index
    %c0_180 = arith.constant 0 : index
    %c0_181 = arith.constant 0 : index
    %c0_182 = arith.constant 0 : index
    %266 = vector.load %arg24[%c0_179, %c0_180, %c0_181, %c0_182] : memref<3x6x32x64xf32, #tpu.memory_space<vmem>>, vector<1x1x32x64xf32>
    %267 = vector.shape_cast %266 : vector<1x1x32x64xf32> to vector<32x64xf32>
    %cst_183 = arith.constant dense<0.000000e+00> : vector<10x64xf32>
    %268 = tpu.matmul %265, %267, %cst_183 {dimension_numbers = #tpu.dot_dimension_numbers<[1], [0], [0], [1], [0, 0, 1, 1], [], []>} : vector<10x32xf32>, vector<32x64xf32>, vector<10x64xf32> -> vector<10x64xf32>
    %cst_184 = arith.constant 1.250000e-01 : f32
    %269 = vector.broadcast %cst_184 : f32 to vector<10x64xf32>
    %270 = arith.mulf %268, %269 : vector<10x64xf32>
    %c1_185 = arith.constant 1 : index
    %c0_186 = arith.constant 0 : index
    %c0_187 = arith.constant 0 : index
    %c0_188 = arith.constant 0 : index
    %271 = vector.load %arg24[%c1_185, %c0_186, %c0_187, %c0_188] : memref<3x6x32x64xf32, #tpu.memory_space<vmem>>, vector<1x1x32x64xf32>
    %272 = vector.shape_cast %271 : vector<1x1x32x64xf32> to vector<32x64xf32>
    %cst_189 = arith.constant dense<0.000000e+00> : vector<10x64xf32>
    %273 = tpu.matmul %265, %272, %cst_189 {dimension_numbers = #tpu.dot_dimension_numbers<[1], [0], [0], [1], [0, 0, 1, 1], [], []>} : vector<10x32xf32>, vector<32x64xf32>, vector<10x64xf32> -> vector<10x64xf32>
    %c2_190 = arith.constant 2 : index
    %c0_191 = arith.constant 0 : index
    %c0_192 = arith.constant 0 : index
    %c0_193 = arith.constant 0 : index
    %274 = vector.load %arg24[%c2_190, %c0_191, %c0_192, %c0_193] : memref<3x6x32x64xf32, #tpu.memory_space<vmem>>, vector<1x1x32x64xf32>
    %275 = vector.shape_cast %274 : vector<1x1x32x64xf32> to vector<32x64xf32>
    %cst_194 = arith.constant dense<0.000000e+00> : vector<10x64xf32>
    %276 = tpu.matmul %265, %275, %cst_194 {dimension_numbers = #tpu.dot_dimension_numbers<[1], [0], [0], [1], [0, 0, 1, 1], [], []>} : vector<10x32xf32>, vector<32x64xf32>, vector<10x64xf32> -> vector<10x64xf32>
    %cst_195 = arith.constant dense<0.000000e+00> : vector<10x10xf32>
    %277 = tpu.matmul %270, %273, %cst_195 {dimension_numbers = #tpu.dot_dimension_numbers<[1], [1], [0], [0], [0, 0, 1, 0], [], []>} : vector<10x64xf32>, vector<10x64xf32>, vector<10x10xf32> -> vector<10x10xf32>
    %278 = arith.addf %277, %1 : vector<10x10xf32>
    %cst_196 = arith.constant dense<0xFF800000> : vector<10xf32>
    %279 = vector.multi_reduction <maximumf>, %278, %cst_196 [1] : vector<10x10xf32> to vector<10xf32>
    %280 = vector.shape_cast %279 : vector<10xf32> to vector<10x1xf32>
    %281 = vector.broadcast %280 : vector<10x1xf32> to vector<10x10xf32>
    %282 = arith.subf %278, %281 : vector<10x10xf32>
    %283 = math.exp %282 : vector<10x10xf32>
    %cst_197 = arith.constant dense<0.000000e+00> : vector<10xf32>
    %284 = vector.multi_reduction <add>, %283, %cst_197 [1] : vector<10x10xf32> to vector<10xf32>
    %285 = vector.shape_cast %284 : vector<10xf32> to vector<10x1xf32>
    %286 = vector.broadcast %285 : vector<10x1xf32> to vector<10x10xf32>
    %287 = arith.divf %283, %286 : vector<10x10xf32>
    %cst_198 = arith.constant dense<0.000000e+00> : vector<10x64xf32>
    %288 = tpu.matmul %287, %276, %cst_198 {dimension_numbers = #tpu.dot_dimension_numbers<[1], [0], [0], [1], [0, 0, 1, 1], [], []>} : vector<10x10xf32>, vector<10x64xf32>, vector<10x64xf32> -> vector<10x64xf32>
    %c0_199 = arith.constant 0 : index
    %c0_200 = arith.constant 0 : index
    %c0_201 = arith.constant 0 : index
    %289 = vector.load %arg25[%c0_199, %c0_200, %c0_201] : memref<6x64x32xf32, #tpu.memory_space<vmem>>, vector<1x64x32xf32>
    %290 = vector.shape_cast %289 : vector<1x64x32xf32> to vector<64x32xf32>
    %cst_202 = arith.constant dense<0.000000e+00> : vector<10x32xf32>
    %291 = tpu.matmul %288, %290, %cst_202 {dimension_numbers = #tpu.dot_dimension_numbers<[1], [0], [0], [1], [0, 0, 1, 1], [], []>} : vector<10x64xf32>, vector<64x32xf32>, vector<10x32xf32> -> vector<10x32xf32>
    %292 = vector.broadcast %243 : vector<1x32xf32> to vector<10x32xf32>
    %293 = arith.addf %292, %291 : vector<10x32xf32>
    %c0_203 = arith.constant 0 : index
    %c1_204 = arith.constant 1 : index
    %c0_205 = arith.constant 0 : index
    %c0_206 = arith.constant 0 : index
    %294 = vector.load %arg24[%c0_203, %c1_204, %c0_205, %c0_206] : memref<3x6x32x64xf32, #tpu.memory_space<vmem>>, vector<1x1x32x64xf32>
    %295 = vector.shape_cast %294 : vector<1x1x32x64xf32> to vector<32x64xf32>
    %cst_207 = arith.constant dense<0.000000e+00> : vector<10x64xf32>
    %296 = tpu.matmul %265, %295, %cst_207 {dimension_numbers = #tpu.dot_dimension_numbers<[1], [0], [0], [1], [0, 0, 1, 1], [], []>} : vector<10x32xf32>, vector<32x64xf32>, vector<10x64xf32> -> vector<10x64xf32>
    %cst_208 = arith.constant 1.250000e-01 : f32
    %297 = vector.broadcast %cst_208 : f32 to vector<10x64xf32>
    %298 = arith.mulf %296, %297 : vector<10x64xf32>
    %c1_209 = arith.constant 1 : index
    %c1_210 = arith.constant 1 : index
    %c0_211 = arith.constant 0 : index
    %c0_212 = arith.constant 0 : index
    %299 = vector.load %arg24[%c1_209, %c1_210, %c0_211, %c0_212] : memref<3x6x32x64xf32, #tpu.memory_space<vmem>>, vector<1x1x32x64xf32>
    %300 = vector.shape_cast %299 : vector<1x1x32x64xf32> to vector<32x64xf32>
    %cst_213 = arith.constant dense<0.000000e+00> : vector<10x64xf32>
    %301 = tpu.matmul %265, %300, %cst_213 {dimension_numbers = #tpu.dot_dimension_numbers<[1], [0], [0], [1], [0, 0, 1, 1], [], []>} : vector<10x32xf32>, vector<32x64xf32>, vector<10x64xf32> -> vector<10x64xf32>
    %c2_214 = arith.constant 2 : index
    %c1_215 = arith.constant 1 : index
    %c0_216 = arith.constant 0 : index
    %c0_217 = arith.constant 0 : index
    %302 = vector.load %arg24[%c2_214, %c1_215, %c0_216, %c0_217] : memref<3x6x32x64xf32, #tpu.memory_space<vmem>>, vector<1x1x32x64xf32>
    %303 = vector.shape_cast %302 : vector<1x1x32x64xf32> to vector<32x64xf32>
    %cst_218 = arith.constant dense<0.000000e+00> : vector<10x64xf32>
    %304 = tpu.matmul %265, %303, %cst_218 {dimension_numbers = #tpu.dot_dimension_numbers<[1], [0], [0], [1], [0, 0, 1, 1], [], []>} : vector<10x32xf32>, vector<32x64xf32>, vector<10x64xf32> -> vector<10x64xf32>
    %cst_219 = arith.constant dense<0.000000e+00> : vector<10x10xf32>
    %305 = tpu.matmul %298, %301, %cst_219 {dimension_numbers = #tpu.dot_dimension_numbers<[1], [1], [0], [0], [0, 0, 1, 0], [], []>} : vector<10x64xf32>, vector<10x64xf32>, vector<10x10xf32> -> vector<10x10xf32>
    %306 = arith.addf %305, %1 : vector<10x10xf32>
    %cst_220 = arith.constant dense<0xFF800000> : vector<10xf32>
    %307 = vector.multi_reduction <maximumf>, %306, %cst_220 [1] : vector<10x10xf32> to vector<10xf32>
    %308 = vector.shape_cast %307 : vector<10xf32> to vector<10x1xf32>
    %309 = vector.broadcast %308 : vector<10x1xf32> to vector<10x10xf32>
    %310 = arith.subf %306, %309 : vector<10x10xf32>
    %311 = math.exp %310 : vector<10x10xf32>
    %cst_221 = arith.constant dense<0.000000e+00> : vector<10xf32>
    %312 = vector.multi_reduction <add>, %311, %cst_221 [1] : vector<10x10xf32> to vector<10xf32>
    %313 = vector.shape_cast %312 : vector<10xf32> to vector<10x1xf32>
    %314 = vector.broadcast %313 : vector<10x1xf32> to vector<10x10xf32>
    %315 = arith.divf %311, %314 : vector<10x10xf32>
    %cst_222 = arith.constant dense<0.000000e+00> : vector<10x64xf32>
    %316 = tpu.matmul %315, %304, %cst_222 {dimension_numbers = #tpu.dot_dimension_numbers<[1], [0], [0], [1], [0, 0, 1, 1], [], []>} : vector<10x10xf32>, vector<10x64xf32>, vector<10x64xf32> -> vector<10x64xf32>
    %c1_223 = arith.constant 1 : index
    %c0_224 = arith.constant 0 : index
    %c0_225 = arith.constant 0 : index
    %317 = vector.load %arg25[%c1_223, %c0_224, %c0_225] : memref<6x64x32xf32, #tpu.memory_space<vmem>>, vector<1x64x32xf32>
    %318 = vector.shape_cast %317 : vector<1x64x32xf32> to vector<64x32xf32>
    %cst_226 = arith.constant dense<0.000000e+00> : vector<10x32xf32>
    %319 = tpu.matmul %316, %318, %cst_226 {dimension_numbers = #tpu.dot_dimension_numbers<[1], [0], [0], [1], [0, 0, 1, 1], [], []>} : vector<10x64xf32>, vector<64x32xf32>, vector<10x32xf32> -> vector<10x32xf32>
    %320 = arith.addf %293, %319 : vector<10x32xf32>
    %c0_227 = arith.constant 0 : index
    %c2_228 = arith.constant 2 : index
    %c0_229 = arith.constant 0 : index
    %c0_230 = arith.constant 0 : index
    %321 = vector.load %arg24[%c0_227, %c2_228, %c0_229, %c0_230] : memref<3x6x32x64xf32, #tpu.memory_space<vmem>>, vector<1x1x32x64xf32>
    %322 = vector.shape_cast %321 : vector<1x1x32x64xf32> to vector<32x64xf32>
    %cst_231 = arith.constant dense<0.000000e+00> : vector<10x64xf32>
    %323 = tpu.matmul %265, %322, %cst_231 {dimension_numbers = #tpu.dot_dimension_numbers<[1], [0], [0], [1], [0, 0, 1, 1], [], []>} : vector<10x32xf32>, vector<32x64xf32>, vector<10x64xf32> -> vector<10x64xf32>
    %cst_232 = arith.constant 1.250000e-01 : f32
    %324 = vector.broadcast %cst_232 : f32 to vector<10x64xf32>
    %325 = arith.mulf %323, %324 : vector<10x64xf32>
    %c1_233 = arith.constant 1 : index
    %c2_234 = arith.constant 2 : index
    %c0_235 = arith.constant 0 : index
    %c0_236 = arith.constant 0 : index
    %326 = vector.load %arg24[%c1_233, %c2_234, %c0_235, %c0_236] : memref<3x6x32x64xf32, #tpu.memory_space<vmem>>, vector<1x1x32x64xf32>
    %327 = vector.shape_cast %326 : vector<1x1x32x64xf32> to vector<32x64xf32>
    %cst_237 = arith.constant dense<0.000000e+00> : vector<10x64xf32>
    %328 = tpu.matmul %265, %327, %cst_237 {dimension_numbers = #tpu.dot_dimension_numbers<[1], [0], [0], [1], [0, 0, 1, 1], [], []>} : vector<10x32xf32>, vector<32x64xf32>, vector<10x64xf32> -> vector<10x64xf32>
    %c2_238 = arith.constant 2 : index
    %c2_239 = arith.constant 2 : index
    %c0_240 = arith.constant 0 : index
    %c0_241 = arith.constant 0 : index
    %329 = vector.load %arg24[%c2_238, %c2_239, %c0_240, %c0_241] : memref<3x6x32x64xf32, #tpu.memory_space<vmem>>, vector<1x1x32x64xf32>
    %330 = vector.shape_cast %329 : vector<1x1x32x64xf32> to vector<32x64xf32>
    %cst_242 = arith.constant dense<0.000000e+00> : vector<10x64xf32>
    %331 = tpu.matmul %265, %330, %cst_242 {dimension_numbers = #tpu.dot_dimension_numbers<[1], [0], [0], [1], [0, 0, 1, 1], [], []>} : vector<10x32xf32>, vector<32x64xf32>, vector<10x64xf32> -> vector<10x64xf32>
    %cst_243 = arith.constant dense<0.000000e+00> : vector<10x10xf32>
    %332 = tpu.matmul %325, %328, %cst_243 {dimension_numbers = #tpu.dot_dimension_numbers<[1], [1], [0], [0], [0, 0, 1, 0], [], []>} : vector<10x64xf32>, vector<10x64xf32>, vector<10x10xf32> -> vector<10x10xf32>
    %333 = arith.addf %332, %1 : vector<10x10xf32>
    %cst_244 = arith.constant dense<0xFF800000> : vector<10xf32>
    %334 = vector.multi_reduction <maximumf>, %333, %cst_244 [1] : vector<10x10xf32> to vector<10xf32>
    %335 = vector.shape_cast %334 : vector<10xf32> to vector<10x1xf32>
    %336 = vector.broadcast %335 : vector<10x1xf32> to vector<10x10xf32>
    %337 = arith.subf %333, %336 : vector<10x10xf32>
    %338 = math.exp %337 : vector<10x10xf32>
    %cst_245 = arith.constant dense<0.000000e+00> : vector<10xf32>
    %339 = vector.multi_reduction <add>, %338, %cst_245 [1] : vector<10x10xf32> to vector<10xf32>
    %340 = vector.shape_cast %339 : vector<10xf32> to vector<10x1xf32>
    %341 = vector.broadcast %340 : vector<10x1xf32> to vector<10x10xf32>
    %342 = arith.divf %338, %341 : vector<10x10xf32>
    %cst_246 = arith.constant dense<0.000000e+00> : vector<10x64xf32>
    %343 = tpu.matmul %342, %331, %cst_246 {dimension_numbers = #tpu.dot_dimension_numbers<[1], [0], [0], [1], [0, 0, 1, 1], [], []>} : vector<10x10xf32>, vector<10x64xf32>, vector<10x64xf32> -> vector<10x64xf32>
    %c2_247 = arith.constant 2 : index
    %c0_248 = arith.constant 0 : index
    %c0_249 = arith.constant 0 : index
    %344 = vector.load %arg25[%c2_247, %c0_248, %c0_249] : memref<6x64x32xf32, #tpu.memory_space<vmem>>, vector<1x64x32xf32>
    %345 = vector.shape_cast %344 : vector<1x64x32xf32> to vector<64x32xf32>
    %cst_250 = arith.constant dense<0.000000e+00> : vector<10x32xf32>
    %346 = tpu.matmul %343, %345, %cst_250 {dimension_numbers = #tpu.dot_dimension_numbers<[1], [0], [0], [1], [0, 0, 1, 1], [], []>} : vector<10x64xf32>, vector<64x32xf32>, vector<10x32xf32> -> vector<10x32xf32>
    %347 = arith.addf %320, %346 : vector<10x32xf32>
    %c0_251 = arith.constant 0 : index
    %c3_252 = arith.constant 3 : index
    %c0_253 = arith.constant 0 : index
    %c0_254 = arith.constant 0 : index
    %348 = vector.load %arg24[%c0_251, %c3_252, %c0_253, %c0_254] : memref<3x6x32x64xf32, #tpu.memory_space<vmem>>, vector<1x1x32x64xf32>
    %349 = vector.shape_cast %348 : vector<1x1x32x64xf32> to vector<32x64xf32>
    %cst_255 = arith.constant dense<0.000000e+00> : vector<10x64xf32>
    %350 = tpu.matmul %265, %349, %cst_255 {dimension_numbers = #tpu.dot_dimension_numbers<[1], [0], [0], [1], [0, 0, 1, 1], [], []>} : vector<10x32xf32>, vector<32x64xf32>, vector<10x64xf32> -> vector<10x64xf32>
    %cst_256 = arith.constant 1.250000e-01 : f32
    %351 = vector.broadcast %cst_256 : f32 to vector<10x64xf32>
    %352 = arith.mulf %350, %351 : vector<10x64xf32>
    %c1_257 = arith.constant 1 : index
    %c3_258 = arith.constant 3 : index
    %c0_259 = arith.constant 0 : index
    %c0_260 = arith.constant 0 : index
    %353 = vector.load %arg24[%c1_257, %c3_258, %c0_259, %c0_260] : memref<3x6x32x64xf32, #tpu.memory_space<vmem>>, vector<1x1x32x64xf32>
    %354 = vector.shape_cast %353 : vector<1x1x32x64xf32> to vector<32x64xf32>
    %cst_261 = arith.constant dense<0.000000e+00> : vector<10x64xf32>
    %355 = tpu.matmul %265, %354, %cst_261 {dimension_numbers = #tpu.dot_dimension_numbers<[1], [0], [0], [1], [0, 0, 1, 1], [], []>} : vector<10x32xf32>, vector<32x64xf32>, vector<10x64xf32> -> vector<10x64xf32>
    %c2_262 = arith.constant 2 : index
    %c3_263 = arith.constant 3 : index
    %c0_264 = arith.constant 0 : index
    %c0_265 = arith.constant 0 : index
    %356 = vector.load %arg24[%c2_262, %c3_263, %c0_264, %c0_265] : memref<3x6x32x64xf32, #tpu.memory_space<vmem>>, vector<1x1x32x64xf32>
    %357 = vector.shape_cast %356 : vector<1x1x32x64xf32> to vector<32x64xf32>
    %cst_266 = arith.constant dense<0.000000e+00> : vector<10x64xf32>
    %358 = tpu.matmul %265, %357, %cst_266 {dimension_numbers = #tpu.dot_dimension_numbers<[1], [0], [0], [1], [0, 0, 1, 1], [], []>} : vector<10x32xf32>, vector<32x64xf32>, vector<10x64xf32> -> vector<10x64xf32>
    %cst_267 = arith.constant dense<0.000000e+00> : vector<10x10xf32>
    %359 = tpu.matmul %352, %355, %cst_267 {dimension_numbers = #tpu.dot_dimension_numbers<[1], [1], [0], [0], [0, 0, 1, 0], [], []>} : vector<10x64xf32>, vector<10x64xf32>, vector<10x10xf32> -> vector<10x10xf32>
    %360 = arith.addf %359, %1 : vector<10x10xf32>
    %cst_268 = arith.constant dense<0xFF800000> : vector<10xf32>
    %361 = vector.multi_reduction <maximumf>, %360, %cst_268 [1] : vector<10x10xf32> to vector<10xf32>
    %362 = vector.shape_cast %361 : vector<10xf32> to vector<10x1xf32>
    %363 = vector.broadcast %362 : vector<10x1xf32> to vector<10x10xf32>
    %364 = arith.subf %360, %363 : vector<10x10xf32>
    %365 = math.exp %364 : vector<10x10xf32>
    %cst_269 = arith.constant dense<0.000000e+00> : vector<10xf32>
    %366 = vector.multi_reduction <add>, %365, %cst_269 [1] : vector<10x10xf32> to vector<10xf32>
    %367 = vector.shape_cast %366 : vector<10xf32> to vector<10x1xf32>
    %368 = vector.broadcast %367 : vector<10x1xf32> to vector<10x10xf32>
    %369 = arith.divf %365, %368 : vector<10x10xf32>
    %cst_270 = arith.constant dense<0.000000e+00> : vector<10x64xf32>
    %370 = tpu.matmul %369, %358, %cst_270 {dimension_numbers = #tpu.dot_dimension_numbers<[1], [0], [0], [1], [0, 0, 1, 1], [], []>} : vector<10x10xf32>, vector<10x64xf32>, vector<10x64xf32> -> vector<10x64xf32>
    %c3_271 = arith.constant 3 : index
    %c0_272 = arith.constant 0 : index
    %c0_273 = arith.constant 0 : index
    %371 = vector.load %arg25[%c3_271, %c0_272, %c0_273] : memref<6x64x32xf32, #tpu.memory_space<vmem>>, vector<1x64x32xf32>
    %372 = vector.shape_cast %371 : vector<1x64x32xf32> to vector<64x32xf32>
    %cst_274 = arith.constant dense<0.000000e+00> : vector<10x32xf32>
    %373 = tpu.matmul %370, %372, %cst_274 {dimension_numbers = #tpu.dot_dimension_numbers<[1], [0], [0], [1], [0, 0, 1, 1], [], []>} : vector<10x64xf32>, vector<64x32xf32>, vector<10x32xf32> -> vector<10x32xf32>
    %374 = arith.addf %347, %373 : vector<10x32xf32>
    %c0_275 = arith.constant 0 : index
    %c4 = arith.constant 4 : index
    %c0_276 = arith.constant 0 : index
    %c0_277 = arith.constant 0 : index
    %375 = vector.load %arg24[%c0_275, %c4, %c0_276, %c0_277] : memref<3x6x32x64xf32, #tpu.memory_space<vmem>>, vector<1x1x32x64xf32>
    %376 = vector.shape_cast %375 : vector<1x1x32x64xf32> to vector<32x64xf32>
    %cst_278 = arith.constant dense<0.000000e+00> : vector<10x64xf32>
    %377 = tpu.matmul %265, %376, %cst_278 {dimension_numbers = #tpu.dot_dimension_numbers<[1], [0], [0], [1], [0, 0, 1, 1], [], []>} : vector<10x32xf32>, vector<32x64xf32>, vector<10x64xf32> -> vector<10x64xf32>
    %cst_279 = arith.constant 1.250000e-01 : f32
    %378 = vector.broadcast %cst_279 : f32 to vector<10x64xf32>
    %379 = arith.mulf %377, %378 : vector<10x64xf32>
    %c1_280 = arith.constant 1 : index
    %c4_281 = arith.constant 4 : index
    %c0_282 = arith.constant 0 : index
    %c0_283 = arith.constant 0 : index
    %380 = vector.load %arg24[%c1_280, %c4_281, %c0_282, %c0_283] : memref<3x6x32x64xf32, #tpu.memory_space<vmem>>, vector<1x1x32x64xf32>
    %381 = vector.shape_cast %380 : vector<1x1x32x64xf32> to vector<32x64xf32>
    %cst_284 = arith.constant dense<0.000000e+00> : vector<10x64xf32>
    %382 = tpu.matmul %265, %381, %cst_284 {dimension_numbers = #tpu.dot_dimension_numbers<[1], [0], [0], [1], [0, 0, 1, 1], [], []>} : vector<10x32xf32>, vector<32x64xf32>, vector<10x64xf32> -> vector<10x64xf32>
    %c2_285 = arith.constant 2 : index
    %c4_286 = arith.constant 4 : index
    %c0_287 = arith.constant 0 : index
    %c0_288 = arith.constant 0 : index
    %383 = vector.load %arg24[%c2_285, %c4_286, %c0_287, %c0_288] : memref<3x6x32x64xf32, #tpu.memory_space<vmem>>, vector<1x1x32x64xf32>
    %384 = vector.shape_cast %383 : vector<1x1x32x64xf32> to vector<32x64xf32>
    %cst_289 = arith.constant dense<0.000000e+00> : vector<10x64xf32>
    %385 = tpu.matmul %265, %384, %cst_289 {dimension_numbers = #tpu.dot_dimension_numbers<[1], [0], [0], [1], [0, 0, 1, 1], [], []>} : vector<10x32xf32>, vector<32x64xf32>, vector<10x64xf32> -> vector<10x64xf32>
    %cst_290 = arith.constant dense<0.000000e+00> : vector<10x10xf32>
    %386 = tpu.matmul %379, %382, %cst_290 {dimension_numbers = #tpu.dot_dimension_numbers<[1], [1], [0], [0], [0, 0, 1, 0], [], []>} : vector<10x64xf32>, vector<10x64xf32>, vector<10x10xf32> -> vector<10x10xf32>
    %387 = arith.addf %386, %1 : vector<10x10xf32>
    %cst_291 = arith.constant dense<0xFF800000> : vector<10xf32>
    %388 = vector.multi_reduction <maximumf>, %387, %cst_291 [1] : vector<10x10xf32> to vector<10xf32>
    %389 = vector.shape_cast %388 : vector<10xf32> to vector<10x1xf32>
    %390 = vector.broadcast %389 : vector<10x1xf32> to vector<10x10xf32>
    %391 = arith.subf %387, %390 : vector<10x10xf32>
    %392 = math.exp %391 : vector<10x10xf32>
    %cst_292 = arith.constant dense<0.000000e+00> : vector<10xf32>
    %393 = vector.multi_reduction <add>, %392, %cst_292 [1] : vector<10x10xf32> to vector<10xf32>
    %394 = vector.shape_cast %393 : vector<10xf32> to vector<10x1xf32>
    %395 = vector.broadcast %394 : vector<10x1xf32> to vector<10x10xf32>
    %396 = arith.divf %392, %395 : vector<10x10xf32>
    %cst_293 = arith.constant dense<0.000000e+00> : vector<10x64xf32>
    %397 = tpu.matmul %396, %385, %cst_293 {dimension_numbers = #tpu.dot_dimension_numbers<[1], [0], [0], [1], [0, 0, 1, 1], [], []>} : vector<10x10xf32>, vector<10x64xf32>, vector<10x64xf32> -> vector<10x64xf32>
    %c4_294 = arith.constant 4 : index
    %c0_295 = arith.constant 0 : index
    %c0_296 = arith.constant 0 : index
    %398 = vector.load %arg25[%c4_294, %c0_295, %c0_296] : memref<6x64x32xf32, #tpu.memory_space<vmem>>, vector<1x64x32xf32>
    %399 = vector.shape_cast %398 : vector<1x64x32xf32> to vector<64x32xf32>
    %cst_297 = arith.constant dense<0.000000e+00> : vector<10x32xf32>
    %400 = tpu.matmul %397, %399, %cst_297 {dimension_numbers = #tpu.dot_dimension_numbers<[1], [0], [0], [1], [0, 0, 1, 1], [], []>} : vector<10x64xf32>, vector<64x32xf32>, vector<10x32xf32> -> vector<10x32xf32>
    %401 = arith.addf %374, %400 : vector<10x32xf32>
    %c0_298 = arith.constant 0 : index
    %c5 = arith.constant 5 : index
    %c0_299 = arith.constant 0 : index
    %c0_300 = arith.constant 0 : index
    %402 = vector.load %arg24[%c0_298, %c5, %c0_299, %c0_300] : memref<3x6x32x64xf32, #tpu.memory_space<vmem>>, vector<1x1x32x64xf32>
    %403 = vector.shape_cast %402 : vector<1x1x32x64xf32> to vector<32x64xf32>
    %cst_301 = arith.constant dense<0.000000e+00> : vector<10x64xf32>
    %404 = tpu.matmul %265, %403, %cst_301 {dimension_numbers = #tpu.dot_dimension_numbers<[1], [0], [0], [1], [0, 0, 1, 1], [], []>} : vector<10x32xf32>, vector<32x64xf32>, vector<10x64xf32> -> vector<10x64xf32>
    %cst_302 = arith.constant 1.250000e-01 : f32
    %405 = vector.broadcast %cst_302 : f32 to vector<10x64xf32>
    %406 = arith.mulf %404, %405 : vector<10x64xf32>
    %c1_303 = arith.constant 1 : index
    %c5_304 = arith.constant 5 : index
    %c0_305 = arith.constant 0 : index
    %c0_306 = arith.constant 0 : index
    %407 = vector.load %arg24[%c1_303, %c5_304, %c0_305, %c0_306] : memref<3x6x32x64xf32, #tpu.memory_space<vmem>>, vector<1x1x32x64xf32>
    %408 = vector.shape_cast %407 : vector<1x1x32x64xf32> to vector<32x64xf32>
    %cst_307 = arith.constant dense<0.000000e+00> : vector<10x64xf32>
    %409 = tpu.matmul %265, %408, %cst_307 {dimension_numbers = #tpu.dot_dimension_numbers<[1], [0], [0], [1], [0, 0, 1, 1], [], []>} : vector<10x32xf32>, vector<32x64xf32>, vector<10x64xf32> -> vector<10x64xf32>
    %c2_308 = arith.constant 2 : index
    %c5_309 = arith.constant 5 : index
    %c0_310 = arith.constant 0 : index
    %c0_311 = arith.constant 0 : index
    %410 = vector.load %arg24[%c2_308, %c5_309, %c0_310, %c0_311] : memref<3x6x32x64xf32, #tpu.memory_space<vmem>>, vector<1x1x32x64xf32>
    %411 = vector.shape_cast %410 : vector<1x1x32x64xf32> to vector<32x64xf32>
    %cst_312 = arith.constant dense<0.000000e+00> : vector<10x64xf32>
    %412 = tpu.matmul %265, %411, %cst_312 {dimension_numbers = #tpu.dot_dimension_numbers<[1], [0], [0], [1], [0, 0, 1, 1], [], []>} : vector<10x32xf32>, vector<32x64xf32>, vector<10x64xf32> -> vector<10x64xf32>
    %cst_313 = arith.constant dense<0.000000e+00> : vector<10x10xf32>
    %413 = tpu.matmul %406, %409, %cst_313 {dimension_numbers = #tpu.dot_dimension_numbers<[1], [1], [0], [0], [0, 0, 1, 0], [], []>} : vector<10x64xf32>, vector<10x64xf32>, vector<10x10xf32> -> vector<10x10xf32>
    %414 = arith.addf %413, %1 : vector<10x10xf32>
    %cst_314 = arith.constant dense<0xFF800000> : vector<10xf32>
    %415 = vector.multi_reduction <maximumf>, %414, %cst_314 [1] : vector<10x10xf32> to vector<10xf32>
    %416 = vector.shape_cast %415 : vector<10xf32> to vector<10x1xf32>
    %417 = vector.broadcast %416 : vector<10x1xf32> to vector<10x10xf32>
    %418 = arith.subf %414, %417 : vector<10x10xf32>
    %419 = math.exp %418 : vector<10x10xf32>
    %cst_315 = arith.constant dense<0.000000e+00> : vector<10xf32>
    %420 = vector.multi_reduction <add>, %419, %cst_315 [1] : vector<10x10xf32> to vector<10xf32>
    %421 = vector.shape_cast %420 : vector<10xf32> to vector<10x1xf32>
    %422 = vector.broadcast %421 : vector<10x1xf32> to vector<10x10xf32>
    %423 = arith.divf %419, %422 : vector<10x10xf32>
    %cst_316 = arith.constant dense<0.000000e+00> : vector<10x64xf32>
    %424 = tpu.matmul %423, %412, %cst_316 {dimension_numbers = #tpu.dot_dimension_numbers<[1], [0], [0], [1], [0, 0, 1, 1], [], []>} : vector<10x10xf32>, vector<10x64xf32>, vector<10x64xf32> -> vector<10x64xf32>
    %c5_317 = arith.constant 5 : index
    %c0_318 = arith.constant 0 : index
    %c0_319 = arith.constant 0 : index
    %425 = vector.load %arg25[%c5_317, %c0_318, %c0_319] : memref<6x64x32xf32, #tpu.memory_space<vmem>>, vector<1x64x32xf32>
    %426 = vector.shape_cast %425 : vector<1x64x32xf32> to vector<64x32xf32>
    %cst_320 = arith.constant dense<0.000000e+00> : vector<10x32xf32>
    %427 = tpu.matmul %424, %426, %cst_320 {dimension_numbers = #tpu.dot_dimension_numbers<[1], [0], [0], [1], [0, 0, 1, 1], [], []>} : vector<10x64xf32>, vector<64x32xf32>, vector<10x32xf32> -> vector<10x32xf32>
    %428 = arith.addf %401, %427 : vector<10x32xf32>
    %429 = arith.addf %240, %428 : vector<10x32xf32>
    %c0_321 = arith.constant 0 : index
    %c0_322 = arith.constant 0 : index
    %430 = vector.load %arg27[%c0_321, %c0_322] : memref<1x32xf32, #tpu.memory_space<vmem>>, vector<1x32xf32>
    %c0_323 = arith.constant 0 : index
    %c0_324 = arith.constant 0 : index
    %431 = vector.load %arg28[%c0_323, %c0_324] : memref<1x32xf32, #tpu.memory_space<vmem>>, vector<1x32xf32>
    %c0_325 = arith.constant 0 : index
    %c0_326 = arith.constant 0 : index
    %432 = vector.load %arg29[%c0_325, %c0_326] : memref<32x128xf32, #tpu.memory_space<vmem>>, vector<32x128xf32>
    %c0_327 = arith.constant 0 : index
    %c0_328 = arith.constant 0 : index
    %433 = vector.load %arg30[%c0_327, %c0_328] : memref<1x128xf32, #tpu.memory_space<vmem>>, vector<1x128xf32>
    %c0_329 = arith.constant 0 : index
    %c0_330 = arith.constant 0 : index
    %434 = vector.load %arg31[%c0_329, %c0_330] : memref<128x32xf32, #tpu.memory_space<vmem>>, vector<128x32xf32>
    %c0_331 = arith.constant 0 : index
    %c0_332 = arith.constant 0 : index
    %435 = vector.load %arg32[%c0_331, %c0_332] : memref<1x32xf32, #tpu.memory_space<vmem>>, vector<1x32xf32>
    %cst_333 = arith.constant dense<0.000000e+00> : vector<10xf32>
    %436 = vector.multi_reduction <add>, %429, %cst_333 [1] : vector<10x32xf32> to vector<10xf32>
    %437 = vector.shape_cast %436 : vector<10xf32> to vector<10x1xf32>
    %cst_334 = arith.constant 3.200000e+01 : f32
    %438 = vector.broadcast %cst_334 : f32 to vector<10x1xf32>
    %439 = arith.divf %437, %438 : vector<10x1xf32>
    %440 = vector.broadcast %439 : vector<10x1xf32> to vector<10x32xf32>
    %441 = arith.subf %429, %440 : vector<10x32xf32>
    %442 = arith.mulf %441, %441 : vector<10x32xf32>
    %cst_335 = arith.constant dense<0.000000e+00> : vector<10xf32>
    %443 = vector.multi_reduction <add>, %442, %cst_335 [1] : vector<10x32xf32> to vector<10xf32>
    %444 = vector.shape_cast %443 : vector<10xf32> to vector<10x1xf32>
    %cst_336 = arith.constant 3.200000e+01 : f32
    %445 = vector.broadcast %cst_336 : f32 to vector<10x1xf32>
    %446 = arith.divf %444, %445 : vector<10x1xf32>
    %447 = vector.broadcast %439 : vector<10x1xf32> to vector<10x32xf32>
    %448 = arith.subf %429, %447 : vector<10x32xf32>
    %cst_337 = arith.constant 9.99999974E-6 : f32
    %449 = vector.broadcast %cst_337 : f32 to vector<10x1xf32>
    %450 = arith.addf %446, %449 : vector<10x1xf32>
    %451 = math.rsqrt %450 : vector<10x1xf32>
    %452 = vector.broadcast %451 : vector<10x1xf32> to vector<10x32xf32>
    %453 = arith.mulf %448, %452 : vector<10x32xf32>
    %454 = vector.broadcast %430 : vector<1x32xf32> to vector<10x32xf32>
    %455 = arith.mulf %453, %454 : vector<10x32xf32>
    %456 = vector.broadcast %431 : vector<1x32xf32> to vector<10x32xf32>
    %457 = arith.addf %455, %456 : vector<10x32xf32>
    %cst_338 = arith.constant dense<0.000000e+00> : vector<10x128xf32>
    %458 = tpu.matmul %457, %432, %cst_338 {dimension_numbers = #tpu.dot_dimension_numbers<[1], [0], [0], [1], [0, 0, 1, 1], [], []>} : vector<10x32xf32>, vector<32x128xf32>, vector<10x128xf32> -> vector<10x128xf32>
    %459 = vector.broadcast %433 : vector<1x128xf32> to vector<10x128xf32>
    %460 = arith.addf %458, %459 : vector<10x128xf32>
    %cst_339 = arith.constant 5.000000e-01 : f32
    %461 = vector.broadcast %cst_339 : f32 to vector<10x128xf32>
    %462 = arith.mulf %461, %460 : vector<10x128xf32>
    %cst_340 = arith.constant 0.707106769 : f32
    %463 = vector.broadcast %cst_340 : f32 to vector<10x128xf32>
    %464 = arith.mulf %460, %463 : vector<10x128xf32>
    %465 = math.erf %464 : vector<10x128xf32>
    %cst_341 = arith.constant 1.000000e+00 : f32
    %466 = vector.broadcast %cst_341 : f32 to vector<10x128xf32>
    %467 = arith.addf %466, %465 : vector<10x128xf32>
    %468 = arith.mulf %462, %467 : vector<10x128xf32>
    %cst_342 = arith.constant dense<0.000000e+00> : vector<10x32xf32>
    %469 = tpu.matmul %468, %434, %cst_342 {dimension_numbers = #tpu.dot_dimension_numbers<[1], [0], [0], [1], [0, 0, 1, 1], [], []>} : vector<10x128xf32>, vector<128x32xf32>, vector<10x32xf32> -> vector<10x32xf32>
    %470 = arith.addf %429, %469 : vector<10x32xf32>
    %471 = vector.broadcast %435 : vector<1x32xf32> to vector<10x32xf32>
    %472 = arith.addf %470, %471 : vector<10x32xf32>
    %c0_343 = arith.constant 0 : index
    %c0_344 = arith.constant 0 : index
    %473 = vector.load %arg33[%c0_343, %c0_344] : memref<1x16xf32, #tpu.memory_space<vmem>>, vector<1x16xf32>
    %c0_345 = arith.constant 0 : index
    %c0_346 = arith.constant 0 : index
    %474 = vector.load %arg34[%c0_345, %c0_346] : memref<1x16xf32, #tpu.memory_space<vmem>>, vector<1x16xf32>
    %c0_347 = arith.constant 0 : index
    %c0_348 = arith.constant 0 : index
    %475 = vector.load %arg37[%c0_347, %c0_348] : memref<1x16xf32, #tpu.memory_space<vmem>>, vector<1x16xf32>
    %cst_349 = arith.constant dense<0.000000e+00> : vector<32xf32>
    %476 = vector.multi_reduction <add>, %188, %cst_349 [1] : vector<32x16xf32> to vector<32xf32>
    %477 = vector.shape_cast %476 : vector<32xf32> to vector<32x1xf32>
    %cst_350 = arith.constant 1.600000e+01 : f32
    %478 = vector.broadcast %cst_350 : f32 to vector<32x1xf32>
    %479 = arith.divf %477, %478 : vector<32x1xf32>
    %480 = vector.broadcast %479 : vector<32x1xf32> to vector<32x16xf32>
    %481 = arith.subf %188, %480 : vector<32x16xf32>
    %482 = arith.mulf %481, %481 : vector<32x16xf32>
    %cst_351 = arith.constant dense<0.000000e+00> : vector<32xf32>
    %483 = vector.multi_reduction <add>, %482, %cst_351 [1] : vector<32x16xf32> to vector<32xf32>
    %484 = vector.shape_cast %483 : vector<32xf32> to vector<32x1xf32>
    %cst_352 = arith.constant 1.600000e+01 : f32
    %485 = vector.broadcast %cst_352 : f32 to vector<32x1xf32>
    %486 = arith.divf %484, %485 : vector<32x1xf32>
    %487 = vector.broadcast %479 : vector<32x1xf32> to vector<32x16xf32>
    %488 = arith.subf %188, %487 : vector<32x16xf32>
    %cst_353 = arith.constant 9.99999974E-6 : f32
    %489 = vector.broadcast %cst_353 : f32 to vector<32x1xf32>
    %490 = arith.addf %486, %489 : vector<32x1xf32>
    %491 = math.rsqrt %490 : vector<32x1xf32>
    %492 = vector.broadcast %491 : vector<32x1xf32> to vector<32x16xf32>
    %493 = arith.mulf %488, %492 : vector<32x16xf32>
    %494 = vector.broadcast %473 : vector<1x16xf32> to vector<32x16xf32>
    %495 = arith.mulf %493, %494 : vector<32x16xf32>
    %496 = vector.broadcast %474 : vector<1x16xf32> to vector<32x16xf32>
    %497 = arith.addf %495, %496 : vector<32x16xf32>
    %c0_354 = arith.constant 0 : index
    %c0_355 = arith.constant 0 : index
    %c0_356 = arith.constant 0 : index
    %c0_357 = arith.constant 0 : index
    %498 = vector.load %arg35[%c0_354, %c0_355, %c0_356, %c0_357] : memref<3x4x16x24xf32, #tpu.memory_space<vmem>>, vector<1x1x16x24xf32>
    %499 = vector.shape_cast %498 : vector<1x1x16x24xf32> to vector<16x24xf32>
    %cst_358 = arith.constant dense<0.000000e+00> : vector<32x24xf32>
    %500 = tpu.matmul %497, %499, %cst_358 {dimension_numbers = #tpu.dot_dimension_numbers<[1], [0], [0], [1], [0, 0, 1, 1], [], []>} : vector<32x16xf32>, vector<16x24xf32>, vector<32x24xf32> -> vector<32x24xf32>
    %cst_359 = arith.constant 0.204124153 : f32
    %501 = vector.broadcast %cst_359 : f32 to vector<32x24xf32>
    %502 = arith.mulf %500, %501 : vector<32x24xf32>
    %c1_360 = arith.constant 1 : index
    %c0_361 = arith.constant 0 : index
    %c0_362 = arith.constant 0 : index
    %c0_363 = arith.constant 0 : index
    %503 = vector.load %arg35[%c1_360, %c0_361, %c0_362, %c0_363] : memref<3x4x16x24xf32, #tpu.memory_space<vmem>>, vector<1x1x16x24xf32>
    %504 = vector.shape_cast %503 : vector<1x1x16x24xf32> to vector<16x24xf32>
    %cst_364 = arith.constant dense<0.000000e+00> : vector<32x24xf32>
    %505 = tpu.matmul %497, %504, %cst_364 {dimension_numbers = #tpu.dot_dimension_numbers<[1], [0], [0], [1], [0, 0, 1, 1], [], []>} : vector<32x16xf32>, vector<16x24xf32>, vector<32x24xf32> -> vector<32x24xf32>
    %c2_365 = arith.constant 2 : index
    %c0_366 = arith.constant 0 : index
    %c0_367 = arith.constant 0 : index
    %c0_368 = arith.constant 0 : index
    %506 = vector.load %arg35[%c2_365, %c0_366, %c0_367, %c0_368] : memref<3x4x16x24xf32, #tpu.memory_space<vmem>>, vector<1x1x16x24xf32>
    %507 = vector.shape_cast %506 : vector<1x1x16x24xf32> to vector<16x24xf32>
    %cst_369 = arith.constant dense<0.000000e+00> : vector<32x24xf32>
    %508 = tpu.matmul %497, %507, %cst_369 {dimension_numbers = #tpu.dot_dimension_numbers<[1], [0], [0], [1], [0, 0, 1, 1], [], []>} : vector<32x16xf32>, vector<16x24xf32>, vector<32x24xf32> -> vector<32x24xf32>
    %cst_370 = arith.constant dense<0.000000e+00> : vector<32x32xf32>
    %509 = tpu.matmul %502, %505, %cst_370 {dimension_numbers = #tpu.dot_dimension_numbers<[1], [1], [0], [0], [0, 0, 1, 0], [], []>} : vector<32x24xf32>, vector<32x24xf32>, vector<32x32xf32> -> vector<32x32xf32>
    %510 = arith.addf %509, %0 : vector<32x32xf32>
    %cst_371 = arith.constant dense<0xFF800000> : vector<32xf32>
    %511 = vector.multi_reduction <maximumf>, %510, %cst_371 [1] : vector<32x32xf32> to vector<32xf32>
    %512 = vector.shape_cast %511 : vector<32xf32> to vector<32x1xf32>
    %513 = vector.broadcast %512 : vector<32x1xf32> to vector<32x32xf32>
    %514 = arith.subf %510, %513 : vector<32x32xf32>
    %515 = math.exp %514 : vector<32x32xf32>
    %cst_372 = arith.constant dense<0.000000e+00> : vector<32xf32>
    %516 = vector.multi_reduction <add>, %515, %cst_372 [1] : vector<32x32xf32> to vector<32xf32>
    %517 = vector.shape_cast %516 : vector<32xf32> to vector<32x1xf32>
    %518 = vector.broadcast %517 : vector<32x1xf32> to vector<32x32xf32>
    %519 = arith.divf %515, %518 : vector<32x32xf32>
    %cst_373 = arith.constant dense<0.000000e+00> : vector<32x24xf32>
    %520 = tpu.matmul %519, %508, %cst_373 {dimension_numbers = #tpu.dot_dimension_numbers<[1], [0], [0], [1], [0, 0, 1, 1], [], []>} : vector<32x32xf32>, vector<32x24xf32>, vector<32x24xf32> -> vector<32x24xf32>
    %c0_374 = arith.constant 0 : index
    %c0_375 = arith.constant 0 : index
    %c0_376 = arith.constant 0 : index
    %521 = vector.load %arg36[%c0_374, %c0_375, %c0_376] : memref<4x24x16xf32, #tpu.memory_space<vmem>>, vector<1x24x16xf32>
    %522 = vector.shape_cast %521 : vector<1x24x16xf32> to vector<24x16xf32>
    %cst_377 = arith.constant dense<0.000000e+00> : vector<32x16xf32>
    %523 = tpu.matmul %520, %522, %cst_377 {dimension_numbers = #tpu.dot_dimension_numbers<[1], [0], [0], [1], [0, 0, 1, 1], [], []>} : vector<32x24xf32>, vector<24x16xf32>, vector<32x16xf32> -> vector<32x16xf32>
    %524 = vector.broadcast %475 : vector<1x16xf32> to vector<32x16xf32>
    %525 = arith.addf %524, %523 : vector<32x16xf32>
    %c0_378 = arith.constant 0 : index
    %c1_379 = arith.constant 1 : index
    %c0_380 = arith.constant 0 : index
    %c0_381 = arith.constant 0 : index
    %526 = vector.load %arg35[%c0_378, %c1_379, %c0_380, %c0_381] : memref<3x4x16x24xf32, #tpu.memory_space<vmem>>, vector<1x1x16x24xf32>
    %527 = vector.shape_cast %526 : vector<1x1x16x24xf32> to vector<16x24xf32>
    %cst_382 = arith.constant dense<0.000000e+00> : vector<32x24xf32>
    %528 = tpu.matmul %497, %527, %cst_382 {dimension_numbers = #tpu.dot_dimension_numbers<[1], [0], [0], [1], [0, 0, 1, 1], [], []>} : vector<32x16xf32>, vector<16x24xf32>, vector<32x24xf32> -> vector<32x24xf32>
    %cst_383 = arith.constant 0.204124153 : f32
    %529 = vector.broadcast %cst_383 : f32 to vector<32x24xf32>
    %530 = arith.mulf %528, %529 : vector<32x24xf32>
    %c1_384 = arith.constant 1 : index
    %c1_385 = arith.constant 1 : index
    %c0_386 = arith.constant 0 : index
    %c0_387 = arith.constant 0 : index
    %531 = vector.load %arg35[%c1_384, %c1_385, %c0_386, %c0_387] : memref<3x4x16x24xf32, #tpu.memory_space<vmem>>, vector<1x1x16x24xf32>
    %532 = vector.shape_cast %531 : vector<1x1x16x24xf32> to vector<16x24xf32>
    %cst_388 = arith.constant dense<0.000000e+00> : vector<32x24xf32>
    %533 = tpu.matmul %497, %532, %cst_388 {dimension_numbers = #tpu.dot_dimension_numbers<[1], [0], [0], [1], [0, 0, 1, 1], [], []>} : vector<32x16xf32>, vector<16x24xf32>, vector<32x24xf32> -> vector<32x24xf32>
    %c2_389 = arith.constant 2 : index
    %c1_390 = arith.constant 1 : index
    %c0_391 = arith.constant 0 : index
    %c0_392 = arith.constant 0 : index
    %534 = vector.load %arg35[%c2_389, %c1_390, %c0_391, %c0_392] : memref<3x4x16x24xf32, #tpu.memory_space<vmem>>, vector<1x1x16x24xf32>
    %535 = vector.shape_cast %534 : vector<1x1x16x24xf32> to vector<16x24xf32>
    %cst_393 = arith.constant dense<0.000000e+00> : vector<32x24xf32>
    %536 = tpu.matmul %497, %535, %cst_393 {dimension_numbers = #tpu.dot_dimension_numbers<[1], [0], [0], [1], [0, 0, 1, 1], [], []>} : vector<32x16xf32>, vector<16x24xf32>, vector<32x24xf32> -> vector<32x24xf32>
    %cst_394 = arith.constant dense<0.000000e+00> : vector<32x32xf32>
    %537 = tpu.matmul %530, %533, %cst_394 {dimension_numbers = #tpu.dot_dimension_numbers<[1], [1], [0], [0], [0, 0, 1, 0], [], []>} : vector<32x24xf32>, vector<32x24xf32>, vector<32x32xf32> -> vector<32x32xf32>
    %538 = arith.addf %537, %0 : vector<32x32xf32>
    %cst_395 = arith.constant dense<0xFF800000> : vector<32xf32>
    %539 = vector.multi_reduction <maximumf>, %538, %cst_395 [1] : vector<32x32xf32> to vector<32xf32>
    %540 = vector.shape_cast %539 : vector<32xf32> to vector<32x1xf32>
    %541 = vector.broadcast %540 : vector<32x1xf32> to vector<32x32xf32>
    %542 = arith.subf %538, %541 : vector<32x32xf32>
    %543 = math.exp %542 : vector<32x32xf32>
    %cst_396 = arith.constant dense<0.000000e+00> : vector<32xf32>
    %544 = vector.multi_reduction <add>, %543, %cst_396 [1] : vector<32x32xf32> to vector<32xf32>
    %545 = vector.shape_cast %544 : vector<32xf32> to vector<32x1xf32>
    %546 = vector.broadcast %545 : vector<32x1xf32> to vector<32x32xf32>
    %547 = arith.divf %543, %546 : vector<32x32xf32>
    %cst_397 = arith.constant dense<0.000000e+00> : vector<32x24xf32>
    %548 = tpu.matmul %547, %536, %cst_397 {dimension_numbers = #tpu.dot_dimension_numbers<[1], [0], [0], [1], [0, 0, 1, 1], [], []>} : vector<32x32xf32>, vector<32x24xf32>, vector<32x24xf32> -> vector<32x24xf32>
    %c1_398 = arith.constant 1 : index
    %c0_399 = arith.constant 0 : index
    %c0_400 = arith.constant 0 : index
    %549 = vector.load %arg36[%c1_398, %c0_399, %c0_400] : memref<4x24x16xf32, #tpu.memory_space<vmem>>, vector<1x24x16xf32>
    %550 = vector.shape_cast %549 : vector<1x24x16xf32> to vector<24x16xf32>
    %cst_401 = arith.constant dense<0.000000e+00> : vector<32x16xf32>
    %551 = tpu.matmul %548, %550, %cst_401 {dimension_numbers = #tpu.dot_dimension_numbers<[1], [0], [0], [1], [0, 0, 1, 1], [], []>} : vector<32x24xf32>, vector<24x16xf32>, vector<32x16xf32> -> vector<32x16xf32>
    %552 = arith.addf %525, %551 : vector<32x16xf32>
    %c0_402 = arith.constant 0 : index
    %c2_403 = arith.constant 2 : index
    %c0_404 = arith.constant 0 : index
    %c0_405 = arith.constant 0 : index
    %553 = vector.load %arg35[%c0_402, %c2_403, %c0_404, %c0_405] : memref<3x4x16x24xf32, #tpu.memory_space<vmem>>, vector<1x1x16x24xf32>
    %554 = vector.shape_cast %553 : vector<1x1x16x24xf32> to vector<16x24xf32>
    %cst_406 = arith.constant dense<0.000000e+00> : vector<32x24xf32>
    %555 = tpu.matmul %497, %554, %cst_406 {dimension_numbers = #tpu.dot_dimension_numbers<[1], [0], [0], [1], [0, 0, 1, 1], [], []>} : vector<32x16xf32>, vector<16x24xf32>, vector<32x24xf32> -> vector<32x24xf32>
    %cst_407 = arith.constant 0.204124153 : f32
    %556 = vector.broadcast %cst_407 : f32 to vector<32x24xf32>
    %557 = arith.mulf %555, %556 : vector<32x24xf32>
    %c1_408 = arith.constant 1 : index
    %c2_409 = arith.constant 2 : index
    %c0_410 = arith.constant 0 : index
    %c0_411 = arith.constant 0 : index
    %558 = vector.load %arg35[%c1_408, %c2_409, %c0_410, %c0_411] : memref<3x4x16x24xf32, #tpu.memory_space<vmem>>, vector<1x1x16x24xf32>
    %559 = vector.shape_cast %558 : vector<1x1x16x24xf32> to vector<16x24xf32>
    %cst_412 = arith.constant dense<0.000000e+00> : vector<32x24xf32>
    %560 = tpu.matmul %497, %559, %cst_412 {dimension_numbers = #tpu.dot_dimension_numbers<[1], [0], [0], [1], [0, 0, 1, 1], [], []>} : vector<32x16xf32>, vector<16x24xf32>, vector<32x24xf32> -> vector<32x24xf32>
    %c2_413 = arith.constant 2 : index
    %c2_414 = arith.constant 2 : index
    %c0_415 = arith.constant 0 : index
    %c0_416 = arith.constant 0 : index
    %561 = vector.load %arg35[%c2_413, %c2_414, %c0_415, %c0_416] : memref<3x4x16x24xf32, #tpu.memory_space<vmem>>, vector<1x1x16x24xf32>
    %562 = vector.shape_cast %561 : vector<1x1x16x24xf32> to vector<16x24xf32>
    %cst_417 = arith.constant dense<0.000000e+00> : vector<32x24xf32>
    %563 = tpu.matmul %497, %562, %cst_417 {dimension_numbers = #tpu.dot_dimension_numbers<[1], [0], [0], [1], [0, 0, 1, 1], [], []>} : vector<32x16xf32>, vector<16x24xf32>, vector<32x24xf32> -> vector<32x24xf32>
    %cst_418 = arith.constant dense<0.000000e+00> : vector<32x32xf32>
    %564 = tpu.matmul %557, %560, %cst_418 {dimension_numbers = #tpu.dot_dimension_numbers<[1], [1], [0], [0], [0, 0, 1, 0], [], []>} : vector<32x24xf32>, vector<32x24xf32>, vector<32x32xf32> -> vector<32x32xf32>
    %565 = arith.addf %564, %0 : vector<32x32xf32>
    %cst_419 = arith.constant dense<0xFF800000> : vector<32xf32>
    %566 = vector.multi_reduction <maximumf>, %565, %cst_419 [1] : vector<32x32xf32> to vector<32xf32>
    %567 = vector.shape_cast %566 : vector<32xf32> to vector<32x1xf32>
    %568 = vector.broadcast %567 : vector<32x1xf32> to vector<32x32xf32>
    %569 = arith.subf %565, %568 : vector<32x32xf32>
    %570 = math.exp %569 : vector<32x32xf32>
    %cst_420 = arith.constant dense<0.000000e+00> : vector<32xf32>
    %571 = vector.multi_reduction <add>, %570, %cst_420 [1] : vector<32x32xf32> to vector<32xf32>
    %572 = vector.shape_cast %571 : vector<32xf32> to vector<32x1xf32>
    %573 = vector.broadcast %572 : vector<32x1xf32> to vector<32x32xf32>
    %574 = arith.divf %570, %573 : vector<32x32xf32>
    %cst_421 = arith.constant dense<0.000000e+00> : vector<32x24xf32>
    %575 = tpu.matmul %574, %563, %cst_421 {dimension_numbers = #tpu.dot_dimension_numbers<[1], [0], [0], [1], [0, 0, 1, 1], [], []>} : vector<32x32xf32>, vector<32x24xf32>, vector<32x24xf32> -> vector<32x24xf32>
    %c2_422 = arith.constant 2 : index
    %c0_423 = arith.constant 0 : index
    %c0_424 = arith.constant 0 : index
    %576 = vector.load %arg36[%c2_422, %c0_423, %c0_424] : memref<4x24x16xf32, #tpu.memory_space<vmem>>, vector<1x24x16xf32>
    %577 = vector.shape_cast %576 : vector<1x24x16xf32> to vector<24x16xf32>
    %cst_425 = arith.constant dense<0.000000e+00> : vector<32x16xf32>
    %578 = tpu.matmul %575, %577, %cst_425 {dimension_numbers = #tpu.dot_dimension_numbers<[1], [0], [0], [1], [0, 0, 1, 1], [], []>} : vector<32x24xf32>, vector<24x16xf32>, vector<32x16xf32> -> vector<32x16xf32>
    %579 = arith.addf %552, %578 : vector<32x16xf32>
    %c0_426 = arith.constant 0 : index
    %c3_427 = arith.constant 3 : index
    %c0_428 = arith.constant 0 : index
    %c0_429 = arith.constant 0 : index
    %580 = vector.load %arg35[%c0_426, %c3_427, %c0_428, %c0_429] : memref<3x4x16x24xf32, #tpu.memory_space<vmem>>, vector<1x1x16x24xf32>
    %581 = vector.shape_cast %580 : vector<1x1x16x24xf32> to vector<16x24xf32>
    %cst_430 = arith.constant dense<0.000000e+00> : vector<32x24xf32>
    %582 = tpu.matmul %497, %581, %cst_430 {dimension_numbers = #tpu.dot_dimension_numbers<[1], [0], [0], [1], [0, 0, 1, 1], [], []>} : vector<32x16xf32>, vector<16x24xf32>, vector<32x24xf32> -> vector<32x24xf32>
    %cst_431 = arith.constant 0.204124153 : f32
    %583 = vector.broadcast %cst_431 : f32 to vector<32x24xf32>
    %584 = arith.mulf %582, %583 : vector<32x24xf32>
    %c1_432 = arith.constant 1 : index
    %c3_433 = arith.constant 3 : index
    %c0_434 = arith.constant 0 : index
    %c0_435 = arith.constant 0 : index
    %585 = vector.load %arg35[%c1_432, %c3_433, %c0_434, %c0_435] : memref<3x4x16x24xf32, #tpu.memory_space<vmem>>, vector<1x1x16x24xf32>
    %586 = vector.shape_cast %585 : vector<1x1x16x24xf32> to vector<16x24xf32>
    %cst_436 = arith.constant dense<0.000000e+00> : vector<32x24xf32>
    %587 = tpu.matmul %497, %586, %cst_436 {dimension_numbers = #tpu.dot_dimension_numbers<[1], [0], [0], [1], [0, 0, 1, 1], [], []>} : vector<32x16xf32>, vector<16x24xf32>, vector<32x24xf32> -> vector<32x24xf32>
    %c2_437 = arith.constant 2 : index
    %c3_438 = arith.constant 3 : index
    %c0_439 = arith.constant 0 : index
    %c0_440 = arith.constant 0 : index
    %588 = vector.load %arg35[%c2_437, %c3_438, %c0_439, %c0_440] : memref<3x4x16x24xf32, #tpu.memory_space<vmem>>, vector<1x1x16x24xf32>
    %589 = vector.shape_cast %588 : vector<1x1x16x24xf32> to vector<16x24xf32>
    %cst_441 = arith.constant dense<0.000000e+00> : vector<32x24xf32>
    %590 = tpu.matmul %497, %589, %cst_441 {dimension_numbers = #tpu.dot_dimension_numbers<[1], [0], [0], [1], [0, 0, 1, 1], [], []>} : vector<32x16xf32>, vector<16x24xf32>, vector<32x24xf32> -> vector<32x24xf32>
    %cst_442 = arith.constant dense<0.000000e+00> : vector<32x32xf32>
    %591 = tpu.matmul %584, %587, %cst_442 {dimension_numbers = #tpu.dot_dimension_numbers<[1], [1], [0], [0], [0, 0, 1, 0], [], []>} : vector<32x24xf32>, vector<32x24xf32>, vector<32x32xf32> -> vector<32x32xf32>
    %592 = arith.addf %591, %0 : vector<32x32xf32>
    %cst_443 = arith.constant dense<0xFF800000> : vector<32xf32>
    %593 = vector.multi_reduction <maximumf>, %592, %cst_443 [1] : vector<32x32xf32> to vector<32xf32>
    %594 = vector.shape_cast %593 : vector<32xf32> to vector<32x1xf32>
    %595 = vector.broadcast %594 : vector<32x1xf32> to vector<32x32xf32>
    %596 = arith.subf %592, %595 : vector<32x32xf32>
    %597 = math.exp %596 : vector<32x32xf32>
    %cst_444 = arith.constant dense<0.000000e+00> : vector<32xf32>
    %598 = vector.multi_reduction <add>, %597, %cst_444 [1] : vector<32x32xf32> to vector<32xf32>
    %599 = vector.shape_cast %598 : vector<32xf32> to vector<32x1xf32>
    %600 = vector.broadcast %599 : vector<32x1xf32> to vector<32x32xf32>
    %601 = arith.divf %597, %600 : vector<32x32xf32>
    %cst_445 = arith.constant dense<0.000000e+00> : vector<32x24xf32>
    %602 = tpu.matmul %601, %590, %cst_445 {dimension_numbers = #tpu.dot_dimension_numbers<[1], [0], [0], [1], [0, 0, 1, 1], [], []>} : vector<32x32xf32>, vector<32x24xf32>, vector<32x24xf32> -> vector<32x24xf32>
    %c3_446 = arith.constant 3 : index
    %c0_447 = arith.constant 0 : index
    %c0_448 = arith.constant 0 : index
    %603 = vector.load %arg36[%c3_446, %c0_447, %c0_448] : memref<4x24x16xf32, #tpu.memory_space<vmem>>, vector<1x24x16xf32>
    %604 = vector.shape_cast %603 : vector<1x24x16xf32> to vector<24x16xf32>
    %cst_449 = arith.constant dense<0.000000e+00> : vector<32x16xf32>
    %605 = tpu.matmul %602, %604, %cst_449 {dimension_numbers = #tpu.dot_dimension_numbers<[1], [0], [0], [1], [0, 0, 1, 1], [], []>} : vector<32x24xf32>, vector<24x16xf32>, vector<32x16xf32> -> vector<32x16xf32>
    %606 = arith.addf %579, %605 : vector<32x16xf32>
    %607 = arith.addf %188, %606 : vector<32x16xf32>
    %c0_450 = arith.constant 0 : index
    %c0_451 = arith.constant 0 : index
    %608 = vector.load %arg38[%c0_450, %c0_451] : memref<1x16xf32, #tpu.memory_space<vmem>>, vector<1x16xf32>
    %c0_452 = arith.constant 0 : index
    %c0_453 = arith.constant 0 : index
    %609 = vector.load %arg39[%c0_452, %c0_453] : memref<1x16xf32, #tpu.memory_space<vmem>>, vector<1x16xf32>
    %c0_454 = arith.constant 0 : index
    %c0_455 = arith.constant 0 : index
    %610 = vector.load %arg40[%c0_454, %c0_455] : memref<16x64xf32, #tpu.memory_space<vmem>>, vector<16x64xf32>
    %c0_456 = arith.constant 0 : index
    %c0_457 = arith.constant 0 : index
    %611 = vector.load %arg41[%c0_456, %c0_457] : memref<1x64xf32, #tpu.memory_space<vmem>>, vector<1x64xf32>
    %c0_458 = arith.constant 0 : index
    %c0_459 = arith.constant 0 : index
    %612 = vector.load %arg42[%c0_458, %c0_459] : memref<64x16xf32, #tpu.memory_space<vmem>>, vector<64x16xf32>
    %c0_460 = arith.constant 0 : index
    %c0_461 = arith.constant 0 : index
    %613 = vector.load %arg43[%c0_460, %c0_461] : memref<1x16xf32, #tpu.memory_space<vmem>>, vector<1x16xf32>
    %cst_462 = arith.constant dense<0.000000e+00> : vector<32xf32>
    %614 = vector.multi_reduction <add>, %607, %cst_462 [1] : vector<32x16xf32> to vector<32xf32>
    %615 = vector.shape_cast %614 : vector<32xf32> to vector<32x1xf32>
    %cst_463 = arith.constant 1.600000e+01 : f32
    %616 = vector.broadcast %cst_463 : f32 to vector<32x1xf32>
    %617 = arith.divf %615, %616 : vector<32x1xf32>
    %618 = vector.broadcast %617 : vector<32x1xf32> to vector<32x16xf32>
    %619 = arith.subf %607, %618 : vector<32x16xf32>
    %620 = arith.mulf %619, %619 : vector<32x16xf32>
    %cst_464 = arith.constant dense<0.000000e+00> : vector<32xf32>
    %621 = vector.multi_reduction <add>, %620, %cst_464 [1] : vector<32x16xf32> to vector<32xf32>
    %622 = vector.shape_cast %621 : vector<32xf32> to vector<32x1xf32>
    %cst_465 = arith.constant 1.600000e+01 : f32
    %623 = vector.broadcast %cst_465 : f32 to vector<32x1xf32>
    %624 = arith.divf %622, %623 : vector<32x1xf32>
    %625 = vector.broadcast %617 : vector<32x1xf32> to vector<32x16xf32>
    %626 = arith.subf %607, %625 : vector<32x16xf32>
    %cst_466 = arith.constant 9.99999974E-6 : f32
    %627 = vector.broadcast %cst_466 : f32 to vector<32x1xf32>
    %628 = arith.addf %624, %627 : vector<32x1xf32>
    %629 = math.rsqrt %628 : vector<32x1xf32>
    %630 = vector.broadcast %629 : vector<32x1xf32> to vector<32x16xf32>
    %631 = arith.mulf %626, %630 : vector<32x16xf32>
    %632 = vector.broadcast %608 : vector<1x16xf32> to vector<32x16xf32>
    %633 = arith.mulf %631, %632 : vector<32x16xf32>
    %634 = vector.broadcast %609 : vector<1x16xf32> to vector<32x16xf32>
    %635 = arith.addf %633, %634 : vector<32x16xf32>
    %cst_467 = arith.constant dense<0.000000e+00> : vector<32x64xf32>
    %636 = tpu.matmul %635, %610, %cst_467 {dimension_numbers = #tpu.dot_dimension_numbers<[1], [0], [0], [1], [0, 0, 1, 1], [], []>} : vector<32x16xf32>, vector<16x64xf32>, vector<32x64xf32> -> vector<32x64xf32>
    %637 = vector.broadcast %611 : vector<1x64xf32> to vector<32x64xf32>
    %638 = arith.addf %636, %637 : vector<32x64xf32>
    %cst_468 = arith.constant 5.000000e-01 : f32
    %639 = vector.broadcast %cst_468 : f32 to vector<32x64xf32>
    %640 = arith.mulf %639, %638 : vector<32x64xf32>
    %cst_469 = arith.constant 0.707106769 : f32
    %641 = vector.broadcast %cst_469 : f32 to vector<32x64xf32>
    %642 = arith.mulf %638, %641 : vector<32x64xf32>
    %643 = math.erf %642 : vector<32x64xf32>
    %cst_470 = arith.constant 1.000000e+00 : f32
    %644 = vector.broadcast %cst_470 : f32 to vector<32x64xf32>
    %645 = arith.addf %644, %643 : vector<32x64xf32>
    %646 = arith.mulf %640, %645 : vector<32x64xf32>
    %cst_471 = arith.constant dense<0.000000e+00> : vector<32x16xf32>
    %647 = tpu.matmul %646, %612, %cst_471 {dimension_numbers = #tpu.dot_dimension_numbers<[1], [0], [0], [1], [0, 0, 1, 1], [], []>} : vector<32x64xf32>, vector<64x16xf32>, vector<32x16xf32> -> vector<32x16xf32>
    %648 = arith.addf %607, %647 : vector<32x16xf32>
    %649 = vector.broadcast %613 : vector<1x16xf32> to vector<32x16xf32>
    %650 = arith.addf %648, %649 : vector<32x16xf32>
    %c0_472 = arith.constant 0 : index
    %c0_473 = arith.constant 0 : index
    %651 = vector.load %arg44[%c0_472, %c0_473] : memref<1x16xf32, #tpu.memory_space<vmem>>, vector<1x16xf32>
    %c0_474 = arith.constant 0 : index
    %c0_475 = arith.constant 0 : index
    %652 = vector.load %arg45[%c0_474, %c0_475] : memref<1x16xf32, #tpu.memory_space<vmem>>, vector<1x16xf32>
    %cst_476 = arith.constant dense<0.000000e+00> : vector<32xf32>
    %653 = vector.multi_reduction <add>, %650, %cst_476 [1] : vector<32x16xf32> to vector<32xf32>
    %654 = vector.shape_cast %653 : vector<32xf32> to vector<32x1xf32>
    %cst_477 = arith.constant 1.600000e+01 : f32
    %655 = vector.broadcast %cst_477 : f32 to vector<32x1xf32>
    %656 = arith.divf %654, %655 : vector<32x1xf32>
    %657 = vector.broadcast %656 : vector<32x1xf32> to vector<32x16xf32>
    %658 = arith.subf %650, %657 : vector<32x16xf32>
    %659 = arith.mulf %658, %658 : vector<32x16xf32>
    %cst_478 = arith.constant dense<0.000000e+00> : vector<32xf32>
    %660 = vector.multi_reduction <add>, %659, %cst_478 [1] : vector<32x16xf32> to vector<32xf32>
    %661 = vector.shape_cast %660 : vector<32xf32> to vector<32x1xf32>
    %cst_479 = arith.constant 1.600000e+01 : f32
    %662 = vector.broadcast %cst_479 : f32 to vector<32x1xf32>
    %663 = arith.divf %661, %662 : vector<32x1xf32>
    %664 = vector.broadcast %656 : vector<32x1xf32> to vector<32x16xf32>
    %665 = arith.subf %650, %664 : vector<32x16xf32>
    %cst_480 = arith.constant 9.99999974E-6 : f32
    %666 = vector.broadcast %cst_480 : f32 to vector<32x1xf32>
    %667 = arith.addf %663, %666 : vector<32x1xf32>
    %668 = math.rsqrt %667 : vector<32x1xf32>
    %669 = vector.broadcast %668 : vector<32x1xf32> to vector<32x16xf32>
    %670 = arith.mulf %665, %669 : vector<32x16xf32>
    %671 = vector.broadcast %651 : vector<1x16xf32> to vector<32x16xf32>
    %672 = arith.mulf %670, %671 : vector<32x16xf32>
    %673 = vector.broadcast %652 : vector<1x16xf32> to vector<32x16xf32>
    %674 = arith.addf %672, %673 : vector<32x16xf32>
    %675 = vector.extract_strided_slice %674 {offsets = [0, 0], sizes = [8, 16], strides = [1, 1]} : vector<32x16xf32> to vector<8x16xf32>
    %c0_481 = arith.constant 0 : index
    %c0_482 = arith.constant 0 : index
    %c0_483 = arith.constant 0 : index
    %676 = vector.load %arg46[%c0_481, %c0_482, %c0_483] : memref<4x16x32xf32, #tpu.memory_space<vmem>>, vector<1x16x32xf32>
    %677 = vector.shape_cast %676 : vector<1x16x32xf32> to vector<16x32xf32>
    %cst_484 = arith.constant dense<0.000000e+00> : vector<8x32xf32>
    %678 = tpu.matmul %675, %677, %cst_484 {dimension_numbers = #tpu.dot_dimension_numbers<[1], [0], [0], [1], [0, 0, 1, 1], [], []>} : vector<8x16xf32>, vector<16x32xf32>, vector<8x32xf32> -> vector<8x32xf32>
    %679 = vector.extract_strided_slice %674 {offsets = [8, 0], sizes = [8, 16], strides = [1, 1]} : vector<32x16xf32> to vector<8x16xf32>
    %c1_485 = arith.constant 1 : index
    %c0_486 = arith.constant 0 : index
    %c0_487 = arith.constant 0 : index
    %680 = vector.load %arg46[%c1_485, %c0_486, %c0_487] : memref<4x16x32xf32, #tpu.memory_space<vmem>>, vector<1x16x32xf32>
    %681 = vector.shape_cast %680 : vector<1x16x32xf32> to vector<16x32xf32>
    %cst_488 = arith.constant dense<0.000000e+00> : vector<8x32xf32>
    %682 = tpu.matmul %679, %681, %cst_488 {dimension_numbers = #tpu.dot_dimension_numbers<[1], [0], [0], [1], [0, 0, 1, 1], [], []>} : vector<8x16xf32>, vector<16x32xf32>, vector<8x32xf32> -> vector<8x32xf32>
    %683 = arith.addf %678, %682 : vector<8x32xf32>
    %684 = vector.extract_strided_slice %674 {offsets = [16, 0], sizes = [8, 16], strides = [1, 1]} : vector<32x16xf32> to vector<8x16xf32>
    %c2_489 = arith.constant 2 : index
    %c0_490 = arith.constant 0 : index
    %c0_491 = arith.constant 0 : index
    %685 = vector.load %arg46[%c2_489, %c0_490, %c0_491] : memref<4x16x32xf32, #tpu.memory_space<vmem>>, vector<1x16x32xf32>
    %686 = vector.shape_cast %685 : vector<1x16x32xf32> to vector<16x32xf32>
    %cst_492 = arith.constant dense<0.000000e+00> : vector<8x32xf32>
    %687 = tpu.matmul %684, %686, %cst_492 {dimension_numbers = #tpu.dot_dimension_numbers<[1], [0], [0], [1], [0, 0, 1, 1], [], []>} : vector<8x16xf32>, vector<16x32xf32>, vector<8x32xf32> -> vector<8x32xf32>
    %688 = arith.addf %683, %687 : vector<8x32xf32>
    %689 = vector.extract_strided_slice %674 {offsets = [24, 0], sizes = [8, 16], strides = [1, 1]} : vector<32x16xf32> to vector<8x16xf32>
    %c3_493 = arith.constant 3 : index
    %c0_494 = arith.constant 0 : index
    %c0_495 = arith.constant 0 : index
    %690 = vector.load %arg46[%c3_493, %c0_494, %c0_495] : memref<4x16x32xf32, #tpu.memory_space<vmem>>, vector<1x16x32xf32>
    %691 = vector.shape_cast %690 : vector<1x16x32xf32> to vector<16x32xf32>
    %cst_496 = arith.constant dense<0.000000e+00> : vector<8x32xf32>
    %692 = tpu.matmul %689, %691, %cst_496 {dimension_numbers = #tpu.dot_dimension_numbers<[1], [0], [0], [1], [0, 0, 1, 1], [], []>} : vector<8x16xf32>, vector<16x32xf32>, vector<8x32xf32> -> vector<8x32xf32>
    %693 = arith.addf %688, %692 : vector<8x32xf32>
    %c0_497 = arith.constant 0 : index
    %c0_498 = arith.constant 0 : index
    %694 = vector.load %arg47[%c0_497, %c0_498] : memref<1x32xf32, #tpu.memory_space<vmem>>, vector<1x32xf32>
    %695 = vector.broadcast %694 : vector<1x32xf32> to vector<8x32xf32>
    %696 = arith.addf %693, %695 : vector<8x32xf32>
    %cst_499 = arith.constant 0.000000e+00 : f32
    %697 = vector.broadcast %cst_499 : f32 to vector<1x32xf32>
    %698 = vector.extract_strided_slice %696 {offsets = [0, 0], sizes = [4, 32], strides = [1, 1]} : vector<8x32xf32> to vector<4x32xf32>
    %cst_500 = arith.constant 0.000000e+00 : f32
    %699 = vector.broadcast %cst_500 : f32 to vector<1x32xf32>
    %700 = vector.extract_strided_slice %696 {offsets = [4, 0], sizes = [4, 32], strides = [1, 1]} : vector<8x32xf32> to vector<4x32xf32>
    %701 = tpu.concatenate %697, %698, %699, %700 in 0 : vector<1x32xf32>, vector<4x32xf32>, vector<1x32xf32>, vector<4x32xf32> -> vector<10x32xf32>
    %702 = arith.addf %472, %701 : vector<10x32xf32>
    %c0_501 = arith.constant 0 : index
    %c0_502 = arith.constant 0 : index
    %703 = vector.load %arg48[%c0_501, %c0_502] : memref<1x32xf32, #tpu.memory_space<vmem>>, vector<1x32xf32>
    %c0_503 = arith.constant 0 : index
    %c0_504 = arith.constant 0 : index
    %704 = vector.load %arg49[%c0_503, %c0_504] : memref<1x32xf32, #tpu.memory_space<vmem>>, vector<1x32xf32>
    %c0_505 = arith.constant 0 : index
    %c0_506 = arith.constant 0 : index
    %705 = vector.load %arg52[%c0_505, %c0_506] : memref<1x32xf32, #tpu.memory_space<vmem>>, vector<1x32xf32>
    %cst_507 = arith.constant dense<0.000000e+00> : vector<10xf32>
    %706 = vector.multi_reduction <add>, %702, %cst_507 [1] : vector<10x32xf32> to vector<10xf32>
    %707 = vector.shape_cast %706 : vector<10xf32> to vector<10x1xf32>
    %cst_508 = arith.constant 3.200000e+01 : f32
    %708 = vector.broadcast %cst_508 : f32 to vector<10x1xf32>
    %709 = arith.divf %707, %708 : vector<10x1xf32>
    %710 = vector.broadcast %709 : vector<10x1xf32> to vector<10x32xf32>
    %711 = arith.subf %702, %710 : vector<10x32xf32>
    %712 = arith.mulf %711, %711 : vector<10x32xf32>
    %cst_509 = arith.constant dense<0.000000e+00> : vector<10xf32>
    %713 = vector.multi_reduction <add>, %712, %cst_509 [1] : vector<10x32xf32> to vector<10xf32>
    %714 = vector.shape_cast %713 : vector<10xf32> to vector<10x1xf32>
    %cst_510 = arith.constant 3.200000e+01 : f32
    %715 = vector.broadcast %cst_510 : f32 to vector<10x1xf32>
    %716 = arith.divf %714, %715 : vector<10x1xf32>
    %717 = vector.broadcast %709 : vector<10x1xf32> to vector<10x32xf32>
    %718 = arith.subf %702, %717 : vector<10x32xf32>
    %cst_511 = arith.constant 9.99999974E-6 : f32
    %719 = vector.broadcast %cst_511 : f32 to vector<10x1xf32>
    %720 = arith.addf %716, %719 : vector<10x1xf32>
    %721 = math.rsqrt %720 : vector<10x1xf32>
    %722 = vector.broadcast %721 : vector<10x1xf32> to vector<10x32xf32>
    %723 = arith.mulf %718, %722 : vector<10x32xf32>
    %724 = vector.broadcast %703 : vector<1x32xf32> to vector<10x32xf32>
    %725 = arith.mulf %723, %724 : vector<10x32xf32>
    %726 = vector.broadcast %704 : vector<1x32xf32> to vector<10x32xf32>
    %727 = arith.addf %725, %726 : vector<10x32xf32>
    %c0_512 = arith.constant 0 : index
    %c0_513 = arith.constant 0 : index
    %c0_514 = arith.constant 0 : index
    %c0_515 = arith.constant 0 : index
    %728 = vector.load %arg50[%c0_512, %c0_513, %c0_514, %c0_515] : memref<3x6x32x64xf32, #tpu.memory_space<vmem>>, vector<1x1x32x64xf32>
    %729 = vector.shape_cast %728 : vector<1x1x32x64xf32> to vector<32x64xf32>
    %cst_516 = arith.constant dense<0.000000e+00> : vector<10x64xf32>
    %730 = tpu.matmul %727, %729, %cst_516 {dimension_numbers = #tpu.dot_dimension_numbers<[1], [0], [0], [1], [0, 0, 1, 1], [], []>} : vector<10x32xf32>, vector<32x64xf32>, vector<10x64xf32> -> vector<10x64xf32>
    %cst_517 = arith.constant 1.250000e-01 : f32
    %731 = vector.broadcast %cst_517 : f32 to vector<10x64xf32>
    %732 = arith.mulf %730, %731 : vector<10x64xf32>
    %c1_518 = arith.constant 1 : index
    %c0_519 = arith.constant 0 : index
    %c0_520 = arith.constant 0 : index
    %c0_521 = arith.constant 0 : index
    %733 = vector.load %arg50[%c1_518, %c0_519, %c0_520, %c0_521] : memref<3x6x32x64xf32, #tpu.memory_space<vmem>>, vector<1x1x32x64xf32>
    %734 = vector.shape_cast %733 : vector<1x1x32x64xf32> to vector<32x64xf32>
    %cst_522 = arith.constant dense<0.000000e+00> : vector<10x64xf32>
    %735 = tpu.matmul %727, %734, %cst_522 {dimension_numbers = #tpu.dot_dimension_numbers<[1], [0], [0], [1], [0, 0, 1, 1], [], []>} : vector<10x32xf32>, vector<32x64xf32>, vector<10x64xf32> -> vector<10x64xf32>
    %c2_523 = arith.constant 2 : index
    %c0_524 = arith.constant 0 : index
    %c0_525 = arith.constant 0 : index
    %c0_526 = arith.constant 0 : index
    %736 = vector.load %arg50[%c2_523, %c0_524, %c0_525, %c0_526] : memref<3x6x32x64xf32, #tpu.memory_space<vmem>>, vector<1x1x32x64xf32>
    %737 = vector.shape_cast %736 : vector<1x1x32x64xf32> to vector<32x64xf32>
    %cst_527 = arith.constant dense<0.000000e+00> : vector<10x64xf32>
    %738 = tpu.matmul %727, %737, %cst_527 {dimension_numbers = #tpu.dot_dimension_numbers<[1], [0], [0], [1], [0, 0, 1, 1], [], []>} : vector<10x32xf32>, vector<32x64xf32>, vector<10x64xf32> -> vector<10x64xf32>
    %cst_528 = arith.constant dense<0.000000e+00> : vector<10x10xf32>
    %739 = tpu.matmul %732, %735, %cst_528 {dimension_numbers = #tpu.dot_dimension_numbers<[1], [1], [0], [0], [0, 0, 1, 0], [], []>} : vector<10x64xf32>, vector<10x64xf32>, vector<10x10xf32> -> vector<10x10xf32>
    %740 = arith.addf %739, %1 : vector<10x10xf32>
    %cst_529 = arith.constant dense<0xFF800000> : vector<10xf32>
    %741 = vector.multi_reduction <maximumf>, %740, %cst_529 [1] : vector<10x10xf32> to vector<10xf32>
    %742 = vector.shape_cast %741 : vector<10xf32> to vector<10x1xf32>
    %743 = vector.broadcast %742 : vector<10x1xf32> to vector<10x10xf32>
    %744 = arith.subf %740, %743 : vector<10x10xf32>
    %745 = math.exp %744 : vector<10x10xf32>
    %cst_530 = arith.constant dense<0.000000e+00> : vector<10xf32>
    %746 = vector.multi_reduction <add>, %745, %cst_530 [1] : vector<10x10xf32> to vector<10xf32>
    %747 = vector.shape_cast %746 : vector<10xf32> to vector<10x1xf32>
    %748 = vector.broadcast %747 : vector<10x1xf32> to vector<10x10xf32>
    %749 = arith.divf %745, %748 : vector<10x10xf32>
    %cst_531 = arith.constant dense<0.000000e+00> : vector<10x64xf32>
    %750 = tpu.matmul %749, %738, %cst_531 {dimension_numbers = #tpu.dot_dimension_numbers<[1], [0], [0], [1], [0, 0, 1, 1], [], []>} : vector<10x10xf32>, vector<10x64xf32>, vector<10x64xf32> -> vector<10x64xf32>
    %c0_532 = arith.constant 0 : index
    %c0_533 = arith.constant 0 : index
    %c0_534 = arith.constant 0 : index
    %751 = vector.load %arg51[%c0_532, %c0_533, %c0_534] : memref<6x64x32xf32, #tpu.memory_space<vmem>>, vector<1x64x32xf32>
    %752 = vector.shape_cast %751 : vector<1x64x32xf32> to vector<64x32xf32>
    %cst_535 = arith.constant dense<0.000000e+00> : vector<10x32xf32>
    %753 = tpu.matmul %750, %752, %cst_535 {dimension_numbers = #tpu.dot_dimension_numbers<[1], [0], [0], [1], [0, 0, 1, 1], [], []>} : vector<10x64xf32>, vector<64x32xf32>, vector<10x32xf32> -> vector<10x32xf32>
    %754 = vector.broadcast %705 : vector<1x32xf32> to vector<10x32xf32>
    %755 = arith.addf %754, %753 : vector<10x32xf32>
    %c0_536 = arith.constant 0 : index
    %c1_537 = arith.constant 1 : index
    %c0_538 = arith.constant 0 : index
    %c0_539 = arith.constant 0 : index
    %756 = vector.load %arg50[%c0_536, %c1_537, %c0_538, %c0_539] : memref<3x6x32x64xf32, #tpu.memory_space<vmem>>, vector<1x1x32x64xf32>
    %757 = vector.shape_cast %756 : vector<1x1x32x64xf32> to vector<32x64xf32>
    %cst_540 = arith.constant dense<0.000000e+00> : vector<10x64xf32>
    %758 = tpu.matmul %727, %757, %cst_540 {dimension_numbers = #tpu.dot_dimension_numbers<[1], [0], [0], [1], [0, 0, 1, 1], [], []>} : vector<10x32xf32>, vector<32x64xf32>, vector<10x64xf32> -> vector<10x64xf32>
    %cst_541 = arith.constant 1.250000e-01 : f32
    %759 = vector.broadcast %cst_541 : f32 to vector<10x64xf32>
    %760 = arith.mulf %758, %759 : vector<10x64xf32>
    %c1_542 = arith.constant 1 : index
    %c1_543 = arith.constant 1 : index
    %c0_544 = arith.constant 0 : index
    %c0_545 = arith.constant 0 : index
    %761 = vector.load %arg50[%c1_542, %c1_543, %c0_544, %c0_545] : memref<3x6x32x64xf32, #tpu.memory_space<vmem>>, vector<1x1x32x64xf32>
    %762 = vector.shape_cast %761 : vector<1x1x32x64xf32> to vector<32x64xf32>
    %cst_546 = arith.constant dense<0.000000e+00> : vector<10x64xf32>
    %763 = tpu.matmul %727, %762, %cst_546 {dimension_numbers = #tpu.dot_dimension_numbers<[1], [0], [0], [1], [0, 0, 1, 1], [], []>} : vector<10x32xf32>, vector<32x64xf32>, vector<10x64xf32> -> vector<10x64xf32>
    %c2_547 = arith.constant 2 : index
    %c1_548 = arith.constant 1 : index
    %c0_549 = arith.constant 0 : index
    %c0_550 = arith.constant 0 : index
    %764 = vector.load %arg50[%c2_547, %c1_548, %c0_549, %c0_550] : memref<3x6x32x64xf32, #tpu.memory_space<vmem>>, vector<1x1x32x64xf32>
    %765 = vector.shape_cast %764 : vector<1x1x32x64xf32> to vector<32x64xf32>
    %cst_551 = arith.constant dense<0.000000e+00> : vector<10x64xf32>
    %766 = tpu.matmul %727, %765, %cst_551 {dimension_numbers = #tpu.dot_dimension_numbers<[1], [0], [0], [1], [0, 0, 1, 1], [], []>} : vector<10x32xf32>, vector<32x64xf32>, vector<10x64xf32> -> vector<10x64xf32>
    %cst_552 = arith.constant dense<0.000000e+00> : vector<10x10xf32>
    %767 = tpu.matmul %760, %763, %cst_552 {dimension_numbers = #tpu.dot_dimension_numbers<[1], [1], [0], [0], [0, 0, 1, 0], [], []>} : vector<10x64xf32>, vector<10x64xf32>, vector<10x10xf32> -> vector<10x10xf32>
    %768 = arith.addf %767, %1 : vector<10x10xf32>
    %cst_553 = arith.constant dense<0xFF800000> : vector<10xf32>
    %769 = vector.multi_reduction <maximumf>, %768, %cst_553 [1] : vector<10x10xf32> to vector<10xf32>
    %770 = vector.shape_cast %769 : vector<10xf32> to vector<10x1xf32>
    %771 = vector.broadcast %770 : vector<10x1xf32> to vector<10x10xf32>
    %772 = arith.subf %768, %771 : vector<10x10xf32>
    %773 = math.exp %772 : vector<10x10xf32>
    %cst_554 = arith.constant dense<0.000000e+00> : vector<10xf32>
    %774 = vector.multi_reduction <add>, %773, %cst_554 [1] : vector<10x10xf32> to vector<10xf32>
    %775 = vector.shape_cast %774 : vector<10xf32> to vector<10x1xf32>
    %776 = vector.broadcast %775 : vector<10x1xf32> to vector<10x10xf32>
    %777 = arith.divf %773, %776 : vector<10x10xf32>
    %cst_555 = arith.constant dense<0.000000e+00> : vector<10x64xf32>
    %778 = tpu.matmul %777, %766, %cst_555 {dimension_numbers = #tpu.dot_dimension_numbers<[1], [0], [0], [1], [0, 0, 1, 1], [], []>} : vector<10x10xf32>, vector<10x64xf32>, vector<10x64xf32> -> vector<10x64xf32>
    %c1_556 = arith.constant 1 : index
    %c0_557 = arith.constant 0 : index
    %c0_558 = arith.constant 0 : index
    %779 = vector.load %arg51[%c1_556, %c0_557, %c0_558] : memref<6x64x32xf32, #tpu.memory_space<vmem>>, vector<1x64x32xf32>
    %780 = vector.shape_cast %779 : vector<1x64x32xf32> to vector<64x32xf32>
    %cst_559 = arith.constant dense<0.000000e+00> : vector<10x32xf32>
    %781 = tpu.matmul %778, %780, %cst_559 {dimension_numbers = #tpu.dot_dimension_numbers<[1], [0], [0], [1], [0, 0, 1, 1], [], []>} : vector<10x64xf32>, vector<64x32xf32>, vector<10x32xf32> -> vector<10x32xf32>
    %782 = arith.addf %755, %781 : vector<10x32xf32>
    %c0_560 = arith.constant 0 : index
    %c2_561 = arith.constant 2 : index
    %c0_562 = arith.constant 0 : index
    %c0_563 = arith.constant 0 : index
    %783 = vector.load %arg50[%c0_560, %c2_561, %c0_562, %c0_563] : memref<3x6x32x64xf32, #tpu.memory_space<vmem>>, vector<1x1x32x64xf32>
    %784 = vector.shape_cast %783 : vector<1x1x32x64xf32> to vector<32x64xf32>
    %cst_564 = arith.constant dense<0.000000e+00> : vector<10x64xf32>
    %785 = tpu.matmul %727, %784, %cst_564 {dimension_numbers = #tpu.dot_dimension_numbers<[1], [0], [0], [1], [0, 0, 1, 1], [], []>} : vector<10x32xf32>, vector<32x64xf32>, vector<10x64xf32> -> vector<10x64xf32>
    %cst_565 = arith.constant 1.250000e-01 : f32
    %786 = vector.broadcast %cst_565 : f32 to vector<10x64xf32>
    %787 = arith.mulf %785, %786 : vector<10x64xf32>
    %c1_566 = arith.constant 1 : index
    %c2_567 = arith.constant 2 : index
    %c0_568 = arith.constant 0 : index
    %c0_569 = arith.constant 0 : index
    %788 = vector.load %arg50[%c1_566, %c2_567, %c0_568, %c0_569] : memref<3x6x32x64xf32, #tpu.memory_space<vmem>>, vector<1x1x32x64xf32>
    %789 = vector.shape_cast %788 : vector<1x1x32x64xf32> to vector<32x64xf32>
    %cst_570 = arith.constant dense<0.000000e+00> : vector<10x64xf32>
    %790 = tpu.matmul %727, %789, %cst_570 {dimension_numbers = #tpu.dot_dimension_numbers<[1], [0], [0], [1], [0, 0, 1, 1], [], []>} : vector<10x32xf32>, vector<32x64xf32>, vector<10x64xf32> -> vector<10x64xf32>
    %c2_571 = arith.constant 2 : index
    %c2_572 = arith.constant 2 : index
    %c0_573 = arith.constant 0 : index
    %c0_574 = arith.constant 0 : index
    %791 = vector.load %arg50[%c2_571, %c2_572, %c0_573, %c0_574] : memref<3x6x32x64xf32, #tpu.memory_space<vmem>>, vector<1x1x32x64xf32>
    %792 = vector.shape_cast %791 : vector<1x1x32x64xf32> to vector<32x64xf32>
    %cst_575 = arith.constant dense<0.000000e+00> : vector<10x64xf32>
    %793 = tpu.matmul %727, %792, %cst_575 {dimension_numbers = #tpu.dot_dimension_numbers<[1], [0], [0], [1], [0, 0, 1, 1], [], []>} : vector<10x32xf32>, vector<32x64xf32>, vector<10x64xf32> -> vector<10x64xf32>
    %cst_576 = arith.constant dense<0.000000e+00> : vector<10x10xf32>
    %794 = tpu.matmul %787, %790, %cst_576 {dimension_numbers = #tpu.dot_dimension_numbers<[1], [1], [0], [0], [0, 0, 1, 0], [], []>} : vector<10x64xf32>, vector<10x64xf32>, vector<10x10xf32> -> vector<10x10xf32>
    %795 = arith.addf %794, %1 : vector<10x10xf32>
    %cst_577 = arith.constant dense<0xFF800000> : vector<10xf32>
    %796 = vector.multi_reduction <maximumf>, %795, %cst_577 [1] : vector<10x10xf32> to vector<10xf32>
    %797 = vector.shape_cast %796 : vector<10xf32> to vector<10x1xf32>
    %798 = vector.broadcast %797 : vector<10x1xf32> to vector<10x10xf32>
    %799 = arith.subf %795, %798 : vector<10x10xf32>
    %800 = math.exp %799 : vector<10x10xf32>
    %cst_578 = arith.constant dense<0.000000e+00> : vector<10xf32>
    %801 = vector.multi_reduction <add>, %800, %cst_578 [1] : vector<10x10xf32> to vector<10xf32>
    %802 = vector.shape_cast %801 : vector<10xf32> to vector<10x1xf32>
    %803 = vector.broadcast %802 : vector<10x1xf32> to vector<10x10xf32>
    %804 = arith.divf %800, %803 : vector<10x10xf32>
    %cst_579 = arith.constant dense<0.000000e+00> : vector<10x64xf32>
    %805 = tpu.matmul %804, %793, %cst_579 {dimension_numbers = #tpu.dot_dimension_numbers<[1], [0], [0], [1], [0, 0, 1, 1], [], []>} : vector<10x10xf32>, vector<10x64xf32>, vector<10x64xf32> -> vector<10x64xf32>
    %c2_580 = arith.constant 2 : index
    %c0_581 = arith.constant 0 : index
    %c0_582 = arith.constant 0 : index
    %806 = vector.load %arg51[%c2_580, %c0_581, %c0_582] : memref<6x64x32xf32, #tpu.memory_space<vmem>>, vector<1x64x32xf32>
    %807 = vector.shape_cast %806 : vector<1x64x32xf32> to vector<64x32xf32>
    %cst_583 = arith.constant dense<0.000000e+00> : vector<10x32xf32>
    %808 = tpu.matmul %805, %807, %cst_583 {dimension_numbers = #tpu.dot_dimension_numbers<[1], [0], [0], [1], [0, 0, 1, 1], [], []>} : vector<10x64xf32>, vector<64x32xf32>, vector<10x32xf32> -> vector<10x32xf32>
    %809 = arith.addf %782, %808 : vector<10x32xf32>
    %c0_584 = arith.constant 0 : index
    %c3_585 = arith.constant 3 : index
    %c0_586 = arith.constant 0 : index
    %c0_587 = arith.constant 0 : index
    %810 = vector.load %arg50[%c0_584, %c3_585, %c0_586, %c0_587] : memref<3x6x32x64xf32, #tpu.memory_space<vmem>>, vector<1x1x32x64xf32>
    %811 = vector.shape_cast %810 : vector<1x1x32x64xf32> to vector<32x64xf32>
    %cst_588 = arith.constant dense<0.000000e+00> : vector<10x64xf32>
    %812 = tpu.matmul %727, %811, %cst_588 {dimension_numbers = #tpu.dot_dimension_numbers<[1], [0], [0], [1], [0, 0, 1, 1], [], []>} : vector<10x32xf32>, vector<32x64xf32>, vector<10x64xf32> -> vector<10x64xf32>
    %cst_589 = arith.constant 1.250000e-01 : f32
    %813 = vector.broadcast %cst_589 : f32 to vector<10x64xf32>
    %814 = arith.mulf %812, %813 : vector<10x64xf32>
    %c1_590 = arith.constant 1 : index
    %c3_591 = arith.constant 3 : index
    %c0_592 = arith.constant 0 : index
    %c0_593 = arith.constant 0 : index
    %815 = vector.load %arg50[%c1_590, %c3_591, %c0_592, %c0_593] : memref<3x6x32x64xf32, #tpu.memory_space<vmem>>, vector<1x1x32x64xf32>
    %816 = vector.shape_cast %815 : vector<1x1x32x64xf32> to vector<32x64xf32>
    %cst_594 = arith.constant dense<0.000000e+00> : vector<10x64xf32>
    %817 = tpu.matmul %727, %816, %cst_594 {dimension_numbers = #tpu.dot_dimension_numbers<[1], [0], [0], [1], [0, 0, 1, 1], [], []>} : vector<10x32xf32>, vector<32x64xf32>, vector<10x64xf32> -> vector<10x64xf32>
    %c2_595 = arith.constant 2 : index
    %c3_596 = arith.constant 3 : index
    %c0_597 = arith.constant 0 : index
    %c0_598 = arith.constant 0 : index
    %818 = vector.load %arg50[%c2_595, %c3_596, %c0_597, %c0_598] : memref<3x6x32x64xf32, #tpu.memory_space<vmem>>, vector<1x1x32x64xf32>
    %819 = vector.shape_cast %818 : vector<1x1x32x64xf32> to vector<32x64xf32>
    %cst_599 = arith.constant dense<0.000000e+00> : vector<10x64xf32>
    %820 = tpu.matmul %727, %819, %cst_599 {dimension_numbers = #tpu.dot_dimension_numbers<[1], [0], [0], [1], [0, 0, 1, 1], [], []>} : vector<10x32xf32>, vector<32x64xf32>, vector<10x64xf32> -> vector<10x64xf32>
    %cst_600 = arith.constant dense<0.000000e+00> : vector<10x10xf32>
    %821 = tpu.matmul %814, %817, %cst_600 {dimension_numbers = #tpu.dot_dimension_numbers<[1], [1], [0], [0], [0, 0, 1, 0], [], []>} : vector<10x64xf32>, vector<10x64xf32>, vector<10x10xf32> -> vector<10x10xf32>
    %822 = arith.addf %821, %1 : vector<10x10xf32>
    %cst_601 = arith.constant dense<0xFF800000> : vector<10xf32>
    %823 = vector.multi_reduction <maximumf>, %822, %cst_601 [1] : vector<10x10xf32> to vector<10xf32>
    %824 = vector.shape_cast %823 : vector<10xf32> to vector<10x1xf32>
    %825 = vector.broadcast %824 : vector<10x1xf32> to vector<10x10xf32>
    %826 = arith.subf %822, %825 : vector<10x10xf32>
    %827 = math.exp %826 : vector<10x10xf32>
    %cst_602 = arith.constant dense<0.000000e+00> : vector<10xf32>
    %828 = vector.multi_reduction <add>, %827, %cst_602 [1] : vector<10x10xf32> to vector<10xf32>
    %829 = vector.shape_cast %828 : vector<10xf32> to vector<10x1xf32>
    %830 = vector.broadcast %829 : vector<10x1xf32> to vector<10x10xf32>
    %831 = arith.divf %827, %830 : vector<10x10xf32>
    %cst_603 = arith.constant dense<0.000000e+00> : vector<10x64xf32>
    %832 = tpu.matmul %831, %820, %cst_603 {dimension_numbers = #tpu.dot_dimension_numbers<[1], [0], [0], [1], [0, 0, 1, 1], [], []>} : vector<10x10xf32>, vector<10x64xf32>, vector<10x64xf32> -> vector<10x64xf32>
    %c3_604 = arith.constant 3 : index
    %c0_605 = arith.constant 0 : index
    %c0_606 = arith.constant 0 : index
    %833 = vector.load %arg51[%c3_604, %c0_605, %c0_606] : memref<6x64x32xf32, #tpu.memory_space<vmem>>, vector<1x64x32xf32>
    %834 = vector.shape_cast %833 : vector<1x64x32xf32> to vector<64x32xf32>
    %cst_607 = arith.constant dense<0.000000e+00> : vector<10x32xf32>
    %835 = tpu.matmul %832, %834, %cst_607 {dimension_numbers = #tpu.dot_dimension_numbers<[1], [0], [0], [1], [0, 0, 1, 1], [], []>} : vector<10x64xf32>, vector<64x32xf32>, vector<10x32xf32> -> vector<10x32xf32>
    %836 = arith.addf %809, %835 : vector<10x32xf32>
    %c0_608 = arith.constant 0 : index
    %c4_609 = arith.constant 4 : index
    %c0_610 = arith.constant 0 : index
    %c0_611 = arith.constant 0 : index
    %837 = vector.load %arg50[%c0_608, %c4_609, %c0_610, %c0_611] : memref<3x6x32x64xf32, #tpu.memory_space<vmem>>, vector<1x1x32x64xf32>
    %838 = vector.shape_cast %837 : vector<1x1x32x64xf32> to vector<32x64xf32>
    %cst_612 = arith.constant dense<0.000000e+00> : vector<10x64xf32>
    %839 = tpu.matmul %727, %838, %cst_612 {dimension_numbers = #tpu.dot_dimension_numbers<[1], [0], [0], [1], [0, 0, 1, 1], [], []>} : vector<10x32xf32>, vector<32x64xf32>, vector<10x64xf32> -> vector<10x64xf32>
    %cst_613 = arith.constant 1.250000e-01 : f32
    %840 = vector.broadcast %cst_613 : f32 to vector<10x64xf32>
    %841 = arith.mulf %839, %840 : vector<10x64xf32>
    %c1_614 = arith.constant 1 : index
    %c4_615 = arith.constant 4 : index
    %c0_616 = arith.constant 0 : index
    %c0_617 = arith.constant 0 : index
    %842 = vector.load %arg50[%c1_614, %c4_615, %c0_616, %c0_617] : memref<3x6x32x64xf32, #tpu.memory_space<vmem>>, vector<1x1x32x64xf32>
    %843 = vector.shape_cast %842 : vector<1x1x32x64xf32> to vector<32x64xf32>
    %cst_618 = arith.constant dense<0.000000e+00> : vector<10x64xf32>
    %844 = tpu.matmul %727, %843, %cst_618 {dimension_numbers = #tpu.dot_dimension_numbers<[1], [0], [0], [1], [0, 0, 1, 1], [], []>} : vector<10x32xf32>, vector<32x64xf32>, vector<10x64xf32> -> vector<10x64xf32>
    %c2_619 = arith.constant 2 : index
    %c4_620 = arith.constant 4 : index
    %c0_621 = arith.constant 0 : index
    %c0_622 = arith.constant 0 : index
    %845 = vector.load %arg50[%c2_619, %c4_620, %c0_621, %c0_622] : memref<3x6x32x64xf32, #tpu.memory_space<vmem>>, vector<1x1x32x64xf32>
    %846 = vector.shape_cast %845 : vector<1x1x32x64xf32> to vector<32x64xf32>
    %cst_623 = arith.constant dense<0.000000e+00> : vector<10x64xf32>
    %847 = tpu.matmul %727, %846, %cst_623 {dimension_numbers = #tpu.dot_dimension_numbers<[1], [0], [0], [1], [0, 0, 1, 1], [], []>} : vector<10x32xf32>, vector<32x64xf32>, vector<10x64xf32> -> vector<10x64xf32>
    %cst_624 = arith.constant dense<0.000000e+00> : vector<10x10xf32>
    %848 = tpu.matmul %841, %844, %cst_624 {dimension_numbers = #tpu.dot_dimension_numbers<[1], [1], [0], [0], [0, 0, 1, 0], [], []>} : vector<10x64xf32>, vector<10x64xf32>, vector<10x10xf32> -> vector<10x10xf32>
    %849 = arith.addf %848, %1 : vector<10x10xf32>
    %cst_625 = arith.constant dense<0xFF800000> : vector<10xf32>
    %850 = vector.multi_reduction <maximumf>, %849, %cst_625 [1] : vector<10x10xf32> to vector<10xf32>
    %851 = vector.shape_cast %850 : vector<10xf32> to vector<10x1xf32>
    %852 = vector.broadcast %851 : vector<10x1xf32> to vector<10x10xf32>
    %853 = arith.subf %849, %852 : vector<10x10xf32>
    %854 = math.exp %853 : vector<10x10xf32>
    %cst_626 = arith.constant dense<0.000000e+00> : vector<10xf32>
    %855 = vector.multi_reduction <add>, %854, %cst_626 [1] : vector<10x10xf32> to vector<10xf32>
    %856 = vector.shape_cast %855 : vector<10xf32> to vector<10x1xf32>
    %857 = vector.broadcast %856 : vector<10x1xf32> to vector<10x10xf32>
    %858 = arith.divf %854, %857 : vector<10x10xf32>
    %cst_627 = arith.constant dense<0.000000e+00> : vector<10x64xf32>
    %859 = tpu.matmul %858, %847, %cst_627 {dimension_numbers = #tpu.dot_dimension_numbers<[1], [0], [0], [1], [0, 0, 1, 1], [], []>} : vector<10x10xf32>, vector<10x64xf32>, vector<10x64xf32> -> vector<10x64xf32>
    %c4_628 = arith.constant 4 : index
    %c0_629 = arith.constant 0 : index
    %c0_630 = arith.constant 0 : index
    %860 = vector.load %arg51[%c4_628, %c0_629, %c0_630] : memref<6x64x32xf32, #tpu.memory_space<vmem>>, vector<1x64x32xf32>
    %861 = vector.shape_cast %860 : vector<1x64x32xf32> to vector<64x32xf32>
    %cst_631 = arith.constant dense<0.000000e+00> : vector<10x32xf32>
    %862 = tpu.matmul %859, %861, %cst_631 {dimension_numbers = #tpu.dot_dimension_numbers<[1], [0], [0], [1], [0, 0, 1, 1], [], []>} : vector<10x64xf32>, vector<64x32xf32>, vector<10x32xf32> -> vector<10x32xf32>
    %863 = arith.addf %836, %862 : vector<10x32xf32>
    %c0_632 = arith.constant 0 : index
    %c5_633 = arith.constant 5 : index
    %c0_634 = arith.constant 0 : index
    %c0_635 = arith.constant 0 : index
    %864 = vector.load %arg50[%c0_632, %c5_633, %c0_634, %c0_635] : memref<3x6x32x64xf32, #tpu.memory_space<vmem>>, vector<1x1x32x64xf32>
    %865 = vector.shape_cast %864 : vector<1x1x32x64xf32> to vector<32x64xf32>
    %cst_636 = arith.constant dense<0.000000e+00> : vector<10x64xf32>
    %866 = tpu.matmul %727, %865, %cst_636 {dimension_numbers = #tpu.dot_dimension_numbers<[1], [0], [0], [1], [0, 0, 1, 1], [], []>} : vector<10x32xf32>, vector<32x64xf32>, vector<10x64xf32> -> vector<10x64xf32>
    %cst_637 = arith.constant 1.250000e-01 : f32
    %867 = vector.broadcast %cst_637 : f32 to vector<10x64xf32>
    %868 = arith.mulf %866, %867 : vector<10x64xf32>
    %c1_638 = arith.constant 1 : index
    %c5_639 = arith.constant 5 : index
    %c0_640 = arith.constant 0 : index
    %c0_641 = arith.constant 0 : index
    %869 = vector.load %arg50[%c1_638, %c5_639, %c0_640, %c0_641] : memref<3x6x32x64xf32, #tpu.memory_space<vmem>>, vector<1x1x32x64xf32>
    %870 = vector.shape_cast %869 : vector<1x1x32x64xf32> to vector<32x64xf32>
    %cst_642 = arith.constant dense<0.000000e+00> : vector<10x64xf32>
    %871 = tpu.matmul %727, %870, %cst_642 {dimension_numbers = #tpu.dot_dimension_numbers<[1], [0], [0], [1], [0, 0, 1, 1], [], []>} : vector<10x32xf32>, vector<32x64xf32>, vector<10x64xf32> -> vector<10x64xf32>
    %c2_643 = arith.constant 2 : index
    %c5_644 = arith.constant 5 : index
    %c0_645 = arith.constant 0 : index
    %c0_646 = arith.constant 0 : index
    %872 = vector.load %arg50[%c2_643, %c5_644, %c0_645, %c0_646] : memref<3x6x32x64xf32, #tpu.memory_space<vmem>>, vector<1x1x32x64xf32>
    %873 = vector.shape_cast %872 : vector<1x1x32x64xf32> to vector<32x64xf32>
    %cst_647 = arith.constant dense<0.000000e+00> : vector<10x64xf32>
    %874 = tpu.matmul %727, %873, %cst_647 {dimension_numbers = #tpu.dot_dimension_numbers<[1], [0], [0], [1], [0, 0, 1, 1], [], []>} : vector<10x32xf32>, vector<32x64xf32>, vector<10x64xf32> -> vector<10x64xf32>
    %cst_648 = arith.constant dense<0.000000e+00> : vector<10x10xf32>
    %875 = tpu.matmul %868, %871, %cst_648 {dimension_numbers = #tpu.dot_dimension_numbers<[1], [1], [0], [0], [0, 0, 1, 0], [], []>} : vector<10x64xf32>, vector<10x64xf32>, vector<10x10xf32> -> vector<10x10xf32>
    %876 = arith.addf %875, %1 : vector<10x10xf32>
    %cst_649 = arith.constant dense<0xFF800000> : vector<10xf32>
    %877 = vector.multi_reduction <maximumf>, %876, %cst_649 [1] : vector<10x10xf32> to vector<10xf32>
    %878 = vector.shape_cast %877 : vector<10xf32> to vector<10x1xf32>
    %879 = vector.broadcast %878 : vector<10x1xf32> to vector<10x10xf32>
    %880 = arith.subf %876, %879 : vector<10x10xf32>
    %881 = math.exp %880 : vector<10x10xf32>
    %cst_650 = arith.constant dense<0.000000e+00> : vector<10xf32>
    %882 = vector.multi_reduction <add>, %881, %cst_650 [1] : vector<10x10xf32> to vector<10xf32>
    %883 = vector.shape_cast %882 : vector<10xf32> to vector<10x1xf32>
    %884 = vector.broadcast %883 : vector<10x1xf32> to vector<10x10xf32>
    %885 = arith.divf %881, %884 : vector<10x10xf32>
    %cst_651 = arith.constant dense<0.000000e+00> : vector<10x64xf32>
    %886 = tpu.matmul %885, %874, %cst_651 {dimension_numbers = #tpu.dot_dimension_numbers<[1], [0], [0], [1], [0, 0, 1, 1], [], []>} : vector<10x10xf32>, vector<10x64xf32>, vector<10x64xf32> -> vector<10x64xf32>
    %c5_652 = arith.constant 5 : index
    %c0_653 = arith.constant 0 : index
    %c0_654 = arith.constant 0 : index
    %887 = vector.load %arg51[%c5_652, %c0_653, %c0_654] : memref<6x64x32xf32, #tpu.memory_space<vmem>>, vector<1x64x32xf32>
    %888 = vector.shape_cast %887 : vector<1x64x32xf32> to vector<64x32xf32>
    %cst_655 = arith.constant dense<0.000000e+00> : vector<10x32xf32>
    %889 = tpu.matmul %886, %888, %cst_655 {dimension_numbers = #tpu.dot_dimension_numbers<[1], [0], [0], [1], [0, 0, 1, 1], [], []>} : vector<10x64xf32>, vector<64x32xf32>, vector<10x32xf32> -> vector<10x32xf32>
    %890 = arith.addf %863, %889 : vector<10x32xf32>
    %891 = arith.addf %702, %890 : vector<10x32xf32>
    %c0_656 = arith.constant 0 : index
    %c0_657 = arith.constant 0 : index
    %892 = vector.load %arg53[%c0_656, %c0_657] : memref<1x32xf32, #tpu.memory_space<vmem>>, vector<1x32xf32>
    %c0_658 = arith.constant 0 : index
    %c0_659 = arith.constant 0 : index
    %893 = vector.load %arg54[%c0_658, %c0_659] : memref<1x32xf32, #tpu.memory_space<vmem>>, vector<1x32xf32>
    %c0_660 = arith.constant 0 : index
    %c0_661 = arith.constant 0 : index
    %894 = vector.load %arg55[%c0_660, %c0_661] : memref<32x128xf32, #tpu.memory_space<vmem>>, vector<32x128xf32>
    %c0_662 = arith.constant 0 : index
    %c0_663 = arith.constant 0 : index
    %895 = vector.load %arg56[%c0_662, %c0_663] : memref<1x128xf32, #tpu.memory_space<vmem>>, vector<1x128xf32>
    %c0_664 = arith.constant 0 : index
    %c0_665 = arith.constant 0 : index
    %896 = vector.load %arg57[%c0_664, %c0_665] : memref<128x32xf32, #tpu.memory_space<vmem>>, vector<128x32xf32>
    %c0_666 = arith.constant 0 : index
    %c0_667 = arith.constant 0 : index
    %897 = vector.load %arg58[%c0_666, %c0_667] : memref<1x32xf32, #tpu.memory_space<vmem>>, vector<1x32xf32>
    %cst_668 = arith.constant dense<0.000000e+00> : vector<10xf32>
    %898 = vector.multi_reduction <add>, %891, %cst_668 [1] : vector<10x32xf32> to vector<10xf32>
    %899 = vector.shape_cast %898 : vector<10xf32> to vector<10x1xf32>
    %cst_669 = arith.constant 3.200000e+01 : f32
    %900 = vector.broadcast %cst_669 : f32 to vector<10x1xf32>
    %901 = arith.divf %899, %900 : vector<10x1xf32>
    %902 = vector.broadcast %901 : vector<10x1xf32> to vector<10x32xf32>
    %903 = arith.subf %891, %902 : vector<10x32xf32>
    %904 = arith.mulf %903, %903 : vector<10x32xf32>
    %cst_670 = arith.constant dense<0.000000e+00> : vector<10xf32>
    %905 = vector.multi_reduction <add>, %904, %cst_670 [1] : vector<10x32xf32> to vector<10xf32>
    %906 = vector.shape_cast %905 : vector<10xf32> to vector<10x1xf32>
    %cst_671 = arith.constant 3.200000e+01 : f32
    %907 = vector.broadcast %cst_671 : f32 to vector<10x1xf32>
    %908 = arith.divf %906, %907 : vector<10x1xf32>
    %909 = vector.broadcast %901 : vector<10x1xf32> to vector<10x32xf32>
    %910 = arith.subf %891, %909 : vector<10x32xf32>
    %cst_672 = arith.constant 9.99999974E-6 : f32
    %911 = vector.broadcast %cst_672 : f32 to vector<10x1xf32>
    %912 = arith.addf %908, %911 : vector<10x1xf32>
    %913 = math.rsqrt %912 : vector<10x1xf32>
    %914 = vector.broadcast %913 : vector<10x1xf32> to vector<10x32xf32>
    %915 = arith.mulf %910, %914 : vector<10x32xf32>
    %916 = vector.broadcast %892 : vector<1x32xf32> to vector<10x32xf32>
    %917 = arith.mulf %915, %916 : vector<10x32xf32>
    %918 = vector.broadcast %893 : vector<1x32xf32> to vector<10x32xf32>
    %919 = arith.addf %917, %918 : vector<10x32xf32>
    %cst_673 = arith.constant dense<0.000000e+00> : vector<10x128xf32>
    %920 = tpu.matmul %919, %894, %cst_673 {dimension_numbers = #tpu.dot_dimension_numbers<[1], [0], [0], [1], [0, 0, 1, 1], [], []>} : vector<10x32xf32>, vector<32x128xf32>, vector<10x128xf32> -> vector<10x128xf32>
    %921 = vector.broadcast %895 : vector<1x128xf32> to vector<10x128xf32>
    %922 = arith.addf %920, %921 : vector<10x128xf32>
    %cst_674 = arith.constant 5.000000e-01 : f32
    %923 = vector.broadcast %cst_674 : f32 to vector<10x128xf32>
    %924 = arith.mulf %923, %922 : vector<10x128xf32>
    %cst_675 = arith.constant 0.707106769 : f32
    %925 = vector.broadcast %cst_675 : f32 to vector<10x128xf32>
    %926 = arith.mulf %922, %925 : vector<10x128xf32>
    %927 = math.erf %926 : vector<10x128xf32>
    %cst_676 = arith.constant 1.000000e+00 : f32
    %928 = vector.broadcast %cst_676 : f32 to vector<10x128xf32>
    %929 = arith.addf %928, %927 : vector<10x128xf32>
    %930 = arith.mulf %924, %929 : vector<10x128xf32>
    %cst_677 = arith.constant dense<0.000000e+00> : vector<10x32xf32>
    %931 = tpu.matmul %930, %896, %cst_677 {dimension_numbers = #tpu.dot_dimension_numbers<[1], [0], [0], [1], [0, 0, 1, 1], [], []>} : vector<10x128xf32>, vector<128x32xf32>, vector<10x32xf32> -> vector<10x32xf32>
    %932 = arith.addf %891, %931 : vector<10x32xf32>
    %933 = vector.broadcast %897 : vector<1x32xf32> to vector<10x32xf32>
    %934 = arith.addf %932, %933 : vector<10x32xf32>
    %935 = vector.extract_strided_slice %934 {offsets = [0, 0], sizes = [1, 32], strides = [1, 1]} : vector<10x32xf32> to vector<1x32xf32>
    %936 = vector.extract_strided_slice %934 {offsets = [5, 0], sizes = [1, 32], strides = [1, 1]} : vector<10x32xf32> to vector<1x32xf32>
    %937 = tpu.concatenate %935, %936 in 0 : vector<1x32xf32>, vector<1x32xf32> -> vector<2x32xf32>
    %c0_678 = arith.constant 0 : index
    %c0_679 = arith.constant 0 : index
    %938 = vector.load %arg59[%c0_678, %c0_679] : memref<1x32xf32, #tpu.memory_space<vmem>>, vector<1x32xf32>
    %c0_680 = arith.constant 0 : index
    %c0_681 = arith.constant 0 : index
    %939 = vector.load %arg60[%c0_680, %c0_681] : memref<1x32xf32, #tpu.memory_space<vmem>>, vector<1x32xf32>
    %cst_682 = arith.constant dense<0.000000e+00> : vector<2xf32>
    %940 = vector.multi_reduction <add>, %937, %cst_682 [1] : vector<2x32xf32> to vector<2xf32>
    %941 = vector.shape_cast %940 : vector<2xf32> to vector<2x1xf32>
    %cst_683 = arith.constant 3.200000e+01 : f32
    %942 = vector.broadcast %cst_683 : f32 to vector<2x1xf32>
    %943 = arith.divf %941, %942 : vector<2x1xf32>
    %944 = vector.broadcast %943 : vector<2x1xf32> to vector<2x32xf32>
    %945 = arith.subf %937, %944 : vector<2x32xf32>
    %946 = arith.mulf %945, %945 : vector<2x32xf32>
    %cst_684 = arith.constant dense<0.000000e+00> : vector<2xf32>
    %947 = vector.multi_reduction <add>, %946, %cst_684 [1] : vector<2x32xf32> to vector<2xf32>
    %948 = vector.shape_cast %947 : vector<2xf32> to vector<2x1xf32>
    %cst_685 = arith.constant 3.200000e+01 : f32
    %949 = vector.broadcast %cst_685 : f32 to vector<2x1xf32>
    %950 = arith.divf %948, %949 : vector<2x1xf32>
    %951 = vector.broadcast %943 : vector<2x1xf32> to vector<2x32xf32>
    %952 = arith.subf %937, %951 : vector<2x32xf32>
    %cst_686 = arith.constant 9.99999974E-6 : f32
    %953 = vector.broadcast %cst_686 : f32 to vector<2x1xf32>
    %954 = arith.addf %950, %953 : vector<2x1xf32>
    %955 = math.rsqrt %954 : vector<2x1xf32>
    %956 = vector.broadcast %955 : vector<2x1xf32> to vector<2x32xf32>
    %957 = arith.mulf %952, %956 : vector<2x32xf32>
    %958 = vector.broadcast %938 : vector<1x32xf32> to vector<2x32xf32>
    %959 = arith.mulf %957, %958 : vector<2x32xf32>
    %960 = vector.broadcast %939 : vector<1x32xf32> to vector<2x32xf32>
    %961 = arith.addf %959, %960 : vector<2x32xf32>
    %c0_687 = arith.constant 0 : index
    %c0_688 = arith.constant 0 : index
    %962 = vector.load %arg61[%c0_687, %c0_688] : memref<32x10xf32, #tpu.memory_space<vmem>>, vector<32x10xf32>
    %cst_689 = arith.constant dense<0.000000e+00> : vector<2x10xf32>
    %963 = tpu.matmul %961, %962, %cst_689 {dimension_numbers = #tpu.dot_dimension_numbers<[1], [0], [0], [1], [0, 0, 1, 1], [], []>} : vector<2x32xf32>, vector<32x10xf32>, vector<2x10xf32> -> vector<2x10xf32>
    %c0_690 = arith.constant 0 : index
    %c0_691 = arith.constant 0 : index
    %964 = vector.load %arg62[%c0_690, %c0_691] : memref<1x10xf32, #tpu.memory_space<vmem>>, vector<1x10xf32>
    %965 = vector.broadcast %964 : vector<1x10xf32> to vector<2x10xf32>
    %966 = arith.addf %963, %965 : vector<2x10xf32>
    %c0_692 = arith.constant 0 : index
    %c0_693 = arith.constant 0 : index
    %967 = vector.load %arg63[%c0_692, %c0_693] : memref<2x10xf32, #tpu.memory_space<vmem>>, vector<2x10xf32>
    tpu.vector_store %arg63[%c0_692, %c0_693], %966 {strides = array<i32>} : memref<2x10xf32, #tpu.memory_space<vmem>>, vector<2x10xf32>,
    return
  }
}

</mosaic_0001>

<llo_original>
// kernel: tile.9
$region0: #{tile.9}
  %s0 = inlined_call_operand.vmem [shape: f32[2,5,32], index: 0, kind: input, shape index: {}]
  %s1 = inlined_call_operand.vmem [shape: f32[10,32], index: 1, kind: output, shape index: {}]
  %v2 = vld [vmem:[%s0] sm:$0x1f]
  %vm3 = vcmask 261120
  %4 = vst.msk [vmem:[%s1] sm:$0x1f] %vm3, %v2
  %s5 = scalar_lea.vmem %s0, 8
  %v6 = vld [vmem:[%s5] sm:$0x1f]
  %vm7 = vcmask 261120
  %s8 = scalar_lea.vmem %s1, 5
  %9 = vst.msk [vmem:[%s8] sm:$0x1f] %vm7, %v6

// kernel: _lambda_.1
$region0: #{_lambda_.1}
  #allocation0 [shape = 'u32[]', space=smem, size = 0x4, offset = 0x4, fixed_abs, tag = 'smem constant byte address 0x4 - core index']
  #allocation1 [shape = 'u32[72,128]{1,0:T(1,128)}', space=vmem, size = 0x9000, scoped, tag = 'internal scratch']
  %s0 = inlined_call_operand.smem [shape: u32[64], index: -1, kind: input, shape index: {}]
  %s1 = sld [smem:[%s0]]
  %s2 = scalar_lea.smem %s0, 1
  %s3 = sld [smem:[%s2]]
  %s4 = scalar_lea.smem %s0, 2
  %s5 = sld [smem:[%s4]]
  %s6 = scalar_lea.smem %s0, 3
  %s7 = sld [smem:[%s6]]
  %s8 = scalar_lea.smem %s0, 4
  %s9 = sld [smem:[%s8]]
  %s10 = scalar_lea.smem %s0, 5
  %s11 = sld [smem:[%s10]]
  %s12 = scalar_lea.smem %s0, 6
  %s13 = sld [smem:[%s12]]
  %s14 = scalar_lea.smem %s0, 7
  %s15 = sld [smem:[%s14]]
  %s16 = scalar_lea.smem %s0, 8
  %s17 = sld [smem:[%s16]]
  %s18 = scalar_lea.smem %s0, 9
  %s19 = sld [smem:[%s18]]
  %s20 = scalar_lea.smem %s0, 10
  %s21 = sld [smem:[%s20]]
  %s22 = scalar_lea.smem %s0, 11
  %s23 = sld [smem:[%s22]]
  %s24 = scalar_lea.smem %s0, 12
  %s25 = sld [smem:[%s24]]
  %s26 = scalar_lea.smem %s0, 13
  %s27 = sld [smem:[%s26]]
  %s28 = scalar_lea.smem %s0, 14
  %s29 = sld [smem:[%s28]]
  %s30 = scalar_lea.smem %s0, 15
  %s31 = sld [smem:[%s30]]
  %s32 = scalar_lea.smem %s0, 16
  %s33 = sld [smem:[%s32]]
  %s34 = scalar_lea.smem %s0, 17
  %s35 = sld [smem:[%s34]]
  %s36 = scalar_lea.smem %s0, 18
  %s37 = sld [smem:[%s36]]
  %s38 = scalar_lea.smem %s0, 19
  %s39 = sld [smem:[%s38]]
  %s40 = scalar_lea.smem %s0, 20
  %s41 = sld [smem:[%s40]]
  %s42 = scalar_lea.smem %s0, 21
  %s43 = sld [smem:[%s42]]
  %s44 = scalar_lea.smem %s0, 22
  %s45 = sld [smem:[%s44]]
  %s46 = scalar_lea.smem %s0, 23
  %s47 = sld [smem:[%s46]]
  %s48 = scalar_lea.smem %s0, 24
  %s49 = sld [smem:[%s48]]
  %s50 = scalar_lea.smem %s0, 25
  %s51 = sld [smem:[%s50]]
  %s52 = scalar_lea.smem %s0, 26
  %s53 = sld [smem:[%s52]]
  %s54 = scalar_lea.smem %s0, 27
  %s55 = sld [smem:[%s54]]
  %s56 = scalar_lea.smem %s0, 28
  %s57 = sld [smem:[%s56]]
  %s58 = scalar_lea.smem %s0, 29
  %s59 = sld [smem:[%s58]]
  %s60 = scalar_lea.smem %s0, 30
  %s61 = sld [smem:[%s60]]
  %s62 = scalar_lea.smem %s0, 31
  %s63 = sld [smem:[%s62]]
  %s64 = scalar_lea.smem %s0, 32
  %s65 = sld [smem:[%s64]]
  %s66 = scalar_lea.smem %s0, 33
  %s67 = sld [smem:[%s66]]
  %s68 = scalar_lea.smem %s0, 34
  %s69 = sld [smem:[%s68]]
  %s70 = scalar_lea.smem %s0, 35
  %s71 = sld [smem:[%s70]]
  %s72 = scalar_lea.smem %s0, 36
  %s73 = sld [smem:[%s72]]
  %s74 = scalar_lea.smem %s0, 37
  %s75 = sld [smem:[%s74]]
  %s76 = scalar_lea.smem %s0, 38
  %s77 = sld [smem:[%s76]]
  %s78 = scalar_lea.smem %s0, 39
  %s79 = sld [smem:[%s78]]
  %s80 = scalar_lea.smem %s0, 40
  %s81 = sld [smem:[%s80]]
  %s82 = scalar_lea.smem %s0, 41
  %s83 = sld [smem:[%s82]]
  %s84 = scalar_lea.smem %s0, 42
  %s85 = sld [smem:[%s84]]
  %s86 = scalar_lea.smem %s0, 43
  %s87 = sld [smem:[%s86]]
  %s88 = scalar_lea.smem %s0, 44
  %s89 = sld [smem:[%s88]]
  %s90 = scalar_lea.smem %s0, 45
  %s91 = sld [smem:[%s90]]
  %s92 = scalar_lea.smem %s0, 46
  %s93 = sld [smem:[%s92]]
  %s94 = scalar_lea.smem %s0, 47
  %s95 = sld [smem:[%s94]]
  %s96 = scalar_lea.smem %s0, 48
  %s97 = sld [smem:[%s96]]
  %s98 = scalar_lea.smem %s0, 49
  %s99 = sld [smem:[%s98]]
  %s100 = scalar_lea.smem %s0, 50
  %s101 = sld [smem:[%s100]]
  %s102 = scalar_lea.smem %s0, 51
  %s103 = sld [smem:[%s102]]
  %s104 = scalar_lea.smem %s0, 52
  %s105 = sld [smem:[%s104]]
  %s106 = scalar_lea.smem %s0, 53
  %s107 = sld [smem:[%s106]]
  %s108 = scalar_lea.smem %s0, 54
  %s109 = sld [smem:[%s108]]
  %s110 = scalar_lea.smem %s0, 55
  %s111 = sld [smem:[%s110]]
  %s112 = scalar_lea.smem %s0, 56
  %s113 = sld [smem:[%s112]]
  %s114 = scalar_lea.smem %s0, 57
  %s115 = sld [smem:[%s114]]
  %s116 = scalar_lea.smem %s0, 58
  %s117 = sld [smem:[%s116]]
  %s118 = scalar_lea.smem %s0, 59
  %s119 = sld [smem:[%s118]]
  %s120 = scalar_lea.smem %s0, 60
  %s121 = sld [smem:[%s120]]
  %s122 = scalar_lea.smem %s0, 61
  %s123 = sld [smem:[%s122]]
  %s124 = scalar_lea.smem %s0, 62
  %s125 = sld [smem:[%s124]]
  %s126 = scalar_lea.smem %s0, 63
  %s127 = sld [smem:[%s126]]
  %s128 = sld [smem:[#allocation0]]
  $region278: #{_lambda_.1} parent=0
    _
  %s130 = ssub.s32 1, %s128
  %s131 = scalar_select 0, %s130, %s128
  $region1: #{_lambda_.1} parent=0
    #allocation2 [shape = 'u8[512]{0}', space=vmem, size = 0x400, scoped, tag = 'input window, operand 58, single buffered']
    #allocation3 [shape = 's32[1]{0}', space=sflag, size = 0x4, scoped, tag = 'scoped memory for _lambda_.1']
    #allocation4 [shape = 's32[1]{0}', space=sflag, size = 0x4, scoped, tag = 'scoped memory for _lambda_.1']
    #allocation5 [shape = 'u8[512]{0}', space=vmem, size = 0x400, scoped, tag = 'input window, operand 59, single buffered']
    #allocation6 [shape = 's32[1]{0}', space=sflag, size = 0x4, scoped, tag = 'scoped memory for _lambda_.1']
    #allocation7 [shape = 'u8[512]{0}', space=vmem, size = 0x400, scoped, tag = 'input window, operand 60, single buffered']
    #allocation8 [shape = 'u8[512]{0}', space=vmem, size = 0x400, scoped, tag = 'input window, operand 62, single buffered']
    #allocation9 [shape = 's32[1]{0}', space=sflag, size = 0x4, scoped, tag = 'scoped memory for _lambda_.1']
    #allocation10 [shape = 'u8[1024]{0}', space=vmem, size = 0x400, scoped, tag = 'output window, operand 0, single buffered']
    %132 = vsyncpa [#allocation3], 0
    %133 = vsyncpa [#allocation6], 0
    %134 = vsyncpa [#allocation9], 0
    %135 = vsyncpa [#allocation4], 0
    // Predicated region
    $region2: #{_lambda_.1} parent=1 // pred_check
      _
    $region3: #{_lambda_.1} parent=1 // pred_check_branch
      %137 = sbr.rel (0) target = $region5
    $region4: #{_lambda_.1} parent=1 // pred_region
      _
    $region5: #{_lambda_.1} parent=1 // pred_fallthru
      _
    // Predicated region
    $region6: #{_lambda_.1} parent=1 // pred_check
      _
    $region7: #{_lambda_.1} parent=1 // pred_check_branch
      %139 = sbr.rel (0) target = $region9
    $region8: #{_lambda_.1} parent=1 // pred_region
      _
    $region9: #{_lambda_.1} parent=1 // pred_fallthru
      _
    // Predicated region
    $region10: #{_lambda_.1} parent=1 // pred_check
      _
    $region11: #{_lambda_.1} parent=1 // pred_check_branch
      %141 = sbr.rel (0) target = $region13
    $region12: #{_lambda_.1} parent=1 // pred_region
      _
    $region13: #{_lambda_.1} parent=1 // pred_fallthru
      _
    // Predicated region
    $region14: #{_lambda_.1} parent=1 // pred_check
      _
    $region15: #{_lambda_.1} parent=1 // pred_check_branch
      %143 = sbr.rel (0) target = $region17
    $region16: #{_lambda_.1} parent=1 // pred_region
      _
    $region17: #{_lambda_.1} parent=1 // pred_fallthru
      _
    // Predicated region
    $region18: #{_lambda_.1} parent=1 // pred_check
      _
    $region19: #{_lambda_.1} parent=1 // pred_check_branch
      %145 = sbr.rel (0) target = $region21
    $region20: #{_lambda_.1} parent=1 // pred_region
      _
    $region21: #{_lambda_.1} parent=1 // pred_fallthru
      _
    // Predicated region
    $region22: #{_lambda_.1} parent=1 // pred_check
      _
    $region23: #{_lambda_.1} parent=1 // pred_check_branch
      %147 = sbr.rel (0) target = $region25
    $region24: #{_lambda_.1} parent=1 // pred_region
      _
    $region25: #{_lambda_.1} parent=1 // pred_fallthru
      _
    // Predicated region
    $region26: #{_lambda_.1} parent=1 // pred_check
      _
    $region27: #{_lambda_.1} parent=1 // pred_check_branch
      %149 = sbr.rel (0) target = $region29
    $region28: #{_lambda_.1} parent=1 // pred_region
      _
    $region29: #{_lambda_.1} parent=1 // pred_fallthru
      _
    // Predicated region
    $region30: #{_lambda_.1} parent=1 // pred_check
      _
    $region31: #{_lambda_.1} parent=1 // pred_check_branch
      %151 = sbr.rel (0) target = $region33
    $region32: #{_lambda_.1} parent=1 // pred_region
      _
    $region33: #{_lambda_.1} parent=1 // pred_fallthru
      _
    // Predicated region
    $region34: #{_lambda_.1} parent=1 // pred_check
      _
    $region35: #{_lambda_.1} parent=1 // pred_check_branch
      %153 = sbr.rel (0) target = $region37
    $region36: #{_lambda_.1} parent=1 // pred_region
      _
    $region37: #{_lambda_.1} parent=1 // pred_fallthru
      _
    // Predicated region
    $region38: #{_lambda_.1} parent=1 // pred_check
      _
    $region39: #{_lambda_.1} parent=1 // pred_check_branch
      %155 = sbr.rel (0) target = $region41
    $region40: #{_lambda_.1} parent=1 // pred_region
      _
    $region41: #{_lambda_.1} parent=1 // pred_fallthru
      _
    // Predicated region
    $region42: #{_lambda_.1} parent=1 // pred_check
      _
    $region43: #{_lambda_.1} parent=1 // pred_check_branch
      %157 = sbr.rel (0) target = $region45
    $region44: #{_lambda_.1} parent=1 // pred_region
      _
    $region45: #{_lambda_.1} parent=1 // pred_fallthru
      _
    // Predicated region
    $region46: #{_lambda_.1} parent=1 // pred_check
      _
    $region47: #{_lambda_.1} parent=1 // pred_check_branch
      %159 = sbr.rel (0) target = $region49
    $region48: #{_lambda_.1} parent=1 // pred_region
      _
    $region49: #{_lambda_.1} parent=1 // pred_fallthru
      _
    // Predicated region
    $region50: #{_lambda_.1} parent=1 // pred_check
      _
    $region51: #{_lambda_.1} parent=1 // pred_check_branch
      %161 = sbr.rel (0) target = $region53
    $region52: #{_lambda_.1} parent=1 // pred_region
      _
    $region53: #{_lambda_.1} parent=1 // pred_fallthru
      _
    // Predicated region
    $region54: #{_lambda_.1} parent=1 // pred_check
      _
    $region55: #{_lambda_.1} parent=1 // pred_check_branch
      %163 = sbr.rel (0) target = $region57
    $region56: #{_lambda_.1} parent=1 // pred_region
      _
    $region57: #{_lambda_.1} parent=1 // pred_fallthru
      _
    // Predicated region
    $region58: #{_lambda_.1} parent=1 // pred_check
      _
    $region59: #{_lambda_.1} parent=1 // pred_check_branch
      %165 = sbr.rel (0) target = $region61
    $region60: #{_lambda_.1} parent=1 // pred_region
      _
    $region61: #{_lambda_.1} parent=1 // pred_fallthru
      _
    // Predicated region
    $region62: #{_lambda_.1} parent=1 // pred_check
      _
    $region63: #{_lambda_.1} parent=1 // pred_check_branch
      %167 = sbr.rel (0) target = $region65
    $region64: #{_lambda_.1} parent=1 // pred_region
      _
    $region65: #{_lambda_.1} parent=1 // pred_fallthru
      _
    // Predicated region
    $region66: #{_lambda_.1} parent=1 // pred_check
      _
    $region67: #{_lambda_.1} parent=1 // pred_check_branch
      %169 = sbr.rel (0) target = $region69
    $region68: #{_lambda_.1} parent=1 // pred_region
      _
    $region69: #{_lambda_.1} parent=1 // pred_fallthru
      _
    // Predicated region
    $region70: #{_lambda_.1} parent=1 // pred_check
      _
    $region71: #{_lambda_.1} parent=1 // pred_check_branch
      %171 = sbr.rel (0) target = $region73
    $region72: #{_lambda_.1} parent=1 // pred_region
      _
    $region73: #{_lambda_.1} parent=1 // pred_fallthru
      _
    // Predicated region
    $region74: #{_lambda_.1} parent=1 // pred_check
      _
    $region75: #{_lambda_.1} parent=1 // pred_check_branch
      %173 = sbr.rel (0) target = $region77
    $region76: #{_lambda_.1} parent=1 // pred_region
      _
    $region77: #{_lambda_.1} parent=1 // pred_fallthru
      _
    // Predicated region
    $region78: #{_lambda_.1} parent=1 // pred_check
      _
    $region79: #{_lambda_.1} parent=1 // pred_check_branch
      %175 = sbr.rel (0) target = $region81
    $region80: #{_lambda_.1} parent=1 // pred_region
      _
    $region81: #{_lambda_.1} parent=1 // pred_fallthru
      _
    // Predicated region
    $region82: #{_lambda_.1} parent=1 // pred_check
      _
    $region83: #{_lambda_.1} parent=1 // pred_check_branch
      %177 = sbr.rel (0) target = $region85
    $region84: #{_lambda_.1} parent=1 // pred_region
      _
    $region85: #{_lambda_.1} parent=1 // pred_fallthru
      _
    // Predicated region
    $region86: #{_lambda_.1} parent=1 // pred_check
      _
    $region87: #{_lambda_.1} parent=1 // pred_check_branch
      %179 = sbr.rel (0) target = $region89
    $region88: #{_lambda_.1} parent=1 // pred_region
      _
    $region89: #{_lambda_.1} parent=1 // pred_fallthru
      _
    // Predicated region
    $region90: #{_lambda_.1} parent=1 // pred_check
      _
    $region91: #{_lambda_.1} parent=1 // pred_check_branch
      %181 = sbr.rel (0) target = $region93
    $region92: #{_lambda_.1} parent=1 // pred_region
      _
    $region93: #{_lambda_.1} parent=1 // pred_fallthru
      _
    // Predicated region
    $region94: #{_lambda_.1} parent=1 // pred_check
      _
    $region95: #{_lambda_.1} parent=1 // pred_check_branch
      %183 = sbr.rel (0) target = $region97
    $region96: #{_lambda_.1} parent=1 // pred_region
      _
    $region97: #{_lambda_.1} parent=1 // pred_fallthru
      _
    // Predicated region
    $region98: #{_lambda_.1} parent=1 // pred_check
      _
    $region99: #{_lambda_.1} parent=1 // pred_check_branch
      %185 = sbr.rel (0) target = $region101
    $region100: #{_lambda_.1} parent=1 // pred_region
      _
    $region101: #{_lambda_.1} parent=1 // pred_fallthru
      _
    // Predicated region
    $region102: #{_lambda_.1} parent=1 // pred_check
      _
    $region103: #{_lambda_.1} parent=1 // pred_check_branch
      %187 = sbr.rel (0) target = $region105
    $region104: #{_lambda_.1} parent=1 // pred_region
      _
    $region105: #{_lambda_.1} parent=1 // pred_fallthru
      _
    // Predicated region
    $region106: #{_lambda_.1} parent=1 // pred_check
      _
    $region107: #{_lambda_.1} parent=1 // pred_check_branch
      %189 = sbr.rel (0) target = $region109
    $region108: #{_lambda_.1} parent=1 // pred_region
      _
    $region109: #{_lambda_.1} parent=1 // pred_fallthru
      _
    // Predicated region
    $region110: #{_lambda_.1} parent=1 // pred_check
      _
    $region111: #{_lambda_.1} parent=1 // pred_check_branch
      %191 = sbr.rel (0) target = $region113
    $region112: #{_lambda_.1} parent=1 // pred_region
      _
    $region113: #{_lambda_.1} parent=1 // pred_fallthru
      _
    // Predicated region
    $region114: #{_lambda_.1} parent=1 // pred_check
      _
    $region115: #{_lambda_.1} parent=1 // pred_check_branch
      %193 = sbr.rel (0) target = $region117
    $region116: #{_lambda_.1} parent=1 // pred_region
      _
    $region117: #{_lambda_.1} parent=1 // pred_fallthru
      _
    // Predicated region
    $region118: #{_lambda_.1} parent=1 // pred_check
      _
    $region119: #{_lambda_.1} parent=1 // pred_check_branch
      %195 = sbr.rel (0) target = $region121
    $region120: #{_lambda_.1} parent=1 // pred_region
      _
    $region121: #{_lambda_.1} parent=1 // pred_fallthru
      _
    // Predicated region
    $region122: #{_lambda_.1} parent=1 // pred_check
      _
    $region123: #{_lambda_.1} parent=1 // pred_check_branch
      %197 = sbr.rel (0) target = $region125
    $region124: #{_lambda_.1} parent=1 // pred_region
      _
    $region125: #{_lambda_.1} parent=1 // pred_fallthru
      _
    // Predicated region
    $region126: #{_lambda_.1} parent=1 // pred_check
      _
    $region127: #{_lambda_.1} parent=1 // pred_check_branch
      %199 = sbr.rel (0) target = $region129
    $region128: #{_lambda_.1} parent=1 // pred_region
      _
    $region129: #{_lambda_.1} parent=1 // pred_fallthru
      _
    // Predicated region
    $region130: #{_lambda_.1} parent=1 // pred_check
      _
    $region131: #{_lambda_.1} parent=1 // pred_check_branch
      %201 = sbr.rel (0) target = $region133
    $region132: #{_lambda_.1} parent=1 // pred_region
      _
    $region133: #{_lambda_.1} parent=1 // pred_fallthru
      _
    // Predicated region
    $region134: #{_lambda_.1} parent=1 // pred_check
      _
    $region135: #{_lambda_.1} parent=1 // pred_check_branch
      %203 = sbr.rel (0) target = $region137
    $region136: #{_lambda_.1} parent=1 // pred_region
      _
    $region137: #{_lambda_.1} parent=1 // pred_fallthru
      _
    // Predicated region
    $region138: #{_lambda_.1} parent=1 // pred_check
      _
    $region139: #{_lambda_.1} parent=1 // pred_check_branch
      %205 = sbr.rel (0) target = $region141
    $region140: #{_lambda_.1} parent=1 // pred_region
      _
    $region141: #{_lambda_.1} parent=1 // pred_fallthru
      _
    // Predicated region
    $region142: #{_lambda_.1} parent=1 // pred_check
      _
    $region143: #{_lambda_.1} parent=1 // pred_check_branch
      %207 = sbr.rel (0) target = $region145
    $region144: #{_lambda_.1} parent=1 // pred_region
      _
    $region145: #{_lambda_.1} parent=1 // pred_fallthru
      _
    // Predicated region
    $region146: #{_lambda_.1} parent=1 // pred_check
      _
    $region147: #{_lambda_.1} parent=1 // pred_check_branch
      %209 = sbr.rel (0) target = $region149
    $region148: #{_lambda_.1} parent=1 // pred_region
      _
    $region149: #{_lambda_.1} parent=1 // pred_fallthru
      _
    // Predicated region
    $region150: #{_lambda_.1} parent=1 // pred_check
      _
    $region151: #{_lambda_.1} parent=1 // pred_check_branch
      %211 = sbr.rel (0) target = $region153
    $region152: #{_lambda_.1} parent=1 // pred_region
      _
    $region153: #{_lambda_.1} parent=1 // pred_fallthru
      _
    // Predicated region
    $region154: #{_lambda_.1} parent=1 // pred_check
      _
    $region155: #{_lambda_.1} parent=1 // pred_check_branch
      %213 = sbr.rel (0) target = $region157
    $region156: #{_lambda_.1} parent=1 // pred_region
      _
    $region157: #{_lambda_.1} parent=1 // pred_fallthru
      _
    // Predicated region
    $region158: #{_lambda_.1} parent=1 // pred_check
      _
    $region159: #{_lambda_.1} parent=1 // pred_check_branch
      %215 = sbr.rel (0) target = $region161
    $region160: #{_lambda_.1} parent=1 // pred_region
      _
    $region161: #{_lambda_.1} parent=1 // pred_fallthru
      _
    // Predicated region
    $region162: #{_lambda_.1} parent=1 // pred_check
      _
    $region163: #{_lambda_.1} parent=1 // pred_check_branch
      %217 = sbr.rel (0) target = $region165
    $region164: #{_lambda_.1} parent=1 // pred_region
      _
    $region165: #{_lambda_.1} parent=1 // pred_fallthru
      _
    // Predicated region
    $region166: #{_lambda_.1} parent=1 // pred_check
      _
    $region167: #{_lambda_.1} parent=1 // pred_check_branch
      %219 = sbr.rel (0) target = $region169
    $region168: #{_lambda_.1} parent=1 // pred_region
      _
    $region169: #{_lambda_.1} parent=1 // pred_fallthru
      _
    // Predicated region
    $region170: #{_lambda_.1} parent=1 // pred_check
      _
    $region171: #{_lambda_.1} parent=1 // pred_check_branch
      %221 = sbr.rel (0) target = $region173
    $region172: #{_lambda_.1} parent=1 // pred_region
      _
    $region173: #{_lambda_.1} parent=1 // pred_fallthru
      _
    // Predicated region
    $region174: #{_lambda_.1} parent=1 // pred_check
      _
    $region175: #{_lambda_.1} parent=1 // pred_check_branch
      %223 = sbr.rel (0) target = $region177
    $region176: #{_lambda_.1} parent=1 // pred_region
      _
    $region177: #{_lambda_.1} parent=1 // pred_fallthru
      _
    // Predicated region
    $region178: #{_lambda_.1} parent=1 // pred_check
      _
    $region179: #{_lambda_.1} parent=1 // pred_check_branch
      %225 = sbr.rel (0) target = $region181
    $region180: #{_lambda_.1} parent=1 // pred_region
      _
    $region181: #{_lambda_.1} parent=1 // pred_fallthru
      _
    // Predicated region
    $region182: #{_lambda_.1} parent=1 // pred_check
      _
    $region183: #{_lambda_.1} parent=1 // pred_check_branch
      %227 = sbr.rel (0) target = $region185
    $region184: #{_lambda_.1} parent=1 // pred_region
      _
    $region185: #{_lambda_.1} parent=1 // pred_fallthru
      _
    // Predicated region
    $region186: #{_lambda_.1} parent=1 // pred_check
      _
    $region187: #{_lambda_.1} parent=1 // pred_check_branch
      %229 = sbr.rel (0) target = $region189
    $region188: #{_lambda_.1} parent=1 // pred_region
      _
    $region189: #{_lambda_.1} parent=1 // pred_fallthru
      _
    // Predicated region
    $region190: #{_lambda_.1} parent=1 // pred_check
      _
    $region191: #{_lambda_.1} parent=1 // pred_check_branch
      %231 = sbr.rel (0) target = $region193
    $region192: #{_lambda_.1} parent=1 // pred_region
      _
    $region193: #{_lambda_.1} parent=1 // pred_fallthru
      _
    // Predicated region
    $region194: #{_lambda_.1} parent=1 // pred_check
      _
    $region195: #{_lambda_.1} parent=1 // pred_check_branch
      %233 = sbr.rel (0) target = $region197
    $region196: #{_lambda_.1} parent=1 // pred_region
      _
    $region197: #{_lambda_.1} parent=1 // pred_fallthru
      _
    // Predicated region
    $region198: #{_lambda_.1} parent=1 // pred_check
      _
    $region199: #{_lambda_.1} parent=1 // pred_check_branch
      %235 = sbr.rel (0) target = $region201
    $region200: #{_lambda_.1} parent=1 // pred_region
      _
    $region201: #{_lambda_.1} parent=1 // pred_fallthru
      _
    // Predicated region
    $region202: #{_lambda_.1} parent=1 // pred_check
      _
    $region203: #{_lambda_.1} parent=1 // pred_check_branch
      %237 = sbr.rel (0) target = $region205
    $region204: #{_lambda_.1} parent=1 // pred_region
      _
    $region205: #{_lambda_.1} parent=1 // pred_fallthru
      _
    // Predicated region
    $region206: #{_lambda_.1} parent=1 // pred_check
      _
    $region207: #{_lambda_.1} parent=1 // pred_check_branch
      %239 = sbr.rel (0) target = $region209
    $region208: #{_lambda_.1} parent=1 // pred_region
      _
    $region209: #{_lambda_.1} parent=1 // pred_fallthru
      _
    // Predicated region
    $region210: #{_lambda_.1} parent=1 // pred_check
      _
    $region211: #{_lambda_.1} parent=1 // pred_check_branch
      %241 = sbr.rel (0) target = $region213
    $region212: #{_lambda_.1} parent=1 // pred_region
      _
    $region213: #{_lambda_.1} parent=1 // pred_fallthru
      _
    // Predicated region
    $region214: #{_lambda_.1} parent=1 // pred_check
      _
    $region215: #{_lambda_.1} parent=1 // pred_check_branch
      %243 = sbr.rel (0) target = $region217
    $region216: #{_lambda_.1} parent=1 // pred_region
      _
    $region217: #{_lambda_.1} parent=1 // pred_fallthru
      _
    // Predicated region
    $region218: #{_lambda_.1} parent=1 // pred_check
      _
    $region219: #{_lambda_.1} parent=1 // pred_check_branch
      %245 = sbr.rel (0) target = $region221
    $region220: #{_lambda_.1} parent=1 // pred_region
      _
    $region221: #{_lambda_.1} parent=1 // pred_fallthru
      _
    // Predicated region
    $region222: #{_lambda_.1} parent=1 // pred_check
      _
    $region223: #{_lambda_.1} parent=1 // pred_check_branch
      %247 = sbr.rel (0) target = $region225
    $region224: #{_lambda_.1} parent=1 // pred_region
      _
    $region225: #{_lambda_.1} parent=1 // pred_fallthru
      _
    // Predicated region
    $region226: #{_lambda_.1} parent=1 // pred_check
      _
    $region227: #{_lambda_.1} parent=1 // pred_check_branch
      %249 = sbr.rel (0) target = $region229
    $region228: #{_lambda_.1} parent=1 // pred_region
      _
    $region229: #{_lambda_.1} parent=1 // pred_fallthru
      _
    // Predicated region
    $region230: #{_lambda_.1} parent=1 // pred_check
      _
    $region231: #{_lambda_.1} parent=1 // pred_check_branch
      %251 = sbr.rel (0) target = $region233
    $region232: #{_lambda_.1} parent=1 // pred_region
      _
    $region233: #{_lambda_.1} parent=1 // pred_fallthru
      _
    // Predicated region
    $region234: #{_lambda_.1} parent=1 // pred_check
      _
    $region235: #{_lambda_.1} parent=1 // pred_check_branch
      %253 = sbr.rel (0) target = $region237
    $region236: #{_lambda_.1} parent=1 // pred_region
      %255 = vsyncadd [#allocation3], 0
      %s257 = sshll.u32 %s117, 4
      %s258 = int_to_ptr.hbm [resolvable:$true] %s257
      %s259 = sshll.u32 [#allocation2], 4
      %s260 = int_to_ptr.vmem [resolvable:$true] %s259
      %262 = dma.hbm_to_vmem [thread:$0]  %s258, 16, %s260, [#allocation3]
    $region237: #{_lambda_.1} parent=1 // pred_fallthru
      _
    // Predicated region
    $region238: #{_lambda_.1} parent=1 // pred_check
      _
    $region239: #{_lambda_.1} parent=1 // pred_check_branch
      %264 = sbr.rel (0) target = $region241
    $region240: #{_lambda_.1} parent=1 // pred_region
      %266 = vsyncadd [#allocation6], 0
      %s268 = sshll.u32 %s119, 4
      %s269 = int_to_ptr.hbm [resolvable:$true] %s268
      %s270 = sshll.u32 [#allocation5], 4
      %s271 = int_to_ptr.vmem [resolvable:$true] %s270
      %273 = dma.hbm_to_vmem [thread:$0]  %s269, 16, %s271, [#allocation6]
    $region241: #{_lambda_.1} parent=1 // pred_fallthru
      _
    // Predicated region
    $region242: #{_lambda_.1} parent=1 // pred_check
      _
    $region243: #{_lambda_.1} parent=1 // pred_check_branch
      %275 = sbr.rel (0) target = $region245
    $region244: #{_lambda_.1} parent=1 // pred_region
      %277 = vsyncadd [#allocation6], 0
      %s279 = sshll.u32 %s121, 4
      %s280 = int_to_ptr.hbm [resolvable:$true] %s279
      %s281 = sshll.u32 [#allocation7], 4
      %s282 = int_to_ptr.vmem [resolvable:$true] %s281
      %284 = dma.hbm_to_vmem [thread:$0]  %s280, 16, %s282, [#allocation6]
    $region245: #{_lambda_.1} parent=1 // pred_fallthru
      _
    // Predicated region
    $region246: #{_lambda_.1} parent=1 // pred_check
      _
    $region247: #{_lambda_.1} parent=1 // pred_check_branch
      %286 = sbr.rel (0) target = $region249
    $region248: #{_lambda_.1} parent=1 // pred_region
      _
    $region249: #{_lambda_.1} parent=1 // pred_fallthru
      _
    // Predicated region
    $region250: #{_lambda_.1} parent=1 // pred_check
      _
    $region251: #{_lambda_.1} parent=1 // pred_check_branch
      %288 = sbr.rel (0) target = $region253
    $region252: #{_lambda_.1} parent=1 // pred_region
      %290 = vsyncadd [#allocation9], 0
      %s292 = sshll.u32 %s125, 4
      %s293 = int_to_ptr.hbm [resolvable:$true] %s292
      %s294 = sshll.u32 [#allocation8], 4
      %s295 = int_to_ptr.vmem [resolvable:$true] %s294
      %297 = dma.hbm_to_vmem [thread:$0]  %s293, 16, %s295, [#allocation9]
    $region253: #{_lambda_.1} parent=1 // pred_fallthru
      _
    // Predicated region
    $region254: #{_lambda_.1} parent=1 // pred_check
      _
    $region255: #{_lambda_.1} parent=1 // pred_check_branch
      %299 = sbr.rel (0) target = $region257
    $region256: #{_lambda_.1} parent=1 // pred_region
      %301 = dma.done [#allocation3], 16
    $region257: #{_lambda_.1} parent=1 // pred_fallthru
      _
    // Predicated region
    $region258: #{_lambda_.1} parent=1 // pred_check
      _
    $region259: #{_lambda_.1} parent=1 // pred_check_branch
      %303 = sbr.rel (0) target = $region261
    $region260: #{_lambda_.1} parent=1 // pred_region
      %305 = dma.done [#allocation6], 16
    $region261: #{_lambda_.1} parent=1 // pred_fallthru
      _
    // Predicated region
    $region262: #{_lambda_.1} parent=1 // pred_check
      _
    $region263: #{_lambda_.1} parent=1 // pred_check_branch
      %307 = sbr.rel (0) target = $region265
    $region264: #{_lambda_.1} parent=1 // pred_region
      %309 = dma.done [#allocation6], 16
    $region265: #{_lambda_.1} parent=1 // pred_fallthru
      _
    // Predicated region
    $region266: #{_lambda_.1} parent=1 // pred_check
      _
    $region267: #{_lambda_.1} parent=1 // pred_check_branch
      %311 = sbr.rel (0) target = $region269
    $region268: #{_lambda_.1} parent=1 // pred_region
      %313 = dma.done [#allocation9], 16
    $region269: #{_lambda_.1} parent=1 // pred_fallthru
      _
    %v314 = vld [vmem:[%s9] sm:$0xff]
    %v315 = vld [vmem:[%s9 + $0x8] sm:$0xff]
    %v316 = vld [vmem:[%s9 + $0x10] sm:$0xff]
    %v317 = vld [vmem:[%s9 + $0x18] sm:$0xff]
    %v318 = vld [vmem:[%s13] sm:$0xff]
    %v319 = vld [vmem:[%s13 + $0x8] sm:$0x3]
    %v320 = vld [vmem:[%s1] sm:$0xff]
    %v321 = vld [vmem:[%s1 + $0x8] sm:$0xff]
    %v322 = vld [vmem:[%s1 + $0x10] sm:$0xff]
    %v323 = vld [vmem:[%s1 + $0x18] sm:$0xff]
    %v324 = vld [vmem:[%s3] sm:$0xff]
    %v325 = vld [vmem:[%s3 + $0x8] sm:$0xff]
    %v326 = vld [vmem:[%s3 + $0x10] sm:$0xff]
    %v327 = vld [vmem:[%s3 + $0x18] sm:$0xff]
    %v328 = vld [vmem:[%s3 + $0x20] sm:$0xff]
    %v329 = vld [vmem:[%s3 + $0x28] sm:$0xff]
    %v330 = vld [vmem:[%s5] sm:$0x1]
    %v332 = vperm.slane %v330, 0
    %vm334 = vcmask 392192
    %v336 = vsel %vm334, %v320, 0
    %v339 = vsel %vm334, %v321, 0
    %v342 = vsel %vm334, %v322, 0
    %v345 = vsel %vm334, %v323, 0
    %347 = vmatpush.msra.mxu0 0.0
    %348 = vmatpush.msra.mxu0 0.0
    %349 = vmatpush.msra.mxu0 0.0
    %350 = vmatpush.msra.mxu0 0.0
    %351 = vmatpush.msra.mxu0 0.0
    %352 = vmatpush.msra.mxu0 0.0
    %353 = vmatpush.msra.mxu0 0.0
    %354 = vmatpush.msra.mxu0 0.0
    %355 = vmatpush.msra.mxu0 0.0
    %356 = vmatpush.msra.mxu0 0.0
    %357 = vmatpush.msra.mxu0 %v329
    %358 = vmatpush.msra.mxu0 %v328
    %359 = vmatpush.msra.mxu0 %v327
    %360 = vmatpush.msra.mxu0 %v326
    %361 = vmatpush.msra.mxu0 %v325
    %362 = vmatpush.msra.mxu0 %v324
    %363 = vmatmul.f32.gmra.mxu0 %v336
    %v364 = vpop.f32.mrf.mxu0
    %v365 = vadd.f32 %v332, %v364
    %366 = vmatmul.f32.gmra.mxu0 %v339
    %v367 = vpop.f32.mrf.mxu0
    %v368 = vadd.f32 %v332, %v367
    %369 = vmatmul.f32.gmra.mxu0 %v342
    %v370 = vpop.f32.mrf.mxu0
    %v371 = vadd.f32 %v332, %v370
    %372 = vmatmul.f32.gmra.mxu0 %v345
    %v373 = vpop.f32.mrf.mxu0
    %v374 = vadd.f32 %v332, %v373
    %375 = vdwg.mxu0
    %v376 = vld [vmem:[%s7] sm:$0xff]
    %v377 = vld [vmem:[%s7 + $0x8] sm:$0xff]
    %v378 = vld [vmem:[%s7 + $0x10] sm:$0xff]
    %v379 = vld [vmem:[%s7 + $0x18] sm:$0xff]
    %v380 = vadd.f32 %v365, %v376
    %v381 = vadd.f32 %v368, %v377
    %v382 = vadd.f32 %v371, %v378
    %v383 = vadd.f32 %v374, %v379
    %v384 = vld [vmem:[%s11] sm:$0xff]
    %v385 = vld [vmem:[%s11 + $0x8] sm:$0x3]
    %v386 = vld [vmem:[%s15] sm:$0x1]
    %v387 = vld [vmem:[%s17] sm:$0x1]
    %v388 = vld [vmem:[%s23] sm:$0x1]
    %vm389 = vcmask 130048
    %v390 = vsel %vm389, %v380, 0.0
    %391 = vadd.xlane.f32.xlu0 %v390
    %v392 = vpop.xlane.xlu0 %391
    %v393 = vsel %vm389, %v381, 0.0
    %394 = vadd.xlane.f32.xlu0 %v393
    %v395 = vpop.xlane.xlu0 %394
    %v396 = vsel %vm389, %v382, 0.0
    %397 = vadd.xlane.f32.xlu0 %v396
    %v398 = vpop.xlane.xlu0 %397
    %v399 = vsel %vm389, %v383, 0.0
    %400 = vadd.xlane.f32.xlu0 %v399
    %v401 = vpop.xlane.xlu0 %400
    %v402 = vrcp.pop 16.0
    %v403 = vmul.f32 16.0, %v402
    %v404 = vsub.f32 1.0, %v403
    %v405 = vmul.f32 %v402, %v404
    %v406 = vadd.f32 %v402, %v405
    %vm407 = vweird.f32 %v402
    %v408 = vsel %vm407, %v402, %v406
    %v409 = vmul.f32 %v392, %v408
    %v410 = vmul.f32 %v395, %v408
    %v411 = vmul.f32 %v398, %v408
    %v412 = vmul.f32 %v401, %v408
    %v413 = vsub.f32 %v380, %v409
    %v414 = vsub.f32 %v381, %v410
    %v415 = vsub.f32 %v382, %v411
    %v416 = vsub.f32 %v383, %v412
    %v417 = vmul.f32 %v413, %v413
    %v418 = vmul.f32 %v414, %v414
    %v419 = vmul.f32 %v415, %v415
    %v420 = vmul.f32 %v416, %v416
    %v421 = vsel %vm389, %v417, 0.0
    %422 = vadd.xlane.f32.xlu0 %v421
    %v423 = vpop.xlane.xlu0 %422
    %v424 = vsel %vm389, %v418, 0.0
    %425 = vadd.xlane.f32.xlu0 %v424
    %v426 = vpop.xlane.xlu0 %425
    %v427 = vsel %vm389, %v419, 0.0
    %428 = vadd.xlane.f32.xlu0 %v427
    %v429 = vpop.xlane.xlu0 %428
    %v430 = vsel %vm389, %v420, 0.0
    %431 = vadd.xlane.f32.xlu0 %v430
    %v432 = vpop.xlane.xlu0 %431
    %v433 = vmul.f32 %v423, %v408
    %v434 = vmul.f32 %v426, %v408
    %v435 = vmul.f32 %v429, %v408
    %v436 = vmul.f32 %v432, %v408
    %v437 = vadd.f32 %v433, 1e-05
    %v438 = vadd.f32 %v434, 1e-05
    %v439 = vadd.f32 %v435, 1e-05
    %v440 = vadd.f32 %v436, 1e-05
    %v441 = vrsqrt.pop %v437
    %v442 = vmul.f32 %v441, %v437
    %v443 = vmul.f32 %v442, %v441
    %v444 = vmul.f32 0.5, %v443
    %v445 = vsub.f32 1.5, %v444
    %v446 = vmul.f32 %v441, %v445
    %vm447 = vweird.f32 %v437
    %vm448 = vweird.f32 %v441
    %vm449 = vmor %vm447, %vm448
    %v450 = vsel %vm449, %v441, %v446
    %v451 = vrsqrt.pop %v438
    %v452 = vmul.f32 %v451, %v438
    %v453 = vmul.f32 %v452, %v451
    %v454 = vmul.f32 0.5, %v453
    %v455 = vsub.f32 1.5, %v454
    %v456 = vmul.f32 %v451, %v455
    %vm457 = vweird.f32 %v438
    %vm458 = vweird.f32 %v451
    %vm459 = vmor %vm457, %vm458
    %v460 = vsel %vm459, %v451, %v456
    %v461 = vrsqrt.pop %v439
    %v462 = vmul.f32 %v461, %v439
    %v463 = vmul.f32 %v462, %v461
    %v464 = vmul.f32 0.5, %v463
    %v465 = vsub.f32 1.5, %v464
    %v466 = vmul.f32 %v461, %v465
    %vm467 = vweird.f32 %v439
    %vm468 = vweird.f32 %v461
    %vm469 = vmor %vm467, %vm468
    %v470 = vsel %vm469, %v461, %v466
    %v471 = vrsqrt.pop %v440
    %v472 = vmul.f32 %v471, %v440
    %v473 = vmul.f32 %v472, %v471
    %v474 = vmul.f32 0.5, %v473
    %v475 = vsub.f32 1.5, %v474
    %v476 = vmul.f32 %v471, %v475
    %vm477 = vweird.f32 %v440
    %vm478 = vweird.f32 %v471
    %vm479 = vmor %vm477, %vm478
    %v480 = vsel %vm479, %v471, %v476
    %v481 = vmul.f32 %v413, %v450
    %v482 = vmul.f32 %v414, %v460
    %v483 = vmul.f32 %v415, %v470
    %v484 = vmul.f32 %v416, %v480
    %v486 = vperm.slane %v386, 0
    %v488 = vmul.f32 %v481, %v486
    %v489 = vmul.f32 %v482, %v486
    %v490 = vmul.f32 %v483, %v486
    %v491 = vmul.f32 %v484, %v486
    %v493 = vperm.slane %v387, 0
    %v495 = vadd.f32 %v488, %v493
    %v496 = vadd.f32 %v489, %v493
    %v497 = vadd.f32 %v490, %v493
    %v498 = vadd.f32 %v491, %v493
    %v499 = vld [vmem:[%s19] sm:$0xff]
    %v500 = vld [vmem:[%s19 + $0x8] sm:$0xff]
    %v502 = vsel %vm389, %v495, 0
    %v505 = vsel %vm389, %v496, 0
    %v508 = vsel %vm389, %v497, 0
    %v511 = vsel %vm389, %v498, 0
    %513 = vmatpush.msra.mxu0 0.0
    %514 = vmatpush.msra.mxu0 0.0
    %515 = vmatpush.msra.mxu0 0.0
    %516 = vmatpush.msra.mxu0 0.0
    %517 = vmatpush.msra.mxu0 0.0
    %518 = vmatpush.msra.mxu0 0.0
    %519 = vmatpush.msra.mxu0 0.0
    %520 = vmatpush.msra.mxu0 0.0
    %521 = vmatpush.msra.mxu0 0.0
    %522 = vmatpush.msra.mxu0 0.0
    %523 = vmatpush.msra.mxu0 0.0
    %524 = vmatpush.msra.mxu0 0.0
    %525 = vmatpush.msra.mxu0 0.0
    %526 = vmatpush.msra.mxu0 0.0
    %527 = vmatpush.msra.mxu0 %v500
    %528 = vmatpush.msra.mxu0 %v499
    %529 = vmatmul.f32.gmra.mxu0 %v502
    %v530 = vpop.f32.mrf.mxu0
    %v531 = vadd.f32 0.0, %v530
    %532 = vmatmul.f32.gmra.mxu0 %v505
    %v533 = vpop.f32.mrf.mxu0
    %v534 = vadd.f32 0.0, %v533
    %535 = vmatmul.f32.gmra.mxu0 %v508
    %v536 = vpop.f32.mrf.mxu0
    %v537 = vadd.f32 0.0, %v536
    %538 = vmatmul.f32.gmra.mxu0 %v511
    %v539 = vpop.f32.mrf.mxu0
    %v540 = vadd.f32 0.0, %v539
    %541 = vdwg.mxu0
    %v542 = vmul.f32 %v531, 0.20412415
    %v543 = vmul.f32 %v534, 0.20412415
    %v544 = vmul.f32 %v537, 0.20412415
    %v545 = vmul.f32 %v540, 0.20412415
    %s546 = scalar_lea.vmem %s19, 64
    %v547 = vld [vmem:[%s546] sm:$0xff]
    %v548 = vld [vmem:[%s546 + $0x8] sm:$0xff]
    %549 = vmatpush.msra.mxu0 0.0
    %550 = vmatpush.msra.mxu0 0.0
    %551 = vmatpush.msra.mxu0 0.0
    %552 = vmatpush.msra.mxu0 0.0
    %553 = vmatpush.msra.mxu0 0.0
    %554 = vmatpush.msra.mxu0 0.0
    %555 = vmatpush.msra.mxu0 0.0
    %556 = vmatpush.msra.mxu0 0.0
    %557 = vmatpush.msra.mxu0 0.0
    %558 = vmatpush.msra.mxu0 0.0
    %559 = vmatpush.msra.mxu0 0.0
    %560 = vmatpush.msra.mxu0 0.0
    %561 = vmatpush.msra.mxu0 0.0
    %562 = vmatpush.msra.mxu0 0.0
    %563 = vmatpush.msra.mxu0 %v548
    %564 = vmatpush.msra.mxu0 %v547
    %565 = vmatmul.f32.gmra.mxu0 %v502
    %v566 = vpop.f32.mrf.mxu0
    %v567 = vadd.f32 0.0, %v566
    %568 = vmatmul.f32.gmra.mxu0 %v505
    %v569 = vpop.f32.mrf.mxu0
    %v570 = vadd.f32 0.0, %v569
    %571 = vmatmul.f32.gmra.mxu0 %v508
    %v572 = vpop.f32.mrf.mxu0
    %v573 = vadd.f32 0.0, %v572
    %574 = vmatmul.f32.gmra.mxu0 %v511
    %v575 = vpop.f32.mrf.mxu0
    %v576 = vadd.f32 0.0, %v575
    %577 = vdwg.mxu0
    %s578 = scalar_lea.vmem %s19, 128
    %v579 = vld [vmem:[%s578] sm:$0xff]
    %v580 = vld [vmem:[%s578 + $0x8] sm:$0xff]
    %581 = vmatpush.msra.mxu0 0.0
    %582 = vmatpush.msra.mxu0 0.0
    %583 = vmatpush.msra.mxu0 0.0
    %584 = vmatpush.msra.mxu0 0.0
    %585 = vmatpush.msra.mxu0 0.0
    %586 = vmatpush.msra.mxu0 0.0
    %587 = vmatpush.msra.mxu0 0.0
    %588 = vmatpush.msra.mxu0 0.0
    %589 = vmatpush.msra.mxu0 0.0
    %590 = vmatpush.msra.mxu0 0.0
    %591 = vmatpush.msra.mxu0 0.0
    %592 = vmatpush.msra.mxu0 0.0
    %593 = vmatpush.msra.mxu0 0.0
    %594 = vmatpush.msra.mxu0 0.0
    %595 = vmatpush.msra.mxu0 %v580
    %596 = vmatpush.msra.mxu0 %v579
    %597 = vmatmul.f32.gmra.mxu0 %v502
    %v598 = vpop.f32.mrf.mxu0
    %v599 = vadd.f32 0.0, %v598
    %600 = vmatmul.f32.gmra.mxu0 %v505
    %v601 = vpop.f32.mrf.mxu0
    %v602 = vadd.f32 0.0, %v601
    %603 = vmatmul.f32.gmra.mxu0 %v508
    %v604 = vpop.f32.mrf.mxu0
    %v605 = vadd.f32 0.0, %v604
    %606 = vmatmul.f32.gmra.mxu0 %v511
    %v607 = vpop.f32.mrf.mxu0
    %v608 = vadd.f32 0.0, %v607
    %609 = vdwg.mxu0
    %vm610 = vcmask 195584
    %v612 = vsel %vm610, %v542, 0
    %v615 = vsel %vm610, %v543, 0
    %v618 = vsel %vm610, %v544, 0
    %v621 = vsel %vm610, %v545, 0
    %v624 = vsel %vm610, %v567, 0
    %v627 = vsel %vm610, %v570, 0
    %v630 = vsel %vm610, %v573, 0
    %v633 = vsel %vm610, %v576, 0
    %635 = vmatpush.xpose.msra.mxu0 0.0
    %636 = vmatpush.xpose.msra.mxu0 0.0
    %637 = vmatpush.xpose.msra.mxu0 0.0
    %638 = vmatpush.xpose.msra.mxu0 0.0
    %639 = vmatpush.xpose.msra.mxu0 0.0
    %640 = vmatpush.xpose.msra.mxu0 0.0
    %641 = vmatpush.xpose.msra.mxu0 0.0
    %642 = vmatpush.xpose.msra.mxu0 0.0
    %643 = vmatpush.xpose.msra.mxu0 0.0
    %644 = vmatpush.xpose.msra.mxu0 0.0
    %645 = vmatpush.xpose.msra.mxu0 0.0
    %646 = vmatpush.xpose.msra.mxu0 0.0
    %647 = vmatpush.xpose.msra.mxu0 %v633
    %648 = vmatpush.xpose.msra.mxu0 %v630
    %649 = vmatpush.xpose.msra.mxu0 %v627
    %650 = vmatpush.xpose.msra.mxu0 %v624
    %651 = vmatmul.f32.gmra.mxu0 %v612
    %v652 = vpop.f32.mrf.mxu0
    %v653 = vadd.f32 %v314, %v652
    %654 = vmatmul.f32.gmra.mxu0 %v615
    %v655 = vpop.f32.mrf.mxu0
    %v656 = vadd.f32 %v315, %v655
    %657 = vmatmul.f32.gmra.mxu0 %v618
    %v658 = vpop.f32.mrf.mxu0
    %v659 = vadd.f32 %v316, %v658
    %660 = vmatmul.f32.gmra.mxu0 %v621
    %v661 = vpop.f32.mrf.mxu0
    %v662 = vadd.f32 %v317, %v661
    %663 = vdwg.mxu0
    %vm664 = vcmask 261120
    %v665 = vsel %vm664, %v653, -inf
    %666 = vmax.xlane.f32.xlu0 %v665
    %v667 = vpop.xlane.xlu0 %666
    %v668 = vsel %vm664, %v656, -inf
    %669 = vmax.xlane.f32.xlu0 %v668
    %v670 = vpop.xlane.xlu0 %669
    %v671 = vsel %vm664, %v659, -inf
    %672 = vmax.xlane.f32.xlu0 %v671
    %v673 = vpop.xlane.xlu0 %672
    %v674 = vsel %vm664, %v662, -inf
    %675 = vmax.xlane.f32.xlu0 %v674
    %v676 = vpop.xlane.xlu0 %675
    %v677 = vsub.f32 %v653, %v667
    %v678 = vsub.f32 %v656, %v670
    %v679 = vsub.f32 %v659, %v673
    %v680 = vsub.f32 %v662, %v676
    %v681 = vmul.f32 %v677, 1.442695
    %v682 = vpow.pop %v681
    %v683 = vmul.f32 %v678, 1.442695
    %v684 = vpow.pop %v683
    %v685 = vmul.f32 %v679, 1.442695
    %v686 = vpow.pop %v685
    %v687 = vmul.f32 %v680, 1.442695
    %v688 = vpow.pop %v687
    %v689 = vsel %vm664, %v682, 0.0
    %690 = vadd.xlane.f32.xlu0 %v689
    %v691 = vpop.xlane.xlu0 %690
    %v692 = vsel %vm664, %v684, 0.0
    %693 = vadd.xlane.f32.xlu0 %v692
    %v694 = vpop.xlane.xlu0 %693
    %v695 = vsel %vm664, %v686, 0.0
    %696 = vadd.xlane.f32.xlu0 %v695
    %v697 = vpop.xlane.xlu0 %696
    %v698 = vsel %vm664, %v688, 0.0
    %699 = vadd.xlane.f32.xlu0 %v698
    %v700 = vpop.xlane.xlu0 %699
    %v701 = vrcp.pop %v691
    %v702 = vmul.f32 %v691, %v701
    %v703 = vsub.f32 1.0, %v702
    %v704 = vmul.f32 %v701, %v703
    %v705 = vadd.f32 %v701, %v704
    %vm706 = vweird.f32 %v691
    %vm707 = vweird.f32 %v701
    %vm708 = vmor %vm706, %vm707
    %v709 = vsel %vm708, %v701, %v705
    %v710 = vand.u32 2147483647, %v691
    %vm711 = vcmp.eq.f32.partialorder %v710, 8.507059e+37
    %v712 = vand.u32 %v691, 2147483648
    %v713 = vor.u32 1.1754944e-38, %v712
    %v714 = vsel %vm711, %v713, %v709
    %v715 = vmul.f32 %v682, %v714
    %v716 = vrcp.pop %v694
    %v717 = vmul.f32 %v694, %v716
    %v718 = vsub.f32 1.0, %v717
    %v719 = vmul.f32 %v716, %v718
    %v720 = vadd.f32 %v716, %v719
    %vm721 = vweird.f32 %v694
    %vm722 = vweird.f32 %v716
    %vm723 = vmor %vm721, %vm722
    %v724 = vsel %vm723, %v716, %v720
    %v725 = vand.u32 2147483647, %v694
    %vm726 = vcmp.eq.f32.partialorder %v725, 8.507059e+37
    %v727 = vand.u32 %v694, 2147483648
    %v728 = vor.u32 1.1754944e-38, %v727
    %v729 = vsel %vm726, %v728, %v724
    %v730 = vmul.f32 %v684, %v729
    %v731 = vrcp.pop %v697
    %v732 = vmul.f32 %v697, %v731
    %v733 = vsub.f32 1.0, %v732
    %v734 = vmul.f32 %v731, %v733
    %v735 = vadd.f32 %v731, %v734
    %vm736 = vweird.f32 %v697
    %vm737 = vweird.f32 %v731
    %vm738 = vmor %vm736, %vm737
    %v739 = vsel %vm738, %v731, %v735
    %v740 = vand.u32 2147483647, %v697
    %vm741 = vcmp.eq.f32.partialorder %v740, 8.507059e+37
    %v742 = vand.u32 %v697, 2147483648
    %v743 = vor.u32 1.1754944e-38, %v742
    %v744 = vsel %vm741, %v743, %v739
    %v745 = vmul.f32 %v686, %v744
    %v746 = vrcp.pop %v700
    %v747 = vmul.f32 %v700, %v746
    %v748 = vsub.f32 1.0, %v747
    %v749 = vmul.f32 %v746, %v748
    %v750 = vadd.f32 %v746, %v749
    %vm751 = vweird.f32 %v700
    %vm752 = vweird.f32 %v746
    %vm753 = vmor %vm751, %vm752
    %v754 = vsel %vm753, %v746, %v750
    %v755 = vand.u32 2147483647, %v700
    %vm756 = vcmp.eq.f32.partialorder %v755, 8.507059e+37
    %v757 = vand.u32 %v700, 2147483648
    %v758 = vor.u32 1.1754944e-38, %v757
    %v759 = vsel %vm756, %v758, %v754
    %v760 = vmul.f32 %v688, %v759
    %v762 = vsel %vm664, %v715, 0
    %v765 = vsel %vm664, %v730, 0
    %v768 = vsel %vm664, %v745, 0
    %v771 = vsel %vm664, %v760, 0
    %773 = vmatpush.msra.mxu0 0.0
    %774 = vmatpush.msra.mxu0 0.0
    %775 = vmatpush.msra.mxu0 0.0
    %776 = vmatpush.msra.mxu0 0.0
    %777 = vmatpush.msra.mxu0 0.0
    %778 = vmatpush.msra.mxu0 0.0
    %779 = vmatpush.msra.mxu0 0.0
    %780 = vmatpush.msra.mxu0 0.0
    %781 = vmatpush.msra.mxu0 0.0
    %782 = vmatpush.msra.mxu0 0.0
    %783 = vmatpush.msra.mxu0 0.0
    %784 = vmatpush.msra.mxu0 0.0
    %785 = vmatpush.msra.mxu0 %v608
    %786 = vmatpush.msra.mxu0 %v605
    %787 = vmatpush.msra.mxu0 %v602
    %788 = vmatpush.msra.mxu0 %v599
    %789 = vmatmul.f32.gmra.mxu0 %v762
    %v790 = vpop.f32.mrf.mxu0
    %v791 = vadd.f32 0.0, %v790
    %792 = vmatmul.f32.gmra.mxu0 %v765
    %v793 = vpop.f32.mrf.mxu0
    %v794 = vadd.f32 0.0, %v793
    %795 = vmatmul.f32.gmra.mxu0 %v768
    %v796 = vpop.f32.mrf.mxu0
    %v797 = vadd.f32 0.0, %v796
    %798 = vmatmul.f32.gmra.mxu0 %v771
    %v799 = vpop.f32.mrf.mxu0
    %v800 = vadd.f32 0.0, %v799
    %801 = vdwg.mxu0
    %v802 = vld [vmem:[%s21] sm:$0xff]
    %v803 = vld [vmem:[%s21 + $0x8] sm:$0xff]
    %v804 = vld [vmem:[%s21 + $0x10] sm:$0xff]
    %v806 = vsel %vm610, %v791, 0
    %v809 = vsel %vm610, %v794, 0
    %v812 = vsel %vm610, %v797, 0
    %v815 = vsel %vm610, %v800, 0
    %817 = vmatpush.msra.mxu0 0.0
    %818 = vmatpush.msra.mxu0 0.0
    %819 = vmatpush.msra.mxu0 0.0
    %820 = vmatpush.msra.mxu0 0.0
    %821 = vmatpush.msra.mxu0 0.0
    %822 = vmatpush.msra.mxu0 0.0
    %823 = vmatpush.msra.mxu0 0.0
    %824 = vmatpush.msra.mxu0 0.0
    %825 = vmatpush.msra.mxu0 0.0
    %826 = vmatpush.msra.mxu0 0.0
    %827 = vmatpush.msra.mxu0 0.0
    %828 = vmatpush.msra.mxu0 0.0
    %829 = vmatpush.msra.mxu0 0.0
    %830 = vmatpush.msra.mxu0 %v804
    %831 = vmatpush.msra.mxu0 %v803
    %832 = vmatpush.msra.mxu0 %v802
    %833 = vmatmul.f32.gmra.mxu0 %v806
    %v834 = vpop.f32.mrf.mxu0
    %v835 = vadd.f32 0.0, %v834
    %836 = vmatmul.f32.gmra.mxu0 %v809
    %v837 = vpop.f32.mrf.mxu0
    %v838 = vadd.f32 0.0, %v837
    %839 = vmatmul.f32.gmra.mxu0 %v812
    %v840 = vpop.f32.mrf.mxu0
    %v841 = vadd.f32 0.0, %v840
    %842 = vmatmul.f32.gmra.mxu0 %v815
    %v843 = vpop.f32.mrf.mxu0
    %v844 = vadd.f32 0.0, %v843
    %845 = vdwg.mxu0
    %v847 = vperm.slane %v388, 0
    %v849 = vadd.f32 %v847, %v835
    %v850 = vadd.f32 %v847, %v838
    %v851 = vadd.f32 %v847, %v841
    %v852 = vadd.f32 %v847, %v844
    %s853 = scalar_lea.vmem %s19, 16
    %v854 = vld [vmem:[%s853] sm:$0xff]
    %v855 = vld [vmem:[%s853 + $0x8] sm:$0xff]
    %856 = vmatpush.msra.mxu0 0.0
    %857 = vmatpush.msra.mxu0 0.0
    %858 = vmatpush.msra.mxu0 0.0
    %859 = vmatpush.msra.mxu0 0.0
    %860 = vmatpush.msra.mxu0 0.0
    %861 = vmatpush.msra.mxu0 0.0
    %862 = vmatpush.msra.mxu0 0.0
    %863 = vmatpush.msra.mxu0 0.0
    %864 = vmatpush.msra.mxu0 0.0
    %865 = vmatpush.msra.mxu0 0.0
    %866 = vmatpush.msra.mxu0 0.0
    %867 = vmatpush.msra.mxu0 0.0
    %868 = vmatpush.msra.mxu0 0.0
    %869 = vmatpush.msra.mxu0 0.0
    %870 = vmatpush.msra.mxu0 %v855
    %871 = vmatpush.msra.mxu0 %v854
    %872 = vmatmul.f32.gmra.mxu0 %v502
    %v873 = vpop.f32.mrf.mxu0
    %v874 = vadd.f32 0.0, %v873
    %875 = vmatmul.f32.gmra.mxu0 %v505
    %v876 = vpop.f32.mrf.mxu0
    %v877 = vadd.f32 0.0, %v876
    %878 = vmatmul.f32.gmra.mxu0 %v508
    %v879 = vpop.f32.mrf.mxu0
    %v880 = vadd.f32 0.0, %v879
    %881 = vmatmul.f32.gmra.mxu0 %v511
    %v882 = vpop.f32.mrf.mxu0
    %v883 = vadd.f32 0.0, %v882
    %884 = vdwg.mxu0
    %v885 = vmul.f32 %v874, 0.20412415
    %v886 = vmul.f32 %v877, 0.20412415
    %v887 = vmul.f32 %v880, 0.20412415
    %v888 = vmul.f32 %v883, 0.20412415
    %s889 = scalar_lea.vmem %s19, 80
    %v890 = vld [vmem:[%s889] sm:$0xff]
    %v891 = vld [vmem:[%s889 + $0x8] sm:$0xff]
    %892 = vmatpush.msra.mxu0 0.0
    %893 = vmatpush.msra.mxu0 0.0
    %894 = vmatpush.msra.mxu0 0.0
    %895 = vmatpush.msra.mxu0 0.0
    %896 = vmatpush.msra.mxu0 0.0
    %897 = vmatpush.msra.mxu0 0.0
    %898 = vmatpush.msra.mxu0 0.0
    %899 = vmatpush.msra.mxu0 0.0
    %900 = vmatpush.msra.mxu0 0.0
    %901 = vmatpush.msra.mxu0 0.0
    %902 = vmatpush.msra.mxu0 0.0
    %903 = vmatpush.msra.mxu0 0.0
    %904 = vmatpush.msra.mxu0 0.0
    %905 = vmatpush.msra.mxu0 0.0
    %906 = vmatpush.msra.mxu0 %v891
    %907 = vmatpush.msra.mxu0 %v890
    %908 = vmatmul.f32.gmra.mxu0 %v502
    %v909 = vpop.f32.mrf.mxu0
    %v910 = vadd.f32 0.0, %v909
    %911 = vmatmul.f32.gmra.mxu0 %v505
    %v912 = vpop.f32.mrf.mxu0
    %v913 = vadd.f32 0.0, %v912
    %914 = vmatmul.f32.gmra.mxu0 %v508
    %v915 = vpop.f32.mrf.mxu0
    %v916 = vadd.f32 0.0, %v915
    %917 = vmatmul.f32.gmra.mxu0 %v511
    %v918 = vpop.f32.mrf.mxu0
    %v919 = vadd.f32 0.0, %v918
    %920 = vdwg.mxu0
    %s921 = scalar_lea.vmem %s19, 144
    %v922 = vld [vmem:[%s921] sm:$0xff]
    %v923 = vld [vmem:[%s921 + $0x8] sm:$0xff]
    %924 = vmatpush.msra.mxu0 0.0
    %925 = vmatpush.msra.mxu0 0.0
    %926 = vmatpush.msra.mxu0 0.0
    %927 = vmatpush.msra.mxu0 0.0
    %928 = vmatpush.msra.mxu0 0.0
    %929 = vmatpush.msra.mxu0 0.0
    %930 = vmatpush.msra.mxu0 0.0
    %931 = vmatpush.msra.mxu0 0.0
    %932 = vmatpush.msra.mxu0 0.0
    %933 = vmatpush.msra.mxu0 0.0
    %934 = vmatpush.msra.mxu0 0.0
    %935 = vmatpush.msra.mxu0 0.0
    %936 = vmatpush.msra.mxu0 0.0
    %937 = vmatpush.msra.mxu0 0.0
    %938 = vmatpush.msra.mxu0 %v923
    %939 = vmatpush.msra.mxu0 %v922
    %940 = vmatmul.f32.gmra.mxu0 %v502
    %v941 = vpop.f32.mrf.mxu0
    %v942 = vadd.f32 0.0, %v941
    %943 = vmatmul.f32.gmra.mxu0 %v505
    %v944 = vpop.f32.mrf.mxu0
    %v945 = vadd.f32 0.0, %v944
    %946 = vmatmul.f32.gmra.mxu0 %v508
    %v947 = vpop.f32.mrf.mxu0
    %v948 = vadd.f32 0.0, %v947
    %949 = vmatmul.f32.gmra.mxu0 %v511
    %v950 = vpop.f32.mrf.mxu0
    %v951 = vadd.f32 0.0, %v950
    %952 = vdwg.mxu0
    %v954 = vsel %vm610, %v885, 0
    %v957 = vsel %vm610, %v886, 0
    %v960 = vsel %vm610, %v887, 0
    %v963 = vsel %vm610, %v888, 0
    %v966 = vsel %vm610, %v910, 0
    %v969 = vsel %vm610, %v913, 0
    %v972 = vsel %vm610, %v916, 0
    %v975 = vsel %vm610, %v919, 0
    %977 = vmatpush.xpose.msra.mxu0 0.0
    %978 = vmatpush.xpose.msra.mxu0 0.0
    %979 = vmatpush.xpose.msra.mxu0 0.0
    %980 = vmatpush.xpose.msra.mxu0 0.0
    %981 = vmatpush.xpose.msra.mxu0 0.0
    %982 = vmatpush.xpose.msra.mxu0 0.0
    %983 = vmatpush.xpose.msra.mxu0 0.0
    %984 = vmatpush.xpose.msra.mxu0 0.0
    %985 = vmatpush.xpose.msra.mxu0 0.0
    %986 = vmatpush.xpose.msra.mxu0 0.0
    %987 = vmatpush.xpose.msra.mxu0 0.0
    %988 = vmatpush.xpose.msra.mxu0 0.0
    %989 = vmatpush.xpose.msra.mxu0 %v975
    %990 = vmatpush.xpose.msra.mxu0 %v972
    %991 = vmatpush.xpose.msra.mxu0 %v969
    %992 = vmatpush.xpose.msra.mxu0 %v966
    %993 = vmatmul.f32.gmra.mxu0 %v954
    %v994 = vpop.f32.mrf.mxu0
    %v995 = vadd.f32 %v314, %v994
    %996 = vmatmul.f32.gmra.mxu0 %v957
    %v997 = vpop.f32.mrf.mxu0
    %v998 = vadd.f32 %v315, %v997
    %999 = vmatmul.f32.gmra.mxu0 %v960
    %v1000 = vpop.f32.mrf.mxu0
    %v1001 = vadd.f32 %v316, %v1000
    %1002 = vmatmul.f32.gmra.mxu0 %v963
    %v1003 = vpop.f32.mrf.mxu0
    %v1004 = vadd.f32 %v317, %v1003
    %1005 = vdwg.mxu0
    %v1006 = vsel %vm664, %v995, -inf
    %1007 = vmax.xlane.f32.xlu0 %v1006
    %v1008 = vpop.xlane.xlu0 %1007
    %v1009 = vsel %vm664, %v998, -inf
    %1010 = vmax.xlane.f32.xlu0 %v1009
    %v1011 = vpop.xlane.xlu0 %1010
    %v1012 = vsel %vm664, %v1001, -inf
    %1013 = vmax.xlane.f32.xlu0 %v1012
    %v1014 = vpop.xlane.xlu0 %1013
    %v1015 = vsel %vm664, %v1004, -inf
    %1016 = vmax.xlane.f32.xlu0 %v1015
    %v1017 = vpop.xlane.xlu0 %1016
    %v1018 = vsub.f32 %v995, %v1008
    %v1019 = vsub.f32 %v998, %v1011
    %v1020 = vsub.f32 %v1001, %v1014
    %v1021 = vsub.f32 %v1004, %v1017
    %v1022 = vmul.f32 %v1018, 1.442695
    %v1023 = vpow.pop %v1022
    %v1024 = vmul.f32 %v1019, 1.442695
    %v1025 = vpow.pop %v1024
    %v1026 = vmul.f32 %v1020, 1.442695
    %v1027 = vpow.pop %v1026
    %v1028 = vmul.f32 %v1021, 1.442695
    %v1029 = vpow.pop %v1028
    %v1030 = vsel %vm664, %v1023, 0.0
    %1031 = vadd.xlane.f32.xlu0 %v1030
    %v1032 = vpop.xlane.xlu0 %1031
    %v1033 = vsel %vm664, %v1025, 0.0
    %1034 = vadd.xlane.f32.xlu0 %v1033
    %v1035 = vpop.xlane.xlu0 %1034
    %v1036 = vsel %vm664, %v1027, 0.0
    %1037 = vadd.xlane.f32.xlu0 %v1036
    %v1038 = vpop.xlane.xlu0 %1037
    %v1039 = vsel %vm664, %v1029, 0.0
    %1040 = vadd.xlane.f32.xlu0 %v1039
    %v1041 = vpop.xlane.xlu0 %1040
    %v1042 = vrcp.pop %v1032
    %v1043 = vmul.f32 %v1032, %v1042
    %v1044 = vsub.f32 1.0, %v1043
    %v1045 = vmul.f32 %v1042, %v1044
    %v1046 = vadd.f32 %v1042, %v1045
    %vm1047 = vweird.f32 %v1032
    %vm1048 = vweird.f32 %v1042
    %vm1049 = vmor %vm1047, %vm1048
    %v1050 = vsel %vm1049, %v1042, %v1046
    %v1051 = vand.u32 2147483647, %v1032
    %vm1052 = vcmp.eq.f32.partialorder %v1051, 8.507059e+37
    %v1053 = vand.u32 %v1032, 2147483648
    %v1054 = vor.u32 1.1754944e-38, %v1053
    %v1055 = vsel %vm1052, %v1054, %v1050
    %v1056 = vmul.f32 %v1023, %v1055
    %v1057 = vrcp.pop %v1035
    %v1058 = vmul.f32 %v1035, %v1057
    %v1059 = vsub.f32 1.0, %v1058
    %v1060 = vmul.f32 %v1057, %v1059
    %v1061 = vadd.f32 %v1057, %v1060
    %vm1062 = vweird.f32 %v1035
    %vm1063 = vweird.f32 %v1057
    %vm1064 = vmor %vm1062, %vm1063
    %v1065 = vsel %vm1064, %v1057, %v1061
    %v1066 = vand.u32 2147483647, %v1035
    %vm1067 = vcmp.eq.f32.partialorder %v1066, 8.507059e+37
    %v1068 = vand.u32 %v1035, 2147483648
    %v1069 = vor.u32 1.1754944e-38, %v1068
    %v1070 = vsel %vm1067, %v1069, %v1065
    %v1071 = vmul.f32 %v1025, %v1070
    %v1072 = vrcp.pop %v1038
    %v1073 = vmul.f32 %v1038, %v1072
    %v1074 = vsub.f32 1.0, %v1073
    %v1075 = vmul.f32 %v1072, %v1074
    %v1076 = vadd.f32 %v1072, %v1075
    %vm1077 = vweird.f32 %v1038
    %vm1078 = vweird.f32 %v1072
    %vm1079 = vmor %vm1077, %vm1078
    %v1080 = vsel %vm1079, %v1072, %v1076
    %v1081 = vand.u32 2147483647, %v1038
    %vm1082 = vcmp.eq.f32.partialorder %v1081, 8.507059e+37
    %v1083 = vand.u32 %v1038, 2147483648
    %v1084 = vor.u32 1.1754944e-38, %v1083
    %v1085 = vsel %vm1082, %v1084, %v1080
    %v1086 = vmul.f32 %v1027, %v1085
    %v1087 = vrcp.pop %v1041
    %v1088 = vmul.f32 %v1041, %v1087
    %v1089 = vsub.f32 1.0, %v1088
    %v1090 = vmul.f32 %v1087, %v1089
    %v1091 = vadd.f32 %v1087, %v1090
    %vm1092 = vweird.f32 %v1041
    %vm1093 = vweird.f32 %v1087
    %vm1094 = vmor %vm1092, %vm1093
    %v1095 = vsel %vm1094, %v1087, %v1091
    %v1096 = vand.u32 2147483647, %v1041
    %vm1097 = vcmp.eq.f32.partialorder %v1096, 8.507059e+37
    %v1098 = vand.u32 %v1041, 2147483648
    %v1099 = vor.u32 1.1754944e-38, %v1098
    %v1100 = vsel %vm1097, %v1099, %v1095
    %v1101 = vmul.f32 %v1029, %v1100
    %v1103 = vsel %vm664, %v1056, 0
    %v1106 = vsel %vm664, %v1071, 0
    %v1109 = vsel %vm664, %v1086, 0
    %v1112 = vsel %vm664, %v1101, 0
    %1114 = vmatpush.msra.mxu0 0.0
    %1115 = vmatpush.msra.mxu0 0.0
    %1116 = vmatpush.msra.mxu0 0.0
    %1117 = vmatpush.msra.mxu0 0.0
    %1118 = vmatpush.msra.mxu0 0.0
    %1119 = vmatpush.msra.mxu0 0.0
    %1120 = vmatpush.msra.mxu0 0.0
    %1121 = vmatpush.msra.mxu0 0.0
    %1122 = vmatpush.msra.mxu0 0.0
    %1123 = vmatpush.msra.mxu0 0.0
    %1124 = vmatpush.msra.mxu0 0.0
    %1125 = vmatpush.msra.mxu0 0.0
    %1126 = vmatpush.msra.mxu0 %v951
    %1127 = vmatpush.msra.mxu0 %v948
    %1128 = vmatpush.msra.mxu0 %v945
    %1129 = vmatpush.msra.mxu0 %v942
    %1130 = vmatmul.f32.gmra.mxu0 %v1103
    %v1131 = vpop.f32.mrf.mxu0
    %v1132 = vadd.f32 0.0, %v1131
    %1133 = vmatmul.f32.gmra.mxu0 %v1106
    %v1134 = vpop.f32.mrf.mxu0
    %v1135 = vadd.f32 0.0, %v1134
    %1136 = vmatmul.f32.gmra.mxu0 %v1109
    %v1137 = vpop.f32.mrf.mxu0
    %v1138 = vadd.f32 0.0, %v1137
    %1139 = vmatmul.f32.gmra.mxu0 %v1112
    %v1140 = vpop.f32.mrf.mxu0
    %v1141 = vadd.f32 0.0, %v1140
    %1142 = vdwg.mxu0
    %s1143 = scalar_lea.vmem %s21, 24
    %v1144 = vld [vmem:[%s1143] sm:$0xff]
    %v1145 = vld [vmem:[%s1143 + $0x8] sm:$0xff]
    %v1146 = vld [vmem:[%s1143 + $0x10] sm:$0xff]
    %v1148 = vsel %vm610, %v1132, 0
    %v1151 = vsel %vm610, %v1135, 0
    %v1154 = vsel %vm610, %v1138, 0
    %v1157 = vsel %vm610, %v1141, 0
    %1159 = vmatpush.msra.mxu0 0.0
    %1160 = vmatpush.msra.mxu0 0.0
    %1161 = vmatpush.msra.mxu0 0.0
    %1162 = vmatpush.msra.mxu0 0.0
    %1163 = vmatpush.msra.mxu0 0.0
    %1164 = vmatpush.msra.mxu0 0.0
    %1165 = vmatpush.msra.mxu0 0.0
    %1166 = vmatpush.msra.mxu0 0.0
    %1167 = vmatpush.msra.mxu0 0.0
    %1168 = vmatpush.msra.mxu0 0.0
    %1169 = vmatpush.msra.mxu0 0.0
    %1170 = vmatpush.msra.mxu0 0.0
    %1171 = vmatpush.msra.mxu0 0.0
    %1172 = vmatpush.msra.mxu0 %v1146
    %1173 = vmatpush.msra.mxu0 %v1145
    %1174 = vmatpush.msra.mxu0 %v1144
    %1175 = vmatmul.f32.gmra.mxu0 %v1148
    %v1176 = vpop.f32.mrf.mxu0
    %v1177 = vadd.f32 0.0, %v1176
    %1178 = vmatmul.f32.gmra.mxu0 %v1151
    %v1179 = vpop.f32.mrf.mxu0
    %v1180 = vadd.f32 0.0, %v1179
    %1181 = vmatmul.f32.gmra.mxu0 %v1154
    %v1182 = vpop.f32.mrf.mxu0
    %v1183 = vadd.f32 0.0, %v1182
    %1184 = vmatmul.f32.gmra.mxu0 %v1157
    %v1185 = vpop.f32.mrf.mxu0
    %v1186 = vadd.f32 0.0, %v1185
    %1187 = vdwg.mxu0
    %v1188 = vadd.f32 %v849, %v1177
    %v1189 = vadd.f32 %v850, %v1180
    %v1190 = vadd.f32 %v851, %v1183
    %v1191 = vadd.f32 %v852, %v1186
    %s1192 = scalar_lea.vmem %s19, 32
    %v1193 = vld [vmem:[%s1192] sm:$0xff]
    %v1194 = vld [vmem:[%s1192 + $0x8] sm:$0xff]
    %1195 = vmatpush.msra.mxu0 0.0
    %1196 = vmatpush.msra.mxu0 0.0
    %1197 = vmatpush.msra.mxu0 0.0
    %1198 = vmatpush.msra.mxu0 0.0
    %1199 = vmatpush.msra.mxu0 0.0
    %1200 = vmatpush.msra.mxu0 0.0
    %1201 = vmatpush.msra.mxu0 0.0
    %1202 = vmatpush.msra.mxu0 0.0
    %1203 = vmatpush.msra.mxu0 0.0
    %1204 = vmatpush.msra.mxu0 0.0
    %1205 = vmatpush.msra.mxu0 0.0
    %1206 = vmatpush.msra.mxu0 0.0
    %1207 = vmatpush.msra.mxu0 0.0
    %1208 = vmatpush.msra.mxu0 0.0
    %1209 = vmatpush.msra.mxu0 %v1194
    %1210 = vmatpush.msra.mxu0 %v1193
    %1211 = vmatmul.f32.gmra.mxu0 %v502
    %v1212 = vpop.f32.mrf.mxu0
    %v1213 = vadd.f32 0.0, %v1212
    %1214 = vmatmul.f32.gmra.mxu0 %v505
    %v1215 = vpop.f32.mrf.mxu0
    %v1216 = vadd.f32 0.0, %v1215
    %1217 = vmatmul.f32.gmra.mxu0 %v508
    %v1218 = vpop.f32.mrf.mxu0
    %v1219 = vadd.f32 0.0, %v1218
    %1220 = vmatmul.f32.gmra.mxu0 %v511
    %v1221 = vpop.f32.mrf.mxu0
    %v1222 = vadd.f32 0.0, %v1221
    %1223 = vdwg.mxu0
    %v1224 = vmul.f32 %v1213, 0.20412415
    %v1225 = vmul.f32 %v1216, 0.20412415
    %v1226 = vmul.f32 %v1219, 0.20412415
    %v1227 = vmul.f32 %v1222, 0.20412415
    %s1228 = scalar_lea.vmem %s19, 96
    %v1229 = vld [vmem:[%s1228] sm:$0xff]
    %v1230 = vld [vmem:[%s1228 + $0x8] sm:$0xff]
    %1231 = vmatpush.msra.mxu0 0.0
    %1232 = vmatpush.msra.mxu0 0.0
    %1233 = vmatpush.msra.mxu0 0.0
    %1234 = vmatpush.msra.mxu0 0.0
    %1235 = vmatpush.msra.mxu0 0.0
    %1236 = vmatpush.msra.mxu0 0.0
    %1237 = vmatpush.msra.mxu0 0.0
    %1238 = vmatpush.msra.mxu0 0.0
    %1239 = vmatpush.msra.mxu0 0.0
    %1240 = vmatpush.msra.mxu0 0.0
    %1241 = vmatpush.msra.mxu0 0.0
    %1242 = vmatpush.msra.mxu0 0.0
    %1243 = vmatpush.msra.mxu0 0.0
    %1244 = vmatpush.msra.mxu0 0.0
    %1245 = vmatpush.msra.mxu0 %v1230
    %1246 = vmatpush.msra.mxu0 %v1229
    %1247 = vmatmul.f32.gmra.mxu0 %v502
    %v1248 = vpop.f32.mrf.mxu0
    %v1249 = vadd.f32 0.0, %v1248
    %1250 = vmatmul.f32.gmra.mxu0 %v505
    %v1251 = vpop.f32.mrf.mxu0
    %v1252 = vadd.f32 0.0, %v1251
    %1253 = vmatmul.f32.gmra.mxu0 %v508
    %v1254 = vpop.f32.mrf.mxu0
    %v1255 = vadd.f32 0.0, %v1254
    %1256 = vmatmul.f32.gmra.mxu0 %v511
    %v1257 = vpop.f32.mrf.mxu0
    %v1258 = vadd.f32 0.0, %v1257
    %1259 = vdwg.mxu0
    %s1260 = scalar_lea.vmem %s19, 160
    %v1261 = vld [vmem:[%s1260] sm:$0xff]
    %v1262 = vld [vmem:[%s1260 + $0x8] sm:$0xff]
    %1263 = vmatpush.msra.mxu0 0.0
    %1264 = vmatpush.msra.mxu0 0.0
    %1265 = vmatpush.msra.mxu0 0.0
    %1266 = vmatpush.msra.mxu0 0.0
    %1267 = vmatpush.msra.mxu0 0.0
    %1268 = vmatpush.msra.mxu0 0.0
    %1269 = vmatpush.msra.mxu0 0.0
    %1270 = vmatpush.msra.mxu0 0.0
    %1271 = vmatpush.msra.mxu0 0.0
    %1272 = vmatpush.msra.mxu0 0.0
    %1273 = vmatpush.msra.mxu0 0.0
    %1274 = vmatpush.msra.mxu0 0.0
    %1275 = vmatpush.msra.mxu0 0.0
    %1276 = vmatpush.msra.mxu0 0.0
    %1277 = vmatpush.msra.mxu0 %v1262
    %1278 = vmatpush.msra.mxu0 %v1261
    %1279 = vmatmul.f32.gmra.mxu0 %v502
    %v1280 = vpop.f32.mrf.mxu0
    %v1281 = vadd.f32 0.0, %v1280
    %1282 = vmatmul.f32.gmra.mxu0 %v505
    %v1283 = vpop.f32.mrf.mxu0
    %v1284 = vadd.f32 0.0, %v1283
    %1285 = vmatmul.f32.gmra.mxu0 %v508
    %v1286 = vpop.f32.mrf.mxu0
    %v1287 = vadd.f32 0.0, %v1286
    %1288 = vmatmul.f32.gmra.mxu0 %v511
    %v1289 = vpop.f32.mrf.mxu0
    %v1290 = vadd.f32 0.0, %v1289
    %1291 = vdwg.mxu0
    %v1293 = vsel %vm610, %v1224, 0
    %v1296 = vsel %vm610, %v1225, 0
    %v1299 = vsel %vm610, %v1226, 0
    %v1302 = vsel %vm610, %v1227, 0
    %v1305 = vsel %vm610, %v1249, 0
    %v1308 = vsel %vm610, %v1252, 0
    %v1311 = vsel %vm610, %v1255, 0
    %v1314 = vsel %vm610, %v1258, 0
    %1316 = vmatpush.xpose.msra.mxu0 0.0
    %1317 = vmatpush.xpose.msra.mxu0 0.0
    %1318 = vmatpush.xpose.msra.mxu0 0.0
    %1319 = vmatpush.xpose.msra.mxu0 0.0
    %1320 = vmatpush.xpose.msra.mxu0 0.0
    %1321 = vmatpush.xpose.msra.mxu0 0.0
    %1322 = vmatpush.xpose.msra.mxu0 0.0
    %1323 = vmatpush.xpose.msra.mxu0 0.0
    %1324 = vmatpush.xpose.msra.mxu0 0.0
    %1325 = vmatpush.xpose.msra.mxu0 0.0
    %1326 = vmatpush.xpose.msra.mxu0 0.0
    %1327 = vmatpush.xpose.msra.mxu0 0.0
    %1328 = vmatpush.xpose.msra.mxu0 %v1314
    %1329 = vmatpush.xpose.msra.mxu0 %v1311
    %1330 = vmatpush.xpose.msra.mxu0 %v1308
    %1331 = vmatpush.xpose.msra.mxu0 %v1305
    %1332 = vmatmul.f32.gmra.mxu0 %v1293
    %v1333 = vpop.f32.mrf.mxu0
    %v1334 = vadd.f32 %v314, %v1333
    %1335 = vmatmul.f32.gmra.mxu0 %v1296
    %v1336 = vpop.f32.mrf.mxu0
    %v1337 = vadd.f32 %v315, %v1336
    %1338 = vmatmul.f32.gmra.mxu0 %v1299
    %v1339 = vpop.f32.mrf.mxu0
    %v1340 = vadd.f32 %v316, %v1339
    %1341 = vmatmul.f32.gmra.mxu0 %v1302
    %v1342 = vpop.f32.mrf.mxu0
    %v1343 = vadd.f32 %v317, %v1342
    %1344 = vdwg.mxu0
    %v1345 = vsel %vm664, %v1334, -inf
    %1346 = vmax.xlane.f32.xlu0 %v1345
    %v1347 = vpop.xlane.xlu0 %1346
    %v1348 = vsel %vm664, %v1337, -inf
    %1349 = vmax.xlane.f32.xlu0 %v1348
    %v1350 = vpop.xlane.xlu0 %1349
    %v1351 = vsel %vm664, %v1340, -inf
    %1352 = vmax.xlane.f32.xlu0 %v1351
    %v1353 = vpop.xlane.xlu0 %1352
    %v1354 = vsel %vm664, %v1343, -inf
    %1355 = vmax.xlane.f32.xlu0 %v1354
    %v1356 = vpop.xlane.xlu0 %1355
    %v1357 = vsub.f32 %v1334, %v1347
    %v1358 = vsub.f32 %v1337, %v1350
    %v1359 = vsub.f32 %v1340, %v1353
    %v1360 = vsub.f32 %v1343, %v1356
    %v1361 = vmul.f32 %v1357, 1.442695
    %v1362 = vpow.pop %v1361
    %v1363 = vmul.f32 %v1358, 1.442695
    %v1364 = vpow.pop %v1363
    %v1365 = vmul.f32 %v1359, 1.442695
    %v1366 = vpow.pop %v1365
    %v1367 = vmul.f32 %v1360, 1.442695
    %v1368 = vpow.pop %v1367
    %v1369 = vsel %vm664, %v1362, 0.0
    %1370 = vadd.xlane.f32.xlu0 %v1369
    %v1371 = vpop.xlane.xlu0 %1370
    %v1372 = vsel %vm664, %v1364, 0.0
    %1373 = vadd.xlane.f32.xlu0 %v1372
    %v1374 = vpop.xlane.xlu0 %1373
    %v1375 = vsel %vm664, %v1366, 0.0
    %1376 = vadd.xlane.f32.xlu0 %v1375
    %v1377 = vpop.xlane.xlu0 %1376
    %v1378 = vsel %vm664, %v1368, 0.0
    %1379 = vadd.xlane.f32.xlu0 %v1378
    %v1380 = vpop.xlane.xlu0 %1379
    %v1381 = vrcp.pop %v1371
    %v1382 = vmul.f32 %v1371, %v1381
    %v1383 = vsub.f32 1.0, %v1382
    %v1384 = vmul.f32 %v1381, %v1383
    %v1385 = vadd.f32 %v1381, %v1384
    %vm1386 = vweird.f32 %v1371
    %vm1387 = vweird.f32 %v1381
    %vm1388 = vmor %vm1386, %vm1387
    %v1389 = vsel %vm1388, %v1381, %v1385
    %v1390 = vand.u32 2147483647, %v1371
    %vm1391 = vcmp.eq.f32.partialorder %v1390, 8.507059e+37
    %v1392 = vand.u32 %v1371, 2147483648
    %v1393 = vor.u32 1.1754944e-38, %v1392
    %v1394 = vsel %vm1391, %v1393, %v1389
    %v1395 = vmul.f32 %v1362, %v1394
    %v1396 = vrcp.pop %v1374
    %v1397 = vmul.f32 %v1374, %v1396
    %v1398 = vsub.f32 1.0, %v1397
    %v1399 = vmul.f32 %v1396, %v1398
    %v1400 = vadd.f32 %v1396, %v1399
    %vm1401 = vweird.f32 %v1374
    %vm1402 = vweird.f32 %v1396
    %vm1403 = vmor %vm1401, %vm1402
    %v1404 = vsel %vm1403, %v1396, %v1400
    %v1405 = vand.u32 2147483647, %v1374
    %vm1406 = vcmp.eq.f32.partialorder %v1405, 8.507059e+37
    %v1407 = vand.u32 %v1374, 2147483648
    %v1408 = vor.u32 1.1754944e-38, %v1407
    %v1409 = vsel %vm1406, %v1408, %v1404
    %v1410 = vmul.f32 %v1364, %v1409
    %v1411 = vrcp.pop %v1377
    %v1412 = vmul.f32 %v1377, %v1411
    %v1413 = vsub.f32 1.0, %v1412
    %v1414 = vmul.f32 %v1411, %v1413
    %v1415 = vadd.f32 %v1411, %v1414
    %vm1416 = vweird.f32 %v1377
    %vm1417 = vweird.f32 %v1411
    %vm1418 = vmor %vm1416, %vm1417
    %v1419 = vsel %vm1418, %v1411, %v1415
    %v1420 = vand.u32 2147483647, %v1377
    %vm1421 = vcmp.eq.f32.partialorder %v1420, 8.507059e+37
    %v1422 = vand.u32 %v1377, 2147483648
    %v1423 = vor.u32 1.1754944e-38, %v1422
    %v1424 = vsel %vm1421, %v1423, %v1419
    %v1425 = vmul.f32 %v1366, %v1424
    %v1426 = vrcp.pop %v1380
    %v1427 = vmul.f32 %v1380, %v1426
    %v1428 = vsub.f32 1.0, %v1427
    %v1429 = vmul.f32 %v1426, %v1428
    %v1430 = vadd.f32 %v1426, %v1429
    %vm1431 = vweird.f32 %v1380
    %vm1432 = vweird.f32 %v1426
    %vm1433 = vmor %vm1431, %vm1432
    %v1434 = vsel %vm1433, %v1426, %v1430
    %v1435 = vand.u32 2147483647, %v1380
    %vm1436 = vcmp.eq.f32.partialorder %v1435, 8.507059e+37
    %v1437 = vand.u32 %v1380, 2147483648
    %v1438 = vor.u32 1.1754944e-38, %v1437
    %v1439 = vsel %vm1436, %v1438, %v1434
    %v1440 = vmul.f32 %v1368, %v1439
    %v1442 = vsel %vm664, %v1395, 0
    %v1445 = vsel %vm664, %v1410, 0
    %v1448 = vsel %vm664, %v1425, 0
    %v1451 = vsel %vm664, %v1440, 0
    %1453 = vmatpush.msra.mxu0 0.0
    %1454 = vmatpush.msra.mxu0 0.0
    %1455 = vmatpush.msra.mxu0 0.0
    %1456 = vmatpush.msra.mxu0 0.0
    %1457 = vmatpush.msra.mxu0 0.0
    %1458 = vmatpush.msra.mxu0 0.0
    %1459 = vmatpush.msra.mxu0 0.0
    %1460 = vmatpush.msra.mxu0 0.0
    %1461 = vmatpush.msra.mxu0 0.0
    %1462 = vmatpush.msra.mxu0 0.0
    %1463 = vmatpush.msra.mxu0 0.0
    %1464 = vmatpush.msra.mxu0 0.0
    %1465 = vmatpush.msra.mxu0 %v1290
    %1466 = vmatpush.msra.mxu0 %v1287
    %1467 = vmatpush.msra.mxu0 %v1284
    %1468 = vmatpush.msra.mxu0 %v1281
    %1469 = vmatmul.f32.gmra.mxu0 %v1442
    %v1470 = vpop.f32.mrf.mxu0
    %v1471 = vadd.f32 0.0, %v1470
    %1472 = vmatmul.f32.gmra.mxu0 %v1445
    %v1473 = vpop.f32.mrf.mxu0
    %v1474 = vadd.f32 0.0, %v1473
    %1475 = vmatmul.f32.gmra.mxu0 %v1448
    %v1476 = vpop.f32.mrf.mxu0
    %v1477 = vadd.f32 0.0, %v1476
    %1478 = vmatmul.f32.gmra.mxu0 %v1451
    %v1479 = vpop.f32.mrf.mxu0
    %v1480 = vadd.f32 0.0, %v1479
    %1481 = vdwg.mxu0
    %s1482 = scalar_lea.vmem %s21, 48
    %v1483 = vld [vmem:[%s1482] sm:$0xff]
    %v1484 = vld [vmem:[%s1482 + $0x8] sm:$0xff]
    %v1485 = vld [vmem:[%s1482 + $0x10] sm:$0xff]
    %v1487 = vsel %vm610, %v1471, 0
    %v1490 = vsel %vm610, %v1474, 0
    %v1493 = vsel %vm610, %v1477, 0
    %v1496 = vsel %vm610, %v1480, 0
    %1498 = vmatpush.msra.mxu0 0.0
    %1499 = vmatpush.msra.mxu0 0.0
    %1500 = vmatpush.msra.mxu0 0.0
    %1501 = vmatpush.msra.mxu0 0.0
    %1502 = vmatpush.msra.mxu0 0.0
    %1503 = vmatpush.msra.mxu0 0.0
    %1504 = vmatpush.msra.mxu0 0.0
    %1505 = vmatpush.msra.mxu0 0.0
    %1506 = vmatpush.msra.mxu0 0.0
    %1507 = vmatpush.msra.mxu0 0.0
    %1508 = vmatpush.msra.mxu0 0.0
    %1509 = vmatpush.msra.mxu0 0.0
    %1510 = vmatpush.msra.mxu0 0.0
    %1511 = vmatpush.msra.mxu0 %v1485
    %1512 = vmatpush.msra.mxu0 %v1484
    %1513 = vmatpush.msra.mxu0 %v1483
    %1514 = vmatmul.f32.gmra.mxu0 %v1487
    %v1515 = vpop.f32.mrf.mxu0
    %v1516 = vadd.f32 0.0, %v1515
    %1517 = vmatmul.f32.gmra.mxu0 %v1490
    %v1518 = vpop.f32.mrf.mxu0
    %v1519 = vadd.f32 0.0, %v1518
    %1520 = vmatmul.f32.gmra.mxu0 %v1493
    %v1521 = vpop.f32.mrf.mxu0
    %v1522 = vadd.f32 0.0, %v1521
    %1523 = vmatmul.f32.gmra.mxu0 %v1496
    %v1524 = vpop.f32.mrf.mxu0
    %v1525 = vadd.f32 0.0, %v1524
    %1526 = vdwg.mxu0
    %v1527 = vadd.f32 %v1188, %v1516
    %v1528 = vadd.f32 %v1189, %v1519
    %v1529 = vadd.f32 %v1190, %v1522
    %v1530 = vadd.f32 %v1191, %v1525
    %s1531 = scalar_lea.vmem %s19, 48
    %v1532 = vld [vmem:[%s1531] sm:$0xff]
    %v1533 = vld [vmem:[%s1531 + $0x8] sm:$0xff]
    %1534 = vmatpush.msra.mxu0 0.0
    %1535 = vmatpush.msra.mxu0 0.0
    %1536 = vmatpush.msra.mxu0 0.0
    %1537 = vmatpush.msra.mxu0 0.0
    %1538 = vmatpush.msra.mxu0 0.0
    %1539 = vmatpush.msra.mxu0 0.0
    %1540 = vmatpush.msra.mxu0 0.0
    %1541 = vmatpush.msra.mxu0 0.0
    %1542 = vmatpush.msra.mxu0 0.0
    %1543 = vmatpush.msra.mxu0 0.0
    %1544 = vmatpush.msra.mxu0 0.0
    %1545 = vmatpush.msra.mxu0 0.0
    %1546 = vmatpush.msra.mxu0 0.0
    %1547 = vmatpush.msra.mxu0 0.0
    %1548 = vmatpush.msra.mxu0 %v1533
    %1549 = vmatpush.msra.mxu0 %v1532
    %1550 = vmatmul.f32.gmra.mxu0 %v502
    %v1551 = vpop.f32.mrf.mxu0
    %v1552 = vadd.f32 0.0, %v1551
    %1553 = vmatmul.f32.gmra.mxu0 %v505
    %v1554 = vpop.f32.mrf.mxu0
    %v1555 = vadd.f32 0.0, %v1554
    %1556 = vmatmul.f32.gmra.mxu0 %v508
    %v1557 = vpop.f32.mrf.mxu0
    %v1558 = vadd.f32 0.0, %v1557
    %1559 = vmatmul.f32.gmra.mxu0 %v511
    %v1560 = vpop.f32.mrf.mxu0
    %v1561 = vadd.f32 0.0, %v1560
    %1562 = vdwg.mxu0
    %v1563 = vmul.f32 %v1552, 0.20412415
    %v1564 = vmul.f32 %v1555, 0.20412415
    %v1565 = vmul.f32 %v1558, 0.20412415
    %v1566 = vmul.f32 %v1561, 0.20412415
    %s1567 = scalar_lea.vmem %s19, 112
    %v1568 = vld [vmem:[%s1567] sm:$0xff]
    %v1569 = vld [vmem:[%s1567 + $0x8] sm:$0xff]
    %1570 = vmatpush.msra.mxu0 0.0
    %1571 = vmatpush.msra.mxu0 0.0
    %1572 = vmatpush.msra.mxu0 0.0
    %1573 = vmatpush.msra.mxu0 0.0
    %1574 = vmatpush.msra.mxu0 0.0
    %1575 = vmatpush.msra.mxu0 0.0
    %1576 = vmatpush.msra.mxu0 0.0
    %1577 = vmatpush.msra.mxu0 0.0
    %1578 = vmatpush.msra.mxu0 0.0
    %1579 = vmatpush.msra.mxu0 0.0
    %1580 = vmatpush.msra.mxu0 0.0
    %1581 = vmatpush.msra.mxu0 0.0
    %1582 = vmatpush.msra.mxu0 0.0
    %1583 = vmatpush.msra.mxu0 0.0
    %1584 = vmatpush.msra.mxu0 %v1569
    %1585 = vmatpush.msra.mxu0 %v1568
    %1586 = vmatmul.f32.gmra.mxu0 %v502
    %v1587 = vpop.f32.mrf.mxu0
    %v1588 = vadd.f32 0.0, %v1587
    %1589 = vmatmul.f32.gmra.mxu0 %v505
    %v1590 = vpop.f32.mrf.mxu0
    %v1591 = vadd.f32 0.0, %v1590
    %1592 = vmatmul.f32.gmra.mxu0 %v508
    %v1593 = vpop.f32.mrf.mxu0
    %v1594 = vadd.f32 0.0, %v1593
    %1595 = vmatmul.f32.gmra.mxu0 %v511
    %v1596 = vpop.f32.mrf.mxu0
    %v1597 = vadd.f32 0.0, %v1596
    %1598 = vdwg.mxu0
    %s1599 = scalar_lea.vmem %s19, 176
    %v1600 = vld [vmem:[%s1599] sm:$0xff]
    %v1601 = vld [vmem:[%s1599 + $0x8] sm:$0xff]
    %1602 = vmatpush.msra.mxu0 0.0
    %1603 = vmatpush.msra.mxu0 0.0
    %1604 = vmatpush.msra.mxu0 0.0
    %1605 = vmatpush.msra.mxu0 0.0
    %1606 = vmatpush.msra.mxu0 0.0
    %1607 = vmatpush.msra.mxu0 0.0
    %1608 = vmatpush.msra.mxu0 0.0
    %1609 = vmatpush.msra.mxu0 0.0
    %1610 = vmatpush.msra.mxu0 0.0
    %1611 = vmatpush.msra.mxu0 0.0
    %1612 = vmatpush.msra.mxu0 0.0
    %1613 = vmatpush.msra.mxu0 0.0
    %1614 = vmatpush.msra.mxu0 0.0
    %1615 = vmatpush.msra.mxu0 0.0
    %1616 = vmatpush.msra.mxu0 %v1601
    %1617 = vmatpush.msra.mxu0 %v1600
    %1618 = vmatmul.f32.gmra.mxu0 %v502
    %v1619 = vpop.f32.mrf.mxu0
    %v1620 = vadd.f32 0.0, %v1619
    %1621 = vmatmul.f32.gmra.mxu0 %v505
    %v1622 = vpop.f32.mrf.mxu0
    %v1623 = vadd.f32 0.0, %v1622
    %1624 = vmatmul.f32.gmra.mxu0 %v508
    %v1625 = vpop.f32.mrf.mxu0
    %v1626 = vadd.f32 0.0, %v1625
    %1627 = vmatmul.f32.gmra.mxu0 %v511
    %v1628 = vpop.f32.mrf.mxu0
    %v1629 = vadd.f32 0.0, %v1628
    %1630 = vdwg.mxu0
    %v1632 = vsel %vm610, %v1563, 0
    %v1635 = vsel %vm610, %v1564, 0
    %v1638 = vsel %vm610, %v1565, 0
    %v1641 = vsel %vm610, %v1566, 0
    %v1644 = vsel %vm610, %v1588, 0
    %v1647 = vsel %vm610, %v1591, 0
    %v1650 = vsel %vm610, %v1594, 0
    %v1653 = vsel %vm610, %v1597, 0
    %1655 = vmatpush.xpose.msra.mxu0 0.0
    %1656 = vmatpush.xpose.msra.mxu0 0.0
    %1657 = vmatpush.xpose.msra.mxu0 0.0
    %1658 = vmatpush.xpose.msra.mxu0 0.0
    %1659 = vmatpush.xpose.msra.mxu0 0.0
    %1660 = vmatpush.xpose.msra.mxu0 0.0
    %1661 = vmatpush.xpose.msra.mxu0 0.0
    %1662 = vmatpush.xpose.msra.mxu0 0.0
    %1663 = vmatpush.xpose.msra.mxu0 0.0
    %1664 = vmatpush.xpose.msra.mxu0 0.0
    %1665 = vmatpush.xpose.msra.mxu0 0.0
    %1666 = vmatpush.xpose.msra.mxu0 0.0
    %1667 = vmatpush.xpose.msra.mxu0 %v1653
    %1668 = vmatpush.xpose.msra.mxu0 %v1650
    %1669 = vmatpush.xpose.msra.mxu0 %v1647
    %1670 = vmatpush.xpose.msra.mxu0 %v1644
    %1671 = vmatmul.f32.gmra.mxu0 %v1632
    %v1672 = vpop.f32.mrf.mxu0
    %v1673 = vadd.f32 %v314, %v1672
    %1674 = vmatmul.f32.gmra.mxu0 %v1635
    %v1675 = vpop.f32.mrf.mxu0
    %v1676 = vadd.f32 %v315, %v1675
    %1677 = vmatmul.f32.gmra.mxu0 %v1638
    %v1678 = vpop.f32.mrf.mxu0
    %v1679 = vadd.f32 %v316, %v1678
    %1680 = vmatmul.f32.gmra.mxu0 %v1641
    %v1681 = vpop.f32.mrf.mxu0
    %v1682 = vadd.f32 %v317, %v1681
    %1683 = vdwg.mxu0
    %v1684 = vsel %vm664, %v1673, -inf
    %1685 = vmax.xlane.f32.xlu0 %v1684
    %v1686 = vpop.xlane.xlu0 %1685
    %v1687 = vsel %vm664, %v1676, -inf
    %1688 = vmax.xlane.f32.xlu0 %v1687
    %v1689 = vpop.xlane.xlu0 %1688
    %v1690 = vsel %vm664, %v1679, -inf
    %1691 = vmax.xlane.f32.xlu0 %v1690
    %v1692 = vpop.xlane.xlu0 %1691
    %v1693 = vsel %vm664, %v1682, -inf
    %1694 = vmax.xlane.f32.xlu0 %v1693
    %v1695 = vpop.xlane.xlu0 %1694
    %v1696 = vsub.f32 %v1673, %v1686
    %v1697 = vsub.f32 %v1676, %v1689
    %v1698 = vsub.f32 %v1679, %v1692
    %v1699 = vsub.f32 %v1682, %v1695
    %v1700 = vmul.f32 %v1696, 1.442695
    %v1701 = vpow.pop %v1700
    %v1702 = vmul.f32 %v1697, 1.442695
    %v1703 = vpow.pop %v1702
    %v1704 = vmul.f32 %v1698, 1.442695
    %v1705 = vpow.pop %v1704
    %v1706 = vmul.f32 %v1699, 1.442695
    %v1707 = vpow.pop %v1706
    %v1708 = vsel %vm664, %v1701, 0.0
    %1709 = vadd.xlane.f32.xlu0 %v1708
    %v1710 = vpop.xlane.xlu0 %1709
    %v1711 = vsel %vm664, %v1703, 0.0
    %1712 = vadd.xlane.f32.xlu0 %v1711
    %v1713 = vpop.xlane.xlu0 %1712
    %v1714 = vsel %vm664, %v1705, 0.0
    %1715 = vadd.xlane.f32.xlu0 %v1714
    %v1716 = vpop.xlane.xlu0 %1715
    %v1717 = vsel %vm664, %v1707, 0.0
    %1718 = vadd.xlane.f32.xlu0 %v1717
    %v1719 = vpop.xlane.xlu0 %1718
    %v1720 = vrcp.pop %v1710
    %v1721 = vmul.f32 %v1710, %v1720
    %v1722 = vsub.f32 1.0, %v1721
    %v1723 = vmul.f32 %v1720, %v1722
    %v1724 = vadd.f32 %v1720, %v1723
    %vm1725 = vweird.f32 %v1710
    %vm1726 = vweird.f32 %v1720
    %vm1727 = vmor %vm1725, %vm1726
    %v1728 = vsel %vm1727, %v1720, %v1724
    %v1729 = vand.u32 2147483647, %v1710
    %vm1730 = vcmp.eq.f32.partialorder %v1729, 8.507059e+37
    %v1731 = vand.u32 %v1710, 2147483648
    %v1732 = vor.u32 1.1754944e-38, %v1731
    %v1733 = vsel %vm1730, %v1732, %v1728
    %v1734 = vmul.f32 %v1701, %v1733
    %v1735 = vrcp.pop %v1713
    %v1736 = vmul.f32 %v1713, %v1735
    %v1737 = vsub.f32 1.0, %v1736
    %v1738 = vmul.f32 %v1735, %v1737
    %v1739 = vadd.f32 %v1735, %v1738
    %vm1740 = vweird.f32 %v1713
    %vm1741 = vweird.f32 %v1735
    %vm1742 = vmor %vm1740, %vm1741
    %v1743 = vsel %vm1742, %v1735, %v1739
    %v1744 = vand.u32 2147483647, %v1713
    %vm1745 = vcmp.eq.f32.partialorder %v1744, 8.507059e+37
    %v1746 = vand.u32 %v1713, 2147483648
    %v1747 = vor.u32 1.1754944e-38, %v1746
    %v1748 = vsel %vm1745, %v1747, %v1743
    %v1749 = vmul.f32 %v1703, %v1748
    %v1750 = vrcp.pop %v1716
    %v1751 = vmul.f32 %v1716, %v1750
    %v1752 = vsub.f32 1.0, %v1751
    %v1753 = vmul.f32 %v1750, %v1752
    %v1754 = vadd.f32 %v1750, %v1753
    %vm1755 = vweird.f32 %v1716
    %vm1756 = vweird.f32 %v1750
    %vm1757 = vmor %vm1755, %vm1756
    %v1758 = vsel %vm1757, %v1750, %v1754
    %v1759 = vand.u32 2147483647, %v1716
    %vm1760 = vcmp.eq.f32.partialorder %v1759, 8.507059e+37
    %v1761 = vand.u32 %v1716, 2147483648
    %v1762 = vor.u32 1.1754944e-38, %v1761
    %v1763 = vsel %vm1760, %v1762, %v1758
    %v1764 = vmul.f32 %v1705, %v1763
    %v1765 = vrcp.pop %v1719
    %v1766 = vmul.f32 %v1719, %v1765
    %v1767 = vsub.f32 1.0, %v1766
    %v1768 = vmul.f32 %v1765, %v1767
    %v1769 = vadd.f32 %v1765, %v1768
    %vm1770 = vweird.f32 %v1719
    %vm1771 = vweird.f32 %v1765
    %vm1772 = vmor %vm1770, %vm1771
    %v1773 = vsel %vm1772, %v1765, %v1769
    %v1774 = vand.u32 2147483647, %v1719
    %vm1775 = vcmp.eq.f32.partialorder %v1774, 8.507059e+37
    %v1776 = vand.u32 %v1719, 2147483648
    %v1777 = vor.u32 1.1754944e-38, %v1776
    %v1778 = vsel %vm1775, %v1777, %v1773
    %v1779 = vmul.f32 %v1707, %v1778
    %v1781 = vsel %vm664, %v1734, 0
    %v1784 = vsel %vm664, %v1749, 0
    %v1787 = vsel %vm664, %v1764, 0
    %v1790 = vsel %vm664, %v1779, 0
    %1792 = vmatpush.msra.mxu0 0.0
    %1793 = vmatpush.msra.mxu0 0.0
    %1794 = vmatpush.msra.mxu0 0.0
    %1795 = vmatpush.msra.mxu0 0.0
    %1796 = vmatpush.msra.mxu0 0.0
    %1797 = vmatpush.msra.mxu0 0.0
    %1798 = vmatpush.msra.mxu0 0.0
    %1799 = vmatpush.msra.mxu0 0.0
    %1800 = vmatpush.msra.mxu0 0.0
    %1801 = vmatpush.msra.mxu0 0.0
    %1802 = vmatpush.msra.mxu0 0.0
    %1803 = vmatpush.msra.mxu0 0.0
    %1804 = vmatpush.msra.mxu0 %v1629
    %1805 = vmatpush.msra.mxu0 %v1626
    %1806 = vmatpush.msra.mxu0 %v1623
    %1807 = vmatpush.msra.mxu0 %v1620
    %1808 = vmatmul.f32.gmra.mxu0 %v1781
    %v1809 = vpop.f32.mrf.mxu0
    %v1810 = vadd.f32 0.0, %v1809
    %1811 = vmatmul.f32.gmra.mxu0 %v1784
    %v1812 = vpop.f32.mrf.mxu0
    %v1813 = vadd.f32 0.0, %v1812
    %1814 = vmatmul.f32.gmra.mxu0 %v1787
    %v1815 = vpop.f32.mrf.mxu0
    %v1816 = vadd.f32 0.0, %v1815
    %1817 = vmatmul.f32.gmra.mxu0 %v1790
    %v1818 = vpop.f32.mrf.mxu0
    %v1819 = vadd.f32 0.0, %v1818
    %1820 = vdwg.mxu0
    %s1821 = scalar_lea.vmem %s21, 72
    %v1822 = vld [vmem:[%s1821] sm:$0xff]
    %v1823 = vld [vmem:[%s1821 + $0x8] sm:$0xff]
    %v1824 = vld [vmem:[%s1821 + $0x10] sm:$0xff]
    %v1826 = vsel %vm610, %v1810, 0
    %v1829 = vsel %vm610, %v1813, 0
    %v1832 = vsel %vm610, %v1816, 0
    %v1835 = vsel %vm610, %v1819, 0
    %1837 = vmatpush.msra.mxu0 0.0
    %1838 = vmatpush.msra.mxu0 0.0
    %1839 = vmatpush.msra.mxu0 0.0
    %1840 = vmatpush.msra.mxu0 0.0
    %1841 = vmatpush.msra.mxu0 0.0
    %1842 = vmatpush.msra.mxu0 0.0
    %1843 = vmatpush.msra.mxu0 0.0
    %1844 = vmatpush.msra.mxu0 0.0
    %1845 = vmatpush.msra.mxu0 0.0
    %1846 = vmatpush.msra.mxu0 0.0
    %1847 = vmatpush.msra.mxu0 0.0
    %1848 = vmatpush.msra.mxu0 0.0
    %1849 = vmatpush.msra.mxu0 0.0
    %1850 = vmatpush.msra.mxu0 %v1824
    %1851 = vmatpush.msra.mxu0 %v1823
    %1852 = vmatpush.msra.mxu0 %v1822
    %1853 = vmatmul.f32.gmra.mxu0 %v1826
    %v1854 = vpop.f32.mrf.mxu0
    %v1855 = vadd.f32 0.0, %v1854
    %1856 = vmatmul.f32.gmra.mxu0 %v1829
    %v1857 = vpop.f32.mrf.mxu0
    %v1858 = vadd.f32 0.0, %v1857
    %1859 = vmatmul.f32.gmra.mxu0 %v1832
    %v1860 = vpop.f32.mrf.mxu0
    %v1861 = vadd.f32 0.0, %v1860
    %1862 = vmatmul.f32.gmra.mxu0 %v1835
    %v1863 = vpop.f32.mrf.mxu0
    %v1864 = vadd.f32 0.0, %v1863
    %1865 = vdwg.mxu0
    %v1866 = vadd.f32 %v1527, %v1855
    %v1867 = vadd.f32 %v1528, %v1858
    %v1868 = vadd.f32 %v1529, %v1861
    %v1869 = vadd.f32 %v1530, %v1864
    %v1870 = vadd.f32 %v380, %v1866
    %v1871 = vadd.f32 %v381, %v1867
    %v1872 = vadd.f32 %v382, %v1868
    %v1873 = vadd.f32 %v383, %v1869
    %v1874 = vld [vmem:[%s25] sm:$0x1]
    %v1875 = vld [vmem:[%s27] sm:$0x1]
    %v1876 = vld [vmem:[%s29] sm:$0xff]
    %v1877 = vld [vmem:[%s29 + $0x8] sm:$0xff]
    %v1878 = vld [vmem:[%s31] sm:$0x1]
    %v1879 = vld [vmem:[%s33] sm:$0xff]
    %v1880 = vld [vmem:[%s33 + $0x8] sm:$0xff]
    %v1881 = vld [vmem:[%s33 + $0x10] sm:$0xff]
    %v1882 = vld [vmem:[%s33 + $0x18] sm:$0xff]
    %v1883 = vld [vmem:[%s33 + $0x20] sm:$0xff]
    %v1884 = vld [vmem:[%s33 + $0x28] sm:$0xff]
    %v1885 = vld [vmem:[%s33 + $0x30] sm:$0xff]
    %v1886 = vld [vmem:[%s33 + $0x38] sm:$0xff]
    %v1887 = vld [vmem:[%s35] sm:$0x1]
    %v1888 = vsel %vm389, %v1870, 0.0
    %1889 = vadd.xlane.f32.xlu0 %v1888
    %v1890 = vpop.xlane.xlu0 %1889
    %v1891 = vsel %vm389, %v1871, 0.0
    %1892 = vadd.xlane.f32.xlu0 %v1891
    %v1893 = vpop.xlane.xlu0 %1892
    %v1894 = vsel %vm389, %v1872, 0.0
    %1895 = vadd.xlane.f32.xlu0 %v1894
    %v1896 = vpop.xlane.xlu0 %1895
    %v1897 = vsel %vm389, %v1873, 0.0
    %1898 = vadd.xlane.f32.xlu0 %v1897
    %v1899 = vpop.xlane.xlu0 %1898
    %v1900 = vmul.f32 %v1890, %v408
    %v1901 = vmul.f32 %v1893, %v408
    %v1902 = vmul.f32 %v1896, %v408
    %v1903 = vmul.f32 %v1899, %v408
    %v1904 = vsub.f32 %v1870, %v1900
    %v1905 = vsub.f32 %v1871, %v1901
    %v1906 = vsub.f32 %v1872, %v1902
    %v1907 = vsub.f32 %v1873, %v1903
    %v1908 = vmul.f32 %v1904, %v1904
    %v1909 = vmul.f32 %v1905, %v1905
    %v1910 = vmul.f32 %v1906, %v1906
    %v1911 = vmul.f32 %v1907, %v1907
    %v1912 = vsel %vm389, %v1908, 0.0
    %1913 = vadd.xlane.f32.xlu0 %v1912
    %v1914 = vpop.xlane.xlu0 %1913
    %v1915 = vsel %vm389, %v1909, 0.0
    %1916 = vadd.xlane.f32.xlu0 %v1915
    %v1917 = vpop.xlane.xlu0 %1916
    %v1918 = vsel %vm389, %v1910, 0.0
    %1919 = vadd.xlane.f32.xlu0 %v1918
    %v1920 = vpop.xlane.xlu0 %1919
    %v1921 = vsel %vm389, %v1911, 0.0
    %1922 = vadd.xlane.f32.xlu0 %v1921
    %v1923 = vpop.xlane.xlu0 %1922
    %v1924 = vmul.f32 %v1914, %v408
    %v1925 = vmul.f32 %v1917, %v408
    %v1926 = vmul.f32 %v1920, %v408
    %v1927 = vmul.f32 %v1923, %v408
    %v1928 = vadd.f32 %v1924, 1e-05
    %v1929 = vadd.f32 %v1925, 1e-05
    %v1930 = vadd.f32 %v1926, 1e-05
    %v1931 = vadd.f32 %v1927, 1e-05
    %v1932 = vrsqrt.pop %v1928
    %v1933 = vmul.f32 %v1932, %v1928
    %v1934 = vmul.f32 %v1933, %v1932
    %v1935 = vmul.f32 0.5, %v1934
    %v1936 = vsub.f32 1.5, %v1935
    %v1937 = vmul.f32 %v1932, %v1936
    %vm1938 = vweird.f32 %v1928
    %vm1939 = vweird.f32 %v1932
    %vm1940 = vmor %vm1938, %vm1939
    %v1941 = vsel %vm1940, %v1932, %v1937
    %v1942 = vrsqrt.pop %v1929
    %v1943 = vmul.f32 %v1942, %v1929
    %v1944 = vmul.f32 %v1943, %v1942
    %v1945 = vmul.f32 0.5, %v1944
    %v1946 = vsub.f32 1.5, %v1945
    %v1947 = vmul.f32 %v1942, %v1946
    %vm1948 = vweird.f32 %v1929
    %vm1949 = vweird.f32 %v1942
    %vm1950 = vmor %vm1948, %vm1949
    %v1951 = vsel %vm1950, %v1942, %v1947
    %v1952 = vrsqrt.pop %v1930
    %v1953 = vmul.f32 %v1952, %v1930
    %v1954 = vmul.f32 %v1953, %v1952
    %v1955 = vmul.f32 0.5, %v1954
    %v1956 = vsub.f32 1.5, %v1955
    %v1957 = vmul.f32 %v1952, %v1956
    %vm1958 = vweird.f32 %v1930
    %vm1959 = vweird.f32 %v1952
    %vm1960 = vmor %vm1958, %vm1959
    %v1961 = vsel %vm1960, %v1952, %v1957
    %v1962 = vrsqrt.pop %v1931
    %v1963 = vmul.f32 %v1962, %v1931
    %v1964 = vmul.f32 %v1963, %v1962
    %v1965 = vmul.f32 0.5, %v1964
    %v1966 = vsub.f32 1.5, %v1965
    %v1967 = vmul.f32 %v1962, %v1966
    %vm1968 = vweird.f32 %v1931
    %vm1969 = vweird.f32 %v1962
    %vm1970 = vmor %vm1968, %vm1969
    %v1971 = vsel %vm1970, %v1962, %v1967
    %v1972 = vmul.f32 %v1904, %v1941
    %v1973 = vmul.f32 %v1905, %v1951
    %v1974 = vmul.f32 %v1906, %v1961
    %v1975 = vmul.f32 %v1907, %v1971
    %v1977 = vperm.slane %v1874, 0
    %v1979 = vmul.f32 %v1972, %v1977
    %v1980 = vmul.f32 %v1973, %v1977
    %v1981 = vmul.f32 %v1974, %v1977
    %v1982 = vmul.f32 %v1975, %v1977
    %v1984 = vperm.slane %v1875, 0
    %v1986 = vadd.f32 %v1979, %v1984
    %v1987 = vadd.f32 %v1980, %v1984
    %v1988 = vadd.f32 %v1981, %v1984
    %v1989 = vadd.f32 %v1982, %v1984
    %v1991 = vperm.slane %v1878, 0
    %v1994 = vsel %vm389, %v1986, 0
    %v1997 = vsel %vm389, %v1987, 0
    %v2000 = vsel %vm389, %v1988, 0
    %v2003 = vsel %vm389, %v1989, 0
    %2005 = vmatpush.msra.mxu0 0.0
    %2006 = vmatpush.msra.mxu0 0.0
    %2007 = vmatpush.msra.mxu0 0.0
    %2008 = vmatpush.msra.mxu0 0.0
    %2009 = vmatpush.msra.mxu0 0.0
    %2010 = vmatpush.msra.mxu0 0.0
    %2011 = vmatpush.msra.mxu0 0.0
    %2012 = vmatpush.msra.mxu0 0.0
    %2013 = vmatpush.msra.mxu0 0.0
    %2014 = vmatpush.msra.mxu0 0.0
    %2015 = vmatpush.msra.mxu0 0.0
    %2016 = vmatpush.msra.mxu0 0.0
    %2017 = vmatpush.msra.mxu0 0.0
    %2018 = vmatpush.msra.mxu0 0.0
    %2019 = vmatpush.msra.mxu0 %v1877
    %2020 = vmatpush.msra.mxu0 %v1876
    %2021 = vmatmul.f32.gmra.mxu0 %v1994
    %v2022 = vpop.f32.mrf.mxu0
    %v2023 = vadd.f32 %v1991, %v2022
    %2024 = vmatmul.f32.gmra.mxu0 %v1997
    %v2025 = vpop.f32.mrf.mxu0
    %v2026 = vadd.f32 %v1991, %v2025
    %2027 = vmatmul.f32.gmra.mxu0 %v2000
    %v2028 = vpop.f32.mrf.mxu0
    %v2029 = vadd.f32 %v1991, %v2028
    %2030 = vmatmul.f32.gmra.mxu0 %v2003
    %v2031 = vpop.f32.mrf.mxu0
    %v2032 = vadd.f32 %v1991, %v2031
    %2033 = vdwg.mxu0
    %v2034 = vmul.f32 %v2023, 0.5
    %v2035 = vmul.f32 %v2026, 0.5
    %v2036 = vmul.f32 %v2029, 0.5
    %v2037 = vmul.f32 %v2032, 0.5
    %v2038 = vmul.f32 %v2023, 0.70710677
    %v2039 = vmul.f32 %v2026, 0.70710677
    %v2040 = vmul.f32 %v2029, 0.70710677
    %v2041 = vmul.f32 %v2032, 0.70710677
    %v2042 = vmul.f32 %v2038, %v2038
    %v2043 = vmin.f32 16.0, %v2042
    %v2044 = vmul.f32 %v2043, 2.1237322e-06
    %v2045 = vadd.f32 %v2044, 0.00028619796
    %v2046 = vmul.f32 %v2043, %v2045
    %v2047 = vadd.f32 %v2046, 0.0036580483
    %v2048 = vmul.f32 %v2043, %v2047
    %v2049 = vadd.f32 %v2048, 0.05243302
    %v2050 = vmul.f32 %v2043, %v2049
    %v2051 = vadd.f32 %v2050, 0.18741608
    %v2052 = vmul.f32 %v2043, %v2051
    %v2053 = vadd.f32 %v2052, 1.1283791
    %v2054 = vmul.f32 %v2038, %v2053
    %v2055 = vmul.f32 %v2043, 3.8918573e-05
    %v2056 = vadd.f32 %v2055, 0.001143296
    %v2057 = vmul.f32 %v2043, %v2056
    %v2058 = vadd.f32 %v2057, 0.014752088
    %v2059 = vmul.f32 %v2043, %v2058
    %v2060 = vadd.f32 %v2059, 0.112945676
    %v2061 = vmul.f32 %v2043, %v2060
    %v2062 = vadd.f32 %v2061, 0.4994258
    %v2063 = vmul.f32 %v2043, %v2062
    %v2064 = vadd.f32 %v2063, 1.0
    %v2065 = vrcp.pop %v2064
    %v2066 = vmul.f32 %v2064, %v2065
    %v2067 = vsub.f32 1.0, %v2066
    %v2068 = vmul.f32 %v2065, %v2067
    %v2069 = vadd.f32 %v2065, %v2068
    %vm2070 = vweird.f32 %v2064
    %vm2071 = vweird.f32 %v2065
    %vm2072 = vmor %vm2070, %vm2071
    %v2073 = vsel %vm2072, %v2065, %v2069
    %v2074 = vand.u32 2147483647, %v2064
    %vm2075 = vcmp.eq.f32.partialorder %v2074, 8.507059e+37
    %v2076 = vand.u32 %v2064, 2147483648
    %v2077 = vor.u32 1.1754944e-38, %v2076
    %v2078 = vsel %vm2075, %v2077, %v2073
    %v2079 = vmul.f32 %v2054, %v2078
    %v2080 = vmin.f32 %v2079, 1.0
    %v2081 = vmax.f32 %v2080, -1.0
    %v2082 = vmul.f32 %v2039, %v2039
    %v2083 = vmin.f32 16.0, %v2082
    %v2084 = vmul.f32 %v2083, 2.1237322e-06
    %v2085 = vadd.f32 %v2084, 0.00028619796
    %v2086 = vmul.f32 %v2083, %v2085
    %v2087 = vadd.f32 %v2086, 0.0036580483
    %v2088 = vmul.f32 %v2083, %v2087
    %v2089 = vadd.f32 %v2088, 0.05243302
    %v2090 = vmul.f32 %v2083, %v2089
    %v2091 = vadd.f32 %v2090, 0.18741608
    %v2092 = vmul.f32 %v2083, %v2091
    %v2093 = vadd.f32 %v2092, 1.1283791
    %v2094 = vmul.f32 %v2039, %v2093
    %v2095 = vmul.f32 %v2083, 3.8918573e-05
    %v2096 = vadd.f32 %v2095, 0.001143296
    %v2097 = vmul.f32 %v2083, %v2096
    %v2098 = vadd.f32 %v2097, 0.014752088
    %v2099 = vmul.f32 %v2083, %v2098
    %v2100 = vadd.f32 %v2099, 0.112945676
    %v2101 = vmul.f32 %v2083, %v2100
    %v2102 = vadd.f32 %v2101, 0.4994258
    %v2103 = vmul.f32 %v2083, %v2102
    %v2104 = vadd.f32 %v2103, 1.0
    %v2105 = vrcp.pop %v2104
    %v2106 = vmul.f32 %v2104, %v2105
    %v2107 = vsub.f32 1.0, %v2106
    %v2108 = vmul.f32 %v2105, %v2107
    %v2109 = vadd.f32 %v2105, %v2108
    %vm2110 = vweird.f32 %v2104
    %vm2111 = vweird.f32 %v2105
    %vm2112 = vmor %vm2110, %vm2111
    %v2113 = vsel %vm2112, %v2105, %v2109
    %v2114 = vand.u32 2147483647, %v2104
    %vm2115 = vcmp.eq.f32.partialorder %v2114, 8.507059e+37
    %v2116 = vand.u32 %v2104, 2147483648
    %v2117 = vor.u32 1.1754944e-38, %v2116
    %v2118 = vsel %vm2115, %v2117, %v2113
    %v2119 = vmul.f32 %v2094, %v2118
    %v2120 = vmin.f32 %v2119, 1.0
    %v2121 = vmax.f32 %v2120, -1.0
    %v2122 = vmul.f32 %v2040, %v2040
    %v2123 = vmin.f32 16.0, %v2122
    %v2124 = vmul.f32 %v2123, 2.1237322e-06
    %v2125 = vadd.f32 %v2124, 0.00028619796
    %v2126 = vmul.f32 %v2123, %v2125
    %v2127 = vadd.f32 %v2126, 0.0036580483
    %v2128 = vmul.f32 %v2123, %v2127
    %v2129 = vadd.f32 %v2128, 0.05243302
    %v2130 = vmul.f32 %v2123, %v2129
    %v2131 = vadd.f32 %v2130, 0.18741608
    %v2132 = vmul.f32 %v2123, %v2131
    %v2133 = vadd.f32 %v2132, 1.1283791
    %v2134 = vmul.f32 %v2040, %v2133
    %v2135 = vmul.f32 %v2123, 3.8918573e-05
    %v2136 = vadd.f32 %v2135, 0.001143296
    %v2137 = vmul.f32 %v2123, %v2136
    %v2138 = vadd.f32 %v2137, 0.014752088
    %v2139 = vmul.f32 %v2123, %v2138
    %v2140 = vadd.f32 %v2139, 0.112945676
    %v2141 = vmul.f32 %v2123, %v2140
    %v2142 = vadd.f32 %v2141, 0.4994258
    %v2143 = vmul.f32 %v2123, %v2142
    %v2144 = vadd.f32 %v2143, 1.0
    %v2145 = vrcp.pop %v2144
    %v2146 = vmul.f32 %v2144, %v2145
    %v2147 = vsub.f32 1.0, %v2146
    %v2148 = vmul.f32 %v2145, %v2147
    %v2149 = vadd.f32 %v2145, %v2148
    %vm2150 = vweird.f32 %v2144
    %vm2151 = vweird.f32 %v2145
    %vm2152 = vmor %vm2150, %vm2151
    %v2153 = vsel %vm2152, %v2145, %v2149
    %v2154 = vand.u32 2147483647, %v2144
    %vm2155 = vcmp.eq.f32.partialorder %v2154, 8.507059e+37
    %v2156 = vand.u32 %v2144, 2147483648
    %v2157 = vor.u32 1.1754944e-38, %v2156
    %v2158 = vsel %vm2155, %v2157, %v2153
    %v2159 = vmul.f32 %v2134, %v2158
    %v2160 = vmin.f32 %v2159, 1.0
    %v2161 = vmax.f32 %v2160, -1.0
    %v2162 = vmul.f32 %v2041, %v2041
    %v2163 = vmin.f32 16.0, %v2162
    %v2164 = vmul.f32 %v2163, 2.1237322e-06
    %v2165 = vadd.f32 %v2164, 0.00028619796
    %v2166 = vmul.f32 %v2163, %v2165
    %v2167 = vadd.f32 %v2166, 0.0036580483
    %v2168 = vmul.f32 %v2163, %v2167
    %v2169 = vadd.f32 %v2168, 0.05243302
    %v2170 = vmul.f32 %v2163, %v2169
    %v2171 = vadd.f32 %v2170, 0.18741608
    %v2172 = vmul.f32 %v2163, %v2171
    %v2173 = vadd.f32 %v2172, 1.1283791
    %v2174 = vmul.f32 %v2041, %v2173
    %v2175 = vmul.f32 %v2163, 3.8918573e-05
    %v2176 = vadd.f32 %v2175, 0.001143296
    %v2177 = vmul.f32 %v2163, %v2176
    %v2178 = vadd.f32 %v2177, 0.014752088
    %v2179 = vmul.f32 %v2163, %v2178
    %v2180 = vadd.f32 %v2179, 0.112945676
    %v2181 = vmul.f32 %v2163, %v2180
    %v2182 = vadd.f32 %v2181, 0.4994258
    %v2183 = vmul.f32 %v2163, %v2182
    %v2184 = vadd.f32 %v2183, 1.0
    %v2185 = vrcp.pop %v2184
    %v2186 = vmul.f32 %v2184, %v2185
    %v2187 = vsub.f32 1.0, %v2186
    %v2188 = vmul.f32 %v2185, %v2187
    %v2189 = vadd.f32 %v2185, %v2188
    %vm2190 = vweird.f32 %v2184
    %vm2191 = vweird.f32 %v2185
    %vm2192 = vmor %vm2190, %vm2191
    %v2193 = vsel %vm2192, %v2185, %v2189
    %v2194 = vand.u32 2147483647, %v2184
    %vm2195 = vcmp.eq.f32.partialorder %v2194, 8.507059e+37
    %v2196 = vand.u32 %v2184, 2147483648
    %v2197 = vor.u32 1.1754944e-38, %v2196
    %v2198 = vsel %vm2195, %v2197, %v2193
    %v2199 = vmul.f32 %v2174, %v2198
    %v2200 = vmin.f32 %v2199, 1.0
    %v2201 = vmax.f32 %v2200, -1.0
    %v2202 = vadd.f32 %v2081, 1.0
    %v2203 = vadd.f32 %v2121, 1.0
    %v2204 = vadd.f32 %v2161, 1.0
    %v2205 = vadd.f32 %v2201, 1.0
    %v2206 = vmul.f32 %v2034, %v2202
    %v2207 = vmul.f32 %v2035, %v2203
    %v2208 = vmul.f32 %v2036, %v2204
    %v2209 = vmul.f32 %v2037, %v2205
    %vm2210 = vcmask 523264
    %v2212 = vsel %vm2210, %v2206, 0
    %v2215 = vsel %vm2210, %v2207, 0
    %v2218 = vsel %vm2210, %v2208, 0
    %v2221 = vsel %vm2210, %v2209, 0
    %2223 = vmatpush.msra.mxu0 0.0
    %2224 = vmatpush.msra.mxu0 0.0
    %2225 = vmatpush.msra.mxu0 0.0
    %2226 = vmatpush.msra.mxu0 0.0
    %2227 = vmatpush.msra.mxu0 0.0
    %2228 = vmatpush.msra.mxu0 0.0
    %2229 = vmatpush.msra.mxu0 0.0
    %2230 = vmatpush.msra.mxu0 0.0
    %2231 = vmatpush.msra.mxu0 %v1886
    %2232 = vmatpush.msra.mxu0 %v1885
    %2233 = vmatpush.msra.mxu0 %v1884
    %2234 = vmatpush.msra.mxu0 %v1883
    %2235 = vmatpush.msra.mxu0 %v1882
    %2236 = vmatpush.msra.mxu0 %v1881
    %2237 = vmatpush.msra.mxu0 %v1880
    %2238 = vmatpush.msra.mxu0 %v1879
    %2239 = vmatmul.f32.gmra.mxu0 %v2212
    %v2240 = vpop.f32.mrf.mxu0
    %v2241 = vadd.f32 0.0, %v2240
    %2242 = vmatmul.f32.gmra.mxu0 %v2215
    %v2243 = vpop.f32.mrf.mxu0
    %v2244 = vadd.f32 0.0, %v2243
    %2245 = vmatmul.f32.gmra.mxu0 %v2218
    %v2246 = vpop.f32.mrf.mxu0
    %v2247 = vadd.f32 0.0, %v2246
    %2248 = vmatmul.f32.gmra.mxu0 %v2221
    %v2249 = vpop.f32.mrf.mxu0
    %v2250 = vadd.f32 0.0, %v2249
    %2251 = vdwg.mxu0
    %v2252 = vadd.f32 %v1870, %v2241
    %v2253 = vadd.f32 %v1871, %v2244
    %v2254 = vadd.f32 %v1872, %v2247
    %v2255 = vadd.f32 %v1873, %v2250
    %v2257 = vperm.slane %v1887, 0
    %v2259 = vadd.f32 %v2252, %v2257
    %v2260 = vadd.f32 %v2253, %v2257
    %v2261 = vadd.f32 %v2254, %v2257
    %v2262 = vadd.f32 %v2255, %v2257
    %v2263 = vld [vmem:[%s37] sm:$0x1]
    %v2264 = vld [vmem:[%s39] sm:$0x1]
    %v2265 = vsel %vm389, %v2259, 0.0
    %2266 = vadd.xlane.f32.xlu0 %v2265
    %v2267 = vpop.xlane.xlu0 %2266
    %v2268 = vsel %vm389, %v2260, 0.0
    %2269 = vadd.xlane.f32.xlu0 %v2268
    %v2270 = vpop.xlane.xlu0 %2269
    %v2271 = vsel %vm389, %v2261, 0.0
    %2272 = vadd.xlane.f32.xlu0 %v2271
    %v2273 = vpop.xlane.xlu0 %2272
    %v2274 = vsel %vm389, %v2262, 0.0
    %2275 = vadd.xlane.f32.xlu0 %v2274
    %v2276 = vpop.xlane.xlu0 %2275
    %v2277 = vmul.f32 %v2267, %v408
    %v2278 = vmul.f32 %v2270, %v408
    %v2279 = vmul.f32 %v2273, %v408
    %v2280 = vmul.f32 %v2276, %v408
    %v2281 = vsub.f32 %v2259, %v2277
    %v2282 = vsub.f32 %v2260, %v2278
    %v2283 = vsub.f32 %v2261, %v2279
    %v2284 = vsub.f32 %v2262, %v2280
    %v2285 = vmul.f32 %v2281, %v2281
    %v2286 = vmul.f32 %v2282, %v2282
    %v2287 = vmul.f32 %v2283, %v2283
    %v2288 = vmul.f32 %v2284, %v2284
    %v2289 = vsel %vm389, %v2285, 0.0
    %2290 = vadd.xlane.f32.xlu0 %v2289
    %v2291 = vpop.xlane.xlu0 %2290
    %v2292 = vsel %vm389, %v2286, 0.0
    %2293 = vadd.xlane.f32.xlu0 %v2292
    %v2294 = vpop.xlane.xlu0 %2293
    %v2295 = vsel %vm389, %v2287, 0.0
    %2296 = vadd.xlane.f32.xlu0 %v2295
    %v2297 = vpop.xlane.xlu0 %2296
    %v2298 = vsel %vm389, %v2288, 0.0
    %2299 = vadd.xlane.f32.xlu0 %v2298
    %v2300 = vpop.xlane.xlu0 %2299
    %v2301 = vmul.f32 %v2291, %v408
    %v2302 = vmul.f32 %v2294, %v408
    %v2303 = vmul.f32 %v2297, %v408
    %v2304 = vmul.f32 %v2300, %v408
    %v2305 = vadd.f32 %v2301, 1e-05
    %v2306 = vadd.f32 %v2302, 1e-05
    %v2307 = vadd.f32 %v2303, 1e-05
    %v2308 = vadd.f32 %v2304, 1e-05
    %v2309 = vrsqrt.pop %v2305
    %v2310 = vmul.f32 %v2309, %v2305
    %v2311 = vmul.f32 %v2310, %v2309
    %v2312 = vmul.f32 0.5, %v2311
    %v2313 = vsub.f32 1.5, %v2312
    %v2314 = vmul.f32 %v2309, %v2313
    %vm2315 = vweird.f32 %v2305
    %vm2316 = vweird.f32 %v2309
    %vm2317 = vmor %vm2315, %vm2316
    %v2318 = vsel %vm2317, %v2309, %v2314
    %v2319 = vrsqrt.pop %v2306
    %v2320 = vmul.f32 %v2319, %v2306
    %v2321 = vmul.f32 %v2320, %v2319
    %v2322 = vmul.f32 0.5, %v2321
    %v2323 = vsub.f32 1.5, %v2322
    %v2324 = vmul.f32 %v2319, %v2323
    %vm2325 = vweird.f32 %v2306
    %vm2326 = vweird.f32 %v2319
    %vm2327 = vmor %vm2325, %vm2326
    %v2328 = vsel %vm2327, %v2319, %v2324
    %v2329 = vrsqrt.pop %v2307
    %v2330 = vmul.f32 %v2329, %v2307
    %v2331 = vmul.f32 %v2330, %v2329
    %v2332 = vmul.f32 0.5, %v2331
    %v2333 = vsub.f32 1.5, %v2332
    %v2334 = vmul.f32 %v2329, %v2333
    %vm2335 = vweird.f32 %v2307
    %vm2336 = vweird.f32 %v2329
    %vm2337 = vmor %vm2335, %vm2336
    %v2338 = vsel %vm2337, %v2329, %v2334
    %v2339 = vrsqrt.pop %v2308
    %v2340 = vmul.f32 %v2339, %v2308
    %v2341 = vmul.f32 %v2340, %v2339
    %v2342 = vmul.f32 0.5, %v2341
    %v2343 = vsub.f32 1.5, %v2342
    %v2344 = vmul.f32 %v2339, %v2343
    %vm2345 = vweird.f32 %v2308
    %vm2346 = vweird.f32 %v2339
    %vm2347 = vmor %vm2345, %vm2346
    %v2348 = vsel %vm2347, %v2339, %v2344
    %v2349 = vmul.f32 %v2281, %v2318
    %v2350 = vmul.f32 %v2282, %v2328
    %v2351 = vmul.f32 %v2283, %v2338
    %v2352 = vmul.f32 %v2284, %v2348
    %v2354 = vperm.slane %v2263, 0
    %v2356 = vmul.f32 %v2349, %v2354
    %v2357 = vmul.f32 %v2350, %v2354
    %v2358 = vmul.f32 %v2351, %v2354
    %v2359 = vmul.f32 %v2352, %v2354
    %v2361 = vperm.slane %v2264, 0
    %v2363 = vadd.f32 %v2356, %v2361
    %v2364 = vadd.f32 %v2357, %v2361
    %v2365 = vadd.f32 %v2358, %v2361
    %v2366 = vadd.f32 %v2359, %v2361
    %v2367 = vld [vmem:[%s41] sm:$0xff]
    %v2368 = vld [vmem:[%s41 + $0x8] sm:$0xff]
    %s2369 = scalar_lea.vmem %s41, 16
    %v2370 = vld [vmem:[%s2369] sm:$0xff]
    %v2371 = vld [vmem:[%s2369 + $0x8] sm:$0xff]
    %v2373 = vsel %vm389, %v2364, 0
    %2375 = vmatpush.msra.mxu0 0.0
    %2376 = vmatpush.msra.mxu0 0.0
    %2377 = vmatpush.msra.mxu0 0.0
    %2378 = vmatpush.msra.mxu0 0.0
    %2379 = vmatpush.msra.mxu0 0.0
    %2380 = vmatpush.msra.mxu0 0.0
    %2381 = vmatpush.msra.mxu0 0.0
    %2382 = vmatpush.msra.mxu0 0.0
    %2383 = vmatpush.msra.mxu0 0.0
    %2384 = vmatpush.msra.mxu0 0.0
    %2385 = vmatpush.msra.mxu0 0.0
    %2386 = vmatpush.msra.mxu0 0.0
    %2387 = vmatpush.msra.mxu0 0.0
    %2388 = vmatpush.msra.mxu0 0.0
    %2389 = vmatpush.msra.mxu0 %v2371
    %2390 = vmatpush.msra.mxu0 %v2370
    %2391 = vmatmul.f32.gmra.mxu0 %v2373
    %v2392 = vpop.f32.mrf.mxu0
    %v2393 = vadd.f32 0.0, %v2392
    %2394 = vdwg.mxu0
    %v2396 = vsel %vm389, %v2363, 0
    %2398 = vmatpush.msra.mxu0 0.0
    %2399 = vmatpush.msra.mxu0 0.0
    %2400 = vmatpush.msra.mxu0 0.0
    %2401 = vmatpush.msra.mxu0 0.0
    %2402 = vmatpush.msra.mxu0 0.0
    %2403 = vmatpush.msra.mxu0 0.0
    %2404 = vmatpush.msra.mxu0 0.0
    %2405 = vmatpush.msra.mxu0 0.0
    %2406 = vmatpush.msra.mxu0 0.0
    %2407 = vmatpush.msra.mxu0 0.0
    %2408 = vmatpush.msra.mxu0 0.0
    %2409 = vmatpush.msra.mxu0 0.0
    %2410 = vmatpush.msra.mxu0 0.0
    %2411 = vmatpush.msra.mxu0 0.0
    %2412 = vmatpush.msra.mxu0 %v2368
    %2413 = vmatpush.msra.mxu0 %v2367
    %2414 = vmatmul.f32.gmra.mxu0 %v2396
    %v2415 = vpop.f32.mrf.mxu0
    %v2416 = vadd.f32 %v2393, %v2415
    %2417 = vdwg.mxu0
    %s2418 = scalar_lea.vmem %s41, 32
    %v2419 = vld [vmem:[%s2418] sm:$0xff]
    %v2420 = vld [vmem:[%s2418 + $0x8] sm:$0xff]
    %v2422 = vsel %vm389, %v2365, 0
    %2424 = vmatpush.msra.mxu0 0.0
    %2425 = vmatpush.msra.mxu0 0.0
    %2426 = vmatpush.msra.mxu0 0.0
    %2427 = vmatpush.msra.mxu0 0.0
    %2428 = vmatpush.msra.mxu0 0.0
    %2429 = vmatpush.msra.mxu0 0.0
    %2430 = vmatpush.msra.mxu0 0.0
    %2431 = vmatpush.msra.mxu0 0.0
    %2432 = vmatpush.msra.mxu0 0.0
    %2433 = vmatpush.msra.mxu0 0.0
    %2434 = vmatpush.msra.mxu0 0.0
    %2435 = vmatpush.msra.mxu0 0.0
    %2436 = vmatpush.msra.mxu0 0.0
    %2437 = vmatpush.msra.mxu0 0.0
    %2438 = vmatpush.msra.mxu0 %v2420
    %2439 = vmatpush.msra.mxu0 %v2419
    %2440 = vmatmul.f32.gmra.mxu0 %v2422
    %v2441 = vpop.f32.mrf.mxu0
    %v2442 = vadd.f32 0.0, %v2441
    %2443 = vdwg.mxu0
    %v2444 = vadd.f32 %v2416, %v2442
    %s2445 = scalar_lea.vmem %s41, 48
    %v2446 = vld [vmem:[%s2445] sm:$0xff]
    %v2447 = vld [vmem:[%s2445 + $0x8] sm:$0xff]
    %v2449 = vsel %vm389, %v2366, 0
    %2451 = vmatpush.msra.mxu0 0.0
    %2452 = vmatpush.msra.mxu0 0.0
    %2453 = vmatpush.msra.mxu0 0.0
    %2454 = vmatpush.msra.mxu0 0.0
    %2455 = vmatpush.msra.mxu0 0.0
    %2456 = vmatpush.msra.mxu0 0.0
    %2457 = vmatpush.msra.mxu0 0.0
    %2458 = vmatpush.msra.mxu0 0.0
    %2459 = vmatpush.msra.mxu0 0.0
    %2460 = vmatpush.msra.mxu0 0.0
    %2461 = vmatpush.msra.mxu0 0.0
    %2462 = vmatpush.msra.mxu0 0.0
    %2463 = vmatpush.msra.mxu0 0.0
    %2464 = vmatpush.msra.mxu0 0.0
    %2465 = vmatpush.msra.mxu0 %v2447
    %2466 = vmatpush.msra.mxu0 %v2446
    %2467 = vmatmul.f32.gmra.mxu0 %v2449
    %v2468 = vpop.f32.mrf.mxu0
    %v2469 = vadd.f32 0.0, %v2468
    %2470 = vdwg.mxu0
    %v2471 = vadd.f32 %v2444, %v2469
    %v2472 = vld [vmem:[%s43] sm:$0x1]
    %v2474 = vperm.slane %v2472, 0
    %v2476 = vadd.f32 %v2471, %v2474
    %v2478 = vrot.slane %v2476, 7
    %v2480 = vrot.slane %v2476, 6
    %vm2482 = vcmask 1040384
    %v2483 = vsel %vm2482, 0.0, %v2478
    %vm2484 = vcmask 1044480
    %v2485 = vsel %vm2484, %v2483, 0.0
    %vm2486 = vcmask 1045504
    %v2487 = vsel %vm2486, %v2485, %v2480
    %v2488 = vadd.f32 %v384, %v2487
    %v2489 = vadd.f32 %v385, %v2480
    %v2490 = vld [vmem:[%s45] sm:$0x1]
    %v2491 = vld [vmem:[%s47] sm:$0x1]
    %v2492 = vld [vmem:[%s53] sm:$0x1]
    %v2493 = vsel %vm664, %v2488, 0.0
    %2494 = vadd.xlane.f32.xlu0 %v2493
    %v2495 = vpop.xlane.xlu0 %2494
    %vm2496 = vcmask 254976
    %v2497 = vsel %vm2496, %v2489, 0.0
    %2498 = vadd.xlane.f32.xlu0 %v2497
    %v2499 = vpop.xlane.xlu0 %2498
    %v2500 = vrcp.pop 32.0
    %v2501 = vmul.f32 32.0, %v2500
    %v2502 = vsub.f32 1.0, %v2501
    %v2503 = vmul.f32 %v2500, %v2502
    %v2504 = vadd.f32 %v2500, %v2503
    %vm2505 = vweird.f32 %v2500
    %v2506 = vsel %vm2505, %v2500, %v2504
    %v2507 = vmul.f32 %v2495, %v2506
    %v2508 = vmul.f32 %v2499, %v2506
    %v2509 = vsub.f32 %v2488, %v2507
    %v2510 = vsub.f32 %v2489, %v2508
    %v2511 = vmul.f32 %v2509, %v2509
    %v2512 = vmul.f32 %v2510, %v2510
    %v2513 = vsel %vm664, %v2511, 0.0
    %2514 = vadd.xlane.f32.xlu0 %v2513
    %v2515 = vpop.xlane.xlu0 %2514
    %v2516 = vsel %vm2496, %v2512, 0.0
    %2517 = vadd.xlane.f32.xlu0 %v2516
    %v2518 = vpop.xlane.xlu0 %2517
    %v2519 = vmul.f32 %v2515, %v2506
    %v2520 = vmul.f32 %v2518, %v2506
    %v2521 = vadd.f32 %v2519, 1e-05
    %v2522 = vadd.f32 %v2520, 1e-05
    %v2523 = vrsqrt.pop %v2521
    %v2524 = vmul.f32 %v2523, %v2521
    %v2525 = vmul.f32 %v2524, %v2523
    %v2526 = vmul.f32 0.5, %v2525
    %v2527 = vsub.f32 1.5, %v2526
    %v2528 = vmul.f32 %v2523, %v2527
    %vm2529 = vweird.f32 %v2521
    %vm2530 = vweird.f32 %v2523
    %vm2531 = vmor %vm2529, %vm2530
    %v2532 = vsel %vm2531, %v2523, %v2528
    %v2533 = vrsqrt.pop %v2522
    %v2534 = vmul.f32 %v2533, %v2522
    %v2535 = vmul.f32 %v2534, %v2533
    %v2536 = vmul.f32 0.5, %v2535
    %v2537 = vsub.f32 1.5, %v2536
    %v2538 = vmul.f32 %v2533, %v2537
    %vm2539 = vweird.f32 %v2522
    %vm2540 = vweird.f32 %v2533
    %vm2541 = vmor %vm2539, %vm2540
    %v2542 = vsel %vm2541, %v2533, %v2538
    %v2543 = vmul.f32 %v2509, %v2532
    %v2544 = vmul.f32 %v2510, %v2542
    %v2546 = vperm.slane %v2490, 0
    %v2548 = vmul.f32 %v2543, %v2546
    %v2549 = vmul.f32 %v2544, %v2546
    %v2551 = vperm.slane %v2491, 0
    %v2553 = vadd.f32 %v2548, %v2551
    %v2554 = vadd.f32 %v2549, %v2551
    %v2555 = vld [vmem:[%s49] sm:$0xff]
    %v2556 = vld [vmem:[%s49 + $0x8] sm:$0xff]
    %v2557 = vld [vmem:[%s49 + $0x10] sm:$0xff]
    %v2558 = vld [vmem:[%s49 + $0x18] sm:$0xff]
    %v2560 = vsel %vm664, %v2553, 0
    %v2563 = vsel %vm664, %v2554, 0
    %2565 = vmatpush.msra.mxu0 0.0
    %2566 = vmatpush.msra.mxu0 0.0
    %2567 = vmatpush.msra.mxu0 0.0
    %2568 = vmatpush.msra.mxu0 0.0
    %2569 = vmatpush.msra.mxu0 0.0
    %2570 = vmatpush.msra.mxu0 0.0
    %2571 = vmatpush.msra.mxu0 0.0
    %2572 = vmatpush.msra.mxu0 0.0
    %2573 = vmatpush.msra.mxu0 0.0
    %2574 = vmatpush.msra.mxu0 0.0
    %2575 = vmatpush.msra.mxu0 0.0
    %2576 = vmatpush.msra.mxu0 0.0
    %2577 = vmatpush.msra.mxu0 %v2558
    %2578 = vmatpush.msra.mxu0 %v2557
    %2579 = vmatpush.msra.mxu0 %v2556
    %2580 = vmatpush.msra.mxu0 %v2555
    %2581 = vmatmul.f32.gmra.mxu0 %v2560
    %v2582 = vpop.f32.mrf.mxu0
    %v2583 = vadd.f32 0.0, %v2582
    %2584 = vmatmul.f32.gmra.mxu0 %v2563
    %v2585 = vpop.f32.mrf.mxu0
    %v2586 = vadd.f32 0.0, %v2585
    %2587 = vdwg.mxu0
    %v2588 = vmul.f32 %v2583, 0.125
    %v2589 = vmul.f32 %v2586, 0.125
    %s2590 = scalar_lea.vmem %s49, 192
    %v2591 = vld [vmem:[%s2590] sm:$0xff]
    %v2592 = vld [vmem:[%s2590 + $0x8] sm:$0xff]
    %v2593 = vld [vmem:[%s2590 + $0x10] sm:$0xff]
    %v2594 = vld [vmem:[%s2590 + $0x18] sm:$0xff]
    %2595 = vmatpush.msra.mxu0 0.0
    %2596 = vmatpush.msra.mxu0 0.0
    %2597 = vmatpush.msra.mxu0 0.0
    %2598 = vmatpush.msra.mxu0 0.0
    %2599 = vmatpush.msra.mxu0 0.0
    %2600 = vmatpush.msra.mxu0 0.0
    %2601 = vmatpush.msra.mxu0 0.0
    %2602 = vmatpush.msra.mxu0 0.0
    %2603 = vmatpush.msra.mxu0 0.0
    %2604 = vmatpush.msra.mxu0 0.0
    %2605 = vmatpush.msra.mxu0 0.0
    %2606 = vmatpush.msra.mxu0 0.0
    %2607 = vmatpush.msra.mxu0 %v2594
    %2608 = vmatpush.msra.mxu0 %v2593
    %2609 = vmatpush.msra.mxu0 %v2592
    %2610 = vmatpush.msra.mxu0 %v2591
    %2611 = vmatmul.f32.gmra.mxu0 %v2560
    %v2612 = vpop.f32.mrf.mxu0
    %v2613 = vadd.f32 0.0, %v2612
    %2614 = vmatmul.f32.gmra.mxu0 %v2563
    %v2615 = vpop.f32.mrf.mxu0
    %v2616 = vadd.f32 0.0, %v2615
    %2617 = vdwg.mxu0
    %s2618 = scalar_lea.vmem %s49, 384
    %v2619 = vld [vmem:[%s2618] sm:$0xff]
    %v2620 = vld [vmem:[%s2618 + $0x8] sm:$0xff]
    %v2621 = vld [vmem:[%s2618 + $0x10] sm:$0xff]
    %v2622 = vld [vmem:[%s2618 + $0x18] sm:$0xff]
    %2623 = vmatpush.msra.mxu0 0.0
    %2624 = vmatpush.msra.mxu0 0.0
    %2625 = vmatpush.msra.mxu0 0.0
    %2626 = vmatpush.msra.mxu0 0.0
    %2627 = vmatpush.msra.mxu0 0.0
    %2628 = vmatpush.msra.mxu0 0.0
    %2629 = vmatpush.msra.mxu0 0.0
    %2630 = vmatpush.msra.mxu0 0.0
    %2631 = vmatpush.msra.mxu0 0.0
    %2632 = vmatpush.msra.mxu0 0.0
    %2633 = vmatpush.msra.mxu0 0.0
    %2634 = vmatpush.msra.mxu0 0.0
    %2635 = vmatpush.msra.mxu0 %v2622
    %2636 = vmatpush.msra.mxu0 %v2621
    %2637 = vmatpush.msra.mxu0 %v2620
    %2638 = vmatpush.msra.mxu0 %v2619
    %2639 = vmatmul.f32.gmra.mxu0 %v2560
    %v2640 = vpop.f32.mrf.mxu0
    %v2641 = vadd.f32 0.0, %v2640
    %2642 = vmatmul.f32.gmra.mxu0 %v2563
    %v2643 = vpop.f32.mrf.mxu0
    %v2644 = vadd.f32 0.0, %v2643
    %2645 = vdwg.mxu0
    %v2647 = vsel %vm2210, %v2588, 0
    %v2650 = vsel %vm2210, %v2589, 0
    %v2653 = vsel %vm2210, %v2613, 0
    %v2656 = vsel %vm2210, %v2616, 0
    %2658 = vmatpush.xpose.msra.mxu0 0.0
    %2659 = vmatpush.xpose.msra.mxu0 0.0
    %2660 = vmatpush.xpose.msra.mxu0 0.0
    %2661 = vmatpush.xpose.msra.mxu0 0.0
    %2662 = vmatpush.xpose.msra.mxu0 0.0
    %2663 = vmatpush.xpose.msra.mxu0 0.0
    %2664 = vmatpush.xpose.msra.mxu0 0.0
    %2665 = vmatpush.xpose.msra.mxu0 0.0
    %2666 = vmatpush.xpose.msra.mxu0 0.0
    %2667 = vmatpush.xpose.msra.mxu0 0.0
    %2668 = vmatpush.xpose.msra.mxu0 0.0
    %2669 = vmatpush.xpose.msra.mxu0 0.0
    %2670 = vmatpush.xpose.msra.mxu0 0.0
    %2671 = vmatpush.xpose.msra.mxu0 0.0
    %2672 = vmatpush.xpose.msra.mxu0 %v2656
    %2673 = vmatpush.xpose.msra.mxu0 %v2653
    %2674 = vmatmul.f32.gmra.mxu0 %v2647
    %v2675 = vpop.f32.mrf.mxu0
    %v2676 = vadd.f32 %v318, %v2675
    %2677 = vmatmul.f32.gmra.mxu0 %v2650
    %v2678 = vpop.f32.mrf.mxu0
    %v2679 = vadd.f32 %v319, %v2678
    %2680 = vdwg.mxu0
    %vm2681 = vcmask 80896
    %v2682 = vsel %vm2681, %v2676, -inf
    %2683 = vmax.xlane.f32.xlu0 %v2682
    %v2684 = vpop.xlane.xlu0 %2683
    %vm2685 = vcmask 74752
    %v2686 = vsel %vm2685, %v2679, -inf
    %2687 = vmax.xlane.f32.xlu0 %v2686
    %v2688 = vpop.xlane.xlu0 %2687
    %v2689 = vsub.f32 %v2676, %v2684
    %v2690 = vsub.f32 %v2679, %v2688
    %v2691 = vmul.f32 %v2689, 1.442695
    %v2692 = vpow.pop %v2691
    %v2693 = vmul.f32 %v2690, 1.442695
    %v2694 = vpow.pop %v2693
    %v2695 = vsel %vm2681, %v2692, 0.0
    %2696 = vadd.xlane.f32.xlu0 %v2695
    %v2697 = vpop.xlane.xlu0 %2696
    %v2698 = vsel %vm2685, %v2694, 0.0
    %2699 = vadd.xlane.f32.xlu0 %v2698
    %v2700 = vpop.xlane.xlu0 %2699
    %v2701 = vrcp.pop %v2697
    %v2702 = vmul.f32 %v2697, %v2701
    %v2703 = vsub.f32 1.0, %v2702
    %v2704 = vmul.f32 %v2701, %v2703
    %v2705 = vadd.f32 %v2701, %v2704
    %vm2706 = vweird.f32 %v2697
    %vm2707 = vweird.f32 %v2701
    %vm2708 = vmor %vm2706, %vm2707
    %v2709 = vsel %vm2708, %v2701, %v2705
    %v2710 = vand.u32 2147483647, %v2697
    %vm2711 = vcmp.eq.f32.partialorder %v2710, 8.507059e+37
    %v2712 = vand.u32 %v2697, 2147483648
    %v2713 = vor.u32 1.1754944e-38, %v2712
    %v2714 = vsel %vm2711, %v2713, %v2709
    %v2715 = vmul.f32 %v2692, %v2714
    %v2716 = vrcp.pop %v2700
    %v2717 = vmul.f32 %v2700, %v2716
    %v2718 = vsub.f32 1.0, %v2717
    %v2719 = vmul.f32 %v2716, %v2718
    %v2720 = vadd.f32 %v2716, %v2719
    %vm2721 = vweird.f32 %v2700
    %vm2722 = vweird.f32 %v2716
    %vm2723 = vmor %vm2721, %vm2722
    %v2724 = vsel %vm2723, %v2716, %v2720
    %v2725 = vand.u32 2147483647, %v2700
    %vm2726 = vcmp.eq.f32.partialorder %v2725, 8.507059e+37
    %v2727 = vand.u32 %v2700, 2147483648
    %v2728 = vor.u32 1.1754944e-38, %v2727
    %v2729 = vsel %vm2726, %v2728, %v2724
    %v2730 = vmul.f32 %v2694, %v2729
    %v2732 = vsel %vm2681, %v2715, 0
    %v2735 = vsel %vm2681, %v2730, 0
    %vm2737 = vcmask 1041408
    %v2739 = vsel %vm2737, %v2644, 0
    %2741 = vmatpush.msra.mxu0 0.0
    %2742 = vmatpush.msra.mxu0 0.0
    %2743 = vmatpush.msra.mxu0 0.0
    %2744 = vmatpush.msra.mxu0 0.0
    %2745 = vmatpush.msra.mxu0 0.0
    %2746 = vmatpush.msra.mxu0 0.0
    %2747 = vmatpush.msra.mxu0 0.0
    %2748 = vmatpush.msra.mxu0 0.0
    %2749 = vmatpush.msra.mxu0 0.0
    %2750 = vmatpush.msra.mxu0 0.0
    %2751 = vmatpush.msra.mxu0 0.0
    %2752 = vmatpush.msra.mxu0 0.0
    %2753 = vmatpush.msra.mxu0 0.0
    %2754 = vmatpush.msra.mxu0 0.0
    %2755 = vmatpush.msra.mxu0 %v2739
    %2756 = vmatpush.msra.mxu0 %v2641
    %2757 = vmatmul.f32.gmra.mxu0 %v2732
    %v2758 = vpop.f32.mrf.mxu0
    %v2759 = vadd.f32 0.0, %v2758
    %2760 = vmatmul.f32.gmra.mxu0 %v2735
    %v2761 = vpop.f32.mrf.mxu0
    %v2762 = vadd.f32 0.0, %v2761
    %2763 = vdwg.mxu0
    %v2764 = vld [vmem:[%s51] sm:$0xff]
    %v2765 = vld [vmem:[%s51 + $0x8] sm:$0xff]
    %v2766 = vld [vmem:[%s51 + $0x10] sm:$0xff]
    %v2767 = vld [vmem:[%s51 + $0x18] sm:$0xff]
    %v2768 = vld [vmem:[%s51 + $0x20] sm:$0xff]
    %v2769 = vld [vmem:[%s51 + $0x28] sm:$0xff]
    %v2770 = vld [vmem:[%s51 + $0x30] sm:$0xff]
    %v2771 = vld [vmem:[%s51 + $0x38] sm:$0xff]
    %v2773 = vsel %vm2210, %v2759, 0
    %v2776 = vsel %vm2210, %v2762, 0
    %2778 = vmatpush.msra.mxu0 0.0
    %2779 = vmatpush.msra.mxu0 0.0
    %2780 = vmatpush.msra.mxu0 0.0
    %2781 = vmatpush.msra.mxu0 0.0
    %2782 = vmatpush.msra.mxu0 0.0
    %2783 = vmatpush.msra.mxu0 0.0
    %2784 = vmatpush.msra.mxu0 0.0
    %2785 = vmatpush.msra.mxu0 0.0
    %2786 = vmatpush.msra.mxu0 %v2771
    %2787 = vmatpush.msra.mxu0 %v2770
    %2788 = vmatpush.msra.mxu0 %v2769
    %2789 = vmatpush.msra.mxu0 %v2768
    %2790 = vmatpush.msra.mxu0 %v2767
    %2791 = vmatpush.msra.mxu0 %v2766
    %2792 = vmatpush.msra.mxu0 %v2765
    %2793 = vmatpush.msra.mxu0 %v2764
    %2794 = vmatmul.f32.gmra.mxu0 %v2773
    %v2795 = vpop.f32.mrf.mxu0
    %v2796 = vadd.f32 0.0, %v2795
    %2797 = vmatmul.f32.gmra.mxu0 %v2776
    %v2798 = vpop.f32.mrf.mxu0
    %v2799 = vadd.f32 0.0, %v2798
    %2800 = vdwg.mxu0
    %v2802 = vperm.slane %v2492, 0
    %v2804 = vadd.f32 %v2802, %v2796
    %v2805 = vadd.f32 %v2802, %v2799
    %s2806 = scalar_lea.vmem %s49, 32
    %v2807 = vld [vmem:[%s2806] sm:$0xff]
    %v2808 = vld [vmem:[%s2806 + $0x8] sm:$0xff]
    %v2809 = vld [vmem:[%s2806 + $0x10] sm:$0xff]
    %v2810 = vld [vmem:[%s2806 + $0x18] sm:$0xff]
    %2811 = vmatpush.msra.mxu0 0.0
    %2812 = vmatpush.msra.mxu0 0.0
    %2813 = vmatpush.msra.mxu0 0.0
    %2814 = vmatpush.msra.mxu0 0.0
    %2815 = vmatpush.msra.mxu0 0.0
    %2816 = vmatpush.msra.mxu0 0.0
    %2817 = vmatpush.msra.mxu0 0.0
    %2818 = vmatpush.msra.mxu0 0.0
    %2819 = vmatpush.msra.mxu0 0.0
    %2820 = vmatpush.msra.mxu0 0.0
    %2821 = vmatpush.msra.mxu0 0.0
    %2822 = vmatpush.msra.mxu0 0.0
    %2823 = vmatpush.msra.mxu0 %v2810
    %2824 = vmatpush.msra.mxu0 %v2809
    %2825 = vmatpush.msra.mxu0 %v2808
    %2826 = vmatpush.msra.mxu0 %v2807
    %2827 = vmatmul.f32.gmra.mxu0 %v2560
    %v2828 = vpop.f32.mrf.mxu0
    %v2829 = vadd.f32 0.0, %v2828
    %2830 = vmatmul.f32.gmra.mxu0 %v2563
    %v2831 = vpop.f32.mrf.mxu0
    %v2832 = vadd.f32 0.0, %v2831
    %2833 = vdwg.mxu0
    %v2834 = vmul.f32 %v2829, 0.125
    %v2835 = vmul.f32 %v2832, 0.125
    %s2836 = scalar_lea.vmem %s49, 224
    %v2837 = vld [vmem:[%s2836] sm:$0xff]
    %v2838 = vld [vmem:[%s2836 + $0x8] sm:$0xff]
    %v2839 = vld [vmem:[%s2836 + $0x10] sm:$0xff]
    %v2840 = vld [vmem:[%s2836 + $0x18] sm:$0xff]
    %2841 = vmatpush.msra.mxu0 0.0
    %2842 = vmatpush.msra.mxu0 0.0
    %2843 = vmatpush.msra.mxu0 0.0
    %2844 = vmatpush.msra.mxu0 0.0
    %2845 = vmatpush.msra.mxu0 0.0
    %2846 = vmatpush.msra.mxu0 0.0
    %2847 = vmatpush.msra.mxu0 0.0
    %2848 = vmatpush.msra.mxu0 0.0
    %2849 = vmatpush.msra.mxu0 0.0
    %2850 = vmatpush.msra.mxu0 0.0
    %2851 = vmatpush.msra.mxu0 0.0
    %2852 = vmatpush.msra.mxu0 0.0
    %2853 = vmatpush.msra.mxu0 %v2840
    %2854 = vmatpush.msra.mxu0 %v2839
    %2855 = vmatpush.msra.mxu0 %v2838
    %2856 = vmatpush.msra.mxu0 %v2837
    %2857 = vmatmul.f32.gmra.mxu0 %v2560
    %v2858 = vpop.f32.mrf.mxu0
    %v2859 = vadd.f32 0.0, %v2858
    %2860 = vmatmul.f32.gmra.mxu0 %v2563
    %v2861 = vpop.f32.mrf.mxu0
    %v2862 = vadd.f32 0.0, %v2861
    %2863 = vdwg.mxu0
    %s2864 = scalar_lea.vmem %s49, 416
    %v2865 = vld [vmem:[%s2864] sm:$0xff]
    %v2866 = vld [vmem:[%s2864 + $0x8] sm:$0xff]
    %v2867 = vld [vmem:[%s2864 + $0x10] sm:$0xff]
    %v2868 = vld [vmem:[%s2864 + $0x18] sm:$0xff]
    %2869 = vmatpush.msra.mxu0 0.0
    %2870 = vmatpush.msra.mxu0 0.0
    %2871 = vmatpush.msra.mxu0 0.0
    %2872 = vmatpush.msra.mxu0 0.0
    %2873 = vmatpush.msra.mxu0 0.0
    %2874 = vmatpush.msra.mxu0 0.0
    %2875 = vmatpush.msra.mxu0 0.0
    %2876 = vmatpush.msra.mxu0 0.0
    %2877 = vmatpush.msra.mxu0 0.0
    %2878 = vmatpush.msra.mxu0 0.0
    %2879 = vmatpush.msra.mxu0 0.0
    %2880 = vmatpush.msra.mxu0 0.0
    %2881 = vmatpush.msra.mxu0 %v2868
    %2882 = vmatpush.msra.mxu0 %v2867
    %2883 = vmatpush.msra.mxu0 %v2866
    %2884 = vmatpush.msra.mxu0 %v2865
    %2885 = vmatmul.f32.gmra.mxu0 %v2560
    %v2886 = vpop.f32.mrf.mxu0
    %v2887 = vadd.f32 0.0, %v2886
    %2888 = vmatmul.f32.gmra.mxu0 %v2563
    %v2889 = vpop.f32.mrf.mxu0
    %v2890 = vadd.f32 0.0, %v2889
    %2891 = vdwg.mxu0
    %v2893 = vsel %vm2210, %v2834, 0
    %v2896 = vsel %vm2210, %v2835, 0
    %v2899 = vsel %vm2210, %v2859, 0
    %v2902 = vsel %vm2210, %v2862, 0
    %2904 = vmatpush.xpose.msra.mxu0 0.0
    %2905 = vmatpush.xpose.msra.mxu0 0.0
    %2906 = vmatpush.xpose.msra.mxu0 0.0
    %2907 = vmatpush.xpose.msra.mxu0 0.0
    %2908 = vmatpush.xpose.msra.mxu0 0.0
    %2909 = vmatpush.xpose.msra.mxu0 0.0
    %2910 = vmatpush.xpose.msra.mxu0 0.0
    %2911 = vmatpush.xpose.msra.mxu0 0.0
    %2912 = vmatpush.xpose.msra.mxu0 0.0
    %2913 = vmatpush.xpose.msra.mxu0 0.0
    %2914 = vmatpush.xpose.msra.mxu0 0.0
    %2915 = vmatpush.xpose.msra.mxu0 0.0
    %2916 = vmatpush.xpose.msra.mxu0 0.0
    %2917 = vmatpush.xpose.msra.mxu0 0.0
    %2918 = vmatpush.xpose.msra.mxu0 %v2902
    %2919 = vmatpush.xpose.msra.mxu0 %v2899
    %2920 = vmatmul.f32.gmra.mxu0 %v2893
    %v2921 = vpop.f32.mrf.mxu0
    %v2922 = vadd.f32 %v318, %v2921
    %2923 = vmatmul.f32.gmra.mxu0 %v2896
    %v2924 = vpop.f32.mrf.mxu0
    %v2925 = vadd.f32 %v319, %v2924
    %2926 = vdwg.mxu0
    %v2927 = vsel %vm2681, %v2922, -inf
    %2928 = vmax.xlane.f32.xlu0 %v2927
    %v2929 = vpop.xlane.xlu0 %2928
    %v2930 = vsel %vm2685, %v2925, -inf
    %2931 = vmax.xlane.f32.xlu0 %v2930
    %v2932 = vpop.xlane.xlu0 %2931
    %v2933 = vsub.f32 %v2922, %v2929
    %v2934 = vsub.f32 %v2925, %v2932
    %v2935 = vmul.f32 %v2933, 1.442695
    %v2936 = vpow.pop %v2935
    %v2937 = vmul.f32 %v2934, 1.442695
    %v2938 = vpow.pop %v2937
    %v2939 = vsel %vm2681, %v2936, 0.0
    %2940 = vadd.xlane.f32.xlu0 %v2939
    %v2941 = vpop.xlane.xlu0 %2940
    %v2942 = vsel %vm2685, %v2938, 0.0
    %2943 = vadd.xlane.f32.xlu0 %v2942
    %v2944 = vpop.xlane.xlu0 %2943
    %v2945 = vrcp.pop %v2941
    %v2946 = vmul.f32 %v2941, %v2945
    %v2947 = vsub.f32 1.0, %v2946
    %v2948 = vmul.f32 %v2945, %v2947
    %v2949 = vadd.f32 %v2945, %v2948
    %vm2950 = vweird.f32 %v2941
    %vm2951 = vweird.f32 %v2945
    %vm2952 = vmor %vm2950, %vm2951
    %v2953 = vsel %vm2952, %v2945, %v2949
    %v2954 = vand.u32 2147483647, %v2941
    %vm2955 = vcmp.eq.f32.partialorder %v2954, 8.507059e+37
    %v2956 = vand.u32 %v2941, 2147483648
    %v2957 = vor.u32 1.1754944e-38, %v2956
    %v2958 = vsel %vm2955, %v2957, %v2953
    %v2959 = vmul.f32 %v2936, %v2958
    %v2960 = vrcp.pop %v2944
    %v2961 = vmul.f32 %v2944, %v2960
    %v2962 = vsub.f32 1.0, %v2961
    %v2963 = vmul.f32 %v2960, %v2962
    %v2964 = vadd.f32 %v2960, %v2963
    %vm2965 = vweird.f32 %v2944
    %vm2966 = vweird.f32 %v2960
    %vm2967 = vmor %vm2965, %vm2966
    %v2968 = vsel %vm2967, %v2960, %v2964
    %v2969 = vand.u32 2147483647, %v2944
    %vm2970 = vcmp.eq.f32.partialorder %v2969, 8.507059e+37
    %v2971 = vand.u32 %v2944, 2147483648
    %v2972 = vor.u32 1.1754944e-38, %v2971
    %v2973 = vsel %vm2970, %v2972, %v2968
    %v2974 = vmul.f32 %v2938, %v2973
    %v2976 = vsel %vm2681, %v2959, 0
    %v2979 = vsel %vm2681, %v2974, 0
    %v2982 = vsel %vm2737, %v2890, 0
    %2984 = vmatpush.msra.mxu0 0.0
    %2985 = vmatpush.msra.mxu0 0.0
    %2986 = vmatpush.msra.mxu0 0.0
    %2987 = vmatpush.msra.mxu0 0.0
    %2988 = vmatpush.msra.mxu0 0.0
    %2989 = vmatpush.msra.mxu0 0.0
    %2990 = vmatpush.msra.mxu0 0.0
    %2991 = vmatpush.msra.mxu0 0.0
    %2992 = vmatpush.msra.mxu0 0.0
    %2993 = vmatpush.msra.mxu0 0.0
    %2994 = vmatpush.msra.mxu0 0.0
    %2995 = vmatpush.msra.mxu0 0.0
    %2996 = vmatpush.msra.mxu0 0.0
    %2997 = vmatpush.msra.mxu0 0.0
    %2998 = vmatpush.msra.mxu0 %v2982
    %2999 = vmatpush.msra.mxu0 %v2887
    %3000 = vmatmul.f32.gmra.mxu0 %v2976
    %v3001 = vpop.f32.mrf.mxu0
    %v3002 = vadd.f32 0.0, %v3001
    %3003 = vmatmul.f32.gmra.mxu0 %v2979
    %v3004 = vpop.f32.mrf.mxu0
    %v3005 = vadd.f32 0.0, %v3004
    %3006 = vdwg.mxu0
    %s3007 = scalar_lea.vmem %s51, 64
    %v3008 = vld [vmem:[%s3007] sm:$0xff]
    %v3009 = vld [vmem:[%s3007 + $0x8] sm:$0xff]
    %v3010 = vld [vmem:[%s3007 + $0x10] sm:$0xff]
    %v3011 = vld [vmem:[%s3007 + $0x18] sm:$0xff]
    %v3012 = vld [vmem:[%s3007 + $0x20] sm:$0xff]
    %v3013 = vld [vmem:[%s3007 + $0x28] sm:$0xff]
    %v3014 = vld [vmem:[%s3007 + $0x30] sm:$0xff]
    %v3015 = vld [vmem:[%s3007 + $0x38] sm:$0xff]
    %v3017 = vsel %vm2210, %v3002, 0
    %v3020 = vsel %vm2210, %v3005, 0
    %3022 = vmatpush.msra.mxu0 0.0
    %3023 = vmatpush.msra.mxu0 0.0
    %3024 = vmatpush.msra.mxu0 0.0
    %3025 = vmatpush.msra.mxu0 0.0
    %3026 = vmatpush.msra.mxu0 0.0
    %3027 = vmatpush.msra.mxu0 0.0
    %3028 = vmatpush.msra.mxu0 0.0
    %3029 = vmatpush.msra.mxu0 0.0
    %3030 = vmatpush.msra.mxu0 %v3015
    %3031 = vmatpush.msra.mxu0 %v3014
    %3032 = vmatpush.msra.mxu0 %v3013
    %3033 = vmatpush.msra.mxu0 %v3012
    %3034 = vmatpush.msra.mxu0 %v3011
    %3035 = vmatpush.msra.mxu0 %v3010
    %3036 = vmatpush.msra.mxu0 %v3009
    %3037 = vmatpush.msra.mxu0 %v3008
    %3038 = vmatmul.f32.gmra.mxu0 %v3017
    %v3039 = vpop.f32.mrf.mxu0
    %v3040 = vadd.f32 0.0, %v3039
    %3041 = vmatmul.f32.gmra.mxu0 %v3020
    %v3042 = vpop.f32.mrf.mxu0
    %v3043 = vadd.f32 0.0, %v3042
    %3044 = vdwg.mxu0
    %v3045 = vadd.f32 %v2804, %v3040
    %v3046 = vadd.f32 %v2805, %v3043
    %s3047 = scalar_lea.vmem %s49, 64
    %v3048 = vld [vmem:[%s3047] sm:$0xff]
    %v3049 = vld [vmem:[%s3047 + $0x8] sm:$0xff]
    %v3050 = vld [vmem:[%s3047 + $0x10] sm:$0xff]
    %v3051 = vld [vmem:[%s3047 + $0x18] sm:$0xff]
    %3052 = vmatpush.msra.mxu0 0.0
    %3053 = vmatpush.msra.mxu0 0.0
    %3054 = vmatpush.msra.mxu0 0.0
    %3055 = vmatpush.msra.mxu0 0.0
    %3056 = vmatpush.msra.mxu0 0.0
    %3057 = vmatpush.msra.mxu0 0.0
    %3058 = vmatpush.msra.mxu0 0.0
    %3059 = vmatpush.msra.mxu0 0.0
    %3060 = vmatpush.msra.mxu0 0.0
    %3061 = vmatpush.msra.mxu0 0.0
    %3062 = vmatpush.msra.mxu0 0.0
    %3063 = vmatpush.msra.mxu0 0.0
    %3064 = vmatpush.msra.mxu0 %v3051
    %3065 = vmatpush.msra.mxu0 %v3050
    %3066 = vmatpush.msra.mxu0 %v3049
    %3067 = vmatpush.msra.mxu0 %v3048
    %3068 = vmatmul.f32.gmra.mxu0 %v2560
    %v3069 = vpop.f32.mrf.mxu0
    %v3070 = vadd.f32 0.0, %v3069
    %3071 = vmatmul.f32.gmra.mxu0 %v2563
    %v3072 = vpop.f32.mrf.mxu0
    %v3073 = vadd.f32 0.0, %v3072
    %3074 = vdwg.mxu0
    %v3075 = vmul.f32 %v3070, 0.125
    %v3076 = vmul.f32 %v3073, 0.125
    %s3077 = scalar_lea.vmem %s49, 256
    %v3078 = vld [vmem:[%s3077] sm:$0xff]
    %v3079 = vld [vmem:[%s3077 + $0x8] sm:$0xff]
    %v3080 = vld [vmem:[%s3077 + $0x10] sm:$0xff]
    %v3081 = vld [vmem:[%s3077 + $0x18] sm:$0xff]
    %3082 = vmatpush.msra.mxu0 0.0
    %3083 = vmatpush.msra.mxu0 0.0
    %3084 = vmatpush.msra.mxu0 0.0
    %3085 = vmatpush.msra.mxu0 0.0
    %3086 = vmatpush.msra.mxu0 0.0
    %3087 = vmatpush.msra.mxu0 0.0
    %3088 = vmatpush.msra.mxu0 0.0
    %3089 = vmatpush.msra.mxu0 0.0
    %3090 = vmatpush.msra.mxu0 0.0
    %3091 = vmatpush.msra.mxu0 0.0
    %3092 = vmatpush.msra.mxu0 0.0
    %3093 = vmatpush.msra.mxu0 0.0
    %3094 = vmatpush.msra.mxu0 %v3081
    %3095 = vmatpush.msra.mxu0 %v3080
    %3096 = vmatpush.msra.mxu0 %v3079
    %3097 = vmatpush.msra.mxu0 %v3078
    %3098 = vmatmul.f32.gmra.mxu0 %v2560
    %v3099 = vpop.f32.mrf.mxu0
    %v3100 = vadd.f32 0.0, %v3099
    %3101 = vmatmul.f32.gmra.mxu0 %v2563
    %v3102 = vpop.f32.mrf.mxu0
    %v3103 = vadd.f32 0.0, %v3102
    %3104 = vdwg.mxu0
    %s3105 = scalar_lea.vmem %s49, 448
    %v3106 = vld [vmem:[%s3105] sm:$0xff]
    %v3107 = vld [vmem:[%s3105 + $0x8] sm:$0xff]
    %v3108 = vld [vmem:[%s3105 + $0x10] sm:$0xff]
    %v3109 = vld [vmem:[%s3105 + $0x18] sm:$0xff]
    %3110 = vmatpush.msra.mxu0 0.0
    %3111 = vmatpush.msra.mxu0 0.0
    %3112 = vmatpush.msra.mxu0 0.0
    %3113 = vmatpush.msra.mxu0 0.0
    %3114 = vmatpush.msra.mxu0 0.0
    %3115 = vmatpush.msra.mxu0 0.0
    %3116 = vmatpush.msra.mxu0 0.0
    %3117 = vmatpush.msra.mxu0 0.0
    %3118 = vmatpush.msra.mxu0 0.0
    %3119 = vmatpush.msra.mxu0 0.0
    %3120 = vmatpush.msra.mxu0 0.0
    %3121 = vmatpush.msra.mxu0 0.0
    %3122 = vmatpush.msra.mxu0 %v3109
    %3123 = vmatpush.msra.mxu0 %v3108
    %3124 = vmatpush.msra.mxu0 %v3107
    %3125 = vmatpush.msra.mxu0 %v3106
    %3126 = vmatmul.f32.gmra.mxu0 %v2560
    %v3127 = vpop.f32.mrf.mxu0
    %v3128 = vadd.f32 0.0, %v3127
    %3129 = vmatmul.f32.gmra.mxu0 %v2563
    %v3130 = vpop.f32.mrf.mxu0
    %v3131 = vadd.f32 0.0, %v3130
    %3132 = vdwg.mxu0
    %v3134 = vsel %vm2210, %v3075, 0
    %v3137 = vsel %vm2210, %v3076, 0
    %v3140 = vsel %vm2210, %v3100, 0
    %v3143 = vsel %vm2210, %v3103, 0
    %3145 = vmatpush.xpose.msra.mxu0 0.0
    %3146 = vmatpush.xpose.msra.mxu0 0.0
    %3147 = vmatpush.xpose.msra.mxu0 0.0
    %3148 = vmatpush.xpose.msra.mxu0 0.0
    %3149 = vmatpush.xpose.msra.mxu0 0.0
    %3150 = vmatpush.xpose.msra.mxu0 0.0
    %3151 = vmatpush.xpose.msra.mxu0 0.0
    %3152 = vmatpush.xpose.msra.mxu0 0.0
    %3153 = vmatpush.xpose.msra.mxu0 0.0
    %3154 = vmatpush.xpose.msra.mxu0 0.0
    %3155 = vmatpush.xpose.msra.mxu0 0.0
    %3156 = vmatpush.xpose.msra.mxu0 0.0
    %3157 = vmatpush.xpose.msra.mxu0 0.0
    %3158 = vmatpush.xpose.msra.mxu0 0.0
    %3159 = vmatpush.xpose.msra.mxu0 %v3143
    %3160 = vmatpush.xpose.msra.mxu0 %v3140
    %3161 = vmatmul.f32.gmra.mxu0 %v3134
    %v3162 = vpop.f32.mrf.mxu0
    %v3163 = vadd.f32 %v318, %v3162
    %3164 = vmatmul.f32.gmra.mxu0 %v3137
    %v3165 = vpop.f32.mrf.mxu0
    %v3166 = vadd.f32 %v319, %v3165
    %3167 = vdwg.mxu0
    %v3168 = vsel %vm2681, %v3163, -inf
    %3169 = vmax.xlane.f32.xlu0 %v3168
    %v3170 = vpop.xlane.xlu0 %3169
    %v3171 = vsel %vm2685, %v3166, -inf
    %3172 = vmax.xlane.f32.xlu0 %v3171
    %v3173 = vpop.xlane.xlu0 %3172
    %v3174 = vsub.f32 %v3163, %v3170
    %v3175 = vsub.f32 %v3166, %v3173
    %v3176 = vmul.f32 %v3174, 1.442695
    %v3177 = vpow.pop %v3176
    %v3178 = vmul.f32 %v3175, 1.442695
    %v3179 = vpow.pop %v3178
    %v3180 = vsel %vm2681, %v3177, 0.0
    %3181 = vadd.xlane.f32.xlu0 %v3180
    %v3182 = vpop.xlane.xlu0 %3181
    %v3183 = vsel %vm2685, %v3179, 0.0
    %3184 = vadd.xlane.f32.xlu0 %v3183
    %v3185 = vpop.xlane.xlu0 %3184
    %v3186 = vrcp.pop %v3182
    %v3187 = vmul.f32 %v3182, %v3186
    %v3188 = vsub.f32 1.0, %v3187
    %v3189 = vmul.f32 %v3186, %v3188
    %v3190 = vadd.f32 %v3186, %v3189
    %vm3191 = vweird.f32 %v3182
    %vm3192 = vweird.f32 %v3186
    %vm3193 = vmor %vm3191, %vm3192
    %v3194 = vsel %vm3193, %v3186, %v3190
    %v3195 = vand.u32 2147483647, %v3182
    %vm3196 = vcmp.eq.f32.partialorder %v3195, 8.507059e+37
    %v3197 = vand.u32 %v3182, 2147483648
    %v3198 = vor.u32 1.1754944e-38, %v3197
    %v3199 = vsel %vm3196, %v3198, %v3194
    %v3200 = vmul.f32 %v3177, %v3199
    %v3201 = vrcp.pop %v3185
    %v3202 = vmul.f32 %v3185, %v3201
    %v3203 = vsub.f32 1.0, %v3202
    %v3204 = vmul.f32 %v3201, %v3203
    %v3205 = vadd.f32 %v3201, %v3204
    %vm3206 = vweird.f32 %v3185
    %vm3207 = vweird.f32 %v3201
    %vm3208 = vmor %vm3206, %vm3207
    %v3209 = vsel %vm3208, %v3201, %v3205
    %v3210 = vand.u32 2147483647, %v3185
    %vm3211 = vcmp.eq.f32.partialorder %v3210, 8.507059e+37
    %v3212 = vand.u32 %v3185, 2147483648
    %v3213 = vor.u32 1.1754944e-38, %v3212
    %v3214 = vsel %vm3211, %v3213, %v3209
    %v3215 = vmul.f32 %v3179, %v3214
    %v3217 = vsel %vm2681, %v3200, 0
    %v3220 = vsel %vm2681, %v3215, 0
    %v3223 = vsel %vm2737, %v3131, 0
    %3225 = vmatpush.msra.mxu0 0.0
    %3226 = vmatpush.msra.mxu0 0.0
    %3227 = vmatpush.msra.mxu0 0.0
    %3228 = vmatpush.msra.mxu0 0.0
    %3229 = vmatpush.msra.mxu0 0.0
    %3230 = vmatpush.msra.mxu0 0.0
    %3231 = vmatpush.msra.mxu0 0.0
    %3232 = vmatpush.msra.mxu0 0.0
    %3233 = vmatpush.msra.mxu0 0.0
    %3234 = vmatpush.msra.mxu0 0.0
    %3235 = vmatpush.msra.mxu0 0.0
    %3236 = vmatpush.msra.mxu0 0.0
    %3237 = vmatpush.msra.mxu0 0.0
    %3238 = vmatpush.msra.mxu0 0.0
    %3239 = vmatpush.msra.mxu0 %v3223
    %3240 = vmatpush.msra.mxu0 %v3128
    %3241 = vmatmul.f32.gmra.mxu0 %v3217
    %v3242 = vpop.f32.mrf.mxu0
    %v3243 = vadd.f32 0.0, %v3242
    %3244 = vmatmul.f32.gmra.mxu0 %v3220
    %v3245 = vpop.f32.mrf.mxu0
    %v3246 = vadd.f32 0.0, %v3245
    %3247 = vdwg.mxu0
    %s3248 = scalar_lea.vmem %s51, 128
    %v3249 = vld [vmem:[%s3248] sm:$0xff]
    %v3250 = vld [vmem:[%s3248 + $0x8] sm:$0xff]
    %v3251 = vld [vmem:[%s3248 + $0x10] sm:$0xff]
    %v3252 = vld [vmem:[%s3248 + $0x18] sm:$0xff]
    %v3253 = vld [vmem:[%s3248 + $0x20] sm:$0xff]
    %v3254 = vld [vmem:[%s3248 + $0x28] sm:$0xff]
    %v3255 = vld [vmem:[%s3248 + $0x30] sm:$0xff]
    %v3256 = vld [vmem:[%s3248 + $0x38] sm:$0xff]
    %v3258 = vsel %vm2210, %v3243, 0
    %v3261 = vsel %vm2210, %v3246, 0
    %3263 = vmatpush.msra.mxu0 0.0
    %3264 = vmatpush.msra.mxu0 0.0
    %3265 = vmatpush.msra.mxu0 0.0
    %3266 = vmatpush.msra.mxu0 0.0
    %3267 = vmatpush.msra.mxu0 0.0
    %3268 = vmatpush.msra.mxu0 0.0
    %3269 = vmatpush.msra.mxu0 0.0
    %3270 = vmatpush.msra.mxu0 0.0
    %3271 = vmatpush.msra.mxu0 %v3256
    %3272 = vmatpush.msra.mxu0 %v3255
    %3273 = vmatpush.msra.mxu0 %v3254
    %3274 = vmatpush.msra.mxu0 %v3253
    %3275 = vmatpush.msra.mxu0 %v3252
    %3276 = vmatpush.msra.mxu0 %v3251
    %3277 = vmatpush.msra.mxu0 %v3250
    %3278 = vmatpush.msra.mxu0 %v3249
    %3279 = vmatmul.f32.gmra.mxu0 %v3258
    %v3280 = vpop.f32.mrf.mxu0
    %v3281 = vadd.f32 0.0, %v3280
    %3282 = vmatmul.f32.gmra.mxu0 %v3261
    %v3283 = vpop.f32.mrf.mxu0
    %v3284 = vadd.f32 0.0, %v3283
    %3285 = vdwg.mxu0
    %v3286 = vadd.f32 %v3045, %v3281
    %v3287 = vadd.f32 %v3046, %v3284
    %s3288 = scalar_lea.vmem %s49, 96
    %v3289 = vld [vmem:[%s3288] sm:$0xff]
    %v3290 = vld [vmem:[%s3288 + $0x8] sm:$0xff]
    %v3291 = vld [vmem:[%s3288 + $0x10] sm:$0xff]
    %v3292 = vld [vmem:[%s3288 + $0x18] sm:$0xff]
    %3293 = vmatpush.msra.mxu0 0.0
    %3294 = vmatpush.msra.mxu0 0.0
    %3295 = vmatpush.msra.mxu0 0.0
    %3296 = vmatpush.msra.mxu0 0.0
    %3297 = vmatpush.msra.mxu0 0.0
    %3298 = vmatpush.msra.mxu0 0.0
    %3299 = vmatpush.msra.mxu0 0.0
    %3300 = vmatpush.msra.mxu0 0.0
    %3301 = vmatpush.msra.mxu0 0.0
    %3302 = vmatpush.msra.mxu0 0.0
    %3303 = vmatpush.msra.mxu0 0.0
    %3304 = vmatpush.msra.mxu0 0.0
    %3305 = vmatpush.msra.mxu0 %v3292
    %3306 = vmatpush.msra.mxu0 %v3291
    %3307 = vmatpush.msra.mxu0 %v3290
    %3308 = vmatpush.msra.mxu0 %v3289
    %3309 = vmatmul.f32.gmra.mxu0 %v2560
    %v3310 = vpop.f32.mrf.mxu0
    %v3311 = vadd.f32 0.0, %v3310
    %3312 = vmatmul.f32.gmra.mxu0 %v2563
    %v3313 = vpop.f32.mrf.mxu0
    %v3314 = vadd.f32 0.0, %v3313
    %3315 = vdwg.mxu0
    %v3316 = vmul.f32 %v3311, 0.125
    %v3317 = vmul.f32 %v3314, 0.125
    %s3318 = scalar_lea.vmem %s49, 288
    %v3319 = vld [vmem:[%s3318] sm:$0xff]
    %v3320 = vld [vmem:[%s3318 + $0x8] sm:$0xff]
    %v3321 = vld [vmem:[%s3318 + $0x10] sm:$0xff]
    %v3322 = vld [vmem:[%s3318 + $0x18] sm:$0xff]
    %3323 = vmatpush.msra.mxu0 0.0
    %3324 = vmatpush.msra.mxu0 0.0
    %3325 = vmatpush.msra.mxu0 0.0
    %3326 = vmatpush.msra.mxu0 0.0
    %3327 = vmatpush.msra.mxu0 0.0
    %3328 = vmatpush.msra.mxu0 0.0
    %3329 = vmatpush.msra.mxu0 0.0
    %3330 = vmatpush.msra.mxu0 0.0
    %3331 = vmatpush.msra.mxu0 0.0
    %3332 = vmatpush.msra.mxu0 0.0
    %3333 = vmatpush.msra.mxu0 0.0
    %3334 = vmatpush.msra.mxu0 0.0
    %3335 = vmatpush.msra.mxu0 %v3322
    %3336 = vmatpush.msra.mxu0 %v3321
    %3337 = vmatpush.msra.mxu0 %v3320
    %3338 = vmatpush.msra.mxu0 %v3319
    %3339 = vmatmul.f32.gmra.mxu0 %v2560
    %v3340 = vpop.f32.mrf.mxu0
    %v3341 = vadd.f32 0.0, %v3340
    %3342 = vmatmul.f32.gmra.mxu0 %v2563
    %v3343 = vpop.f32.mrf.mxu0
    %v3344 = vadd.f32 0.0, %v3343
    %3345 = vdwg.mxu0
    %s3346 = scalar_lea.vmem %s49, 480
    %v3347 = vld [vmem:[%s3346] sm:$0xff]
    %v3348 = vld [vmem:[%s3346 + $0x8] sm:$0xff]
    %v3349 = vld [vmem:[%s3346 + $0x10] sm:$0xff]
    %v3350 = vld [vmem:[%s3346 + $0x18] sm:$0xff]
    %3351 = vmatpush.msra.mxu0 0.0
    %3352 = vmatpush.msra.mxu0 0.0
    %3353 = vmatpush.msra.mxu0 0.0
    %3354 = vmatpush.msra.mxu0 0.0
    %3355 = vmatpush.msra.mxu0 0.0
    %3356 = vmatpush.msra.mxu0 0.0
    %3357 = vmatpush.msra.mxu0 0.0
    %3358 = vmatpush.msra.mxu0 0.0
    %3359 = vmatpush.msra.mxu0 0.0
    %3360 = vmatpush.msra.mxu0 0.0
    %3361 = vmatpush.msra.mxu0 0.0
    %3362 = vmatpush.msra.mxu0 0.0
    %3363 = vmatpush.msra.mxu0 %v3350
    %3364 = vmatpush.msra.mxu0 %v3349
    %3365 = vmatpush.msra.mxu0 %v3348
    %3366 = vmatpush.msra.mxu0 %v3347
    %3367 = vmatmul.f32.gmra.mxu0 %v2560
    %v3368 = vpop.f32.mrf.mxu0
    %v3369 = vadd.f32 0.0, %v3368
    %3370 = vmatmul.f32.gmra.mxu0 %v2563
    %v3371 = vpop.f32.mrf.mxu0
    %v3372 = vadd.f32 0.0, %v3371
    %3373 = vdwg.mxu0
    %v3375 = vsel %vm2210, %v3316, 0
    %v3378 = vsel %vm2210, %v3317, 0
    %v3381 = vsel %vm2210, %v3341, 0
    %v3384 = vsel %vm2210, %v3344, 0
    %3386 = vmatpush.xpose.msra.mxu0 0.0
    %3387 = vmatpush.xpose.msra.mxu0 0.0
    %3388 = vmatpush.xpose.msra.mxu0 0.0
    %3389 = vmatpush.xpose.msra.mxu0 0.0
    %3390 = vmatpush.xpose.msra.mxu0 0.0
    %3391 = vmatpush.xpose.msra.mxu0 0.0
    %3392 = vmatpush.xpose.msra.mxu0 0.0
    %3393 = vmatpush.xpose.msra.mxu0 0.0
    %3394 = vmatpush.xpose.msra.mxu0 0.0
    %3395 = vmatpush.xpose.msra.mxu0 0.0
    %3396 = vmatpush.xpose.msra.mxu0 0.0
    %3397 = vmatpush.xpose.msra.mxu0 0.0
    %3398 = vmatpush.xpose.msra.mxu0 0.0
    %3399 = vmatpush.xpose.msra.mxu0 0.0
    %3400 = vmatpush.xpose.msra.mxu0 %v3384
    %3401 = vmatpush.xpose.msra.mxu0 %v3381
    %3402 = vmatmul.f32.gmra.mxu0 %v3375
    %v3403 = vpop.f32.mrf.mxu0
    %v3404 = vadd.f32 %v318, %v3403
    %3405 = vmatmul.f32.gmra.mxu0 %v3378
    %v3406 = vpop.f32.mrf.mxu0
    %v3407 = vadd.f32 %v319, %v3406
    %3408 = vdwg.mxu0
    %v3409 = vsel %vm2681, %v3404, -inf
    %3410 = vmax.xlane.f32.xlu0 %v3409
    %v3411 = vpop.xlane.xlu0 %3410
    %v3412 = vsel %vm2685, %v3407, -inf
    %3413 = vmax.xlane.f32.xlu0 %v3412
    %v3414 = vpop.xlane.xlu0 %3413
    %v3415 = vsub.f32 %v3404, %v3411
    %v3416 = vsub.f32 %v3407, %v3414
    %v3417 = vmul.f32 %v3415, 1.442695
    %v3418 = vpow.pop %v3417
    %v3419 = vmul.f32 %v3416, 1.442695
    %v3420 = vpow.pop %v3419
    %v3421 = vsel %vm2681, %v3418, 0.0
    %3422 = vadd.xlane.f32.xlu0 %v3421
    %v3423 = vpop.xlane.xlu0 %3422
    %v3424 = vsel %vm2685, %v3420, 0.0
    %3425 = vadd.xlane.f32.xlu0 %v3424
    %v3426 = vpop.xlane.xlu0 %3425
    %v3427 = vrcp.pop %v3423
    %v3428 = vmul.f32 %v3423, %v3427
    %v3429 = vsub.f32 1.0, %v3428
    %v3430 = vmul.f32 %v3427, %v3429
    %v3431 = vadd.f32 %v3427, %v3430
    %vm3432 = vweird.f32 %v3423
    %vm3433 = vweird.f32 %v3427
    %vm3434 = vmor %vm3432, %vm3433
    %v3435 = vsel %vm3434, %v3427, %v3431
    %v3436 = vand.u32 2147483647, %v3423
    %vm3437 = vcmp.eq.f32.partialorder %v3436, 8.507059e+37
    %v3438 = vand.u32 %v3423, 2147483648
    %v3439 = vor.u32 1.1754944e-38, %v3438
    %v3440 = vsel %vm3437, %v3439, %v3435
    %v3441 = vmul.f32 %v3418, %v3440
    %v3442 = vrcp.pop %v3426
    %v3443 = vmul.f32 %v3426, %v3442
    %v3444 = vsub.f32 1.0, %v3443
    %v3445 = vmul.f32 %v3442, %v3444
    %v3446 = vadd.f32 %v3442, %v3445
    %vm3447 = vweird.f32 %v3426
    %vm3448 = vweird.f32 %v3442
    %vm3449 = vmor %vm3447, %vm3448
    %v3450 = vsel %vm3449, %v3442, %v3446
    %v3451 = vand.u32 2147483647, %v3426
    %vm3452 = vcmp.eq.f32.partialorder %v3451, 8.507059e+37
    %v3453 = vand.u32 %v3426, 2147483648
    %v3454 = vor.u32 1.1754944e-38, %v3453
    %v3455 = vsel %vm3452, %v3454, %v3450
    %v3456 = vmul.f32 %v3420, %v3455
    %v3458 = vsel %vm2681, %v3441, 0
    %v3461 = vsel %vm2681, %v3456, 0
    %v3464 = vsel %vm2737, %v3372, 0
    %3466 = vmatpush.msra.mxu0 0.0
    %3467 = vmatpush.msra.mxu0 0.0
    %3468 = vmatpush.msra.mxu0 0.0
    %3469 = vmatpush.msra.mxu0 0.0
    %3470 = vmatpush.msra.mxu0 0.0
    %3471 = vmatpush.msra.mxu0 0.0
    %3472 = vmatpush.msra.mxu0 0.0
    %3473 = vmatpush.msra.mxu0 0.0
    %3474 = vmatpush.msra.mxu0 0.0
    %3475 = vmatpush.msra.mxu0 0.0
    %3476 = vmatpush.msra.mxu0 0.0
    %3477 = vmatpush.msra.mxu0 0.0
    %3478 = vmatpush.msra.mxu0 0.0
    %3479 = vmatpush.msra.mxu0 0.0
    %3480 = vmatpush.msra.mxu0 %v3464
    %3481 = vmatpush.msra.mxu0 %v3369
    %3482 = vmatmul.f32.gmra.mxu0 %v3458
    %v3483 = vpop.f32.mrf.mxu0
    %v3484 = vadd.f32 0.0, %v3483
    %3485 = vmatmul.f32.gmra.mxu0 %v3461
    %v3486 = vpop.f32.mrf.mxu0
    %v3487 = vadd.f32 0.0, %v3486
    %3488 = vdwg.mxu0
    %s3489 = scalar_lea.vmem %s51, 192
    %v3490 = vld [vmem:[%s3489] sm:$0xff]
    %v3491 = vld [vmem:[%s3489 + $0x8] sm:$0xff]
    %v3492 = vld [vmem:[%s3489 + $0x10] sm:$0xff]
    %v3493 = vld [vmem:[%s3489 + $0x18] sm:$0xff]
    %v3494 = vld [vmem:[%s3489 + $0x20] sm:$0xff]
    %v3495 = vld [vmem:[%s3489 + $0x28] sm:$0xff]
    %v3496 = vld [vmem:[%s3489 + $0x30] sm:$0xff]
    %v3497 = vld [vmem:[%s3489 + $0x38] sm:$0xff]
    %v3499 = vsel %vm2210, %v3484, 0
    %v3502 = vsel %vm2210, %v3487, 0
    %3504 = vmatpush.msra.mxu0 0.0
    %3505 = vmatpush.msra.mxu0 0.0
    %3506 = vmatpush.msra.mxu0 0.0
    %3507 = vmatpush.msra.mxu0 0.0
    %3508 = vmatpush.msra.mxu0 0.0
    %3509 = vmatpush.msra.mxu0 0.0
    %3510 = vmatpush.msra.mxu0 0.0
    %3511 = vmatpush.msra.mxu0 0.0
    %3512 = vmatpush.msra.mxu0 %v3497
    %3513 = vmatpush.msra.mxu0 %v3496
    %3514 = vmatpush.msra.mxu0 %v3495
    %3515 = vmatpush.msra.mxu0 %v3494
    %3516 = vmatpush.msra.mxu0 %v3493
    %3517 = vmatpush.msra.mxu0 %v3492
    %3518 = vmatpush.msra.mxu0 %v3491
    %3519 = vmatpush.msra.mxu0 %v3490
    %3520 = vmatmul.f32.gmra.mxu0 %v3499
    %v3521 = vpop.f32.mrf.mxu0
    %v3522 = vadd.f32 0.0, %v3521
    %3523 = vmatmul.f32.gmra.mxu0 %v3502
    %v3524 = vpop.f32.mrf.mxu0
    %v3525 = vadd.f32 0.0, %v3524
    %3526 = vdwg.mxu0
    %v3527 = vadd.f32 %v3286, %v3522
    %v3528 = vadd.f32 %v3287, %v3525
    %s3529 = scalar_lea.vmem %s49, 128
    %v3530 = vld [vmem:[%s3529] sm:$0xff]
    %v3531 = vld [vmem:[%s3529 + $0x8] sm:$0xff]
    %v3532 = vld [vmem:[%s3529 + $0x10] sm:$0xff]
    %v3533 = vld [vmem:[%s3529 + $0x18] sm:$0xff]
    %3534 = vmatpush.msra.mxu0 0.0
    %3535 = vmatpush.msra.mxu0 0.0
    %3536 = vmatpush.msra.mxu0 0.0
    %3537 = vmatpush.msra.mxu0 0.0
    %3538 = vmatpush.msra.mxu0 0.0
    %3539 = vmatpush.msra.mxu0 0.0
    %3540 = vmatpush.msra.mxu0 0.0
    %3541 = vmatpush.msra.mxu0 0.0
    %3542 = vmatpush.msra.mxu0 0.0
    %3543 = vmatpush.msra.mxu0 0.0
    %3544 = vmatpush.msra.mxu0 0.0
    %3545 = vmatpush.msra.mxu0 0.0
    %3546 = vmatpush.msra.mxu0 %v3533
    %3547 = vmatpush.msra.mxu0 %v3532
    %3548 = vmatpush.msra.mxu0 %v3531
    %3549 = vmatpush.msra.mxu0 %v3530
    %3550 = vmatmul.f32.gmra.mxu0 %v2560
    %v3551 = vpop.f32.mrf.mxu0
    %v3552 = vadd.f32 0.0, %v3551
    %3553 = vmatmul.f32.gmra.mxu0 %v2563
    %v3554 = vpop.f32.mrf.mxu0
    %v3555 = vadd.f32 0.0, %v3554
    %3556 = vdwg.mxu0
    %v3557 = vmul.f32 %v3552, 0.125
    %v3558 = vmul.f32 %v3555, 0.125
    %s3559 = scalar_lea.vmem %s49, 320
    %v3560 = vld [vmem:[%s3559] sm:$0xff]
    %v3561 = vld [vmem:[%s3559 + $0x8] sm:$0xff]
    %v3562 = vld [vmem:[%s3559 + $0x10] sm:$0xff]
    %v3563 = vld [vmem:[%s3559 + $0x18] sm:$0xff]
    %3564 = vmatpush.msra.mxu0 0.0
    %3565 = vmatpush.msra.mxu0 0.0
    %3566 = vmatpush.msra.mxu0 0.0
    %3567 = vmatpush.msra.mxu0 0.0
    %3568 = vmatpush.msra.mxu0 0.0
    %3569 = vmatpush.msra.mxu0 0.0
    %3570 = vmatpush.msra.mxu0 0.0
    %3571 = vmatpush.msra.mxu0 0.0
    %3572 = vmatpush.msra.mxu0 0.0
    %3573 = vmatpush.msra.mxu0 0.0
    %3574 = vmatpush.msra.mxu0 0.0
    %3575 = vmatpush.msra.mxu0 0.0
    %3576 = vmatpush.msra.mxu0 %v3563
    %3577 = vmatpush.msra.mxu0 %v3562
    %3578 = vmatpush.msra.mxu0 %v3561
    %3579 = vmatpush.msra.mxu0 %v3560
    %3580 = vmatmul.f32.gmra.mxu0 %v2560
    %v3581 = vpop.f32.mrf.mxu0
    %v3582 = vadd.f32 0.0, %v3581
    %3583 = vmatmul.f32.gmra.mxu0 %v2563
    %v3584 = vpop.f32.mrf.mxu0
    %v3585 = vadd.f32 0.0, %v3584
    %3586 = vdwg.mxu0
    %s3587 = scalar_lea.vmem %s49, 512
    %v3588 = vld [vmem:[%s3587] sm:$0xff]
    %v3589 = vld [vmem:[%s3587 + $0x8] sm:$0xff]
    %v3590 = vld [vmem:[%s3587 + $0x10] sm:$0xff]
    %v3591 = vld [vmem:[%s3587 + $0x18] sm:$0xff]
    %3592 = vmatpush.msra.mxu0 0.0
    %3593 = vmatpush.msra.mxu0 0.0
    %3594 = vmatpush.msra.mxu0 0.0
    %3595 = vmatpush.msra.mxu0 0.0
    %3596 = vmatpush.msra.mxu0 0.0
    %3597 = vmatpush.msra.mxu0 0.0
    %3598 = vmatpush.msra.mxu0 0.0
    %3599 = vmatpush.msra.mxu0 0.0
    %3600 = vmatpush.msra.mxu0 0.0
    %3601 = vmatpush.msra.mxu0 0.0
    %3602 = vmatpush.msra.mxu0 0.0
    %3603 = vmatpush.msra.mxu0 0.0
    %3604 = vmatpush.msra.mxu0 %v3591
    %3605 = vmatpush.msra.mxu0 %v3590
    %3606 = vmatpush.msra.mxu0 %v3589
    %3607 = vmatpush.msra.mxu0 %v3588
    %3608 = vmatmul.f32.gmra.mxu0 %v2560
    %v3609 = vpop.f32.mrf.mxu0
    %v3610 = vadd.f32 0.0, %v3609
    %3611 = vmatmul.f32.gmra.mxu0 %v2563
    %v3612 = vpop.f32.mrf.mxu0
    %v3613 = vadd.f32 0.0, %v3612
    %3614 = vdwg.mxu0
    %v3616 = vsel %vm2210, %v3557, 0
    %v3619 = vsel %vm2210, %v3558, 0
    %v3622 = vsel %vm2210, %v3582, 0
    %v3625 = vsel %vm2210, %v3585, 0
    %3627 = vmatpush.xpose.msra.mxu0 0.0
    %3628 = vmatpush.xpose.msra.mxu0 0.0
    %3629 = vmatpush.xpose.msra.mxu0 0.0
    %3630 = vmatpush.xpose.msra.mxu0 0.0
    %3631 = vmatpush.xpose.msra.mxu0 0.0
    %3632 = vmatpush.xpose.msra.mxu0 0.0
    %3633 = vmatpush.xpose.msra.mxu0 0.0
    %3634 = vmatpush.xpose.msra.mxu0 0.0
    %3635 = vmatpush.xpose.msra.mxu0 0.0
    %3636 = vmatpush.xpose.msra.mxu0 0.0
    %3637 = vmatpush.xpose.msra.mxu0 0.0
    %3638 = vmatpush.xpose.msra.mxu0 0.0
    %3639 = vmatpush.xpose.msra.mxu0 0.0
    %3640 = vmatpush.xpose.msra.mxu0 0.0
    %3641 = vmatpush.xpose.msra.mxu0 %v3625
    %3642 = vmatpush.xpose.msra.mxu0 %v3622
    %3643 = vmatmul.f32.gmra.mxu0 %v3616
    %v3644 = vpop.f32.mrf.mxu0
    %v3645 = vadd.f32 %v318, %v3644
    %3646 = vmatmul.f32.gmra.mxu0 %v3619
    %v3647 = vpop.f32.mrf.mxu0
    %v3648 = vadd.f32 %v319, %v3647
    %3649 = vdwg.mxu0
    %v3650 = vsel %vm2681, %v3645, -inf
    %3651 = vmax.xlane.f32.xlu0 %v3650
    %v3652 = vpop.xlane.xlu0 %3651
    %v3653 = vsel %vm2685, %v3648, -inf
    %3654 = vmax.xlane.f32.xlu0 %v3653
    %v3655 = vpop.xlane.xlu0 %3654
    %v3656 = vsub.f32 %v3645, %v3652
    %v3657 = vsub.f32 %v3648, %v3655
    %v3658 = vmul.f32 %v3656, 1.442695
    %v3659 = vpow.pop %v3658
    %v3660 = vmul.f32 %v3657, 1.442695
    %v3661 = vpow.pop %v3660
    %v3662 = vsel %vm2681, %v3659, 0.0
    %3663 = vadd.xlane.f32.xlu0 %v3662
    %v3664 = vpop.xlane.xlu0 %3663
    %v3665 = vsel %vm2685, %v3661, 0.0
    %3666 = vadd.xlane.f32.xlu0 %v3665
    %v3667 = vpop.xlane.xlu0 %3666
    %v3668 = vrcp.pop %v3664
    %v3669 = vmul.f32 %v3664, %v3668
    %v3670 = vsub.f32 1.0, %v3669
    %v3671 = vmul.f32 %v3668, %v3670
    %v3672 = vadd.f32 %v3668, %v3671
    %vm3673 = vweird.f32 %v3664
    %vm3674 = vweird.f32 %v3668
    %vm3675 = vmor %vm3673, %vm3674
    %v3676 = vsel %vm3675, %v3668, %v3672
    %v3677 = vand.u32 2147483647, %v3664
    %vm3678 = vcmp.eq.f32.partialorder %v3677, 8.507059e+37
    %v3679 = vand.u32 %v3664, 2147483648
    %v3680 = vor.u32 1.1754944e-38, %v3679
    %v3681 = vsel %vm3678, %v3680, %v3676
    %v3682 = vmul.f32 %v3659, %v3681
    %v3683 = vrcp.pop %v3667
    %v3684 = vmul.f32 %v3667, %v3683
    %v3685 = vsub.f32 1.0, %v3684
    %v3686 = vmul.f32 %v3683, %v3685
    %v3687 = vadd.f32 %v3683, %v3686
    %vm3688 = vweird.f32 %v3667
    %vm3689 = vweird.f32 %v3683
    %vm3690 = vmor %vm3688, %vm3689
    %v3691 = vsel %vm3690, %v3683, %v3687
    %v3692 = vand.u32 2147483647, %v3667
    %vm3693 = vcmp.eq.f32.partialorder %v3692, 8.507059e+37
    %v3694 = vand.u32 %v3667, 2147483648
    %v3695 = vor.u32 1.1754944e-38, %v3694
    %v3696 = vsel %vm3693, %v3695, %v3691
    %v3697 = vmul.f32 %v3661, %v3696
    %v3699 = vsel %vm2681, %v3682, 0
    %v3702 = vsel %vm2681, %v3697, 0
    %v3705 = vsel %vm2737, %v3613, 0
    %3707 = vmatpush.msra.mxu0 0.0
    %3708 = vmatpush.msra.mxu0 0.0
    %3709 = vmatpush.msra.mxu0 0.0
    %3710 = vmatpush.msra.mxu0 0.0
    %3711 = vmatpush.msra.mxu0 0.0
    %3712 = vmatpush.msra.mxu0 0.0
    %3713 = vmatpush.msra.mxu0 0.0
    %3714 = vmatpush.msra.mxu0 0.0
    %3715 = vmatpush.msra.mxu0 0.0
    %3716 = vmatpush.msra.mxu0 0.0
    %3717 = vmatpush.msra.mxu0 0.0
    %3718 = vmatpush.msra.mxu0 0.0
    %3719 = vmatpush.msra.mxu0 0.0
    %3720 = vmatpush.msra.mxu0 0.0
    %3721 = vmatpush.msra.mxu0 %v3705
    %3722 = vmatpush.msra.mxu0 %v3610
    %3723 = vmatmul.f32.gmra.mxu0 %v3699
    %v3724 = vpop.f32.mrf.mxu0
    %v3725 = vadd.f32 0.0, %v3724
    %3726 = vmatmul.f32.gmra.mxu0 %v3702
    %v3727 = vpop.f32.mrf.mxu0
    %v3728 = vadd.f32 0.0, %v3727
    %3729 = vdwg.mxu0
    %s3730 = scalar_lea.vmem %s51, 256
    %v3731 = vld [vmem:[%s3730] sm:$0xff]
    %v3732 = vld [vmem:[%s3730 + $0x8] sm:$0xff]
    %v3733 = vld [vmem:[%s3730 + $0x10] sm:$0xff]
    %v3734 = vld [vmem:[%s3730 + $0x18] sm:$0xff]
    %v3735 = vld [vmem:[%s3730 + $0x20] sm:$0xff]
    %v3736 = vld [vmem:[%s3730 + $0x28] sm:$0xff]
    %v3737 = vld [vmem:[%s3730 + $0x30] sm:$0xff]
    %v3738 = vld [vmem:[%s3730 + $0x38] sm:$0xff]
    %v3740 = vsel %vm2210, %v3725, 0
    %v3743 = vsel %vm2210, %v3728, 0
    %3745 = vmatpush.msra.mxu0 0.0
    %3746 = vmatpush.msra.mxu0 0.0
    %3747 = vmatpush.msra.mxu0 0.0
    %3748 = vmatpush.msra.mxu0 0.0
    %3749 = vmatpush.msra.mxu0 0.0
    %3750 = vmatpush.msra.mxu0 0.0
    %3751 = vmatpush.msra.mxu0 0.0
    %3752 = vmatpush.msra.mxu0 0.0
    %3753 = vmatpush.msra.mxu0 %v3738
    %3754 = vmatpush.msra.mxu0 %v3737
    %3755 = vmatpush.msra.mxu0 %v3736
    %3756 = vmatpush.msra.mxu0 %v3735
    %3757 = vmatpush.msra.mxu0 %v3734
    %3758 = vmatpush.msra.mxu0 %v3733
    %3759 = vmatpush.msra.mxu0 %v3732
    %3760 = vmatpush.msra.mxu0 %v3731
    %3761 = vmatmul.f32.gmra.mxu0 %v3740
    %v3762 = vpop.f32.mrf.mxu0
    %v3763 = vadd.f32 0.0, %v3762
    %3764 = vmatmul.f32.gmra.mxu0 %v3743
    %v3765 = vpop.f32.mrf.mxu0
    %v3766 = vadd.f32 0.0, %v3765
    %3767 = vdwg.mxu0
    %v3768 = vadd.f32 %v3527, %v3763
    %v3769 = vadd.f32 %v3528, %v3766
    %s3770 = scalar_lea.vmem %s49, 160
    %v3771 = vld [vmem:[%s3770] sm:$0xff]
    %v3772 = vld [vmem:[%s3770 + $0x8] sm:$0xff]
    %v3773 = vld [vmem:[%s3770 + $0x10] sm:$0xff]
    %v3774 = vld [vmem:[%s3770 + $0x18] sm:$0xff]
    %3775 = vmatpush.msra.mxu0 0.0
    %3776 = vmatpush.msra.mxu0 0.0
    %3777 = vmatpush.msra.mxu0 0.0
    %3778 = vmatpush.msra.mxu0 0.0
    %3779 = vmatpush.msra.mxu0 0.0
    %3780 = vmatpush.msra.mxu0 0.0
    %3781 = vmatpush.msra.mxu0 0.0
    %3782 = vmatpush.msra.mxu0 0.0
    %3783 = vmatpush.msra.mxu0 0.0
    %3784 = vmatpush.msra.mxu0 0.0
    %3785 = vmatpush.msra.mxu0 0.0
    %3786 = vmatpush.msra.mxu0 0.0
    %3787 = vmatpush.msra.mxu0 %v3774
    %3788 = vmatpush.msra.mxu0 %v3773
    %3789 = vmatpush.msra.mxu0 %v3772
    %3790 = vmatpush.msra.mxu0 %v3771
    %3791 = vmatmul.f32.gmra.mxu0 %v2560
    %v3792 = vpop.f32.mrf.mxu0
    %v3793 = vadd.f32 0.0, %v3792
    %3794 = vmatmul.f32.gmra.mxu0 %v2563
    %v3795 = vpop.f32.mrf.mxu0
    %v3796 = vadd.f32 0.0, %v3795
    %3797 = vdwg.mxu0
    %v3798 = vmul.f32 %v3793, 0.125
    %v3799 = vmul.f32 %v3796, 0.125
    %s3800 = scalar_lea.vmem %s49, 352
    %v3801 = vld [vmem:[%s3800] sm:$0xff]
    %v3802 = vld [vmem:[%s3800 + $0x8] sm:$0xff]
    %v3803 = vld [vmem:[%s3800 + $0x10] sm:$0xff]
    %v3804 = vld [vmem:[%s3800 + $0x18] sm:$0xff]
    %3805 = vmatpush.msra.mxu0 0.0
    %3806 = vmatpush.msra.mxu0 0.0
    %3807 = vmatpush.msra.mxu0 0.0
    %3808 = vmatpush.msra.mxu0 0.0
    %3809 = vmatpush.msra.mxu0 0.0
    %3810 = vmatpush.msra.mxu0 0.0
    %3811 = vmatpush.msra.mxu0 0.0
    %3812 = vmatpush.msra.mxu0 0.0
    %3813 = vmatpush.msra.mxu0 0.0
    %3814 = vmatpush.msra.mxu0 0.0
    %3815 = vmatpush.msra.mxu0 0.0
    %3816 = vmatpush.msra.mxu0 0.0
    %3817 = vmatpush.msra.mxu0 %v3804
    %3818 = vmatpush.msra.mxu0 %v3803
    %3819 = vmatpush.msra.mxu0 %v3802
    %3820 = vmatpush.msra.mxu0 %v3801
    %3821 = vmatmul.f32.gmra.mxu0 %v2560
    %v3822 = vpop.f32.mrf.mxu0
    %v3823 = vadd.f32 0.0, %v3822
    %3824 = vmatmul.f32.gmra.mxu0 %v2563
    %v3825 = vpop.f32.mrf.mxu0
    %v3826 = vadd.f32 0.0, %v3825
    %3827 = vdwg.mxu0
    %s3828 = scalar_lea.vmem %s49, 544
    %v3829 = vld [vmem:[%s3828] sm:$0xff]
    %v3830 = vld [vmem:[%s3828 + $0x8] sm:$0xff]
    %v3831 = vld [vmem:[%s3828 + $0x10] sm:$0xff]
    %v3832 = vld [vmem:[%s3828 + $0x18] sm:$0xff]
    %3833 = vmatpush.msra.mxu0 0.0
    %3834 = vmatpush.msra.mxu0 0.0
    %3835 = vmatpush.msra.mxu0 0.0
    %3836 = vmatpush.msra.mxu0 0.0
    %3837 = vmatpush.msra.mxu0 0.0
    %3838 = vmatpush.msra.mxu0 0.0
    %3839 = vmatpush.msra.mxu0 0.0
    %3840 = vmatpush.msra.mxu0 0.0
    %3841 = vmatpush.msra.mxu0 0.0
    %3842 = vmatpush.msra.mxu0 0.0
    %3843 = vmatpush.msra.mxu0 0.0
    %3844 = vmatpush.msra.mxu0 0.0
    %3845 = vmatpush.msra.mxu0 %v3832
    %3846 = vmatpush.msra.mxu0 %v3831
    %3847 = vmatpush.msra.mxu0 %v3830
    %3848 = vmatpush.msra.mxu0 %v3829
    %3849 = vmatmul.f32.gmra.mxu0 %v2560
    %v3850 = vpop.f32.mrf.mxu0
    %v3851 = vadd.f32 0.0, %v3850
    %3852 = vmatmul.f32.gmra.mxu0 %v2563
    %v3853 = vpop.f32.mrf.mxu0
    %v3854 = vadd.f32 0.0, %v3853
    %3855 = vdwg.mxu0
    %v3857 = vsel %vm2210, %v3798, 0
    %v3860 = vsel %vm2210, %v3799, 0
    %v3863 = vsel %vm2210, %v3823, 0
    %v3866 = vsel %vm2210, %v3826, 0
    %3868 = vmatpush.xpose.msra.mxu0 0.0
    %3869 = vmatpush.xpose.msra.mxu0 0.0
    %3870 = vmatpush.xpose.msra.mxu0 0.0
    %3871 = vmatpush.xpose.msra.mxu0 0.0
    %3872 = vmatpush.xpose.msra.mxu0 0.0
    %3873 = vmatpush.xpose.msra.mxu0 0.0
    %3874 = vmatpush.xpose.msra.mxu0 0.0
    %3875 = vmatpush.xpose.msra.mxu0 0.0
    %3876 = vmatpush.xpose.msra.mxu0 0.0
    %3877 = vmatpush.xpose.msra.mxu0 0.0
    %3878 = vmatpush.xpose.msra.mxu0 0.0
    %3879 = vmatpush.xpose.msra.mxu0 0.0
    %3880 = vmatpush.xpose.msra.mxu0 0.0
    %3881 = vmatpush.xpose.msra.mxu0 0.0
    %3882 = vmatpush.xpose.msra.mxu0 %v3866
    %3883 = vmatpush.xpose.msra.mxu0 %v3863
    %3884 = vmatmul.f32.gmra.mxu0 %v3857
    %v3885 = vpop.f32.mrf.mxu0
    %v3886 = vadd.f32 %v318, %v3885
    %3887 = vmatmul.f32.gmra.mxu0 %v3860
    %v3888 = vpop.f32.mrf.mxu0
    %v3889 = vadd.f32 %v319, %v3888
    %3890 = vdwg.mxu0
    %v3891 = vsel %vm2681, %v3886, -inf
    %3892 = vmax.xlane.f32.xlu0 %v3891
    %v3893 = vpop.xlane.xlu0 %3892
    %v3894 = vsel %vm2685, %v3889, -inf
    %3895 = vmax.xlane.f32.xlu0 %v3894
    %v3896 = vpop.xlane.xlu0 %3895
    %v3897 = vsub.f32 %v3886, %v3893
    %v3898 = vsub.f32 %v3889, %v3896
    %v3899 = vmul.f32 %v3897, 1.442695
    %v3900 = vpow.pop %v3899
    %v3901 = vmul.f32 %v3898, 1.442695
    %v3902 = vpow.pop %v3901
    %v3903 = vsel %vm2681, %v3900, 0.0
    %3904 = vadd.xlane.f32.xlu0 %v3903
    %v3905 = vpop.xlane.xlu0 %3904
    %v3906 = vsel %vm2685, %v3902, 0.0
    %3907 = vadd.xlane.f32.xlu0 %v3906
    %v3908 = vpop.xlane.xlu0 %3907
    %v3909 = vrcp.pop %v3905
    %v3910 = vmul.f32 %v3905, %v3909
    %v3911 = vsub.f32 1.0, %v3910
    %v3912 = vmul.f32 %v3909, %v3911
    %v3913 = vadd.f32 %v3909, %v3912
    %vm3914 = vweird.f32 %v3905
    %vm3915 = vweird.f32 %v3909
    %vm3916 = vmor %vm3914, %vm3915
    %v3917 = vsel %vm3916, %v3909, %v3913
    %v3918 = vand.u32 2147483647, %v3905
    %vm3919 = vcmp.eq.f32.partialorder %v3918, 8.507059e+37
    %v3920 = vand.u32 %v3905, 2147483648
    %v3921 = vor.u32 1.1754944e-38, %v3920
    %v3922 = vsel %vm3919, %v3921, %v3917
    %v3923 = vmul.f32 %v3900, %v3922
    %v3924 = vrcp.pop %v3908
    %v3925 = vmul.f32 %v3908, %v3924
    %v3926 = vsub.f32 1.0, %v3925
    %v3927 = vmul.f32 %v3924, %v3926
    %v3928 = vadd.f32 %v3924, %v3927
    %vm3929 = vweird.f32 %v3908
    %vm3930 = vweird.f32 %v3924
    %vm3931 = vmor %vm3929, %vm3930
    %v3932 = vsel %vm3931, %v3924, %v3928
    %v3933 = vand.u32 2147483647, %v3908
    %vm3934 = vcmp.eq.f32.partialorder %v3933, 8.507059e+37
    %v3935 = vand.u32 %v3908, 2147483648
    %v3936 = vor.u32 1.1754944e-38, %v3935
    %v3937 = vsel %vm3934, %v3936, %v3932
    %v3938 = vmul.f32 %v3902, %v3937
    %v3940 = vsel %vm2681, %v3923, 0
    %v3943 = vsel %vm2681, %v3938, 0
    %v3946 = vsel %vm2737, %v3854, 0
    %3948 = vmatpush.msra.mxu0 0.0
    %3949 = vmatpush.msra.mxu0 0.0
    %3950 = vmatpush.msra.mxu0 0.0
    %3951 = vmatpush.msra.mxu0 0.0
    %3952 = vmatpush.msra.mxu0 0.0
    %3953 = vmatpush.msra.mxu0 0.0
    %3954 = vmatpush.msra.mxu0 0.0
    %3955 = vmatpush.msra.mxu0 0.0
    %3956 = vmatpush.msra.mxu0 0.0
    %3957 = vmatpush.msra.mxu0 0.0
    %3958 = vmatpush.msra.mxu0 0.0
    %3959 = vmatpush.msra.mxu0 0.0
    %3960 = vmatpush.msra.mxu0 0.0
    %3961 = vmatpush.msra.mxu0 0.0
    %3962 = vmatpush.msra.mxu0 %v3946
    %3963 = vmatpush.msra.mxu0 %v3851
    %3964 = vmatmul.f32.gmra.mxu0 %v3940
    %v3965 = vpop.f32.mrf.mxu0
    %v3966 = vadd.f32 0.0, %v3965
    %3967 = vmatmul.f32.gmra.mxu0 %v3943
    %v3968 = vpop.f32.mrf.mxu0
    %v3969 = vadd.f32 0.0, %v3968
    %3970 = vdwg.mxu0
    %s3971 = scalar_lea.vmem %s51, 320
    %v3972 = vld [vmem:[%s3971] sm:$0xff]
    %v3973 = vld [vmem:[%s3971 + $0x8] sm:$0xff]
    %v3974 = vld [vmem:[%s3971 + $0x10] sm:$0xff]
    %v3975 = vld [vmem:[%s3971 + $0x18] sm:$0xff]
    %v3976 = vld [vmem:[%s3971 + $0x20] sm:$0xff]
    %v3977 = vld [vmem:[%s3971 + $0x28] sm:$0xff]
    %v3978 = vld [vmem:[%s3971 + $0x30] sm:$0xff]
    %v3979 = vld [vmem:[%s3971 + $0x38] sm:$0xff]
    %v3981 = vsel %vm2210, %v3966, 0
    %v3984 = vsel %vm2210, %v3969, 0
    %3986 = vmatpush.msra.mxu0 0.0
    %3987 = vmatpush.msra.mxu0 0.0
    %3988 = vmatpush.msra.mxu0 0.0
    %3989 = vmatpush.msra.mxu0 0.0
    %3990 = vmatpush.msra.mxu0 0.0
    %3991 = vmatpush.msra.mxu0 0.0
    %3992 = vmatpush.msra.mxu0 0.0
    %3993 = vmatpush.msra.mxu0 0.0
    %3994 = vmatpush.msra.mxu0 %v3979
    %3995 = vmatpush.msra.mxu0 %v3978
    %3996 = vmatpush.msra.mxu0 %v3977
    %3997 = vmatpush.msra.mxu0 %v3976
    %3998 = vmatpush.msra.mxu0 %v3975
    %3999 = vmatpush.msra.mxu0 %v3974
    %4000 = vmatpush.msra.mxu0 %v3973
    %4001 = vmatpush.msra.mxu0 %v3972
    %4002 = vmatmul.f32.gmra.mxu0 %v3981
    %v4003 = vpop.f32.mrf.mxu0
    %v4004 = vadd.f32 0.0, %v4003
    %4005 = vmatmul.f32.gmra.mxu0 %v3984
    %v4006 = vpop.f32.mrf.mxu0
    %v4007 = vadd.f32 0.0, %v4006
    %4008 = vdwg.mxu0
    %v4009 = vadd.f32 %v3768, %v4004
    %v4010 = vadd.f32 %v3769, %v4007
    %v4011 = vadd.f32 %v2488, %v4009
    %v4012 = vadd.f32 %v2489, %v4010
    %v4013 = vld [vmem:[%s55] sm:$0x1]
    %v4014 = vld [vmem:[%s57] sm:$0x1]
    %v4015 = vld [vmem:[%s59] sm:$0xff]
    %v4016 = vld [vmem:[%s59 + $0x8] sm:$0xff]
    %v4017 = vld [vmem:[%s59 + $0x10] sm:$0xff]
    %v4018 = vld [vmem:[%s59 + $0x18] sm:$0xff]
    %v4019 = vld [vmem:[%s61] sm:$0x1]
    %v4020 = vld [vmem:[%s63] sm:$0xff]
    %v4021 = vld [vmem:[%s63 + $0x8] sm:$0xff]
    %v4022 = vld [vmem:[%s63 + $0x10] sm:$0xff]
    %v4023 = vld [vmem:[%s63 + $0x18] sm:$0xff]
    %v4024 = vld [vmem:[%s63 + $0x20] sm:$0xff]
    %v4025 = vld [vmem:[%s63 + $0x28] sm:$0xff]
    %v4026 = vld [vmem:[%s63 + $0x30] sm:$0xff]
    %v4027 = vld [vmem:[%s63 + $0x38] sm:$0xff]
    %v4028 = vld [vmem:[%s63 + $0x40] sm:$0xff]
    %v4029 = vld [vmem:[%s63 + $0x48] sm:$0xff]
    %v4030 = vld [vmem:[%s63 + $0x50] sm:$0xff]
    %v4031 = vld [vmem:[%s63 + $0x58] sm:$0xff]
    %v4032 = vld [vmem:[%s63 + $0x60] sm:$0xff]
    %v4033 = vld [vmem:[%s63 + $0x68] sm:$0xff]
    %v4034 = vld [vmem:[%s63 + $0x70] sm:$0xff]
    %v4035 = vld [vmem:[%s63 + $0x78] sm:$0xff]
    %v4036 = vld [vmem:[%s65] sm:$0x1]
    %v4037 = vsel %vm664, %v4011, 0.0
    %4038 = vadd.xlane.f32.xlu0 %v4037
    %v4039 = vpop.xlane.xlu0 %4038
    %v4040 = vsel %vm2496, %v4012, 0.0
    %4041 = vadd.xlane.f32.xlu0 %v4040
    %v4042 = vpop.xlane.xlu0 %4041
    %v4043 = vmul.f32 %v4039, %v2506
    %v4044 = vmul.f32 %v4042, %v2506
    %v4045 = vsub.f32 %v4011, %v4043
    %v4046 = vsub.f32 %v4012, %v4044
    %v4047 = vmul.f32 %v4045, %v4045
    %v4048 = vmul.f32 %v4046, %v4046
    %v4049 = vsel %vm664, %v4047, 0.0
    %4050 = vadd.xlane.f32.xlu0 %v4049
    %v4051 = vpop.xlane.xlu0 %4050
    %v4052 = vsel %vm2496, %v4048, 0.0
    %4053 = vadd.xlane.f32.xlu0 %v4052
    %v4054 = vpop.xlane.xlu0 %4053
    %v4055 = vmul.f32 %v4051, %v2506
    %v4056 = vmul.f32 %v4054, %v2506
    %v4057 = vadd.f32 %v4055, 1e-05
    %v4058 = vadd.f32 %v4056, 1e-05
    %v4059 = vrsqrt.pop %v4057
    %v4060 = vmul.f32 %v4059, %v4057
    %v4061 = vmul.f32 %v4060, %v4059
    %v4062 = vmul.f32 0.5, %v4061
    %v4063 = vsub.f32 1.5, %v4062
    %v4064 = vmul.f32 %v4059, %v4063
    %vm4065 = vweird.f32 %v4057
    %vm4066 = vweird.f32 %v4059
    %vm4067 = vmor %vm4065, %vm4066
    %v4068 = vsel %vm4067, %v4059, %v4064
    %v4069 = vrsqrt.pop %v4058
    %v4070 = vmul.f32 %v4069, %v4058
    %v4071 = vmul.f32 %v4070, %v4069
    %v4072 = vmul.f32 0.5, %v4071
    %v4073 = vsub.f32 1.5, %v4072
    %v4074 = vmul.f32 %v4069, %v4073
    %vm4075 = vweird.f32 %v4058
    %vm4076 = vweird.f32 %v4069
    %vm4077 = vmor %vm4075, %vm4076
    %v4078 = vsel %vm4077, %v4069, %v4074
    %v4079 = vmul.f32 %v4045, %v4068
    %v4080 = vmul.f32 %v4046, %v4078
    %v4082 = vperm.slane %v4013, 0
    %v4084 = vmul.f32 %v4079, %v4082
    %v4085 = vmul.f32 %v4080, %v4082
    %v4087 = vperm.slane %v4014, 0
    %v4089 = vadd.f32 %v4084, %v4087
    %v4090 = vadd.f32 %v4085, %v4087
    %v4092 = vperm.slane %v4019, 0
    %v4095 = vsel %vm664, %v4089, 0
    %v4098 = vsel %vm664, %v4090, 0
    %4100 = vmatpush.msra.mxu0 0.0
    %4101 = vmatpush.msra.mxu0 0.0
    %4102 = vmatpush.msra.mxu0 0.0
    %4103 = vmatpush.msra.mxu0 0.0
    %4104 = vmatpush.msra.mxu0 0.0
    %4105 = vmatpush.msra.mxu0 0.0
    %4106 = vmatpush.msra.mxu0 0.0
    %4107 = vmatpush.msra.mxu0 0.0
    %4108 = vmatpush.msra.mxu0 0.0
    %4109 = vmatpush.msra.mxu0 0.0
    %4110 = vmatpush.msra.mxu0 0.0
    %4111 = vmatpush.msra.mxu0 0.0
    %4112 = vmatpush.msra.mxu0 %v4018
    %4113 = vmatpush.msra.mxu0 %v4017
    %4114 = vmatpush.msra.mxu0 %v4016
    %4115 = vmatpush.msra.mxu0 %v4015
    %4116 = vmatmul.f32.gmra.mxu0 %v4095
    %v4117 = vpop.f32.mrf.mxu0
    %v4118 = vadd.f32 %v4092, %v4117
    %4119 = vmatmul.f32.gmra.mxu0 %v4098
    %v4120 = vpop.f32.mrf.mxu0
    %v4121 = vadd.f32 %v4092, %v4120
    %4122 = vdwg.mxu0
    %v4123 = vmul.f32 %v4118, 0.5
    %v4124 = vmul.f32 %v4121, 0.5
    %v4125 = vmul.f32 %v4118, 0.70710677
    %v4126 = vmul.f32 %v4121, 0.70710677
    %v4127 = vmul.f32 %v4125, %v4125
    %v4128 = vmin.f32 16.0, %v4127
    %v4129 = vmul.f32 %v4128, 2.1237322e-06
    %v4130 = vadd.f32 %v4129, 0.00028619796
    %v4131 = vmul.f32 %v4128, %v4130
    %v4132 = vadd.f32 %v4131, 0.0036580483
    %v4133 = vmul.f32 %v4128, %v4132
    %v4134 = vadd.f32 %v4133, 0.05243302
    %v4135 = vmul.f32 %v4128, %v4134
    %v4136 = vadd.f32 %v4135, 0.18741608
    %v4137 = vmul.f32 %v4128, %v4136
    %v4138 = vadd.f32 %v4137, 1.1283791
    %v4139 = vmul.f32 %v4125, %v4138
    %v4140 = vmul.f32 %v4128, 3.8918573e-05
    %v4141 = vadd.f32 %v4140, 0.001143296
    %v4142 = vmul.f32 %v4128, %v4141
    %v4143 = vadd.f32 %v4142, 0.014752088
    %v4144 = vmul.f32 %v4128, %v4143
    %v4145 = vadd.f32 %v4144, 0.112945676
    %v4146 = vmul.f32 %v4128, %v4145
    %v4147 = vadd.f32 %v4146, 0.4994258
    %v4148 = vmul.f32 %v4128, %v4147
    %v4149 = vadd.f32 %v4148, 1.0
    %v4150 = vrcp.pop %v4149
    %v4151 = vmul.f32 %v4149, %v4150
    %v4152 = vsub.f32 1.0, %v4151
    %v4153 = vmul.f32 %v4150, %v4152
    %v4154 = vadd.f32 %v4150, %v4153
    %vm4155 = vweird.f32 %v4149
    %vm4156 = vweird.f32 %v4150
    %vm4157 = vmor %vm4155, %vm4156
    %v4158 = vsel %vm4157, %v4150, %v4154
    %v4159 = vand.u32 2147483647, %v4149
    %vm4160 = vcmp.eq.f32.partialorder %v4159, 8.507059e+37
    %v4161 = vand.u32 %v4149, 2147483648
    %v4162 = vor.u32 1.1754944e-38, %v4161
    %v4163 = vsel %vm4160, %v4162, %v4158
    %v4164 = vmul.f32 %v4139, %v4163
    %v4165 = vmin.f32 %v4164, 1.0
    %v4166 = vmax.f32 %v4165, -1.0
    %v4167 = vmul.f32 %v4126, %v4126
    %v4168 = vmin.f32 16.0, %v4167
    %v4169 = vmul.f32 %v4168, 2.1237322e-06
    %v4170 = vadd.f32 %v4169, 0.00028619796
    %v4171 = vmul.f32 %v4168, %v4170
    %v4172 = vadd.f32 %v4171, 0.0036580483
    %v4173 = vmul.f32 %v4168, %v4172
    %v4174 = vadd.f32 %v4173, 0.05243302
    %v4175 = vmul.f32 %v4168, %v4174
    %v4176 = vadd.f32 %v4175, 0.18741608
    %v4177 = vmul.f32 %v4168, %v4176
    %v4178 = vadd.f32 %v4177, 1.1283791
    %v4179 = vmul.f32 %v4126, %v4178
    %v4180 = vmul.f32 %v4168, 3.8918573e-05
    %v4181 = vadd.f32 %v4180, 0.001143296
    %v4182 = vmul.f32 %v4168, %v4181
    %v4183 = vadd.f32 %v4182, 0.014752088
    %v4184 = vmul.f32 %v4168, %v4183
    %v4185 = vadd.f32 %v4184, 0.112945676
    %v4186 = vmul.f32 %v4168, %v4185
    %v4187 = vadd.f32 %v4186, 0.4994258
    %v4188 = vmul.f32 %v4168, %v4187
    %v4189 = vadd.f32 %v4188, 1.0
    %v4190 = vrcp.pop %v4189
    %v4191 = vmul.f32 %v4189, %v4190
    %v4192 = vsub.f32 1.0, %v4191
    %v4193 = vmul.f32 %v4190, %v4192
    %v4194 = vadd.f32 %v4190, %v4193
    %vm4195 = vweird.f32 %v4189
    %vm4196 = vweird.f32 %v4190
    %vm4197 = vmor %vm4195, %vm4196
    %v4198 = vsel %vm4197, %v4190, %v4194
    %v4199 = vand.u32 2147483647, %v4189
    %vm4200 = vcmp.eq.f32.partialorder %v4199, 8.507059e+37
    %v4201 = vand.u32 %v4189, 2147483648
    %v4202 = vor.u32 1.1754944e-38, %v4201
    %v4203 = vsel %vm4200, %v4202, %v4198
    %v4204 = vmul.f32 %v4179, %v4203
    %v4205 = vmin.f32 %v4204, 1.0
    %v4206 = vmax.f32 %v4205, -1.0
    %v4207 = vadd.f32 %v4166, 1.0
    %v4208 = vadd.f32 %v4206, 1.0
    %v4209 = vmul.f32 %v4123, %v4207
    %v4210 = vmul.f32 %v4124, %v4208
    %4211 = vmatpush.msra.mxu0 %v4035
    %4212 = vmatpush.msra.mxu0 %v4034
    %4213 = vmatpush.msra.mxu0 %v4033
    %4214 = vmatpush.msra.mxu0 %v4032
    %4215 = vmatpush.msra.mxu0 %v4031
    %4216 = vmatpush.msra.mxu0 %v4030
    %4217 = vmatpush.msra.mxu0 %v4029
    %4218 = vmatpush.msra.mxu0 %v4028
    %4219 = vmatpush.msra.mxu0 %v4027
    %4220 = vmatpush.msra.mxu0 %v4026
    %4221 = vmatpush.msra.mxu0 %v4025
    %4222 = vmatpush.msra.mxu0 %v4024
    %4223 = vmatpush.msra.mxu0 %v4023
    %4224 = vmatpush.msra.mxu0 %v4022
    %4225 = vmatpush.msra.mxu0 %v4021
    %4226 = vmatpush.msra.mxu0 %v4020
    %4227 = vmatmul.f32.gmra.mxu0 %v4209
    %v4228 = vpop.f32.mrf.mxu0
    %v4229 = vadd.f32 0.0, %v4228
    %4230 = vmatmul.f32.gmra.mxu0 %v4210
    %v4231 = vpop.f32.mrf.mxu0
    %v4232 = vadd.f32 0.0, %v4231
    %4233 = vdwg.mxu0
    %v4234 = vadd.f32 %v4011, %v4229
    %v4235 = vadd.f32 %v4012, %v4232
    %v4237 = vperm.slane %v4036, 0
    %v4239 = vadd.f32 %v4234, %v4237
    %v4240 = vadd.f32 %v4235, %v4237
    %v4241 = vld [vmem:[%s67] sm:$0x1]
    %v4242 = vld [vmem:[%s69] sm:$0x1]
    %v4243 = vld [vmem:[%s75] sm:$0x1]
    %v4245 = vperm.slane %v4241, 0
    %v4247 = vmul.f32 %v2349, %v4245
    %v4248 = vmul.f32 %v2350, %v4245
    %v4249 = vmul.f32 %v2351, %v4245
    %v4250 = vmul.f32 %v2352, %v4245
    %v4252 = vperm.slane %v4242, 0
    %v4254 = vadd.f32 %v4247, %v4252
    %v4255 = vadd.f32 %v4248, %v4252
    %v4256 = vadd.f32 %v4249, %v4252
    %v4257 = vadd.f32 %v4250, %v4252
    %v4258 = vld [vmem:[%s71] sm:$0xff]
    %v4259 = vld [vmem:[%s71 + $0x8] sm:$0xff]
    %v4261 = vsel %vm389, %v4254, 0
    %v4264 = vsel %vm389, %v4255, 0
    %v4267 = vsel %vm389, %v4256, 0
    %v4270 = vsel %vm389, %v4257, 0
    %4272 = vmatpush.msra.mxu0 0.0
    %4273 = vmatpush.msra.mxu0 0.0
    %4274 = vmatpush.msra.mxu0 0.0
    %4275 = vmatpush.msra.mxu0 0.0
    %4276 = vmatpush.msra.mxu0 0.0
    %4277 = vmatpush.msra.mxu0 0.0
    %4278 = vmatpush.msra.mxu0 0.0
    %4279 = vmatpush.msra.mxu0 0.0
    %4280 = vmatpush.msra.mxu0 0.0
    %4281 = vmatpush.msra.mxu0 0.0
    %4282 = vmatpush.msra.mxu0 0.0
    %4283 = vmatpush.msra.mxu0 0.0
    %4284 = vmatpush.msra.mxu0 0.0
    %4285 = vmatpush.msra.mxu0 0.0
    %4286 = vmatpush.msra.mxu0 %v4259
    %4287 = vmatpush.msra.mxu0 %v4258
    %4288 = vmatmul.f32.gmra.mxu0 %v4261
    %v4289 = vpop.f32.mrf.mxu0
    %v4290 = vadd.f32 0.0, %v4289
    %4291 = vmatmul.f32.gmra.mxu0 %v4264
    %v4292 = vpop.f32.mrf.mxu0
    %v4293 = vadd.f32 0.0, %v4292
    %4294 = vmatmul.f32.gmra.mxu0 %v4267
    %v4295 = vpop.f32.mrf.mxu0
    %v4296 = vadd.f32 0.0, %v4295
    %4297 = vmatmul.f32.gmra.mxu0 %v4270
    %v4298 = vpop.f32.mrf.mxu0
    %v4299 = vadd.f32 0.0, %v4298
    %4300 = vdwg.mxu0
    %v4301 = vmul.f32 %v4290, 0.20412415
    %v4302 = vmul.f32 %v4293, 0.20412415
    %v4303 = vmul.f32 %v4296, 0.20412415
    %v4304 = vmul.f32 %v4299, 0.20412415
    %s4305 = scalar_lea.vmem %s71, 64
    %v4306 = vld [vmem:[%s4305] sm:$0xff]
    %v4307 = vld [vmem:[%s4305 + $0x8] sm:$0xff]
    %4308 = vmatpush.msra.mxu0 0.0
    %4309 = vmatpush.msra.mxu0 0.0
    %4310 = vmatpush.msra.mxu0 0.0
    %4311 = vmatpush.msra.mxu0 0.0
    %4312 = vmatpush.msra.mxu0 0.0
    %4313 = vmatpush.msra.mxu0 0.0
    %4314 = vmatpush.msra.mxu0 0.0
    %4315 = vmatpush.msra.mxu0 0.0
    %4316 = vmatpush.msra.mxu0 0.0
    %4317 = vmatpush.msra.mxu0 0.0
    %4318 = vmatpush.msra.mxu0 0.0
    %4319 = vmatpush.msra.mxu0 0.0
    %4320 = vmatpush.msra.mxu0 0.0
    %4321 = vmatpush.msra.mxu0 0.0
    %4322 = vmatpush.msra.mxu0 %v4307
    %4323 = vmatpush.msra.mxu0 %v4306
    %4324 = vmatmul.f32.gmra.mxu0 %v4261
    %v4325 = vpop.f32.mrf.mxu0
    %v4326 = vadd.f32 0.0, %v4325
    %4327 = vmatmul.f32.gmra.mxu0 %v4264
    %v4328 = vpop.f32.mrf.mxu0
    %v4329 = vadd.f32 0.0, %v4328
    %4330 = vmatmul.f32.gmra.mxu0 %v4267
    %v4331 = vpop.f32.mrf.mxu0
    %v4332 = vadd.f32 0.0, %v4331
    %4333 = vmatmul.f32.gmra.mxu0 %v4270
    %v4334 = vpop.f32.mrf.mxu0
    %v4335 = vadd.f32 0.0, %v4334
    %4336 = vdwg.mxu0
    %s4337 = scalar_lea.vmem %s71, 128
    %v4338 = vld [vmem:[%s4337] sm:$0xff]
    %v4339 = vld [vmem:[%s4337 + $0x8] sm:$0xff]
    %4340 = vmatpush.msra.mxu0 0.0
    %4341 = vmatpush.msra.mxu0 0.0
    %4342 = vmatpush.msra.mxu0 0.0
    %4343 = vmatpush.msra.mxu0 0.0
    %4344 = vmatpush.msra.mxu0 0.0
    %4345 = vmatpush.msra.mxu0 0.0
    %4346 = vmatpush.msra.mxu0 0.0
    %4347 = vmatpush.msra.mxu0 0.0
    %4348 = vmatpush.msra.mxu0 0.0
    %4349 = vmatpush.msra.mxu0 0.0
    %4350 = vmatpush.msra.mxu0 0.0
    %4351 = vmatpush.msra.mxu0 0.0
    %4352 = vmatpush.msra.mxu0 0.0
    %4353 = vmatpush.msra.mxu0 0.0
    %4354 = vmatpush.msra.mxu0 %v4339
    %4355 = vmatpush.msra.mxu0 %v4338
    %4356 = vmatmul.f32.gmra.mxu0 %v4261
    %v4357 = vpop.f32.mrf.mxu0
    %v4358 = vadd.f32 0.0, %v4357
    %4359 = vmatmul.f32.gmra.mxu0 %v4264
    %v4360 = vpop.f32.mrf.mxu0
    %v4361 = vadd.f32 0.0, %v4360
    %4362 = vmatmul.f32.gmra.mxu0 %v4267
    %v4363 = vpop.f32.mrf.mxu0
    %v4364 = vadd.f32 0.0, %v4363
    %4365 = vmatmul.f32.gmra.mxu0 %v4270
    %v4366 = vpop.f32.mrf.mxu0
    %v4367 = vadd.f32 0.0, %v4366
    %4368 = vdwg.mxu0
    %v4370 = vsel %vm610, %v4301, 0
    %v4373 = vsel %vm610, %v4302, 0
    %v4376 = vsel %vm610, %v4303, 0
    %v4379 = vsel %vm610, %v4304, 0
    %v4382 = vsel %vm610, %v4326, 0
    %v4385 = vsel %vm610, %v4329, 0
    %v4388 = vsel %vm610, %v4332, 0
    %v4391 = vsel %vm610, %v4335, 0
    %4393 = vmatpush.xpose.msra.mxu0 0.0
    %4394 = vmatpush.xpose.msra.mxu0 0.0
    %4395 = vmatpush.xpose.msra.mxu0 0.0
    %4396 = vmatpush.xpose.msra.mxu0 0.0
    %4397 = vmatpush.xpose.msra.mxu0 0.0
    %4398 = vmatpush.xpose.msra.mxu0 0.0
    %4399 = vmatpush.xpose.msra.mxu0 0.0
    %4400 = vmatpush.xpose.msra.mxu0 0.0
    %4401 = vmatpush.xpose.msra.mxu0 0.0
    %4402 = vmatpush.xpose.msra.mxu0 0.0
    %4403 = vmatpush.xpose.msra.mxu0 0.0
    %4404 = vmatpush.xpose.msra.mxu0 0.0
    %4405 = vmatpush.xpose.msra.mxu0 %v4391
    %4406 = vmatpush.xpose.msra.mxu0 %v4388
    %4407 = vmatpush.xpose.msra.mxu0 %v4385
    %4408 = vmatpush.xpose.msra.mxu0 %v4382
    %4409 = vmatmul.f32.gmra.mxu0 %v4370
    %v4410 = vpop.f32.mrf.mxu0
    %v4411 = vadd.f32 %v314, %v4410
    %4412 = vmatmul.f32.gmra.mxu0 %v4373
    %v4413 = vpop.f32.mrf.mxu0
    %v4414 = vadd.f32 %v315, %v4413
    %4415 = vmatmul.f32.gmra.mxu0 %v4376
    %v4416 = vpop.f32.mrf.mxu0
    %v4417 = vadd.f32 %v316, %v4416
    %4418 = vmatmul.f32.gmra.mxu0 %v4379
    %v4419 = vpop.f32.mrf.mxu0
    %v4420 = vadd.f32 %v317, %v4419
    %4421 = vdwg.mxu0
    %v4422 = vsel %vm664, %v4411, -inf
    %4423 = vmax.xlane.f32.xlu0 %v4422
    %v4424 = vpop.xlane.xlu0 %4423
    %v4425 = vsel %vm664, %v4414, -inf
    %4426 = vmax.xlane.f32.xlu0 %v4425
    %v4427 = vpop.xlane.xlu0 %4426
    %v4428 = vsel %vm664, %v4417, -inf
    %4429 = vmax.xlane.f32.xlu0 %v4428
    %v4430 = vpop.xlane.xlu0 %4429
    %v4431 = vsel %vm664, %v4420, -inf
    %4432 = vmax.xlane.f32.xlu0 %v4431
    %v4433 = vpop.xlane.xlu0 %4432
    %v4434 = vsub.f32 %v4411, %v4424
    %v4435 = vsub.f32 %v4414, %v4427
    %v4436 = vsub.f32 %v4417, %v4430
    %v4437 = vsub.f32 %v4420, %v4433
    %v4438 = vmul.f32 %v4434, 1.442695
    %v4439 = vpow.pop %v4438
    %v4440 = vmul.f32 %v4435, 1.442695
    %v4441 = vpow.pop %v4440
    %v4442 = vmul.f32 %v4436, 1.442695
    %v4443 = vpow.pop %v4442
    %v4444 = vmul.f32 %v4437, 1.442695
    %v4445 = vpow.pop %v4444
    %v4446 = vsel %vm664, %v4439, 0.0
    %4447 = vadd.xlane.f32.xlu0 %v4446
    %v4448 = vpop.xlane.xlu0 %4447
    %v4449 = vsel %vm664, %v4441, 0.0
    %4450 = vadd.xlane.f32.xlu0 %v4449
    %v4451 = vpop.xlane.xlu0 %4450
    %v4452 = vsel %vm664, %v4443, 0.0
    %4453 = vadd.xlane.f32.xlu0 %v4452
    %v4454 = vpop.xlane.xlu0 %4453
    %v4455 = vsel %vm664, %v4445, 0.0
    %4456 = vadd.xlane.f32.xlu0 %v4455
    %v4457 = vpop.xlane.xlu0 %4456
    %v4458 = vrcp.pop %v4448
    %v4459 = vmul.f32 %v4448, %v4458
    %v4460 = vsub.f32 1.0, %v4459
    %v4461 = vmul.f32 %v4458, %v4460
    %v4462 = vadd.f32 %v4458, %v4461
    %vm4463 = vweird.f32 %v4448
    %vm4464 = vweird.f32 %v4458
    %vm4465 = vmor %vm4463, %vm4464
    %v4466 = vsel %vm4465, %v4458, %v4462
    %v4467 = vand.u32 2147483647, %v4448
    %vm4468 = vcmp.eq.f32.partialorder %v4467, 8.507059e+37
    %v4469 = vand.u32 %v4448, 2147483648
    %v4470 = vor.u32 1.1754944e-38, %v4469
    %v4471 = vsel %vm4468, %v4470, %v4466
    %v4472 = vmul.f32 %v4439, %v4471
    %v4473 = vrcp.pop %v4451
    %v4474 = vmul.f32 %v4451, %v4473
    %v4475 = vsub.f32 1.0, %v4474
    %v4476 = vmul.f32 %v4473, %v4475
    %v4477 = vadd.f32 %v4473, %v4476
    %vm4478 = vweird.f32 %v4451
    %vm4479 = vweird.f32 %v4473
    %vm4480 = vmor %vm4478, %vm4479
    %v4481 = vsel %vm4480, %v4473, %v4477
    %v4482 = vand.u32 2147483647, %v4451
    %vm4483 = vcmp.eq.f32.partialorder %v4482, 8.507059e+37
    %v4484 = vand.u32 %v4451, 2147483648
    %v4485 = vor.u32 1.1754944e-38, %v4484
    %v4486 = vsel %vm4483, %v4485, %v4481
    %v4487 = vmul.f32 %v4441, %v4486
    %v4488 = vrcp.pop %v4454
    %v4489 = vmul.f32 %v4454, %v4488
    %v4490 = vsub.f32 1.0, %v4489
    %v4491 = vmul.f32 %v4488, %v4490
    %v4492 = vadd.f32 %v4488, %v4491
    %vm4493 = vweird.f32 %v4454
    %vm4494 = vweird.f32 %v4488
    %vm4495 = vmor %vm4493, %vm4494
    %v4496 = vsel %vm4495, %v4488, %v4492
    %v4497 = vand.u32 2147483647, %v4454
    %vm4498 = vcmp.eq.f32.partialorder %v4497, 8.507059e+37
    %v4499 = vand.u32 %v4454, 2147483648
    %v4500 = vor.u32 1.1754944e-38, %v4499
    %v4501 = vsel %vm4498, %v4500, %v4496
    %v4502 = vmul.f32 %v4443, %v4501
    %v4503 = vrcp.pop %v4457
    %v4504 = vmul.f32 %v4457, %v4503
    %v4505 = vsub.f32 1.0, %v4504
    %v4506 = vmul.f32 %v4503, %v4505
    %v4507 = vadd.f32 %v4503, %v4506
    %vm4508 = vweird.f32 %v4457
    %vm4509 = vweird.f32 %v4503
    %vm4510 = vmor %vm4508, %vm4509
    %v4511 = vsel %vm4510, %v4503, %v4507
    %v4512 = vand.u32 2147483647, %v4457
    %vm4513 = vcmp.eq.f32.partialorder %v4512, 8.507059e+37
    %v4514 = vand.u32 %v4457, 2147483648
    %v4515 = vor.u32 1.1754944e-38, %v4514
    %v4516 = vsel %vm4513, %v4515, %v4511
    %v4517 = vmul.f32 %v4445, %v4516
    %v4519 = vsel %vm664, %v4472, 0
    %v4522 = vsel %vm664, %v4487, 0
    %v4525 = vsel %vm664, %v4502, 0
    %v4528 = vsel %vm664, %v4517, 0
    %4530 = vmatpush.msra.mxu0 0.0
    %4531 = vmatpush.msra.mxu0 0.0
    %4532 = vmatpush.msra.mxu0 0.0
    %4533 = vmatpush.msra.mxu0 0.0
    %4534 = vmatpush.msra.mxu0 0.0
    %4535 = vmatpush.msra.mxu0 0.0
    %4536 = vmatpush.msra.mxu0 0.0
    %4537 = vmatpush.msra.mxu0 0.0
    %4538 = vmatpush.msra.mxu0 0.0
    %4539 = vmatpush.msra.mxu0 0.0
    %4540 = vmatpush.msra.mxu0 0.0
    %4541 = vmatpush.msra.mxu0 0.0
    %4542 = vmatpush.msra.mxu0 %v4367
    %4543 = vmatpush.msra.mxu0 %v4364
    %4544 = vmatpush.msra.mxu0 %v4361
    %4545 = vmatpush.msra.mxu0 %v4358
    %4546 = vmatmul.f32.gmra.mxu0 %v4519
    %v4547 = vpop.f32.mrf.mxu0
    %v4548 = vadd.f32 0.0, %v4547
    %4549 = vmatmul.f32.gmra.mxu0 %v4522
    %v4550 = vpop.f32.mrf.mxu0
    %v4551 = vadd.f32 0.0, %v4550
    %4552 = vmatmul.f32.gmra.mxu0 %v4525
    %v4553 = vpop.f32.mrf.mxu0
    %v4554 = vadd.f32 0.0, %v4553
    %4555 = vmatmul.f32.gmra.mxu0 %v4528
    %v4556 = vpop.f32.mrf.mxu0
    %v4557 = vadd.f32 0.0, %v4556
    %4558 = vdwg.mxu0
    %v4559 = vld [vmem:[%s73] sm:$0xff]
    %v4560 = vld [vmem:[%s73 + $0x8] sm:$0xff]
    %v4561 = vld [vmem:[%s73 + $0x10] sm:$0xff]
    %v4563 = vsel %vm610, %v4548, 0
    %v4566 = vsel %vm610, %v4551, 0
    %v4569 = vsel %vm610, %v4554, 0
    %v4572 = vsel %vm610, %v4557, 0
    %4574 = vmatpush.msra.mxu0 0.0
    %4575 = vmatpush.msra.mxu0 0.0
    %4576 = vmatpush.msra.mxu0 0.0
    %4577 = vmatpush.msra.mxu0 0.0
    %4578 = vmatpush.msra.mxu0 0.0
    %4579 = vmatpush.msra.mxu0 0.0
    %4580 = vmatpush.msra.mxu0 0.0
    %4581 = vmatpush.msra.mxu0 0.0
    %4582 = vmatpush.msra.mxu0 0.0
    %4583 = vmatpush.msra.mxu0 0.0
    %4584 = vmatpush.msra.mxu0 0.0
    %4585 = vmatpush.msra.mxu0 0.0
    %4586 = vmatpush.msra.mxu0 0.0
    %4587 = vmatpush.msra.mxu0 %v4561
    %4588 = vmatpush.msra.mxu0 %v4560
    %4589 = vmatpush.msra.mxu0 %v4559
    %4590 = vmatmul.f32.gmra.mxu0 %v4563
    %v4591 = vpop.f32.mrf.mxu0
    %v4592 = vadd.f32 0.0, %v4591
    %4593 = vmatmul.f32.gmra.mxu0 %v4566
    %v4594 = vpop.f32.mrf.mxu0
    %v4595 = vadd.f32 0.0, %v4594
    %4596 = vmatmul.f32.gmra.mxu0 %v4569
    %v4597 = vpop.f32.mrf.mxu0
    %v4598 = vadd.f32 0.0, %v4597
    %4599 = vmatmul.f32.gmra.mxu0 %v4572
    %v4600 = vpop.f32.mrf.mxu0
    %v4601 = vadd.f32 0.0, %v4600
    %4602 = vdwg.mxu0
    %v4604 = vperm.slane %v4243, 0
    %v4606 = vadd.f32 %v4604, %v4592
    %v4607 = vadd.f32 %v4604, %v4595
    %v4608 = vadd.f32 %v4604, %v4598
    %v4609 = vadd.f32 %v4604, %v4601
    %s4610 = scalar_lea.vmem %s71, 16
    %v4611 = vld [vmem:[%s4610] sm:$0xff]
    %v4612 = vld [vmem:[%s4610 + $0x8] sm:$0xff]
    %4613 = vmatpush.msra.mxu0 0.0
    %4614 = vmatpush.msra.mxu0 0.0
    %4615 = vmatpush.msra.mxu0 0.0
    %4616 = vmatpush.msra.mxu0 0.0
    %4617 = vmatpush.msra.mxu0 0.0
    %4618 = vmatpush.msra.mxu0 0.0
    %4619 = vmatpush.msra.mxu0 0.0
    %4620 = vmatpush.msra.mxu0 0.0
    %4621 = vmatpush.msra.mxu0 0.0
    %4622 = vmatpush.msra.mxu0 0.0
    %4623 = vmatpush.msra.mxu0 0.0
    %4624 = vmatpush.msra.mxu0 0.0
    %4625 = vmatpush.msra.mxu0 0.0
    %4626 = vmatpush.msra.mxu0 0.0
    %4627 = vmatpush.msra.mxu0 %v4612
    %4628 = vmatpush.msra.mxu0 %v4611
    %4629 = vmatmul.f32.gmra.mxu0 %v4261
    %v4630 = vpop.f32.mrf.mxu0
    %v4631 = vadd.f32 0.0, %v4630
    %4632 = vmatmul.f32.gmra.mxu0 %v4264
    %v4633 = vpop.f32.mrf.mxu0
    %v4634 = vadd.f32 0.0, %v4633
    %4635 = vmatmul.f32.gmra.mxu0 %v4267
    %v4636 = vpop.f32.mrf.mxu0
    %v4637 = vadd.f32 0.0, %v4636
    %4638 = vmatmul.f32.gmra.mxu0 %v4270
    %v4639 = vpop.f32.mrf.mxu0
    %v4640 = vadd.f32 0.0, %v4639
    %4641 = vdwg.mxu0
    %v4642 = vmul.f32 %v4631, 0.20412415
    %v4643 = vmul.f32 %v4634, 0.20412415
    %v4644 = vmul.f32 %v4637, 0.20412415
    %v4645 = vmul.f32 %v4640, 0.20412415
    %s4646 = scalar_lea.vmem %s71, 80
    %v4647 = vld [vmem:[%s4646] sm:$0xff]
    %v4648 = vld [vmem:[%s4646 + $0x8] sm:$0xff]
    %4649 = vmatpush.msra.mxu0 0.0
    %4650 = vmatpush.msra.mxu0 0.0
    %4651 = vmatpush.msra.mxu0 0.0
    %4652 = vmatpush.msra.mxu0 0.0
    %4653 = vmatpush.msra.mxu0 0.0
    %4654 = vmatpush.msra.mxu0 0.0
    %4655 = vmatpush.msra.mxu0 0.0
    %4656 = vmatpush.msra.mxu0 0.0
    %4657 = vmatpush.msra.mxu0 0.0
    %4658 = vmatpush.msra.mxu0 0.0
    %4659 = vmatpush.msra.mxu0 0.0
    %4660 = vmatpush.msra.mxu0 0.0
    %4661 = vmatpush.msra.mxu0 0.0
    %4662 = vmatpush.msra.mxu0 0.0
    %4663 = vmatpush.msra.mxu0 %v4648
    %4664 = vmatpush.msra.mxu0 %v4647
    %4665 = vmatmul.f32.gmra.mxu0 %v4261
    %v4666 = vpop.f32.mrf.mxu0
    %v4667 = vadd.f32 0.0, %v4666
    %4668 = vmatmul.f32.gmra.mxu0 %v4264
    %v4669 = vpop.f32.mrf.mxu0
    %v4670 = vadd.f32 0.0, %v4669
    %4671 = vmatmul.f32.gmra.mxu0 %v4267
    %v4672 = vpop.f32.mrf.mxu0
    %v4673 = vadd.f32 0.0, %v4672
    %4674 = vmatmul.f32.gmra.mxu0 %v4270
    %v4675 = vpop.f32.mrf.mxu0
    %v4676 = vadd.f32 0.0, %v4675
    %4677 = vdwg.mxu0
    %s4678 = scalar_lea.vmem %s71, 144
    %v4679 = vld [vmem:[%s4678] sm:$0xff]
    %v4680 = vld [vmem:[%s4678 + $0x8] sm:$0xff]
    %4681 = vmatpush.msra.mxu0 0.0
    %4682 = vmatpush.msra.mxu0 0.0
    %4683 = vmatpush.msra.mxu0 0.0
    %4684 = vmatpush.msra.mxu0 0.0
    %4685 = vmatpush.msra.mxu0 0.0
    %4686 = vmatpush.msra.mxu0 0.0
    %4687 = vmatpush.msra.mxu0 0.0
    %4688 = vmatpush.msra.mxu0 0.0
    %4689 = vmatpush.msra.mxu0 0.0
    %4690 = vmatpush.msra.mxu0 0.0
    %4691 = vmatpush.msra.mxu0 0.0
    %4692 = vmatpush.msra.mxu0 0.0
    %4693 = vmatpush.msra.mxu0 0.0
    %4694 = vmatpush.msra.mxu0 0.0
    %4695 = vmatpush.msra.mxu0 %v4680
    %4696 = vmatpush.msra.mxu0 %v4679
    %4697 = vmatmul.f32.gmra.mxu0 %v4261
    %v4698 = vpop.f32.mrf.mxu0
    %v4699 = vadd.f32 0.0, %v4698
    %4700 = vmatmul.f32.gmra.mxu0 %v4264
    %v4701 = vpop.f32.mrf.mxu0
    %v4702 = vadd.f32 0.0, %v4701
    %4703 = vmatmul.f32.gmra.mxu0 %v4267
    %v4704 = vpop.f32.mrf.mxu0
    %v4705 = vadd.f32 0.0, %v4704
    %4706 = vmatmul.f32.gmra.mxu0 %v4270
    %v4707 = vpop.f32.mrf.mxu0
    %v4708 = vadd.f32 0.0, %v4707
    %4709 = vdwg.mxu0
    %v4711 = vsel %vm610, %v4642, 0
    %v4714 = vsel %vm610, %v4643, 0
    %v4717 = vsel %vm610, %v4644, 0
    %v4720 = vsel %vm610, %v4645, 0
    %v4723 = vsel %vm610, %v4667, 0
    %v4726 = vsel %vm610, %v4670, 0
    %v4729 = vsel %vm610, %v4673, 0
    %v4732 = vsel %vm610, %v4676, 0
    %4734 = vmatpush.xpose.msra.mxu0 0.0
    %4735 = vmatpush.xpose.msra.mxu0 0.0
    %4736 = vmatpush.xpose.msra.mxu0 0.0
    %4737 = vmatpush.xpose.msra.mxu0 0.0
    %4738 = vmatpush.xpose.msra.mxu0 0.0
    %4739 = vmatpush.xpose.msra.mxu0 0.0
    %4740 = vmatpush.xpose.msra.mxu0 0.0
    %4741 = vmatpush.xpose.msra.mxu0 0.0
    %4742 = vmatpush.xpose.msra.mxu0 0.0
    %4743 = vmatpush.xpose.msra.mxu0 0.0
    %4744 = vmatpush.xpose.msra.mxu0 0.0
    %4745 = vmatpush.xpose.msra.mxu0 0.0
    %4746 = vmatpush.xpose.msra.mxu0 %v4732
    %4747 = vmatpush.xpose.msra.mxu0 %v4729
    %4748 = vmatpush.xpose.msra.mxu0 %v4726
    %4749 = vmatpush.xpose.msra.mxu0 %v4723
    %4750 = vmatmul.f32.gmra.mxu0 %v4711
    %v4751 = vpop.f32.mrf.mxu0
    %v4752 = vadd.f32 %v314, %v4751
    %4753 = vmatmul.f32.gmra.mxu0 %v4714
    %v4754 = vpop.f32.mrf.mxu0
    %v4755 = vadd.f32 %v315, %v4754
    %4756 = vmatmul.f32.gmra.mxu0 %v4717
    %v4757 = vpop.f32.mrf.mxu0
    %v4758 = vadd.f32 %v316, %v4757
    %4759 = vmatmul.f32.gmra.mxu0 %v4720
    %v4760 = vpop.f32.mrf.mxu0
    %v4761 = vadd.f32 %v317, %v4760
    %4762 = vdwg.mxu0
    %v4763 = vsel %vm664, %v4752, -inf
    %4764 = vmax.xlane.f32.xlu0 %v4763
    %v4765 = vpop.xlane.xlu0 %4764
    %v4766 = vsel %vm664, %v4755, -inf
    %4767 = vmax.xlane.f32.xlu0 %v4766
    %v4768 = vpop.xlane.xlu0 %4767
    %v4769 = vsel %vm664, %v4758, -inf
    %4770 = vmax.xlane.f32.xlu0 %v4769
    %v4771 = vpop.xlane.xlu0 %4770
    %v4772 = vsel %vm664, %v4761, -inf
    %4773 = vmax.xlane.f32.xlu0 %v4772
    %v4774 = vpop.xlane.xlu0 %4773
    %v4775 = vsub.f32 %v4752, %v4765
    %v4776 = vsub.f32 %v4755, %v4768
    %v4777 = vsub.f32 %v4758, %v4771
    %v4778 = vsub.f32 %v4761, %v4774
    %v4779 = vmul.f32 %v4775, 1.442695
    %v4780 = vpow.pop %v4779
    %v4781 = vmul.f32 %v4776, 1.442695
    %v4782 = vpow.pop %v4781
    %v4783 = vmul.f32 %v4777, 1.442695
    %v4784 = vpow.pop %v4783
    %v4785 = vmul.f32 %v4778, 1.442695
    %v4786 = vpow.pop %v4785
    %v4787 = vsel %vm664, %v4780, 0.0
    %4788 = vadd.xlane.f32.xlu0 %v4787
    %v4789 = vpop.xlane.xlu0 %4788
    %v4790 = vsel %vm664, %v4782, 0.0
    %4791 = vadd.xlane.f32.xlu0 %v4790
    %v4792 = vpop.xlane.xlu0 %4791
    %v4793 = vsel %vm664, %v4784, 0.0
    %4794 = vadd.xlane.f32.xlu0 %v4793
    %v4795 = vpop.xlane.xlu0 %4794
    %v4796 = vsel %vm664, %v4786, 0.0
    %4797 = vadd.xlane.f32.xlu0 %v4796
    %v4798 = vpop.xlane.xlu0 %4797
    %v4799 = vrcp.pop %v4789
    %v4800 = vmul.f32 %v4789, %v4799
    %v4801 = vsub.f32 1.0, %v4800
    %v4802 = vmul.f32 %v4799, %v4801
    %v4803 = vadd.f32 %v4799, %v4802
    %vm4804 = vweird.f32 %v4789
    %vm4805 = vweird.f32 %v4799
    %vm4806 = vmor %vm4804, %vm4805
    %v4807 = vsel %vm4806, %v4799, %v4803
    %v4808 = vand.u32 2147483647, %v4789
    %vm4809 = vcmp.eq.f32.partialorder %v4808, 8.507059e+37
    %v4810 = vand.u32 %v4789, 2147483648
    %v4811 = vor.u32 1.1754944e-38, %v4810
    %v4812 = vsel %vm4809, %v4811, %v4807
    %v4813 = vmul.f32 %v4780, %v4812
    %v4814 = vrcp.pop %v4792
    %v4815 = vmul.f32 %v4792, %v4814
    %v4816 = vsub.f32 1.0, %v4815
    %v4817 = vmul.f32 %v4814, %v4816
    %v4818 = vadd.f32 %v4814, %v4817
    %vm4819 = vweird.f32 %v4792
    %vm4820 = vweird.f32 %v4814
    %vm4821 = vmor %vm4819, %vm4820
    %v4822 = vsel %vm4821, %v4814, %v4818
    %v4823 = vand.u32 2147483647, %v4792
    %vm4824 = vcmp.eq.f32.partialorder %v4823, 8.507059e+37
    %v4825 = vand.u32 %v4792, 2147483648
    %v4826 = vor.u32 1.1754944e-38, %v4825
    %v4827 = vsel %vm4824, %v4826, %v4822
    %v4828 = vmul.f32 %v4782, %v4827
    %v4829 = vrcp.pop %v4795
    %v4830 = vmul.f32 %v4795, %v4829
    %v4831 = vsub.f32 1.0, %v4830
    %v4832 = vmul.f32 %v4829, %v4831
    %v4833 = vadd.f32 %v4829, %v4832
    %vm4834 = vweird.f32 %v4795
    %vm4835 = vweird.f32 %v4829
    %vm4836 = vmor %vm4834, %vm4835
    %v4837 = vsel %vm4836, %v4829, %v4833
    %v4838 = vand.u32 2147483647, %v4795
    %vm4839 = vcmp.eq.f32.partialorder %v4838, 8.507059e+37
    %v4840 = vand.u32 %v4795, 2147483648
    %v4841 = vor.u32 1.1754944e-38, %v4840
    %v4842 = vsel %vm4839, %v4841, %v4837
    %v4843 = vmul.f32 %v4784, %v4842
    %v4844 = vrcp.pop %v4798
    %v4845 = vmul.f32 %v4798, %v4844
    %v4846 = vsub.f32 1.0, %v4845
    %v4847 = vmul.f32 %v4844, %v4846
    %v4848 = vadd.f32 %v4844, %v4847
    %vm4849 = vweird.f32 %v4798
    %vm4850 = vweird.f32 %v4844
    %vm4851 = vmor %vm4849, %vm4850
    %v4852 = vsel %vm4851, %v4844, %v4848
    %v4853 = vand.u32 2147483647, %v4798
    %vm4854 = vcmp.eq.f32.partialorder %v4853, 8.507059e+37
    %v4855 = vand.u32 %v4798, 2147483648
    %v4856 = vor.u32 1.1754944e-38, %v4855
    %v4857 = vsel %vm4854, %v4856, %v4852
    %v4858 = vmul.f32 %v4786, %v4857
    %v4860 = vsel %vm664, %v4813, 0
    %v4863 = vsel %vm664, %v4828, 0
    %v4866 = vsel %vm664, %v4843, 0
    %v4869 = vsel %vm664, %v4858, 0
    %4871 = vmatpush.msra.mxu0 0.0
    %4872 = vmatpush.msra.mxu0 0.0
    %4873 = vmatpush.msra.mxu0 0.0
    %4874 = vmatpush.msra.mxu0 0.0
    %4875 = vmatpush.msra.mxu0 0.0
    %4876 = vmatpush.msra.mxu0 0.0
    %4877 = vmatpush.msra.mxu0 0.0
    %4878 = vmatpush.msra.mxu0 0.0
    %4879 = vmatpush.msra.mxu0 0.0
    %4880 = vmatpush.msra.mxu0 0.0
    %4881 = vmatpush.msra.mxu0 0.0
    %4882 = vmatpush.msra.mxu0 0.0
    %4883 = vmatpush.msra.mxu0 %v4708
    %4884 = vmatpush.msra.mxu0 %v4705
    %4885 = vmatpush.msra.mxu0 %v4702
    %4886 = vmatpush.msra.mxu0 %v4699
    %4887 = vmatmul.f32.gmra.mxu0 %v4860
    %v4888 = vpop.f32.mrf.mxu0
    %v4889 = vadd.f32 0.0, %v4888
    %4890 = vmatmul.f32.gmra.mxu0 %v4863
    %v4891 = vpop.f32.mrf.mxu0
    %v4892 = vadd.f32 0.0, %v4891
    %4893 = vmatmul.f32.gmra.mxu0 %v4866
    %v4894 = vpop.f32.mrf.mxu0
    %v4895 = vadd.f32 0.0, %v4894
    %4896 = vmatmul.f32.gmra.mxu0 %v4869
    %v4897 = vpop.f32.mrf.mxu0
    %v4898 = vadd.f32 0.0, %v4897
    %4899 = vdwg.mxu0
    %s4900 = scalar_lea.vmem %s73, 24
    %v4901 = vld [vmem:[%s4900] sm:$0xff]
    %v4902 = vld [vmem:[%s4900 + $0x8] sm:$0xff]
    %v4903 = vld [vmem:[%s4900 + $0x10] sm:$0xff]
    %v4905 = vsel %vm610, %v4889, 0
    %v4908 = vsel %vm610, %v4892, 0
    %v4911 = vsel %vm610, %v4895, 0
    %v4914 = vsel %vm610, %v4898, 0
    %4916 = vmatpush.msra.mxu0 0.0
    %4917 = vmatpush.msra.mxu0 0.0
    %4918 = vmatpush.msra.mxu0 0.0
    %4919 = vmatpush.msra.mxu0 0.0
    %4920 = vmatpush.msra.mxu0 0.0
    %4921 = vmatpush.msra.mxu0 0.0
    %4922 = vmatpush.msra.mxu0 0.0
    %4923 = vmatpush.msra.mxu0 0.0
    %4924 = vmatpush.msra.mxu0 0.0
    %4925 = vmatpush.msra.mxu0 0.0
    %4926 = vmatpush.msra.mxu0 0.0
    %4927 = vmatpush.msra.mxu0 0.0
    %4928 = vmatpush.msra.mxu0 0.0
    %4929 = vmatpush.msra.mxu0 %v4903
    %4930 = vmatpush.msra.mxu0 %v4902
    %4931 = vmatpush.msra.mxu0 %v4901
    %4932 = vmatmul.f32.gmra.mxu0 %v4905
    %v4933 = vpop.f32.mrf.mxu0
    %v4934 = vadd.f32 0.0, %v4933
    %4935 = vmatmul.f32.gmra.mxu0 %v4908
    %v4936 = vpop.f32.mrf.mxu0
    %v4937 = vadd.f32 0.0, %v4936
    %4938 = vmatmul.f32.gmra.mxu0 %v4911
    %v4939 = vpop.f32.mrf.mxu0
    %v4940 = vadd.f32 0.0, %v4939
    %4941 = vmatmul.f32.gmra.mxu0 %v4914
    %v4942 = vpop.f32.mrf.mxu0
    %v4943 = vadd.f32 0.0, %v4942
    %4944 = vdwg.mxu0
    %v4945 = vadd.f32 %v4606, %v4934
    %v4946 = vadd.f32 %v4607, %v4937
    %v4947 = vadd.f32 %v4608, %v4940
    %v4948 = vadd.f32 %v4609, %v4943
    %s4949 = scalar_lea.vmem %s71, 32
    %v4950 = vld [vmem:[%s4949] sm:$0xff]
    %v4951 = vld [vmem:[%s4949 + $0x8] sm:$0xff]
    %4952 = vmatpush.msra.mxu0 0.0
    %4953 = vmatpush.msra.mxu0 0.0
    %4954 = vmatpush.msra.mxu0 0.0
    %4955 = vmatpush.msra.mxu0 0.0
    %4956 = vmatpush.msra.mxu0 0.0
    %4957 = vmatpush.msra.mxu0 0.0
    %4958 = vmatpush.msra.mxu0 0.0
    %4959 = vmatpush.msra.mxu0 0.0
    %4960 = vmatpush.msra.mxu0 0.0
    %4961 = vmatpush.msra.mxu0 0.0
    %4962 = vmatpush.msra.mxu0 0.0
    %4963 = vmatpush.msra.mxu0 0.0
    %4964 = vmatpush.msra.mxu0 0.0
    %4965 = vmatpush.msra.mxu0 0.0
    %4966 = vmatpush.msra.mxu0 %v4951
    %4967 = vmatpush.msra.mxu0 %v4950
    %4968 = vmatmul.f32.gmra.mxu0 %v4261
    %v4969 = vpop.f32.mrf.mxu0
    %v4970 = vadd.f32 0.0, %v4969
    %4971 = vmatmul.f32.gmra.mxu0 %v4264
    %v4972 = vpop.f32.mrf.mxu0
    %v4973 = vadd.f32 0.0, %v4972
    %4974 = vmatmul.f32.gmra.mxu0 %v4267
    %v4975 = vpop.f32.mrf.mxu0
    %v4976 = vadd.f32 0.0, %v4975
    %4977 = vmatmul.f32.gmra.mxu0 %v4270
    %v4978 = vpop.f32.mrf.mxu0
    %v4979 = vadd.f32 0.0, %v4978
    %4980 = vdwg.mxu0
    %v4981 = vmul.f32 %v4970, 0.20412415
    %v4982 = vmul.f32 %v4973, 0.20412415
    %v4983 = vmul.f32 %v4976, 0.20412415
    %v4984 = vmul.f32 %v4979, 0.20412415
    %s4985 = scalar_lea.vmem %s71, 96
    %v4986 = vld [vmem:[%s4985] sm:$0xff]
    %v4987 = vld [vmem:[%s4985 + $0x8] sm:$0xff]
    %4988 = vmatpush.msra.mxu0 0.0
    %4989 = vmatpush.msra.mxu0 0.0
    %4990 = vmatpush.msra.mxu0 0.0
    %4991 = vmatpush.msra.mxu0 0.0
    %4992 = vmatpush.msra.mxu0 0.0
    %4993 = vmatpush.msra.mxu0 0.0
    %4994 = vmatpush.msra.mxu0 0.0
    %4995 = vmatpush.msra.mxu0 0.0
    %4996 = vmatpush.msra.mxu0 0.0
    %4997 = vmatpush.msra.mxu0 0.0
    %4998 = vmatpush.msra.mxu0 0.0
    %4999 = vmatpush.msra.mxu0 0.0
    %5000 = vmatpush.msra.mxu0 0.0
    %5001 = vmatpush.msra.mxu0 0.0
    %5002 = vmatpush.msra.mxu0 %v4987
    %5003 = vmatpush.msra.mxu0 %v4986
    %5004 = vmatmul.f32.gmra.mxu0 %v4261
    %v5005 = vpop.f32.mrf.mxu0
    %v5006 = vadd.f32 0.0, %v5005
    %5007 = vmatmul.f32.gmra.mxu0 %v4264
    %v5008 = vpop.f32.mrf.mxu0
    %v5009 = vadd.f32 0.0, %v5008
    %5010 = vmatmul.f32.gmra.mxu0 %v4267
    %v5011 = vpop.f32.mrf.mxu0
    %v5012 = vadd.f32 0.0, %v5011
    %5013 = vmatmul.f32.gmra.mxu0 %v4270
    %v5014 = vpop.f32.mrf.mxu0
    %v5015 = vadd.f32 0.0, %v5014
    %5016 = vdwg.mxu0
    %s5017 = scalar_lea.vmem %s71, 160
    %v5018 = vld [vmem:[%s5017] sm:$0xff]
    %v5019 = vld [vmem:[%s5017 + $0x8] sm:$0xff]
    %5020 = vmatpush.msra.mxu0 0.0
    %5021 = vmatpush.msra.mxu0 0.0
    %5022 = vmatpush.msra.mxu0 0.0
    %5023 = vmatpush.msra.mxu0 0.0
    %5024 = vmatpush.msra.mxu0 0.0
    %5025 = vmatpush.msra.mxu0 0.0
    %5026 = vmatpush.msra.mxu0 0.0
    %5027 = vmatpush.msra.mxu0 0.0
    %5028 = vmatpush.msra.mxu0 0.0
    %5029 = vmatpush.msra.mxu0 0.0
    %5030 = vmatpush.msra.mxu0 0.0
    %5031 = vmatpush.msra.mxu0 0.0
    %5032 = vmatpush.msra.mxu0 0.0
    %5033 = vmatpush.msra.mxu0 0.0
    %5034 = vmatpush.msra.mxu0 %v5019
    %5035 = vmatpush.msra.mxu0 %v5018
    %5036 = vmatmul.f32.gmra.mxu0 %v4261
    %v5037 = vpop.f32.mrf.mxu0
    %v5038 = vadd.f32 0.0, %v5037
    %5039 = vmatmul.f32.gmra.mxu0 %v4264
    %v5040 = vpop.f32.mrf.mxu0
    %v5041 = vadd.f32 0.0, %v5040
    %5042 = vmatmul.f32.gmra.mxu0 %v4267
    %v5043 = vpop.f32.mrf.mxu0
    %v5044 = vadd.f32 0.0, %v5043
    %5045 = vmatmul.f32.gmra.mxu0 %v4270
    %v5046 = vpop.f32.mrf.mxu0
    %v5047 = vadd.f32 0.0, %v5046
    %5048 = vdwg.mxu0
    %v5050 = vsel %vm610, %v4981, 0
    %v5053 = vsel %vm610, %v4982, 0
    %v5056 = vsel %vm610, %v4983, 0
    %v5059 = vsel %vm610, %v4984, 0
    %v5062 = vsel %vm610, %v5006, 0
    %v5065 = vsel %vm610, %v5009, 0
    %v5068 = vsel %vm610, %v5012, 0
    %v5071 = vsel %vm610, %v5015, 0
    %5073 = vmatpush.xpose.msra.mxu0 0.0
    %5074 = vmatpush.xpose.msra.mxu0 0.0
    %5075 = vmatpush.xpose.msra.mxu0 0.0
    %5076 = vmatpush.xpose.msra.mxu0 0.0
    %5077 = vmatpush.xpose.msra.mxu0 0.0
    %5078 = vmatpush.xpose.msra.mxu0 0.0
    %5079 = vmatpush.xpose.msra.mxu0 0.0
    %5080 = vmatpush.xpose.msra.mxu0 0.0
    %5081 = vmatpush.xpose.msra.mxu0 0.0
    %5082 = vmatpush.xpose.msra.mxu0 0.0
    %5083 = vmatpush.xpose.msra.mxu0 0.0
    %5084 = vmatpush.xpose.msra.mxu0 0.0
    %5085 = vmatpush.xpose.msra.mxu0 %v5071
    %5086 = vmatpush.xpose.msra.mxu0 %v5068
    %5087 = vmatpush.xpose.msra.mxu0 %v5065
    %5088 = vmatpush.xpose.msra.mxu0 %v5062
    %5089 = vmatmul.f32.gmra.mxu0 %v5050
    %v5090 = vpop.f32.mrf.mxu0
    %v5091 = vadd.f32 %v314, %v5090
    %5092 = vmatmul.f32.gmra.mxu0 %v5053
    %v5093 = vpop.f32.mrf.mxu0
    %v5094 = vadd.f32 %v315, %v5093
    %5095 = vmatmul.f32.gmra.mxu0 %v5056
    %v5096 = vpop.f32.mrf.mxu0
    %v5097 = vadd.f32 %v316, %v5096
    %5098 = vmatmul.f32.gmra.mxu0 %v5059
    %v5099 = vpop.f32.mrf.mxu0
    %v5100 = vadd.f32 %v317, %v5099
    %5101 = vdwg.mxu0
    %v5102 = vsel %vm664, %v5091, -inf
    %5103 = vmax.xlane.f32.xlu0 %v5102
    %v5104 = vpop.xlane.xlu0 %5103
    %v5105 = vsel %vm664, %v5094, -inf
    %5106 = vmax.xlane.f32.xlu0 %v5105
    %v5107 = vpop.xlane.xlu0 %5106
    %v5108 = vsel %vm664, %v5097, -inf
    %5109 = vmax.xlane.f32.xlu0 %v5108
    %v5110 = vpop.xlane.xlu0 %5109
    %v5111 = vsel %vm664, %v5100, -inf
    %5112 = vmax.xlane.f32.xlu0 %v5111
    %v5113 = vpop.xlane.xlu0 %5112
    %v5114 = vsub.f32 %v5091, %v5104
    %v5115 = vsub.f32 %v5094, %v5107
    %v5116 = vsub.f32 %v5097, %v5110
    %v5117 = vsub.f32 %v5100, %v5113
    %v5118 = vmul.f32 %v5114, 1.442695
    %v5119 = vpow.pop %v5118
    %v5120 = vmul.f32 %v5115, 1.442695
    %v5121 = vpow.pop %v5120
    %v5122 = vmul.f32 %v5116, 1.442695
    %v5123 = vpow.pop %v5122
    %v5124 = vmul.f32 %v5117, 1.442695
    %v5125 = vpow.pop %v5124
    %v5126 = vsel %vm664, %v5119, 0.0
    %5127 = vadd.xlane.f32.xlu0 %v5126
    %v5128 = vpop.xlane.xlu0 %5127
    %v5129 = vsel %vm664, %v5121, 0.0
    %5130 = vadd.xlane.f32.xlu0 %v5129
    %v5131 = vpop.xlane.xlu0 %5130
    %v5132 = vsel %vm664, %v5123, 0.0
    %5133 = vadd.xlane.f32.xlu0 %v5132
    %v5134 = vpop.xlane.xlu0 %5133
    %v5135 = vsel %vm664, %v5125, 0.0
    %5136 = vadd.xlane.f32.xlu0 %v5135
    %v5137 = vpop.xlane.xlu0 %5136
    %v5138 = vrcp.pop %v5128
    %v5139 = vmul.f32 %v5128, %v5138
    %v5140 = vsub.f32 1.0, %v5139
    %v5141 = vmul.f32 %v5138, %v5140
    %v5142 = vadd.f32 %v5138, %v5141
    %vm5143 = vweird.f32 %v5128
    %vm5144 = vweird.f32 %v5138
    %vm5145 = vmor %vm5143, %vm5144
    %v5146 = vsel %vm5145, %v5138, %v5142
    %v5147 = vand.u32 2147483647, %v5128
    %vm5148 = vcmp.eq.f32.partialorder %v5147, 8.507059e+37
    %v5149 = vand.u32 %v5128, 2147483648
    %v5150 = vor.u32 1.1754944e-38, %v5149
    %v5151 = vsel %vm5148, %v5150, %v5146
    %v5152 = vmul.f32 %v5119, %v5151
    %v5153 = vrcp.pop %v5131
    %v5154 = vmul.f32 %v5131, %v5153
    %v5155 = vsub.f32 1.0, %v5154
    %v5156 = vmul.f32 %v5153, %v5155
    %v5157 = vadd.f32 %v5153, %v5156
    %vm5158 = vweird.f32 %v5131
    %vm5159 = vweird.f32 %v5153
    %vm5160 = vmor %vm5158, %vm5159
    %v5161 = vsel %vm5160, %v5153, %v5157
    %v5162 = vand.u32 2147483647, %v5131
    %vm5163 = vcmp.eq.f32.partialorder %v5162, 8.507059e+37
    %v5164 = vand.u32 %v5131, 2147483648
    %v5165 = vor.u32 1.1754944e-38, %v5164
    %v5166 = vsel %vm5163, %v5165, %v5161
    %v5167 = vmul.f32 %v5121, %v5166
    %v5168 = vrcp.pop %v5134
    %v5169 = vmul.f32 %v5134, %v5168
    %v5170 = vsub.f32 1.0, %v5169
    %v5171 = vmul.f32 %v5168, %v5170
    %v5172 = vadd.f32 %v5168, %v5171
    %vm5173 = vweird.f32 %v5134
    %vm5174 = vweird.f32 %v5168
    %vm5175 = vmor %vm5173, %vm5174
    %v5176 = vsel %vm5175, %v5168, %v5172
    %v5177 = vand.u32 2147483647, %v5134
    %vm5178 = vcmp.eq.f32.partialorder %v5177, 8.507059e+37
    %v5179 = vand.u32 %v5134, 2147483648
    %v5180 = vor.u32 1.1754944e-38, %v5179
    %v5181 = vsel %vm5178, %v5180, %v5176
    %v5182 = vmul.f32 %v5123, %v5181
    %v5183 = vrcp.pop %v5137
    %v5184 = vmul.f32 %v5137, %v5183
    %v5185 = vsub.f32 1.0, %v5184
    %v5186 = vmul.f32 %v5183, %v5185
    %v5187 = vadd.f32 %v5183, %v5186
    %vm5188 = vweird.f32 %v5137
    %vm5189 = vweird.f32 %v5183
    %vm5190 = vmor %vm5188, %vm5189
    %v5191 = vsel %vm5190, %v5183, %v5187
    %v5192 = vand.u32 2147483647, %v5137
    %vm5193 = vcmp.eq.f32.partialorder %v5192, 8.507059e+37
    %v5194 = vand.u32 %v5137, 2147483648
    %v5195 = vor.u32 1.1754944e-38, %v5194
    %v5196 = vsel %vm5193, %v5195, %v5191
    %v5197 = vmul.f32 %v5125, %v5196
    %v5199 = vsel %vm664, %v5152, 0
    %v5202 = vsel %vm664, %v5167, 0
    %v5205 = vsel %vm664, %v5182, 0
    %v5208 = vsel %vm664, %v5197, 0
    %5210 = vmatpush.msra.mxu0 0.0
    %5211 = vmatpush.msra.mxu0 0.0
    %5212 = vmatpush.msra.mxu0 0.0
    %5213 = vmatpush.msra.mxu0 0.0
    %5214 = vmatpush.msra.mxu0 0.0
    %5215 = vmatpush.msra.mxu0 0.0
    %5216 = vmatpush.msra.mxu0 0.0
    %5217 = vmatpush.msra.mxu0 0.0
    %5218 = vmatpush.msra.mxu0 0.0
    %5219 = vmatpush.msra.mxu0 0.0
    %5220 = vmatpush.msra.mxu0 0.0
    %5221 = vmatpush.msra.mxu0 0.0
    %5222 = vmatpush.msra.mxu0 %v5047
    %5223 = vmatpush.msra.mxu0 %v5044
    %5224 = vmatpush.msra.mxu0 %v5041
    %5225 = vmatpush.msra.mxu0 %v5038
    %5226 = vmatmul.f32.gmra.mxu0 %v5199
    %v5227 = vpop.f32.mrf.mxu0
    %v5228 = vadd.f32 0.0, %v5227
    %5229 = vmatmul.f32.gmra.mxu0 %v5202
    %v5230 = vpop.f32.mrf.mxu0
    %v5231 = vadd.f32 0.0, %v5230
    %5232 = vmatmul.f32.gmra.mxu0 %v5205
    %v5233 = vpop.f32.mrf.mxu0
    %v5234 = vadd.f32 0.0, %v5233
    %5235 = vmatmul.f32.gmra.mxu0 %v5208
    %v5236 = vpop.f32.mrf.mxu0
    %v5237 = vadd.f32 0.0, %v5236
    %5238 = vdwg.mxu0
    %s5239 = scalar_lea.vmem %s73, 48
    %v5240 = vld [vmem:[%s5239] sm:$0xff]
    %v5241 = vld [vmem:[%s5239 + $0x8] sm:$0xff]
    %v5242 = vld [vmem:[%s5239 + $0x10] sm:$0xff]
    %v5244 = vsel %vm610, %v5228, 0
    %v5247 = vsel %vm610, %v5231, 0
    %v5250 = vsel %vm610, %v5234, 0
    %v5253 = vsel %vm610, %v5237, 0
    %5255 = vmatpush.msra.mxu0 0.0
    %5256 = vmatpush.msra.mxu0 0.0
    %5257 = vmatpush.msra.mxu0 0.0
    %5258 = vmatpush.msra.mxu0 0.0
    %5259 = vmatpush.msra.mxu0 0.0
    %5260 = vmatpush.msra.mxu0 0.0
    %5261 = vmatpush.msra.mxu0 0.0
    %5262 = vmatpush.msra.mxu0 0.0
    %5263 = vmatpush.msra.mxu0 0.0
    %5264 = vmatpush.msra.mxu0 0.0
    %5265 = vmatpush.msra.mxu0 0.0
    %5266 = vmatpush.msra.mxu0 0.0
    %5267 = vmatpush.msra.mxu0 0.0
    %5268 = vmatpush.msra.mxu0 %v5242
    %5269 = vmatpush.msra.mxu0 %v5241
    %5270 = vmatpush.msra.mxu0 %v5240
    %5271 = vmatmul.f32.gmra.mxu0 %v5244
    %v5272 = vpop.f32.mrf.mxu0
    %v5273 = vadd.f32 0.0, %v5272
    %5274 = vmatmul.f32.gmra.mxu0 %v5247
    %v5275 = vpop.f32.mrf.mxu0
    %v5276 = vadd.f32 0.0, %v5275
    %5277 = vmatmul.f32.gmra.mxu0 %v5250
    %v5278 = vpop.f32.mrf.mxu0
    %v5279 = vadd.f32 0.0, %v5278
    %5280 = vmatmul.f32.gmra.mxu0 %v5253
    %v5281 = vpop.f32.mrf.mxu0
    %v5282 = vadd.f32 0.0, %v5281
    %5283 = vdwg.mxu0
    %v5284 = vadd.f32 %v4945, %v5273
    %v5285 = vadd.f32 %v4946, %v5276
    %v5286 = vadd.f32 %v4947, %v5279
    %v5287 = vadd.f32 %v4948, %v5282
    %s5288 = scalar_lea.vmem %s71, 48
    %v5289 = vld [vmem:[%s5288] sm:$0xff]
    %v5290 = vld [vmem:[%s5288 + $0x8] sm:$0xff]
    %5291 = vmatpush.msra.mxu0 0.0
    %5292 = vmatpush.msra.mxu0 0.0
    %5293 = vmatpush.msra.mxu0 0.0
    %5294 = vmatpush.msra.mxu0 0.0
    %5295 = vmatpush.msra.mxu0 0.0
    %5296 = vmatpush.msra.mxu0 0.0
    %5297 = vmatpush.msra.mxu0 0.0
    %5298 = vmatpush.msra.mxu0 0.0
    %5299 = vmatpush.msra.mxu0 0.0
    %5300 = vmatpush.msra.mxu0 0.0
    %5301 = vmatpush.msra.mxu0 0.0
    %5302 = vmatpush.msra.mxu0 0.0
    %5303 = vmatpush.msra.mxu0 0.0
    %5304 = vmatpush.msra.mxu0 0.0
    %5305 = vmatpush.msra.mxu0 %v5290
    %5306 = vmatpush.msra.mxu0 %v5289
    %5307 = vmatmul.f32.gmra.mxu0 %v4261
    %v5308 = vpop.f32.mrf.mxu0
    %v5309 = vadd.f32 0.0, %v5308
    %5310 = vmatmul.f32.gmra.mxu0 %v4264
    %v5311 = vpop.f32.mrf.mxu0
    %v5312 = vadd.f32 0.0, %v5311
    %5313 = vmatmul.f32.gmra.mxu0 %v4267
    %v5314 = vpop.f32.mrf.mxu0
    %v5315 = vadd.f32 0.0, %v5314
    %5316 = vmatmul.f32.gmra.mxu0 %v4270
    %v5317 = vpop.f32.mrf.mxu0
    %v5318 = vadd.f32 0.0, %v5317
    %5319 = vdwg.mxu0
    %v5320 = vmul.f32 %v5309, 0.20412415
    %v5321 = vmul.f32 %v5312, 0.20412415
    %v5322 = vmul.f32 %v5315, 0.20412415
    %v5323 = vmul.f32 %v5318, 0.20412415
    %s5324 = scalar_lea.vmem %s71, 112
    %v5325 = vld [vmem:[%s5324] sm:$0xff]
    %v5326 = vld [vmem:[%s5324 + $0x8] sm:$0xff]
    %5327 = vmatpush.msra.mxu0 0.0
    %5328 = vmatpush.msra.mxu0 0.0
    %5329 = vmatpush.msra.mxu0 0.0
    %5330 = vmatpush.msra.mxu0 0.0
    %5331 = vmatpush.msra.mxu0 0.0
    %5332 = vmatpush.msra.mxu0 0.0
    %5333 = vmatpush.msra.mxu0 0.0
    %5334 = vmatpush.msra.mxu0 0.0
    %5335 = vmatpush.msra.mxu0 0.0
    %5336 = vmatpush.msra.mxu0 0.0
    %5337 = vmatpush.msra.mxu0 0.0
    %5338 = vmatpush.msra.mxu0 0.0
    %5339 = vmatpush.msra.mxu0 0.0
    %5340 = vmatpush.msra.mxu0 0.0
    %5341 = vmatpush.msra.mxu0 %v5326
    %5342 = vmatpush.msra.mxu0 %v5325
    %5343 = vmatmul.f32.gmra.mxu0 %v4261
    %v5344 = vpop.f32.mrf.mxu0
    %v5345 = vadd.f32 0.0, %v5344
    %5346 = vmatmul.f32.gmra.mxu0 %v4264
    %v5347 = vpop.f32.mrf.mxu0
    %v5348 = vadd.f32 0.0, %v5347
    %5349 = vmatmul.f32.gmra.mxu0 %v4267
    %v5350 = vpop.f32.mrf.mxu0
    %v5351 = vadd.f32 0.0, %v5350
    %5352 = vmatmul.f32.gmra.mxu0 %v4270
    %v5353 = vpop.f32.mrf.mxu0
    %v5354 = vadd.f32 0.0, %v5353
    %5355 = vdwg.mxu0
    %s5356 = scalar_lea.vmem %s71, 176
    %v5357 = vld [vmem:[%s5356] sm:$0xff]
    %v5358 = vld [vmem:[%s5356 + $0x8] sm:$0xff]
    %5359 = vmatpush.msra.mxu0 0.0
    %5360 = vmatpush.msra.mxu0 0.0
    %5361 = vmatpush.msra.mxu0 0.0
    %5362 = vmatpush.msra.mxu0 0.0
    %5363 = vmatpush.msra.mxu0 0.0
    %5364 = vmatpush.msra.mxu0 0.0
    %5365 = vmatpush.msra.mxu0 0.0
    %5366 = vmatpush.msra.mxu0 0.0
    %5367 = vmatpush.msra.mxu0 0.0
    %5368 = vmatpush.msra.mxu0 0.0
    %5369 = vmatpush.msra.mxu0 0.0
    %5370 = vmatpush.msra.mxu0 0.0
    %5371 = vmatpush.msra.mxu0 0.0
    %5372 = vmatpush.msra.mxu0 0.0
    %5373 = vmatpush.msra.mxu0 %v5358
    %5374 = vmatpush.msra.mxu0 %v5357
    %5375 = vmatmul.f32.gmra.mxu0 %v4261
    %v5376 = vpop.f32.mrf.mxu0
    %v5377 = vadd.f32 0.0, %v5376
    %5378 = vmatmul.f32.gmra.mxu0 %v4264
    %v5379 = vpop.f32.mrf.mxu0
    %v5380 = vadd.f32 0.0, %v5379
    %5381 = vmatmul.f32.gmra.mxu0 %v4267
    %v5382 = vpop.f32.mrf.mxu0
    %v5383 = vadd.f32 0.0, %v5382
    %5384 = vmatmul.f32.gmra.mxu0 %v4270
    %v5385 = vpop.f32.mrf.mxu0
    %v5386 = vadd.f32 0.0, %v5385
    %5387 = vdwg.mxu0
    %v5389 = vsel %vm610, %v5320, 0
    %v5392 = vsel %vm610, %v5321, 0
    %v5395 = vsel %vm610, %v5322, 0
    %v5398 = vsel %vm610, %v5323, 0
    %v5401 = vsel %vm610, %v5345, 0
    %v5404 = vsel %vm610, %v5348, 0
    %v5407 = vsel %vm610, %v5351, 0
    %v5410 = vsel %vm610, %v5354, 0
    %5412 = vmatpush.xpose.msra.mxu0 0.0
    %5413 = vmatpush.xpose.msra.mxu0 0.0
    %5414 = vmatpush.xpose.msra.mxu0 0.0
    %5415 = vmatpush.xpose.msra.mxu0 0.0
    %5416 = vmatpush.xpose.msra.mxu0 0.0
    %5417 = vmatpush.xpose.msra.mxu0 0.0
    %5418 = vmatpush.xpose.msra.mxu0 0.0
    %5419 = vmatpush.xpose.msra.mxu0 0.0
    %5420 = vmatpush.xpose.msra.mxu0 0.0
    %5421 = vmatpush.xpose.msra.mxu0 0.0
    %5422 = vmatpush.xpose.msra.mxu0 0.0
    %5423 = vmatpush.xpose.msra.mxu0 0.0
    %5424 = vmatpush.xpose.msra.mxu0 %v5410
    %5425 = vmatpush.xpose.msra.mxu0 %v5407
    %5426 = vmatpush.xpose.msra.mxu0 %v5404
    %5427 = vmatpush.xpose.msra.mxu0 %v5401
    %5428 = vmatmul.f32.gmra.mxu0 %v5389
    %v5429 = vpop.f32.mrf.mxu0
    %v5430 = vadd.f32 %v314, %v5429
    %5431 = vmatmul.f32.gmra.mxu0 %v5392
    %v5432 = vpop.f32.mrf.mxu0
    %v5433 = vadd.f32 %v315, %v5432
    %5434 = vmatmul.f32.gmra.mxu0 %v5395
    %v5435 = vpop.f32.mrf.mxu0
    %v5436 = vadd.f32 %v316, %v5435
    %5437 = vmatmul.f32.gmra.mxu0 %v5398
    %v5438 = vpop.f32.mrf.mxu0
    %v5439 = vadd.f32 %v317, %v5438
    %5440 = vdwg.mxu0
    %v5441 = vsel %vm664, %v5430, -inf
    %5442 = vmax.xlane.f32.xlu0 %v5441
    %v5443 = vpop.xlane.xlu0 %5442
    %v5444 = vsel %vm664, %v5433, -inf
    %5445 = vmax.xlane.f32.xlu0 %v5444
    %v5446 = vpop.xlane.xlu0 %5445
    %v5447 = vsel %vm664, %v5436, -inf
    %5448 = vmax.xlane.f32.xlu0 %v5447
    %v5449 = vpop.xlane.xlu0 %5448
    %v5450 = vsel %vm664, %v5439, -inf
    %5451 = vmax.xlane.f32.xlu0 %v5450
    %v5452 = vpop.xlane.xlu0 %5451
    %v5453 = vsub.f32 %v5430, %v5443
    %v5454 = vsub.f32 %v5433, %v5446
    %v5455 = vsub.f32 %v5436, %v5449
    %v5456 = vsub.f32 %v5439, %v5452
    %v5457 = vmul.f32 %v5453, 1.442695
    %v5458 = vpow.pop %v5457
    %v5459 = vmul.f32 %v5454, 1.442695
    %v5460 = vpow.pop %v5459
    %v5461 = vmul.f32 %v5455, 1.442695
    %v5462 = vpow.pop %v5461
    %v5463 = vmul.f32 %v5456, 1.442695
    %v5464 = vpow.pop %v5463
    %v5465 = vsel %vm664, %v5458, 0.0
    %5466 = vadd.xlane.f32.xlu0 %v5465
    %v5467 = vpop.xlane.xlu0 %5466
    %v5468 = vsel %vm664, %v5460, 0.0
    %5469 = vadd.xlane.f32.xlu0 %v5468
    %v5470 = vpop.xlane.xlu0 %5469
    %v5471 = vsel %vm664, %v5462, 0.0
    %5472 = vadd.xlane.f32.xlu0 %v5471
    %v5473 = vpop.xlane.xlu0 %5472
    %v5474 = vsel %vm664, %v5464, 0.0
    %5475 = vadd.xlane.f32.xlu0 %v5474
    %v5476 = vpop.xlane.xlu0 %5475
    %v5477 = vrcp.pop %v5467
    %v5478 = vmul.f32 %v5467, %v5477
    %v5479 = vsub.f32 1.0, %v5478
    %v5480 = vmul.f32 %v5477, %v5479
    %v5481 = vadd.f32 %v5477, %v5480
    %vm5482 = vweird.f32 %v5467
    %vm5483 = vweird.f32 %v5477
    %vm5484 = vmor %vm5482, %vm5483
    %v5485 = vsel %vm5484, %v5477, %v5481
    %v5486 = vand.u32 2147483647, %v5467
    %vm5487 = vcmp.eq.f32.partialorder %v5486, 8.507059e+37
    %v5488 = vand.u32 %v5467, 2147483648
    %v5489 = vor.u32 1.1754944e-38, %v5488
    %v5490 = vsel %vm5487, %v5489, %v5485
    %v5491 = vmul.f32 %v5458, %v5490
    %v5492 = vrcp.pop %v5470
    %v5493 = vmul.f32 %v5470, %v5492
    %v5494 = vsub.f32 1.0, %v5493
    %v5495 = vmul.f32 %v5492, %v5494
    %v5496 = vadd.f32 %v5492, %v5495
    %vm5497 = vweird.f32 %v5470
    %vm5498 = vweird.f32 %v5492
    %vm5499 = vmor %vm5497, %vm5498
    %v5500 = vsel %vm5499, %v5492, %v5496
    %v5501 = vand.u32 2147483647, %v5470
    %vm5502 = vcmp.eq.f32.partialorder %v5501, 8.507059e+37
    %v5503 = vand.u32 %v5470, 2147483648
    %v5504 = vor.u32 1.1754944e-38, %v5503
    %v5505 = vsel %vm5502, %v5504, %v5500
    %v5506 = vmul.f32 %v5460, %v5505
    %v5507 = vrcp.pop %v5473
    %v5508 = vmul.f32 %v5473, %v5507
    %v5509 = vsub.f32 1.0, %v5508
    %v5510 = vmul.f32 %v5507, %v5509
    %v5511 = vadd.f32 %v5507, %v5510
    %vm5512 = vweird.f32 %v5473
    %vm5513 = vweird.f32 %v5507
    %vm5514 = vmor %vm5512, %vm5513
    %v5515 = vsel %vm5514, %v5507, %v5511
    %v5516 = vand.u32 2147483647, %v5473
    %vm5517 = vcmp.eq.f32.partialorder %v5516, 8.507059e+37
    %v5518 = vand.u32 %v5473, 2147483648
    %v5519 = vor.u32 1.1754944e-38, %v5518
    %v5520 = vsel %vm5517, %v5519, %v5515
    %v5521 = vmul.f32 %v5462, %v5520
    %v5522 = vrcp.pop %v5476
    %v5523 = vmul.f32 %v5476, %v5522
    %v5524 = vsub.f32 1.0, %v5523
    %v5525 = vmul.f32 %v5522, %v5524
    %v5526 = vadd.f32 %v5522, %v5525
    %vm5527 = vweird.f32 %v5476
    %vm5528 = vweird.f32 %v5522
    %vm5529 = vmor %vm5527, %vm5528
    %v5530 = vsel %vm5529, %v5522, %v5526
    %v5531 = vand.u32 2147483647, %v5476
    %vm5532 = vcmp.eq.f32.partialorder %v5531, 8.507059e+37
    %v5533 = vand.u32 %v5476, 2147483648
    %v5534 = vor.u32 1.1754944e-38, %v5533
    %v5535 = vsel %vm5532, %v5534, %v5530
    %v5536 = vmul.f32 %v5464, %v5535
    %v5538 = vsel %vm664, %v5491, 0
    %v5541 = vsel %vm664, %v5506, 0
    %v5544 = vsel %vm664, %v5521, 0
    %v5547 = vsel %vm664, %v5536, 0
    %5549 = vmatpush.msra.mxu0 0.0
    %5550 = vmatpush.msra.mxu0 0.0
    %5551 = vmatpush.msra.mxu0 0.0
    %5552 = vmatpush.msra.mxu0 0.0
    %5553 = vmatpush.msra.mxu0 0.0
    %5554 = vmatpush.msra.mxu0 0.0
    %5555 = vmatpush.msra.mxu0 0.0
    %5556 = vmatpush.msra.mxu0 0.0
    %5557 = vmatpush.msra.mxu0 0.0
    %5558 = vmatpush.msra.mxu0 0.0
    %5559 = vmatpush.msra.mxu0 0.0
    %5560 = vmatpush.msra.mxu0 0.0
    %5561 = vmatpush.msra.mxu0 %v5386
    %5562 = vmatpush.msra.mxu0 %v5383
    %5563 = vmatpush.msra.mxu0 %v5380
    %5564 = vmatpush.msra.mxu0 %v5377
    %5565 = vmatmul.f32.gmra.mxu0 %v5538
    %v5566 = vpop.f32.mrf.mxu0
    %v5567 = vadd.f32 0.0, %v5566
    %5568 = vmatmul.f32.gmra.mxu0 %v5541
    %v5569 = vpop.f32.mrf.mxu0
    %v5570 = vadd.f32 0.0, %v5569
    %5571 = vmatmul.f32.gmra.mxu0 %v5544
    %v5572 = vpop.f32.mrf.mxu0
    %v5573 = vadd.f32 0.0, %v5572
    %5574 = vmatmul.f32.gmra.mxu0 %v5547
    %v5575 = vpop.f32.mrf.mxu0
    %v5576 = vadd.f32 0.0, %v5575
    %5577 = vdwg.mxu0
    %s5578 = scalar_lea.vmem %s73, 72
    %v5579 = vld [vmem:[%s5578] sm:$0xff]
    %v5580 = vld [vmem:[%s5578 + $0x8] sm:$0xff]
    %v5581 = vld [vmem:[%s5578 + $0x10] sm:$0xff]
    %v5583 = vsel %vm610, %v5567, 0
    %v5586 = vsel %vm610, %v5570, 0
    %v5589 = vsel %vm610, %v5573, 0
    %v5592 = vsel %vm610, %v5576, 0
    %5594 = vmatpush.msra.mxu0 0.0
    %5595 = vmatpush.msra.mxu0 0.0
    %5596 = vmatpush.msra.mxu0 0.0
    %5597 = vmatpush.msra.mxu0 0.0
    %5598 = vmatpush.msra.mxu0 0.0
    %5599 = vmatpush.msra.mxu0 0.0
    %5600 = vmatpush.msra.mxu0 0.0
    %5601 = vmatpush.msra.mxu0 0.0
    %5602 = vmatpush.msra.mxu0 0.0
    %5603 = vmatpush.msra.mxu0 0.0
    %5604 = vmatpush.msra.mxu0 0.0
    %5605 = vmatpush.msra.mxu0 0.0
    %5606 = vmatpush.msra.mxu0 0.0
    %5607 = vmatpush.msra.mxu0 %v5581
    %5608 = vmatpush.msra.mxu0 %v5580
    %5609 = vmatpush.msra.mxu0 %v5579
    %5610 = vmatmul.f32.gmra.mxu0 %v5583
    %v5611 = vpop.f32.mrf.mxu0
    %v5612 = vadd.f32 0.0, %v5611
    %5613 = vmatmul.f32.gmra.mxu0 %v5586
    %v5614 = vpop.f32.mrf.mxu0
    %v5615 = vadd.f32 0.0, %v5614
    %5616 = vmatmul.f32.gmra.mxu0 %v5589
    %v5617 = vpop.f32.mrf.mxu0
    %v5618 = vadd.f32 0.0, %v5617
    %5619 = vmatmul.f32.gmra.mxu0 %v5592
    %v5620 = vpop.f32.mrf.mxu0
    %v5621 = vadd.f32 0.0, %v5620
    %5622 = vdwg.mxu0
    %v5623 = vadd.f32 %v5284, %v5612
    %v5624 = vadd.f32 %v5285, %v5615
    %v5625 = vadd.f32 %v5286, %v5618
    %v5626 = vadd.f32 %v5287, %v5621
    %v5627 = vadd.f32 %v2259, %v5623
    %v5628 = vadd.f32 %v2260, %v5624
    %v5629 = vadd.f32 %v2261, %v5625
    %v5630 = vadd.f32 %v2262, %v5626
    %v5631 = vld [vmem:[%s77] sm:$0x1]
    %v5632 = vld [vmem:[%s79] sm:$0x1]
    %v5633 = vld [vmem:[%s81] sm:$0xff]
    %v5634 = vld [vmem:[%s81 + $0x8] sm:$0xff]
    %v5635 = vld [vmem:[%s83] sm:$0x1]
    %v5636 = vld [vmem:[%s85] sm:$0xff]
    %v5637 = vld [vmem:[%s85 + $0x8] sm:$0xff]
    %v5638 = vld [vmem:[%s85 + $0x10] sm:$0xff]
    %v5639 = vld [vmem:[%s85 + $0x18] sm:$0xff]
    %v5640 = vld [vmem:[%s85 + $0x20] sm:$0xff]
    %v5641 = vld [vmem:[%s85 + $0x28] sm:$0xff]
    %v5642 = vld [vmem:[%s85 + $0x30] sm:$0xff]
    %v5643 = vld [vmem:[%s85 + $0x38] sm:$0xff]
    %v5644 = vld [vmem:[%s87] sm:$0x1]
    %v5645 = vsel %vm389, %v5627, 0.0
    %5646 = vadd.xlane.f32.xlu0 %v5645
    %v5647 = vpop.xlane.xlu0 %5646
    %v5648 = vsel %vm389, %v5628, 0.0
    %5649 = vadd.xlane.f32.xlu0 %v5648
    %v5650 = vpop.xlane.xlu0 %5649
    %v5651 = vsel %vm389, %v5629, 0.0
    %5652 = vadd.xlane.f32.xlu0 %v5651
    %v5653 = vpop.xlane.xlu0 %5652
    %v5654 = vsel %vm389, %v5630, 0.0
    %5655 = vadd.xlane.f32.xlu0 %v5654
    %v5656 = vpop.xlane.xlu0 %5655
    %v5657 = vmul.f32 %v5647, %v408
    %v5658 = vmul.f32 %v5650, %v408
    %v5659 = vmul.f32 %v5653, %v408
    %v5660 = vmul.f32 %v5656, %v408
    %v5661 = vsub.f32 %v5627, %v5657
    %v5662 = vsub.f32 %v5628, %v5658
    %v5663 = vsub.f32 %v5629, %v5659
    %v5664 = vsub.f32 %v5630, %v5660
    %v5665 = vmul.f32 %v5661, %v5661
    %v5666 = vmul.f32 %v5662, %v5662
    %v5667 = vmul.f32 %v5663, %v5663
    %v5668 = vmul.f32 %v5664, %v5664
    %v5669 = vsel %vm389, %v5665, 0.0
    %5670 = vadd.xlane.f32.xlu0 %v5669
    %v5671 = vpop.xlane.xlu0 %5670
    %v5672 = vsel %vm389, %v5666, 0.0
    %5673 = vadd.xlane.f32.xlu0 %v5672
    %v5674 = vpop.xlane.xlu0 %5673
    %v5675 = vsel %vm389, %v5667, 0.0
    %5676 = vadd.xlane.f32.xlu0 %v5675
    %v5677 = vpop.xlane.xlu0 %5676
    %v5678 = vsel %vm389, %v5668, 0.0
    %5679 = vadd.xlane.f32.xlu0 %v5678
    %v5680 = vpop.xlane.xlu0 %5679
    %v5681 = vmul.f32 %v5671, %v408
    %v5682 = vmul.f32 %v5674, %v408
    %v5683 = vmul.f32 %v5677, %v408
    %v5684 = vmul.f32 %v5680, %v408
    %v5685 = vadd.f32 %v5681, 1e-05
    %v5686 = vadd.f32 %v5682, 1e-05
    %v5687 = vadd.f32 %v5683, 1e-05
    %v5688 = vadd.f32 %v5684, 1e-05
    %v5689 = vrsqrt.pop %v5685
    %v5690 = vmul.f32 %v5689, %v5685
    %v5691 = vmul.f32 %v5690, %v5689
    %v5692 = vmul.f32 0.5, %v5691
    %v5693 = vsub.f32 1.5, %v5692
    %v5694 = vmul.f32 %v5689, %v5693
    %vm5695 = vweird.f32 %v5685
    %vm5696 = vweird.f32 %v5689
    %vm5697 = vmor %vm5695, %vm5696
    %v5698 = vsel %vm5697, %v5689, %v5694
    %v5699 = vrsqrt.pop %v5686
    %v5700 = vmul.f32 %v5699, %v5686
    %v5701 = vmul.f32 %v5700, %v5699
    %v5702 = vmul.f32 0.5, %v5701
    %v5703 = vsub.f32 1.5, %v5702
    %v5704 = vmul.f32 %v5699, %v5703
    %vm5705 = vweird.f32 %v5686
    %vm5706 = vweird.f32 %v5699
    %vm5707 = vmor %vm5705, %vm5706
    %v5708 = vsel %vm5707, %v5699, %v5704
    %v5709 = vrsqrt.pop %v5687
    %v5710 = vmul.f32 %v5709, %v5687
    %v5711 = vmul.f32 %v5710, %v5709
    %v5712 = vmul.f32 0.5, %v5711
    %v5713 = vsub.f32 1.5, %v5712
    %v5714 = vmul.f32 %v5709, %v5713
    %vm5715 = vweird.f32 %v5687
    %vm5716 = vweird.f32 %v5709
    %vm5717 = vmor %vm5715, %vm5716
    %v5718 = vsel %vm5717, %v5709, %v5714
    %v5719 = vrsqrt.pop %v5688
    %v5720 = vmul.f32 %v5719, %v5688
    %v5721 = vmul.f32 %v5720, %v5719
    %v5722 = vmul.f32 0.5, %v5721
    %v5723 = vsub.f32 1.5, %v5722
    %v5724 = vmul.f32 %v5719, %v5723
    %vm5725 = vweird.f32 %v5688
    %vm5726 = vweird.f32 %v5719
    %vm5727 = vmor %vm5725, %vm5726
    %v5728 = vsel %vm5727, %v5719, %v5724
    %v5729 = vmul.f32 %v5661, %v5698
    %v5730 = vmul.f32 %v5662, %v5708
    %v5731 = vmul.f32 %v5663, %v5718
    %v5732 = vmul.f32 %v5664, %v5728
    %v5734 = vperm.slane %v5631, 0
    %v5736 = vmul.f32 %v5729, %v5734
    %v5737 = vmul.f32 %v5730, %v5734
    %v5738 = vmul.f32 %v5731, %v5734
    %v5739 = vmul.f32 %v5732, %v5734
    %v5741 = vperm.slane %v5632, 0
    %v5743 = vadd.f32 %v5736, %v5741
    %v5744 = vadd.f32 %v5737, %v5741
    %v5745 = vadd.f32 %v5738, %v5741
    %v5746 = vadd.f32 %v5739, %v5741
    %v5748 = vperm.slane %v5635, 0
    %v5751 = vsel %vm389, %v5743, 0
    %v5754 = vsel %vm389, %v5744, 0
    %v5757 = vsel %vm389, %v5745, 0
    %v5760 = vsel %vm389, %v5746, 0
    %5762 = vmatpush.msra.mxu0 0.0
    %5763 = vmatpush.msra.mxu0 0.0
    %5764 = vmatpush.msra.mxu0 0.0
    %5765 = vmatpush.msra.mxu0 0.0
    %5766 = vmatpush.msra.mxu0 0.0
    %5767 = vmatpush.msra.mxu0 0.0
    %5768 = vmatpush.msra.mxu0 0.0
    %5769 = vmatpush.msra.mxu0 0.0
    %5770 = vmatpush.msra.mxu0 0.0
    %5771 = vmatpush.msra.mxu0 0.0
    %5772 = vmatpush.msra.mxu0 0.0
    %5773 = vmatpush.msra.mxu0 0.0
    %5774 = vmatpush.msra.mxu0 0.0
    %5775 = vmatpush.msra.mxu0 0.0
    %5776 = vmatpush.msra.mxu0 %v5634
    %5777 = vmatpush.msra.mxu0 %v5633
    %5778 = vmatmul.f32.gmra.mxu0 %v5751
    %v5779 = vpop.f32.mrf.mxu0
    %v5780 = vadd.f32 %v5748, %v5779
    %5781 = vmatmul.f32.gmra.mxu0 %v5754
    %v5782 = vpop.f32.mrf.mxu0
    %v5783 = vadd.f32 %v5748, %v5782
    %5784 = vmatmul.f32.gmra.mxu0 %v5757
    %v5785 = vpop.f32.mrf.mxu0
    %v5786 = vadd.f32 %v5748, %v5785
    %5787 = vmatmul.f32.gmra.mxu0 %v5760
    %v5788 = vpop.f32.mrf.mxu0
    %v5789 = vadd.f32 %v5748, %v5788
    %5790 = vdwg.mxu0
    %v5791 = vmul.f32 %v5780, 0.5
    %v5792 = vmul.f32 %v5783, 0.5
    %v5793 = vmul.f32 %v5786, 0.5
    %v5794 = vmul.f32 %v5789, 0.5
    %v5795 = vmul.f32 %v5780, 0.70710677
    %v5796 = vmul.f32 %v5783, 0.70710677
    %v5797 = vmul.f32 %v5786, 0.70710677
    %v5798 = vmul.f32 %v5789, 0.70710677
    %v5799 = vmul.f32 %v5795, %v5795
    %v5800 = vmin.f32 16.0, %v5799
    %v5801 = vmul.f32 %v5800, 2.1237322e-06
    %v5802 = vadd.f32 %v5801, 0.00028619796
    %v5803 = vmul.f32 %v5800, %v5802
    %v5804 = vadd.f32 %v5803, 0.0036580483
    %v5805 = vmul.f32 %v5800, %v5804
    %v5806 = vadd.f32 %v5805, 0.05243302
    %v5807 = vmul.f32 %v5800, %v5806
    %v5808 = vadd.f32 %v5807, 0.18741608
    %v5809 = vmul.f32 %v5800, %v5808
    %v5810 = vadd.f32 %v5809, 1.1283791
    %v5811 = vmul.f32 %v5795, %v5810
    %v5812 = vmul.f32 %v5800, 3.8918573e-05
    %v5813 = vadd.f32 %v5812, 0.001143296
    %v5814 = vmul.f32 %v5800, %v5813
    %v5815 = vadd.f32 %v5814, 0.014752088
    %v5816 = vmul.f32 %v5800, %v5815
    %v5817 = vadd.f32 %v5816, 0.112945676
    %v5818 = vmul.f32 %v5800, %v5817
    %v5819 = vadd.f32 %v5818, 0.4994258
    %v5820 = vmul.f32 %v5800, %v5819
    %v5821 = vadd.f32 %v5820, 1.0
    %v5822 = vrcp.pop %v5821
    %v5823 = vmul.f32 %v5821, %v5822
    %v5824 = vsub.f32 1.0, %v5823
    %v5825 = vmul.f32 %v5822, %v5824
    %v5826 = vadd.f32 %v5822, %v5825
    %vm5827 = vweird.f32 %v5821
    %vm5828 = vweird.f32 %v5822
    %vm5829 = vmor %vm5827, %vm5828
    %v5830 = vsel %vm5829, %v5822, %v5826
    %v5831 = vand.u32 2147483647, %v5821
    %vm5832 = vcmp.eq.f32.partialorder %v5831, 8.507059e+37
    %v5833 = vand.u32 %v5821, 2147483648
    %v5834 = vor.u32 1.1754944e-38, %v5833
    %v5835 = vsel %vm5832, %v5834, %v5830
    %v5836 = vmul.f32 %v5811, %v5835
    %v5837 = vmin.f32 %v5836, 1.0
    %v5838 = vmax.f32 %v5837, -1.0
    %v5839 = vmul.f32 %v5796, %v5796
    %v5840 = vmin.f32 16.0, %v5839
    %v5841 = vmul.f32 %v5840, 2.1237322e-06
    %v5842 = vadd.f32 %v5841, 0.00028619796
    %v5843 = vmul.f32 %v5840, %v5842
    %v5844 = vadd.f32 %v5843, 0.0036580483
    %v5845 = vmul.f32 %v5840, %v5844
    %v5846 = vadd.f32 %v5845, 0.05243302
    %v5847 = vmul.f32 %v5840, %v5846
    %v5848 = vadd.f32 %v5847, 0.18741608
    %v5849 = vmul.f32 %v5840, %v5848
    %v5850 = vadd.f32 %v5849, 1.1283791
    %v5851 = vmul.f32 %v5796, %v5850
    %v5852 = vmul.f32 %v5840, 3.8918573e-05
    %v5853 = vadd.f32 %v5852, 0.001143296
    %v5854 = vmul.f32 %v5840, %v5853
    %v5855 = vadd.f32 %v5854, 0.014752088
    %v5856 = vmul.f32 %v5840, %v5855
    %v5857 = vadd.f32 %v5856, 0.112945676
    %v5858 = vmul.f32 %v5840, %v5857
    %v5859 = vadd.f32 %v5858, 0.4994258
    %v5860 = vmul.f32 %v5840, %v5859
    %v5861 = vadd.f32 %v5860, 1.0
    %v5862 = vrcp.pop %v5861
    %v5863 = vmul.f32 %v5861, %v5862
    %v5864 = vsub.f32 1.0, %v5863
    %v5865 = vmul.f32 %v5862, %v5864
    %v5866 = vadd.f32 %v5862, %v5865
    %vm5867 = vweird.f32 %v5861
    %vm5868 = vweird.f32 %v5862
    %vm5869 = vmor %vm5867, %vm5868
    %v5870 = vsel %vm5869, %v5862, %v5866
    %v5871 = vand.u32 2147483647, %v5861
    %vm5872 = vcmp.eq.f32.partialorder %v5871, 8.507059e+37
    %v5873 = vand.u32 %v5861, 2147483648
    %v5874 = vor.u32 1.1754944e-38, %v5873
    %v5875 = vsel %vm5872, %v5874, %v5870
    %v5876 = vmul.f32 %v5851, %v5875
    %v5877 = vmin.f32 %v5876, 1.0
    %v5878 = vmax.f32 %v5877, -1.0
    %v5879 = vmul.f32 %v5797, %v5797
    %v5880 = vmin.f32 16.0, %v5879
    %v5881 = vmul.f32 %v5880, 2.1237322e-06
    %v5882 = vadd.f32 %v5881, 0.00028619796
    %v5883 = vmul.f32 %v5880, %v5882
    %v5884 = vadd.f32 %v5883, 0.0036580483
    %v5885 = vmul.f32 %v5880, %v5884
    %v5886 = vadd.f32 %v5885, 0.05243302
    %v5887 = vmul.f32 %v5880, %v5886
    %v5888 = vadd.f32 %v5887, 0.18741608
    %v5889 = vmul.f32 %v5880, %v5888
    %v5890 = vadd.f32 %v5889, 1.1283791
    %v5891 = vmul.f32 %v5797, %v5890
    %v5892 = vmul.f32 %v5880, 3.8918573e-05
    %v5893 = vadd.f32 %v5892, 0.001143296
    %v5894 = vmul.f32 %v5880, %v5893
    %v5895 = vadd.f32 %v5894, 0.014752088
    %v5896 = vmul.f32 %v5880, %v5895
    %v5897 = vadd.f32 %v5896, 0.112945676
    %v5898 = vmul.f32 %v5880, %v5897
    %v5899 = vadd.f32 %v5898, 0.4994258
    %v5900 = vmul.f32 %v5880, %v5899
    %v5901 = vadd.f32 %v5900, 1.0
    %v5902 = vrcp.pop %v5901
    %v5903 = vmul.f32 %v5901, %v5902
    %v5904 = vsub.f32 1.0, %v5903
    %v5905 = vmul.f32 %v5902, %v5904
    %v5906 = vadd.f32 %v5902, %v5905
    %vm5907 = vweird.f32 %v5901
    %vm5908 = vweird.f32 %v5902
    %vm5909 = vmor %vm5907, %vm5908
    %v5910 = vsel %vm5909, %v5902, %v5906
    %v5911 = vand.u32 2147483647, %v5901
    %vm5912 = vcmp.eq.f32.partialorder %v5911, 8.507059e+37
    %v5913 = vand.u32 %v5901, 2147483648
    %v5914 = vor.u32 1.1754944e-38, %v5913
    %v5915 = vsel %vm5912, %v5914, %v5910
    %v5916 = vmul.f32 %v5891, %v5915
    %v5917 = vmin.f32 %v5916, 1.0
    %v5918 = vmax.f32 %v5917, -1.0
    %v5919 = vmul.f32 %v5798, %v5798
    %v5920 = vmin.f32 16.0, %v5919
    %v5921 = vmul.f32 %v5920, 2.1237322e-06
    %v5922 = vadd.f32 %v5921, 0.00028619796
    %v5923 = vmul.f32 %v5920, %v5922
    %v5924 = vadd.f32 %v5923, 0.0036580483
    %v5925 = vmul.f32 %v5920, %v5924
    %v5926 = vadd.f32 %v5925, 0.05243302
    %v5927 = vmul.f32 %v5920, %v5926
    %v5928 = vadd.f32 %v5927, 0.18741608
    %v5929 = vmul.f32 %v5920, %v5928
    %v5930 = vadd.f32 %v5929, 1.1283791
    %v5931 = vmul.f32 %v5798, %v5930
    %v5932 = vmul.f32 %v5920, 3.8918573e-05
    %v5933 = vadd.f32 %v5932, 0.001143296
    %v5934 = vmul.f32 %v5920, %v5933
    %v5935 = vadd.f32 %v5934, 0.014752088
    %v5936 = vmul.f32 %v5920, %v5935
    %v5937 = vadd.f32 %v5936, 0.112945676
    %v5938 = vmul.f32 %v5920, %v5937
    %v5939 = vadd.f32 %v5938, 0.4994258
    %v5940 = vmul.f32 %v5920, %v5939
    %v5941 = vadd.f32 %v5940, 1.0
    %v5942 = vrcp.pop %v5941
    %v5943 = vmul.f32 %v5941, %v5942
    %v5944 = vsub.f32 1.0, %v5943
    %v5945 = vmul.f32 %v5942, %v5944
    %v5946 = vadd.f32 %v5942, %v5945
    %vm5947 = vweird.f32 %v5941
    %vm5948 = vweird.f32 %v5942
    %vm5949 = vmor %vm5947, %vm5948
    %v5950 = vsel %vm5949, %v5942, %v5946
    %v5951 = vand.u32 2147483647, %v5941
    %vm5952 = vcmp.eq.f32.partialorder %v5951, 8.507059e+37
    %v5953 = vand.u32 %v5941, 2147483648
    %v5954 = vor.u32 1.1754944e-38, %v5953
    %v5955 = vsel %vm5952, %v5954, %v5950
    %v5956 = vmul.f32 %v5931, %v5955
    %v5957 = vmin.f32 %v5956, 1.0
    %v5958 = vmax.f32 %v5957, -1.0
    %v5959 = vadd.f32 %v5838, 1.0
    %v5960 = vadd.f32 %v5878, 1.0
    %v5961 = vadd.f32 %v5918, 1.0
    %v5962 = vadd.f32 %v5958, 1.0
    %v5963 = vmul.f32 %v5791, %v5959
    %v5964 = vmul.f32 %v5792, %v5960
    %v5965 = vmul.f32 %v5793, %v5961
    %v5966 = vmul.f32 %v5794, %v5962
    %v5968 = vsel %vm2210, %v5963, 0
    %v5971 = vsel %vm2210, %v5964, 0
    %v5974 = vsel %vm2210, %v5965, 0
    %v5977 = vsel %vm2210, %v5966, 0
    %5979 = vmatpush.msra.mxu0 0.0
    %5980 = vmatpush.msra.mxu0 0.0
    %5981 = vmatpush.msra.mxu0 0.0
    %5982 = vmatpush.msra.mxu0 0.0
    %5983 = vmatpush.msra.mxu0 0.0
    %5984 = vmatpush.msra.mxu0 0.0
    %5985 = vmatpush.msra.mxu0 0.0
    %5986 = vmatpush.msra.mxu0 0.0
    %5987 = vmatpush.msra.mxu0 %v5643
    %5988 = vmatpush.msra.mxu0 %v5642
    %5989 = vmatpush.msra.mxu0 %v5641
    %5990 = vmatpush.msra.mxu0 %v5640
    %5991 = vmatpush.msra.mxu0 %v5639
    %5992 = vmatpush.msra.mxu0 %v5638
    %5993 = vmatpush.msra.mxu0 %v5637
    %5994 = vmatpush.msra.mxu0 %v5636
    %5995 = vmatmul.f32.gmra.mxu0 %v5968
    %v5996 = vpop.f32.mrf.mxu0
    %v5997 = vadd.f32 0.0, %v5996
    %5998 = vmatmul.f32.gmra.mxu0 %v5971
    %v5999 = vpop.f32.mrf.mxu0
    %v6000 = vadd.f32 0.0, %v5999
    %6001 = vmatmul.f32.gmra.mxu0 %v5974
    %v6002 = vpop.f32.mrf.mxu0
    %v6003 = vadd.f32 0.0, %v6002
    %6004 = vmatmul.f32.gmra.mxu0 %v5977
    %v6005 = vpop.f32.mrf.mxu0
    %v6006 = vadd.f32 0.0, %v6005
    %6007 = vdwg.mxu0
    %v6008 = vadd.f32 %v5627, %v5997
    %v6009 = vadd.f32 %v5628, %v6000
    %v6010 = vadd.f32 %v5629, %v6003
    %v6011 = vadd.f32 %v5630, %v6006
    %v6013 = vperm.slane %v5644, 0
    %v6015 = vadd.f32 %v6008, %v6013
    %v6016 = vadd.f32 %v6009, %v6013
    %v6017 = vadd.f32 %v6010, %v6013
    %v6018 = vadd.f32 %v6011, %v6013
    %v6019 = vld [vmem:[%s89] sm:$0x1]
    %v6020 = vld [vmem:[%s91] sm:$0x1]
    %v6021 = vsel %vm389, %v6015, 0.0
    %6022 = vadd.xlane.f32.xlu0 %v6021
    %v6023 = vpop.xlane.xlu0 %6022
    %v6024 = vsel %vm389, %v6016, 0.0
    %6025 = vadd.xlane.f32.xlu0 %v6024
    %v6026 = vpop.xlane.xlu0 %6025
    %v6027 = vsel %vm389, %v6017, 0.0
    %6028 = vadd.xlane.f32.xlu0 %v6027
    %v6029 = vpop.xlane.xlu0 %6028
    %v6030 = vsel %vm389, %v6018, 0.0
    %6031 = vadd.xlane.f32.xlu0 %v6030
    %v6032 = vpop.xlane.xlu0 %6031
    %v6033 = vmul.f32 %v6023, %v408
    %v6034 = vmul.f32 %v6026, %v408
    %v6035 = vmul.f32 %v6029, %v408
    %v6036 = vmul.f32 %v6032, %v408
    %v6037 = vsub.f32 %v6015, %v6033
    %v6038 = vsub.f32 %v6016, %v6034
    %v6039 = vsub.f32 %v6017, %v6035
    %v6040 = vsub.f32 %v6018, %v6036
    %v6041 = vmul.f32 %v6037, %v6037
    %v6042 = vmul.f32 %v6038, %v6038
    %v6043 = vmul.f32 %v6039, %v6039
    %v6044 = vmul.f32 %v6040, %v6040
    %v6045 = vsel %vm389, %v6041, 0.0
    %6046 = vadd.xlane.f32.xlu0 %v6045
    %v6047 = vpop.xlane.xlu0 %6046
    %v6048 = vsel %vm389, %v6042, 0.0
    %6049 = vadd.xlane.f32.xlu0 %v6048
    %v6050 = vpop.xlane.xlu0 %6049
    %v6051 = vsel %vm389, %v6043, 0.0
    %6052 = vadd.xlane.f32.xlu0 %v6051
    %v6053 = vpop.xlane.xlu0 %6052
    %v6054 = vsel %vm389, %v6044, 0.0
    %6055 = vadd.xlane.f32.xlu0 %v6054
    %v6056 = vpop.xlane.xlu0 %6055
    %v6057 = vmul.f32 %v6047, %v408
    %v6058 = vmul.f32 %v6050, %v408
    %v6059 = vmul.f32 %v6053, %v408
    %v6060 = vmul.f32 %v6056, %v408
    %v6061 = vadd.f32 %v6057, 1e-05
    %v6062 = vadd.f32 %v6058, 1e-05
    %v6063 = vadd.f32 %v6059, 1e-05
    %v6064 = vadd.f32 %v6060, 1e-05
    %v6065 = vrsqrt.pop %v6061
    %v6066 = vmul.f32 %v6065, %v6061
    %v6067 = vmul.f32 %v6066, %v6065
    %v6068 = vmul.f32 0.5, %v6067
    %v6069 = vsub.f32 1.5, %v6068
    %v6070 = vmul.f32 %v6065, %v6069
    %vm6071 = vweird.f32 %v6061
    %vm6072 = vweird.f32 %v6065
    %vm6073 = vmor %vm6071, %vm6072
    %v6074 = vsel %vm6073, %v6065, %v6070
    %v6075 = vrsqrt.pop %v6062
    %v6076 = vmul.f32 %v6075, %v6062
    %v6077 = vmul.f32 %v6076, %v6075
    %v6078 = vmul.f32 0.5, %v6077
    %v6079 = vsub.f32 1.5, %v6078
    %v6080 = vmul.f32 %v6075, %v6079
    %vm6081 = vweird.f32 %v6062
    %vm6082 = vweird.f32 %v6075
    %vm6083 = vmor %vm6081, %vm6082
    %v6084 = vsel %vm6083, %v6075, %v6080
    %v6085 = vrsqrt.pop %v6063
    %v6086 = vmul.f32 %v6085, %v6063
    %v6087 = vmul.f32 %v6086, %v6085
    %v6088 = vmul.f32 0.5, %v6087
    %v6089 = vsub.f32 1.5, %v6088
    %v6090 = vmul.f32 %v6085, %v6089
    %vm6091 = vweird.f32 %v6063
    %vm6092 = vweird.f32 %v6085
    %vm6093 = vmor %vm6091, %vm6092
    %v6094 = vsel %vm6093, %v6085, %v6090
    %v6095 = vrsqrt.pop %v6064
    %v6096 = vmul.f32 %v6095, %v6064
    %v6097 = vmul.f32 %v6096, %v6095
    %v6098 = vmul.f32 0.5, %v6097
    %v6099 = vsub.f32 1.5, %v6098
    %v6100 = vmul.f32 %v6095, %v6099
    %vm6101 = vweird.f32 %v6064
    %vm6102 = vweird.f32 %v6095
    %vm6103 = vmor %vm6101, %vm6102
    %v6104 = vsel %vm6103, %v6095, %v6100
    %v6105 = vmul.f32 %v6037, %v6074
    %v6106 = vmul.f32 %v6038, %v6084
    %v6107 = vmul.f32 %v6039, %v6094
    %v6108 = vmul.f32 %v6040, %v6104
    %v6110 = vperm.slane %v6019, 0
    %v6112 = vmul.f32 %v6105, %v6110
    %v6113 = vmul.f32 %v6106, %v6110
    %v6114 = vmul.f32 %v6107, %v6110
    %v6115 = vmul.f32 %v6108, %v6110
    %v6117 = vperm.slane %v6020, 0
    %v6119 = vadd.f32 %v6112, %v6117
    %v6120 = vadd.f32 %v6113, %v6117
    %v6121 = vadd.f32 %v6114, %v6117
    %v6122 = vadd.f32 %v6115, %v6117
    %v6123 = vld [vmem:[%s93] sm:$0xff]
    %v6124 = vld [vmem:[%s93 + $0x8] sm:$0xff]
    %s6125 = scalar_lea.vmem %s93, 16
    %v6126 = vld [vmem:[%s6125] sm:$0xff]
    %v6127 = vld [vmem:[%s6125 + $0x8] sm:$0xff]
    %v6129 = vsel %vm389, %v6120, 0
    %6131 = vmatpush.msra.mxu0 0.0
    %6132 = vmatpush.msra.mxu0 0.0
    %6133 = vmatpush.msra.mxu0 0.0
    %6134 = vmatpush.msra.mxu0 0.0
    %6135 = vmatpush.msra.mxu0 0.0
    %6136 = vmatpush.msra.mxu0 0.0
    %6137 = vmatpush.msra.mxu0 0.0
    %6138 = vmatpush.msra.mxu0 0.0
    %6139 = vmatpush.msra.mxu0 0.0
    %6140 = vmatpush.msra.mxu0 0.0
    %6141 = vmatpush.msra.mxu0 0.0
    %6142 = vmatpush.msra.mxu0 0.0
    %6143 = vmatpush.msra.mxu0 0.0
    %6144 = vmatpush.msra.mxu0 0.0
    %6145 = vmatpush.msra.mxu0 %v6127
    %6146 = vmatpush.msra.mxu0 %v6126
    %6147 = vmatmul.f32.gmra.mxu0 %v6129
    %v6148 = vpop.f32.mrf.mxu0
    %v6149 = vadd.f32 0.0, %v6148
    %6150 = vdwg.mxu0
    %v6152 = vsel %vm389, %v6119, 0
    %6154 = vmatpush.msra.mxu0 0.0
    %6155 = vmatpush.msra.mxu0 0.0
    %6156 = vmatpush.msra.mxu0 0.0
    %6157 = vmatpush.msra.mxu0 0.0
    %6158 = vmatpush.msra.mxu0 0.0
    %6159 = vmatpush.msra.mxu0 0.0
    %6160 = vmatpush.msra.mxu0 0.0
    %6161 = vmatpush.msra.mxu0 0.0
    %6162 = vmatpush.msra.mxu0 0.0
    %6163 = vmatpush.msra.mxu0 0.0
    %6164 = vmatpush.msra.mxu0 0.0
    %6165 = vmatpush.msra.mxu0 0.0
    %6166 = vmatpush.msra.mxu0 0.0
    %6167 = vmatpush.msra.mxu0 0.0
    %6168 = vmatpush.msra.mxu0 %v6124
    %6169 = vmatpush.msra.mxu0 %v6123
    %6170 = vmatmul.f32.gmra.mxu0 %v6152
    %v6171 = vpop.f32.mrf.mxu0
    %v6172 = vadd.f32 %v6149, %v6171
    %6173 = vdwg.mxu0
    %s6174 = scalar_lea.vmem %s93, 32
    %v6175 = vld [vmem:[%s6174] sm:$0xff]
    %v6176 = vld [vmem:[%s6174 + $0x8] sm:$0xff]
    %v6178 = vsel %vm389, %v6121, 0
    %6180 = vmatpush.msra.mxu0 0.0
    %6181 = vmatpush.msra.mxu0 0.0
    %6182 = vmatpush.msra.mxu0 0.0
    %6183 = vmatpush.msra.mxu0 0.0
    %6184 = vmatpush.msra.mxu0 0.0
    %6185 = vmatpush.msra.mxu0 0.0
    %6186 = vmatpush.msra.mxu0 0.0
    %6187 = vmatpush.msra.mxu0 0.0
    %6188 = vmatpush.msra.mxu0 0.0
    %6189 = vmatpush.msra.mxu0 0.0
    %6190 = vmatpush.msra.mxu0 0.0
    %6191 = vmatpush.msra.mxu0 0.0
    %6192 = vmatpush.msra.mxu0 0.0
    %6193 = vmatpush.msra.mxu0 0.0
    %6194 = vmatpush.msra.mxu0 %v6176
    %6195 = vmatpush.msra.mxu0 %v6175
    %6196 = vmatmul.f32.gmra.mxu0 %v6178
    %v6197 = vpop.f32.mrf.mxu0
    %v6198 = vadd.f32 0.0, %v6197
    %6199 = vdwg.mxu0
    %v6200 = vadd.f32 %v6172, %v6198
    %s6201 = scalar_lea.vmem %s93, 48
    %v6202 = vld [vmem:[%s6201] sm:$0xff]
    %v6203 = vld [vmem:[%s6201 + $0x8] sm:$0xff]
    %v6205 = vsel %vm389, %v6122, 0
    %6207 = vmatpush.msra.mxu0 0.0
    %6208 = vmatpush.msra.mxu0 0.0
    %6209 = vmatpush.msra.mxu0 0.0
    %6210 = vmatpush.msra.mxu0 0.0
    %6211 = vmatpush.msra.mxu0 0.0
    %6212 = vmatpush.msra.mxu0 0.0
    %6213 = vmatpush.msra.mxu0 0.0
    %6214 = vmatpush.msra.mxu0 0.0
    %6215 = vmatpush.msra.mxu0 0.0
    %6216 = vmatpush.msra.mxu0 0.0
    %6217 = vmatpush.msra.mxu0 0.0
    %6218 = vmatpush.msra.mxu0 0.0
    %6219 = vmatpush.msra.mxu0 0.0
    %6220 = vmatpush.msra.mxu0 0.0
    %6221 = vmatpush.msra.mxu0 %v6203
    %6222 = vmatpush.msra.mxu0 %v6202
    %6223 = vmatmul.f32.gmra.mxu0 %v6205
    %v6224 = vpop.f32.mrf.mxu0
    %v6225 = vadd.f32 0.0, %v6224
    %6226 = vdwg.mxu0
    %v6227 = vadd.f32 %v6200, %v6225
    %v6228 = vld [vmem:[%s95] sm:$0x1]
    %v6230 = vperm.slane %v6228, 0
    %v6232 = vadd.f32 %v6227, %v6230
    %v6234 = vrot.slane %v6232, 7
    %v6236 = vrot.slane %v6232, 6
    %v6238 = vsel %vm2482, 0.0, %v6234
    %v6239 = vsel %vm2484, %v6238, 0.0
    %v6240 = vsel %vm2486, %v6239, %v6236
    %v6241 = vadd.f32 %v4239, %v6240
    %v6242 = vadd.f32 %v4240, %v6236
    %v6243 = vld [vmem:[%s97] sm:$0x1]
    %v6244 = vld [vmem:[%s99] sm:$0x1]
    %v6245 = vld [vmem:[%s105] sm:$0x1]
    %v6246 = vsel %vm664, %v6241, 0.0
    %6247 = vadd.xlane.f32.xlu0 %v6246
    %v6248 = vpop.xlane.xlu0 %6247
    %v6249 = vsel %vm2496, %v6242, 0.0
    %6250 = vadd.xlane.f32.xlu0 %v6249
    %v6251 = vpop.xlane.xlu0 %6250
    %v6252 = vmul.f32 %v6248, %v2506
    %v6253 = vmul.f32 %v6251, %v2506
    %v6254 = vsub.f32 %v6241, %v6252
    %v6255 = vsub.f32 %v6242, %v6253
    %v6256 = vmul.f32 %v6254, %v6254
    %v6257 = vmul.f32 %v6255, %v6255
    %v6258 = vsel %vm664, %v6256, 0.0
    %6259 = vadd.xlane.f32.xlu0 %v6258
    %v6260 = vpop.xlane.xlu0 %6259
    %v6261 = vsel %vm2496, %v6257, 0.0
    %6262 = vadd.xlane.f32.xlu0 %v6261
    %v6263 = vpop.xlane.xlu0 %6262
    %v6264 = vmul.f32 %v6260, %v2506
    %v6265 = vmul.f32 %v6263, %v2506
    %v6266 = vadd.f32 %v6264, 1e-05
    %v6267 = vadd.f32 %v6265, 1e-05
    %v6268 = vrsqrt.pop %v6266
    %v6269 = vmul.f32 %v6268, %v6266
    %v6270 = vmul.f32 %v6269, %v6268
    %v6271 = vmul.f32 0.5, %v6270
    %v6272 = vsub.f32 1.5, %v6271
    %v6273 = vmul.f32 %v6268, %v6272
    %vm6274 = vweird.f32 %v6266
    %vm6275 = vweird.f32 %v6268
    %vm6276 = vmor %vm6274, %vm6275
    %v6277 = vsel %vm6276, %v6268, %v6273
    %v6278 = vrsqrt.pop %v6267
    %v6279 = vmul.f32 %v6278, %v6267
    %v6280 = vmul.f32 %v6279, %v6278
    %v6281 = vmul.f32 0.5, %v6280
    %v6282 = vsub.f32 1.5, %v6281
    %v6283 = vmul.f32 %v6278, %v6282
    %vm6284 = vweird.f32 %v6267
    %vm6285 = vweird.f32 %v6278
    %vm6286 = vmor %vm6284, %vm6285
    %v6287 = vsel %vm6286, %v6278, %v6283
    %v6288 = vmul.f32 %v6254, %v6277
    %v6289 = vmul.f32 %v6255, %v6287
    %v6291 = vperm.slane %v6243, 0
    %v6293 = vmul.f32 %v6288, %v6291
    %v6294 = vmul.f32 %v6289, %v6291
    %v6296 = vperm.slane %v6244, 0
    %v6298 = vadd.f32 %v6293, %v6296
    %v6299 = vadd.f32 %v6294, %v6296
    %v6300 = vld [vmem:[%s101] sm:$0xff]
    %v6301 = vld [vmem:[%s101 + $0x8] sm:$0xff]
    %v6302 = vld [vmem:[%s101 + $0x10] sm:$0xff]
    %v6303 = vld [vmem:[%s101 + $0x18] sm:$0xff]
    %v6305 = vsel %vm664, %v6298, 0
    %v6308 = vsel %vm664, %v6299, 0
    %6310 = vmatpush.msra.mxu0 0.0
    %6311 = vmatpush.msra.mxu0 0.0
    %6312 = vmatpush.msra.mxu0 0.0
    %6313 = vmatpush.msra.mxu0 0.0
    %6314 = vmatpush.msra.mxu0 0.0
    %6315 = vmatpush.msra.mxu0 0.0
    %6316 = vmatpush.msra.mxu0 0.0
    %6317 = vmatpush.msra.mxu0 0.0
    %6318 = vmatpush.msra.mxu0 0.0
    %6319 = vmatpush.msra.mxu0 0.0
    %6320 = vmatpush.msra.mxu0 0.0
    %6321 = vmatpush.msra.mxu0 0.0
    %6322 = vmatpush.msra.mxu0 %v6303
    %6323 = vmatpush.msra.mxu0 %v6302
    %6324 = vmatpush.msra.mxu0 %v6301
    %6325 = vmatpush.msra.mxu0 %v6300
    %6326 = vmatmul.f32.gmra.mxu0 %v6305
    %v6327 = vpop.f32.mrf.mxu0
    %v6328 = vadd.f32 0.0, %v6327
    %6329 = vmatmul.f32.gmra.mxu0 %v6308
    %v6330 = vpop.f32.mrf.mxu0
    %v6331 = vadd.f32 0.0, %v6330
    %6332 = vdwg.mxu0
    %v6333 = vmul.f32 %v6328, 0.125
    %v6334 = vmul.f32 %v6331, 0.125
    %s6335 = scalar_lea.vmem %s101, 192
    %v6336 = vld [vmem:[%s6335] sm:$0xff]
    %v6337 = vld [vmem:[%s6335 + $0x8] sm:$0xff]
    %v6338 = vld [vmem:[%s6335 + $0x10] sm:$0xff]
    %v6339 = vld [vmem:[%s6335 + $0x18] sm:$0xff]
    %6340 = vmatpush.msra.mxu0 0.0
    %6341 = vmatpush.msra.mxu0 0.0
    %6342 = vmatpush.msra.mxu0 0.0
    %6343 = vmatpush.msra.mxu0 0.0
    %6344 = vmatpush.msra.mxu0 0.0
    %6345 = vmatpush.msra.mxu0 0.0
    %6346 = vmatpush.msra.mxu0 0.0
    %6347 = vmatpush.msra.mxu0 0.0
    %6348 = vmatpush.msra.mxu0 0.0
    %6349 = vmatpush.msra.mxu0 0.0
    %6350 = vmatpush.msra.mxu0 0.0
    %6351 = vmatpush.msra.mxu0 0.0
    %6352 = vmatpush.msra.mxu0 %v6339
    %6353 = vmatpush.msra.mxu0 %v6338
    %6354 = vmatpush.msra.mxu0 %v6337
    %6355 = vmatpush.msra.mxu0 %v6336
    %6356 = vmatmul.f32.gmra.mxu0 %v6305
    %v6357 = vpop.f32.mrf.mxu0
    %v6358 = vadd.f32 0.0, %v6357
    %6359 = vmatmul.f32.gmra.mxu0 %v6308
    %v6360 = vpop.f32.mrf.mxu0
    %v6361 = vadd.f32 0.0, %v6360
    %6362 = vdwg.mxu0
    %s6363 = scalar_lea.vmem %s101, 384
    %v6364 = vld [vmem:[%s6363] sm:$0xff]
    %v6365 = vld [vmem:[%s6363 + $0x8] sm:$0xff]
    %v6366 = vld [vmem:[%s6363 + $0x10] sm:$0xff]
    %v6367 = vld [vmem:[%s6363 + $0x18] sm:$0xff]
    %6368 = vmatpush.msra.mxu0 0.0
    %6369 = vmatpush.msra.mxu0 0.0
    %6370 = vmatpush.msra.mxu0 0.0
    %6371 = vmatpush.msra.mxu0 0.0
    %6372 = vmatpush.msra.mxu0 0.0
    %6373 = vmatpush.msra.mxu0 0.0
    %6374 = vmatpush.msra.mxu0 0.0
    %6375 = vmatpush.msra.mxu0 0.0
    %6376 = vmatpush.msra.mxu0 0.0
    %6377 = vmatpush.msra.mxu0 0.0
    %6378 = vmatpush.msra.mxu0 0.0
    %6379 = vmatpush.msra.mxu0 0.0
    %6380 = vmatpush.msra.mxu0 %v6367
    %6381 = vmatpush.msra.mxu0 %v6366
    %6382 = vmatpush.msra.mxu0 %v6365
    %6383 = vmatpush.msra.mxu0 %v6364
    %6384 = vmatmul.f32.gmra.mxu0 %v6305
    %v6385 = vpop.f32.mrf.mxu0
    %v6386 = vadd.f32 0.0, %v6385
    %6387 = vmatmul.f32.gmra.mxu0 %v6308
    %v6388 = vpop.f32.mrf.mxu0
    %v6389 = vadd.f32 0.0, %v6388
    %6390 = vdwg.mxu0
    %v6392 = vsel %vm2210, %v6333, 0
    %v6395 = vsel %vm2210, %v6334, 0
    %v6398 = vsel %vm2210, %v6358, 0
    %v6401 = vsel %vm2210, %v6361, 0
    %6403 = vmatpush.xpose.msra.mxu0 0.0
    %6404 = vmatpush.xpose.msra.mxu0 0.0
    %6405 = vmatpush.xpose.msra.mxu0 0.0
    %6406 = vmatpush.xpose.msra.mxu0 0.0
    %6407 = vmatpush.xpose.msra.mxu0 0.0
    %6408 = vmatpush.xpose.msra.mxu0 0.0
    %6409 = vmatpush.xpose.msra.mxu0 0.0
    %6410 = vmatpush.xpose.msra.mxu0 0.0
    %6411 = vmatpush.xpose.msra.mxu0 0.0
    %6412 = vmatpush.xpose.msra.mxu0 0.0
    %6413 = vmatpush.xpose.msra.mxu0 0.0
    %6414 = vmatpush.xpose.msra.mxu0 0.0
    %6415 = vmatpush.xpose.msra.mxu0 0.0
    %6416 = vmatpush.xpose.msra.mxu0 0.0
    %6417 = vmatpush.xpose.msra.mxu0 %v6401
    %6418 = vmatpush.xpose.msra.mxu0 %v6398
    %6419 = vmatmul.f32.gmra.mxu0 %v6392
    %v6420 = vpop.f32.mrf.mxu0
    %v6421 = vadd.f32 %v318, %v6420
    %6422 = vmatmul.f32.gmra.mxu0 %v6395
    %v6423 = vpop.f32.mrf.mxu0
    %v6424 = vadd.f32 %v319, %v6423
    %6425 = vdwg.mxu0
    %v6426 = vsel %vm2681, %v6421, -inf
    %6427 = vmax.xlane.f32.xlu0 %v6426
    %v6428 = vpop.xlane.xlu0 %6427
    %v6429 = vsel %vm2685, %v6424, -inf
    %6430 = vmax.xlane.f32.xlu0 %v6429
    %v6431 = vpop.xlane.xlu0 %6430
    %v6432 = vsub.f32 %v6421, %v6428
    %v6433 = vsub.f32 %v6424, %v6431
    %v6434 = vmul.f32 %v6432, 1.442695
    %v6435 = vpow.pop %v6434
    %v6436 = vmul.f32 %v6433, 1.442695
    %v6437 = vpow.pop %v6436
    %v6438 = vsel %vm2681, %v6435, 0.0
    %6439 = vadd.xlane.f32.xlu0 %v6438
    %v6440 = vpop.xlane.xlu0 %6439
    %v6441 = vsel %vm2685, %v6437, 0.0
    %6442 = vadd.xlane.f32.xlu0 %v6441
    %v6443 = vpop.xlane.xlu0 %6442
    %v6444 = vrcp.pop %v6440
    %v6445 = vmul.f32 %v6440, %v6444
    %v6446 = vsub.f32 1.0, %v6445
    %v6447 = vmul.f32 %v6444, %v6446
    %v6448 = vadd.f32 %v6444, %v6447
    %vm6449 = vweird.f32 %v6440
    %vm6450 = vweird.f32 %v6444
    %vm6451 = vmor %vm6449, %vm6450
    %v6452 = vsel %vm6451, %v6444, %v6448
    %v6453 = vand.u32 2147483647, %v6440
    %vm6454 = vcmp.eq.f32.partialorder %v6453, 8.507059e+37
    %v6455 = vand.u32 %v6440, 2147483648
    %v6456 = vor.u32 1.1754944e-38, %v6455
    %v6457 = vsel %vm6454, %v6456, %v6452
    %v6458 = vmul.f32 %v6435, %v6457
    %v6459 = vrcp.pop %v6443
    %v6460 = vmul.f32 %v6443, %v6459
    %v6461 = vsub.f32 1.0, %v6460
    %v6462 = vmul.f32 %v6459, %v6461
    %v6463 = vadd.f32 %v6459, %v6462
    %vm6464 = vweird.f32 %v6443
    %vm6465 = vweird.f32 %v6459
    %vm6466 = vmor %vm6464, %vm6465
    %v6467 = vsel %vm6466, %v6459, %v6463
    %v6468 = vand.u32 2147483647, %v6443
    %vm6469 = vcmp.eq.f32.partialorder %v6468, 8.507059e+37
    %v6470 = vand.u32 %v6443, 2147483648
    %v6471 = vor.u32 1.1754944e-38, %v6470
    %v6472 = vsel %vm6469, %v6471, %v6467
    %v6473 = vmul.f32 %v6437, %v6472
    %v6475 = vsel %vm2681, %v6458, 0
    %v6478 = vsel %vm2681, %v6473, 0
    %v6481 = vsel %vm2737, %v6389, 0
    %6483 = vmatpush.msra.mxu0 0.0
    %6484 = vmatpush.msra.mxu0 0.0
    %6485 = vmatpush.msra.mxu0 0.0
    %6486 = vmatpush.msra.mxu0 0.0
    %6487 = vmatpush.msra.mxu0 0.0
    %6488 = vmatpush.msra.mxu0 0.0
    %6489 = vmatpush.msra.mxu0 0.0
    %6490 = vmatpush.msra.mxu0 0.0
    %6491 = vmatpush.msra.mxu0 0.0
    %6492 = vmatpush.msra.mxu0 0.0
    %6493 = vmatpush.msra.mxu0 0.0
    %6494 = vmatpush.msra.mxu0 0.0
    %6495 = vmatpush.msra.mxu0 0.0
    %6496 = vmatpush.msra.mxu0 0.0
    %6497 = vmatpush.msra.mxu0 %v6481
    %6498 = vmatpush.msra.mxu0 %v6386
    %6499 = vmatmul.f32.gmra.mxu0 %v6475
    %v6500 = vpop.f32.mrf.mxu0
    %v6501 = vadd.f32 0.0, %v6500
    %6502 = vmatmul.f32.gmra.mxu0 %v6478
    %v6503 = vpop.f32.mrf.mxu0
    %v6504 = vadd.f32 0.0, %v6503
    %6505 = vdwg.mxu0
    %v6506 = vld [vmem:[%s103] sm:$0xff]
    %v6507 = vld [vmem:[%s103 + $0x8] sm:$0xff]
    %v6508 = vld [vmem:[%s103 + $0x10] sm:$0xff]
    %v6509 = vld [vmem:[%s103 + $0x18] sm:$0xff]
    %v6510 = vld [vmem:[%s103 + $0x20] sm:$0xff]
    %v6511 = vld [vmem:[%s103 + $0x28] sm:$0xff]
    %v6512 = vld [vmem:[%s103 + $0x30] sm:$0xff]
    %v6513 = vld [vmem:[%s103 + $0x38] sm:$0xff]
    %v6515 = vsel %vm2210, %v6501, 0
    %v6518 = vsel %vm2210, %v6504, 0
    %6520 = vmatpush.msra.mxu0 0.0
    %6521 = vmatpush.msra.mxu0 0.0
    %6522 = vmatpush.msra.mxu0 0.0
    %6523 = vmatpush.msra.mxu0 0.0
    %6524 = vmatpush.msra.mxu0 0.0
    %6525 = vmatpush.msra.mxu0 0.0
    %6526 = vmatpush.msra.mxu0 0.0
    %6527 = vmatpush.msra.mxu0 0.0
    %6528 = vmatpush.msra.mxu0 %v6513
    %6529 = vmatpush.msra.mxu0 %v6512
    %6530 = vmatpush.msra.mxu0 %v6511
    %6531 = vmatpush.msra.mxu0 %v6510
    %6532 = vmatpush.msra.mxu0 %v6509
    %6533 = vmatpush.msra.mxu0 %v6508
    %6534 = vmatpush.msra.mxu0 %v6507
    %6535 = vmatpush.msra.mxu0 %v6506
    %6536 = vmatmul.f32.gmra.mxu0 %v6515
    %v6537 = vpop.f32.mrf.mxu0
    %v6538 = vadd.f32 0.0, %v6537
    %6539 = vmatmul.f32.gmra.mxu0 %v6518
    %v6540 = vpop.f32.mrf.mxu0
    %v6541 = vadd.f32 0.0, %v6540
    %6542 = vdwg.mxu0
    %v6544 = vperm.slane %v6245, 0
    %v6546 = vadd.f32 %v6544, %v6538
    %v6547 = vadd.f32 %v6544, %v6541
    %s6548 = scalar_lea.vmem %s101, 32
    %v6549 = vld [vmem:[%s6548] sm:$0xff]
    %v6550 = vld [vmem:[%s6548 + $0x8] sm:$0xff]
    %v6551 = vld [vmem:[%s6548 + $0x10] sm:$0xff]
    %v6552 = vld [vmem:[%s6548 + $0x18] sm:$0xff]
    %6553 = vmatpush.msra.mxu0 0.0
    %6554 = vmatpush.msra.mxu0 0.0
    %6555 = vmatpush.msra.mxu0 0.0
    %6556 = vmatpush.msra.mxu0 0.0
    %6557 = vmatpush.msra.mxu0 0.0
    %6558 = vmatpush.msra.mxu0 0.0
    %6559 = vmatpush.msra.mxu0 0.0
    %6560 = vmatpush.msra.mxu0 0.0
    %6561 = vmatpush.msra.mxu0 0.0
    %6562 = vmatpush.msra.mxu0 0.0
    %6563 = vmatpush.msra.mxu0 0.0
    %6564 = vmatpush.msra.mxu0 0.0
    %6565 = vmatpush.msra.mxu0 %v6552
    %6566 = vmatpush.msra.mxu0 %v6551
    %6567 = vmatpush.msra.mxu0 %v6550
    %6568 = vmatpush.msra.mxu0 %v6549
    %6569 = vmatmul.f32.gmra.mxu0 %v6305
    %v6570 = vpop.f32.mrf.mxu0
    %v6571 = vadd.f32 0.0, %v6570
    %6572 = vmatmul.f32.gmra.mxu0 %v6308
    %v6573 = vpop.f32.mrf.mxu0
    %v6574 = vadd.f32 0.0, %v6573
    %6575 = vdwg.mxu0
    %v6576 = vmul.f32 %v6571, 0.125
    %v6577 = vmul.f32 %v6574, 0.125
    %s6578 = scalar_lea.vmem %s101, 224
    %v6579 = vld [vmem:[%s6578] sm:$0xff]
    %v6580 = vld [vmem:[%s6578 + $0x8] sm:$0xff]
    %v6581 = vld [vmem:[%s6578 + $0x10] sm:$0xff]
    %v6582 = vld [vmem:[%s6578 + $0x18] sm:$0xff]
    %6583 = vmatpush.msra.mxu0 0.0
    %6584 = vmatpush.msra.mxu0 0.0
    %6585 = vmatpush.msra.mxu0 0.0
    %6586 = vmatpush.msra.mxu0 0.0
    %6587 = vmatpush.msra.mxu0 0.0
    %6588 = vmatpush.msra.mxu0 0.0
    %6589 = vmatpush.msra.mxu0 0.0
    %6590 = vmatpush.msra.mxu0 0.0
    %6591 = vmatpush.msra.mxu0 0.0
    %6592 = vmatpush.msra.mxu0 0.0
    %6593 = vmatpush.msra.mxu0 0.0
    %6594 = vmatpush.msra.mxu0 0.0
    %6595 = vmatpush.msra.mxu0 %v6582
    %6596 = vmatpush.msra.mxu0 %v6581
    %6597 = vmatpush.msra.mxu0 %v6580
    %6598 = vmatpush.msra.mxu0 %v6579
    %6599 = vmatmul.f32.gmra.mxu0 %v6305
    %v6600 = vpop.f32.mrf.mxu0
    %v6601 = vadd.f32 0.0, %v6600
    %6602 = vmatmul.f32.gmra.mxu0 %v6308
    %v6603 = vpop.f32.mrf.mxu0
    %v6604 = vadd.f32 0.0, %v6603
    %6605 = vdwg.mxu0
    %s6606 = scalar_lea.vmem %s101, 416
    %v6607 = vld [vmem:[%s6606] sm:$0xff]
    %v6608 = vld [vmem:[%s6606 + $0x8] sm:$0xff]
    %v6609 = vld [vmem:[%s6606 + $0x10] sm:$0xff]
    %v6610 = vld [vmem:[%s6606 + $0x18] sm:$0xff]
    %6611 = vmatpush.msra.mxu0 0.0
    %6612 = vmatpush.msra.mxu0 0.0
    %6613 = vmatpush.msra.mxu0 0.0
    %6614 = vmatpush.msra.mxu0 0.0
    %6615 = vmatpush.msra.mxu0 0.0
    %6616 = vmatpush.msra.mxu0 0.0
    %6617 = vmatpush.msra.mxu0 0.0
    %6618 = vmatpush.msra.mxu0 0.0
    %6619 = vmatpush.msra.mxu0 0.0
    %6620 = vmatpush.msra.mxu0 0.0
    %6621 = vmatpush.msra.mxu0 0.0
    %6622 = vmatpush.msra.mxu0 0.0
    %6623 = vmatpush.msra.mxu0 %v6610
    %6624 = vmatpush.msra.mxu0 %v6609
    %6625 = vmatpush.msra.mxu0 %v6608
    %6626 = vmatpush.msra.mxu0 %v6607
    %6627 = vmatmul.f32.gmra.mxu0 %v6305
    %v6628 = vpop.f32.mrf.mxu0
    %v6629 = vadd.f32 0.0, %v6628
    %6630 = vmatmul.f32.gmra.mxu0 %v6308
    %v6631 = vpop.f32.mrf.mxu0
    %v6632 = vadd.f32 0.0, %v6631
    %6633 = vdwg.mxu0
    %v6635 = vsel %vm2210, %v6576, 0
    %v6638 = vsel %vm2210, %v6577, 0
    %v6641 = vsel %vm2210, %v6601, 0
    %v6644 = vsel %vm2210, %v6604, 0
    %6646 = vmatpush.xpose.msra.mxu0 0.0
    %6647 = vmatpush.xpose.msra.mxu0 0.0
    %6648 = vmatpush.xpose.msra.mxu0 0.0
    %6649 = vmatpush.xpose.msra.mxu0 0.0
    %6650 = vmatpush.xpose.msra.mxu0 0.0
    %6651 = vmatpush.xpose.msra.mxu0 0.0
    %6652 = vmatpush.xpose.msra.mxu0 0.0
    %6653 = vmatpush.xpose.msra.mxu0 0.0
    %6654 = vmatpush.xpose.msra.mxu0 0.0
    %6655 = vmatpush.xpose.msra.mxu0 0.0
    %6656 = vmatpush.xpose.msra.mxu0 0.0
    %6657 = vmatpush.xpose.msra.mxu0 0.0
    %6658 = vmatpush.xpose.msra.mxu0 0.0
    %6659 = vmatpush.xpose.msra.mxu0 0.0
    %6660 = vmatpush.xpose.msra.mxu0 %v6644
    %6661 = vmatpush.xpose.msra.mxu0 %v6641
    %6662 = vmatmul.f32.gmra.mxu0 %v6635
    %v6663 = vpop.f32.mrf.mxu0
    %v6664 = vadd.f32 %v318, %v6663
    %6665 = vmatmul.f32.gmra.mxu0 %v6638
    %v6666 = vpop.f32.mrf.mxu0
    %v6667 = vadd.f32 %v319, %v6666
    %6668 = vdwg.mxu0
    %v6669 = vsel %vm2681, %v6664, -inf
    %6670 = vmax.xlane.f32.xlu0 %v6669
    %v6671 = vpop.xlane.xlu0 %6670
    %v6672 = vsel %vm2685, %v6667, -inf
    %6673 = vmax.xlane.f32.xlu0 %v6672
    %v6674 = vpop.xlane.xlu0 %6673
    %v6675 = vsub.f32 %v6664, %v6671
    %v6676 = vsub.f32 %v6667, %v6674
    %v6677 = vmul.f32 %v6675, 1.442695
    %v6678 = vpow.pop %v6677
    %v6679 = vmul.f32 %v6676, 1.442695
    %v6680 = vpow.pop %v6679
    %v6681 = vsel %vm2681, %v6678, 0.0
    %6682 = vadd.xlane.f32.xlu0 %v6681
    %v6683 = vpop.xlane.xlu0 %6682
    %v6684 = vsel %vm2685, %v6680, 0.0
    %6685 = vadd.xlane.f32.xlu0 %v6684
    %v6686 = vpop.xlane.xlu0 %6685
    %v6687 = vrcp.pop %v6683
    %v6688 = vmul.f32 %v6683, %v6687
    %v6689 = vsub.f32 1.0, %v6688
    %v6690 = vmul.f32 %v6687, %v6689
    %v6691 = vadd.f32 %v6687, %v6690
    %vm6692 = vweird.f32 %v6683
    %vm6693 = vweird.f32 %v6687
    %vm6694 = vmor %vm6692, %vm6693
    %v6695 = vsel %vm6694, %v6687, %v6691
    %v6696 = vand.u32 2147483647, %v6683
    %vm6697 = vcmp.eq.f32.partialorder %v6696, 8.507059e+37
    %v6698 = vand.u32 %v6683, 2147483648
    %v6699 = vor.u32 1.1754944e-38, %v6698
    %v6700 = vsel %vm6697, %v6699, %v6695
    %v6701 = vmul.f32 %v6678, %v6700
    %v6702 = vrcp.pop %v6686
    %v6703 = vmul.f32 %v6686, %v6702
    %v6704 = vsub.f32 1.0, %v6703
    %v6705 = vmul.f32 %v6702, %v6704
    %v6706 = vadd.f32 %v6702, %v6705
    %vm6707 = vweird.f32 %v6686
    %vm6708 = vweird.f32 %v6702
    %vm6709 = vmor %vm6707, %vm6708
    %v6710 = vsel %vm6709, %v6702, %v6706
    %v6711 = vand.u32 2147483647, %v6686
    %vm6712 = vcmp.eq.f32.partialorder %v6711, 8.507059e+37
    %v6713 = vand.u32 %v6686, 2147483648
    %v6714 = vor.u32 1.1754944e-38, %v6713
    %v6715 = vsel %vm6712, %v6714, %v6710
    %v6716 = vmul.f32 %v6680, %v6715
    %v6718 = vsel %vm2681, %v6701, 0
    %v6721 = vsel %vm2681, %v6716, 0
    %v6724 = vsel %vm2737, %v6632, 0
    %6726 = vmatpush.msra.mxu0 0.0
    %6727 = vmatpush.msra.mxu0 0.0
    %6728 = vmatpush.msra.mxu0 0.0
    %6729 = vmatpush.msra.mxu0 0.0
    %6730 = vmatpush.msra.mxu0 0.0
    %6731 = vmatpush.msra.mxu0 0.0
    %6732 = vmatpush.msra.mxu0 0.0
    %6733 = vmatpush.msra.mxu0 0.0
    %6734 = vmatpush.msra.mxu0 0.0
    %6735 = vmatpush.msra.mxu0 0.0
    %6736 = vmatpush.msra.mxu0 0.0
    %6737 = vmatpush.msra.mxu0 0.0
    %6738 = vmatpush.msra.mxu0 0.0
    %6739 = vmatpush.msra.mxu0 0.0
    %6740 = vmatpush.msra.mxu0 %v6724
    %6741 = vmatpush.msra.mxu0 %v6629
    %6742 = vmatmul.f32.gmra.mxu0 %v6718
    %v6743 = vpop.f32.mrf.mxu0
    %v6744 = vadd.f32 0.0, %v6743
    %6745 = vmatmul.f32.gmra.mxu0 %v6721
    %v6746 = vpop.f32.mrf.mxu0
    %v6747 = vadd.f32 0.0, %v6746
    %6748 = vdwg.mxu0
    %s6749 = scalar_lea.vmem %s103, 64
    %v6750 = vld [vmem:[%s6749] sm:$0xff]
    %v6751 = vld [vmem:[%s6749 + $0x8] sm:$0xff]
    %v6752 = vld [vmem:[%s6749 + $0x10] sm:$0xff]
    %v6753 = vld [vmem:[%s6749 + $0x18] sm:$0xff]
    %v6754 = vld [vmem:[%s6749 + $0x20] sm:$0xff]
    %v6755 = vld [vmem:[%s6749 + $0x28] sm:$0xff]
    %v6756 = vld [vmem:[%s6749 + $0x30] sm:$0xff]
    %v6757 = vld [vmem:[%s6749 + $0x38] sm:$0xff]
    %v6759 = vsel %vm2210, %v6744, 0
    %v6762 = vsel %vm2210, %v6747, 0
    %6764 = vmatpush.msra.mxu0 0.0
    %6765 = vmatpush.msra.mxu0 0.0
    %6766 = vmatpush.msra.mxu0 0.0
    %6767 = vmatpush.msra.mxu0 0.0
    %6768 = vmatpush.msra.mxu0 0.0
    %6769 = vmatpush.msra.mxu0 0.0
    %6770 = vmatpush.msra.mxu0 0.0
    %6771 = vmatpush.msra.mxu0 0.0
    %6772 = vmatpush.msra.mxu0 %v6757
    %6773 = vmatpush.msra.mxu0 %v6756
    %6774 = vmatpush.msra.mxu0 %v6755
    %6775 = vmatpush.msra.mxu0 %v6754
    %6776 = vmatpush.msra.mxu0 %v6753
    %6777 = vmatpush.msra.mxu0 %v6752
    %6778 = vmatpush.msra.mxu0 %v6751
    %6779 = vmatpush.msra.mxu0 %v6750
    %6780 = vmatmul.f32.gmra.mxu0 %v6759
    %v6781 = vpop.f32.mrf.mxu0
    %v6782 = vadd.f32 0.0, %v6781
    %6783 = vmatmul.f32.gmra.mxu0 %v6762
    %v6784 = vpop.f32.mrf.mxu0
    %v6785 = vadd.f32 0.0, %v6784
    %6786 = vdwg.mxu0
    %v6787 = vadd.f32 %v6546, %v6782
    %v6788 = vadd.f32 %v6547, %v6785
    %s6789 = scalar_lea.vmem %s101, 64
    %v6790 = vld [vmem:[%s6789] sm:$0xff]
    %v6791 = vld [vmem:[%s6789 + $0x8] sm:$0xff]
    %v6792 = vld [vmem:[%s6789 + $0x10] sm:$0xff]
    %v6793 = vld [vmem:[%s6789 + $0x18] sm:$0xff]
    %6794 = vmatpush.msra.mxu0 0.0
    %6795 = vmatpush.msra.mxu0 0.0
    %6796 = vmatpush.msra.mxu0 0.0
    %6797 = vmatpush.msra.mxu0 0.0
    %6798 = vmatpush.msra.mxu0 0.0
    %6799 = vmatpush.msra.mxu0 0.0
    %6800 = vmatpush.msra.mxu0 0.0
    %6801 = vmatpush.msra.mxu0 0.0
    %6802 = vmatpush.msra.mxu0 0.0
    %6803 = vmatpush.msra.mxu0 0.0
    %6804 = vmatpush.msra.mxu0 0.0
    %6805 = vmatpush.msra.mxu0 0.0
    %6806 = vmatpush.msra.mxu0 %v6793
    %6807 = vmatpush.msra.mxu0 %v6792
    %6808 = vmatpush.msra.mxu0 %v6791
    %6809 = vmatpush.msra.mxu0 %v6790
    %6810 = vmatmul.f32.gmra.mxu0 %v6305
    %v6811 = vpop.f32.mrf.mxu0
    %v6812 = vadd.f32 0.0, %v6811
    %6813 = vmatmul.f32.gmra.mxu0 %v6308
    %v6814 = vpop.f32.mrf.mxu0
    %v6815 = vadd.f32 0.0, %v6814
    %6816 = vdwg.mxu0
    %v6817 = vmul.f32 %v6812, 0.125
    %v6818 = vmul.f32 %v6815, 0.125
    %s6819 = scalar_lea.vmem %s101, 256
    %v6820 = vld [vmem:[%s6819] sm:$0xff]
    %v6821 = vld [vmem:[%s6819 + $0x8] sm:$0xff]
    %v6822 = vld [vmem:[%s6819 + $0x10] sm:$0xff]
    %v6823 = vld [vmem:[%s6819 + $0x18] sm:$0xff]
    %6824 = vmatpush.msra.mxu0 0.0
    %6825 = vmatpush.msra.mxu0 0.0
    %6826 = vmatpush.msra.mxu0 0.0
    %6827 = vmatpush.msra.mxu0 0.0
    %6828 = vmatpush.msra.mxu0 0.0
    %6829 = vmatpush.msra.mxu0 0.0
    %6830 = vmatpush.msra.mxu0 0.0
    %6831 = vmatpush.msra.mxu0 0.0
    %6832 = vmatpush.msra.mxu0 0.0
    %6833 = vmatpush.msra.mxu0 0.0
    %6834 = vmatpush.msra.mxu0 0.0
    %6835 = vmatpush.msra.mxu0 0.0
    %6836 = vmatpush.msra.mxu0 %v6823
    %6837 = vmatpush.msra.mxu0 %v6822
    %6838 = vmatpush.msra.mxu0 %v6821
    %6839 = vmatpush.msra.mxu0 %v6820
    %6840 = vmatmul.f32.gmra.mxu0 %v6305
    %v6841 = vpop.f32.mrf.mxu0
    %v6842 = vadd.f32 0.0, %v6841
    %6843 = vmatmul.f32.gmra.mxu0 %v6308
    %v6844 = vpop.f32.mrf.mxu0
    %v6845 = vadd.f32 0.0, %v6844
    %6846 = vdwg.mxu0
    %s6847 = scalar_lea.vmem %s101, 448
    %v6848 = vld [vmem:[%s6847] sm:$0xff]
    %v6849 = vld [vmem:[%s6847 + $0x8] sm:$0xff]
    %v6850 = vld [vmem:[%s6847 + $0x10] sm:$0xff]
    %v6851 = vld [vmem:[%s6847 + $0x18] sm:$0xff]
    %6852 = vmatpush.msra.mxu0 0.0
    %6853 = vmatpush.msra.mxu0 0.0
    %6854 = vmatpush.msra.mxu0 0.0
    %6855 = vmatpush.msra.mxu0 0.0
    %6856 = vmatpush.msra.mxu0 0.0
    %6857 = vmatpush.msra.mxu0 0.0
    %6858 = vmatpush.msra.mxu0 0.0
    %6859 = vmatpush.msra.mxu0 0.0
    %6860 = vmatpush.msra.mxu0 0.0
    %6861 = vmatpush.msra.mxu0 0.0
    %6862 = vmatpush.msra.mxu0 0.0
    %6863 = vmatpush.msra.mxu0 0.0
    %6864 = vmatpush.msra.mxu0 %v6851
    %6865 = vmatpush.msra.mxu0 %v6850
    %6866 = vmatpush.msra.mxu0 %v6849
    %6867 = vmatpush.msra.mxu0 %v6848
    %6868 = vmatmul.f32.gmra.mxu0 %v6305
    %v6869 = vpop.f32.mrf.mxu0
    %v6870 = vadd.f32 0.0, %v6869
    %6871 = vmatmul.f32.gmra.mxu0 %v6308
    %v6872 = vpop.f32.mrf.mxu0
    %v6873 = vadd.f32 0.0, %v6872
    %6874 = vdwg.mxu0
    %v6876 = vsel %vm2210, %v6817, 0
    %v6879 = vsel %vm2210, %v6818, 0
    %v6882 = vsel %vm2210, %v6842, 0
    %v6885 = vsel %vm2210, %v6845, 0
    %6887 = vmatpush.xpose.msra.mxu0 0.0
    %6888 = vmatpush.xpose.msra.mxu0 0.0
    %6889 = vmatpush.xpose.msra.mxu0 0.0
    %6890 = vmatpush.xpose.msra.mxu0 0.0
    %6891 = vmatpush.xpose.msra.mxu0 0.0
    %6892 = vmatpush.xpose.msra.mxu0 0.0
    %6893 = vmatpush.xpose.msra.mxu0 0.0
    %6894 = vmatpush.xpose.msra.mxu0 0.0
    %6895 = vmatpush.xpose.msra.mxu0 0.0
    %6896 = vmatpush.xpose.msra.mxu0 0.0
    %6897 = vmatpush.xpose.msra.mxu0 0.0
    %6898 = vmatpush.xpose.msra.mxu0 0.0
    %6899 = vmatpush.xpose.msra.mxu0 0.0
    %6900 = vmatpush.xpose.msra.mxu0 0.0
    %6901 = vmatpush.xpose.msra.mxu0 %v6885
    %6902 = vmatpush.xpose.msra.mxu0 %v6882
    %6903 = vmatmul.f32.gmra.mxu0 %v6876
    %v6904 = vpop.f32.mrf.mxu0
    %v6905 = vadd.f32 %v318, %v6904
    %6906 = vmatmul.f32.gmra.mxu0 %v6879
    %v6907 = vpop.f32.mrf.mxu0
    %v6908 = vadd.f32 %v319, %v6907
    %6909 = vdwg.mxu0
    %v6910 = vsel %vm2681, %v6905, -inf
    %6911 = vmax.xlane.f32.xlu0 %v6910
    %v6912 = vpop.xlane.xlu0 %6911
    %v6913 = vsel %vm2685, %v6908, -inf
    %6914 = vmax.xlane.f32.xlu0 %v6913
    %v6915 = vpop.xlane.xlu0 %6914
    %v6916 = vsub.f32 %v6905, %v6912
    %v6917 = vsub.f32 %v6908, %v6915
    %v6918 = vmul.f32 %v6916, 1.442695
    %v6919 = vpow.pop %v6918
    %v6920 = vmul.f32 %v6917, 1.442695
    %v6921 = vpow.pop %v6920
    %v6922 = vsel %vm2681, %v6919, 0.0
    %6923 = vadd.xlane.f32.xlu0 %v6922
    %v6924 = vpop.xlane.xlu0 %6923
    %v6925 = vsel %vm2685, %v6921, 0.0
    %6926 = vadd.xlane.f32.xlu0 %v6925
    %v6927 = vpop.xlane.xlu0 %6926
    %v6928 = vrcp.pop %v6924
    %v6929 = vmul.f32 %v6924, %v6928
    %v6930 = vsub.f32 1.0, %v6929
    %v6931 = vmul.f32 %v6928, %v6930
    %v6932 = vadd.f32 %v6928, %v6931
    %vm6933 = vweird.f32 %v6924
    %vm6934 = vweird.f32 %v6928
    %vm6935 = vmor %vm6933, %vm6934
    %v6936 = vsel %vm6935, %v6928, %v6932
    %v6937 = vand.u32 2147483647, %v6924
    %vm6938 = vcmp.eq.f32.partialorder %v6937, 8.507059e+37
    %v6939 = vand.u32 %v6924, 2147483648
    %v6940 = vor.u32 1.1754944e-38, %v6939
    %v6941 = vsel %vm6938, %v6940, %v6936
    %v6942 = vmul.f32 %v6919, %v6941
    %v6943 = vrcp.pop %v6927
    %v6944 = vmul.f32 %v6927, %v6943
    %v6945 = vsub.f32 1.0, %v6944
    %v6946 = vmul.f32 %v6943, %v6945
    %v6947 = vadd.f32 %v6943, %v6946
    %vm6948 = vweird.f32 %v6927
    %vm6949 = vweird.f32 %v6943
    %vm6950 = vmor %vm6948, %vm6949
    %v6951 = vsel %vm6950, %v6943, %v6947
    %v6952 = vand.u32 2147483647, %v6927
    %vm6953 = vcmp.eq.f32.partialorder %v6952, 8.507059e+37
    %v6954 = vand.u32 %v6927, 2147483648
    %v6955 = vor.u32 1.1754944e-38, %v6954
    %v6956 = vsel %vm6953, %v6955, %v6951
    %v6957 = vmul.f32 %v6921, %v6956
    %v6959 = vsel %vm2681, %v6942, 0
    %v6962 = vsel %vm2681, %v6957, 0
    %v6965 = vsel %vm2737, %v6873, 0
    %6967 = vmatpush.msra.mxu0 0.0
    %6968 = vmatpush.msra.mxu0 0.0
    %6969 = vmatpush.msra.mxu0 0.0
    %6970 = vmatpush.msra.mxu0 0.0
    %6971 = vmatpush.msra.mxu0 0.0
    %6972 = vmatpush.msra.mxu0 0.0
    %6973 = vmatpush.msra.mxu0 0.0
    %6974 = vmatpush.msra.mxu0 0.0
    %6975 = vmatpush.msra.mxu0 0.0
    %6976 = vmatpush.msra.mxu0 0.0
    %6977 = vmatpush.msra.mxu0 0.0
    %6978 = vmatpush.msra.mxu0 0.0
    %6979 = vmatpush.msra.mxu0 0.0
    %6980 = vmatpush.msra.mxu0 0.0
    %6981 = vmatpush.msra.mxu0 %v6965
    %6982 = vmatpush.msra.mxu0 %v6870
    %6983 = vmatmul.f32.gmra.mxu0 %v6959
    %v6984 = vpop.f32.mrf.mxu0
    %v6985 = vadd.f32 0.0, %v6984
    %6986 = vmatmul.f32.gmra.mxu0 %v6962
    %v6987 = vpop.f32.mrf.mxu0
    %v6988 = vadd.f32 0.0, %v6987
    %6989 = vdwg.mxu0
    %s6990 = scalar_lea.vmem %s103, 128
    %v6991 = vld [vmem:[%s6990] sm:$0xff]
    %v6992 = vld [vmem:[%s6990 + $0x8] sm:$0xff]
    %v6993 = vld [vmem:[%s6990 + $0x10] sm:$0xff]
    %v6994 = vld [vmem:[%s6990 + $0x18] sm:$0xff]
    %v6995 = vld [vmem:[%s6990 + $0x20] sm:$0xff]
    %v6996 = vld [vmem:[%s6990 + $0x28] sm:$0xff]
    %v6997 = vld [vmem:[%s6990 + $0x30] sm:$0xff]
    %v6998 = vld [vmem:[%s6990 + $0x38] sm:$0xff]
    %v7000 = vsel %vm2210, %v6985, 0
    %v7003 = vsel %vm2210, %v6988, 0
    %7005 = vmatpush.msra.mxu0 0.0
    %7006 = vmatpush.msra.mxu0 0.0
    %7007 = vmatpush.msra.mxu0 0.0
    %7008 = vmatpush.msra.mxu0 0.0
    %7009 = vmatpush.msra.mxu0 0.0
    %7010 = vmatpush.msra.mxu0 0.0
    %7011 = vmatpush.msra.mxu0 0.0
    %7012 = vmatpush.msra.mxu0 0.0
    %7013 = vmatpush.msra.mxu0 %v6998
    %7014 = vmatpush.msra.mxu0 %v6997
    %7015 = vmatpush.msra.mxu0 %v6996
    %7016 = vmatpush.msra.mxu0 %v6995
    %7017 = vmatpush.msra.mxu0 %v6994
    %7018 = vmatpush.msra.mxu0 %v6993
    %7019 = vmatpush.msra.mxu0 %v6992
    %7020 = vmatpush.msra.mxu0 %v6991
    %7021 = vmatmul.f32.gmra.mxu0 %v7000
    %v7022 = vpop.f32.mrf.mxu0
    %v7023 = vadd.f32 0.0, %v7022
    %7024 = vmatmul.f32.gmra.mxu0 %v7003
    %v7025 = vpop.f32.mrf.mxu0
    %v7026 = vadd.f32 0.0, %v7025
    %7027 = vdwg.mxu0
    %v7028 = vadd.f32 %v6787, %v7023
    %v7029 = vadd.f32 %v6788, %v7026
    %s7030 = scalar_lea.vmem %s101, 96
    %v7031 = vld [vmem:[%s7030] sm:$0xff]
    %v7032 = vld [vmem:[%s7030 + $0x8] sm:$0xff]
    %v7033 = vld [vmem:[%s7030 + $0x10] sm:$0xff]
    %v7034 = vld [vmem:[%s7030 + $0x18] sm:$0xff]
    %7035 = vmatpush.msra.mxu0 0.0
    %7036 = vmatpush.msra.mxu0 0.0
    %7037 = vmatpush.msra.mxu0 0.0
    %7038 = vmatpush.msra.mxu0 0.0
    %7039 = vmatpush.msra.mxu0 0.0
    %7040 = vmatpush.msra.mxu0 0.0
    %7041 = vmatpush.msra.mxu0 0.0
    %7042 = vmatpush.msra.mxu0 0.0
    %7043 = vmatpush.msra.mxu0 0.0
    %7044 = vmatpush.msra.mxu0 0.0
    %7045 = vmatpush.msra.mxu0 0.0
    %7046 = vmatpush.msra.mxu0 0.0
    %7047 = vmatpush.msra.mxu0 %v7034
    %7048 = vmatpush.msra.mxu0 %v7033
    %7049 = vmatpush.msra.mxu0 %v7032
    %7050 = vmatpush.msra.mxu0 %v7031
    %7051 = vmatmul.f32.gmra.mxu0 %v6305
    %v7052 = vpop.f32.mrf.mxu0
    %v7053 = vadd.f32 0.0, %v7052
    %7054 = vmatmul.f32.gmra.mxu0 %v6308
    %v7055 = vpop.f32.mrf.mxu0
    %v7056 = vadd.f32 0.0, %v7055
    %7057 = vdwg.mxu0
    %v7058 = vmul.f32 %v7053, 0.125
    %v7059 = vmul.f32 %v7056, 0.125
    %s7060 = scalar_lea.vmem %s101, 288
    %v7061 = vld [vmem:[%s7060] sm:$0xff]
    %v7062 = vld [vmem:[%s7060 + $0x8] sm:$0xff]
    %v7063 = vld [vmem:[%s7060 + $0x10] sm:$0xff]
    %v7064 = vld [vmem:[%s7060 + $0x18] sm:$0xff]
    %7065 = vmatpush.msra.mxu0 0.0
    %7066 = vmatpush.msra.mxu0 0.0
    %7067 = vmatpush.msra.mxu0 0.0
    %7068 = vmatpush.msra.mxu0 0.0
    %7069 = vmatpush.msra.mxu0 0.0
    %7070 = vmatpush.msra.mxu0 0.0
    %7071 = vmatpush.msra.mxu0 0.0
    %7072 = vmatpush.msra.mxu0 0.0
    %7073 = vmatpush.msra.mxu0 0.0
    %7074 = vmatpush.msra.mxu0 0.0
    %7075 = vmatpush.msra.mxu0 0.0
    %7076 = vmatpush.msra.mxu0 0.0
    %7077 = vmatpush.msra.mxu0 %v7064
    %7078 = vmatpush.msra.mxu0 %v7063
    %7079 = vmatpush.msra.mxu0 %v7062
    %7080 = vmatpush.msra.mxu0 %v7061
    %7081 = vmatmul.f32.gmra.mxu0 %v6305
    %v7082 = vpop.f32.mrf.mxu0
    %v7083 = vadd.f32 0.0, %v7082
    %7084 = vmatmul.f32.gmra.mxu0 %v6308
    %v7085 = vpop.f32.mrf.mxu0
    %v7086 = vadd.f32 0.0, %v7085
    %7087 = vdwg.mxu0
    %s7088 = scalar_lea.vmem %s101, 480
    %v7089 = vld [vmem:[%s7088] sm:$0xff]
    %v7090 = vld [vmem:[%s7088 + $0x8] sm:$0xff]
    %v7091 = vld [vmem:[%s7088 + $0x10] sm:$0xff]
    %v7092 = vld [vmem:[%s7088 + $0x18] sm:$0xff]
    %7093 = vmatpush.msra.mxu0 0.0
    %7094 = vmatpush.msra.mxu0 0.0
    %7095 = vmatpush.msra.mxu0 0.0
    %7096 = vmatpush.msra.mxu0 0.0
    %7097 = vmatpush.msra.mxu0 0.0
    %7098 = vmatpush.msra.mxu0 0.0
    %7099 = vmatpush.msra.mxu0 0.0
    %7100 = vmatpush.msra.mxu0 0.0
    %7101 = vmatpush.msra.mxu0 0.0
    %7102 = vmatpush.msra.mxu0 0.0
    %7103 = vmatpush.msra.mxu0 0.0
    %7104 = vmatpush.msra.mxu0 0.0
    %7105 = vmatpush.msra.mxu0 %v7092
    %7106 = vmatpush.msra.mxu0 %v7091
    %7107 = vmatpush.msra.mxu0 %v7090
    %7108 = vmatpush.msra.mxu0 %v7089
    %7109 = vmatmul.f32.gmra.mxu0 %v6305
    %v7110 = vpop.f32.mrf.mxu0
    %v7111 = vadd.f32 0.0, %v7110
    %7112 = vmatmul.f32.gmra.mxu0 %v6308
    %v7113 = vpop.f32.mrf.mxu0
    %v7114 = vadd.f32 0.0, %v7113
    %7115 = vdwg.mxu0
    %v7117 = vsel %vm2210, %v7058, 0
    %v7120 = vsel %vm2210, %v7059, 0
    %v7123 = vsel %vm2210, %v7083, 0
    %v7126 = vsel %vm2210, %v7086, 0
    %7128 = vmatpush.xpose.msra.mxu0 0.0
    %7129 = vmatpush.xpose.msra.mxu0 0.0
    %7130 = vmatpush.xpose.msra.mxu0 0.0
    %7131 = vmatpush.xpose.msra.mxu0 0.0
    %7132 = vmatpush.xpose.msra.mxu0 0.0
    %7133 = vmatpush.xpose.msra.mxu0 0.0
    %7134 = vmatpush.xpose.msra.mxu0 0.0
    %7135 = vmatpush.xpose.msra.mxu0 0.0
    %7136 = vmatpush.xpose.msra.mxu0 0.0
    %7137 = vmatpush.xpose.msra.mxu0 0.0
    %7138 = vmatpush.xpose.msra.mxu0 0.0
    %7139 = vmatpush.xpose.msra.mxu0 0.0
    %7140 = vmatpush.xpose.msra.mxu0 0.0
    %7141 = vmatpush.xpose.msra.mxu0 0.0
    %7142 = vmatpush.xpose.msra.mxu0 %v7126
    %7143 = vmatpush.xpose.msra.mxu0 %v7123
    %7144 = vmatmul.f32.gmra.mxu0 %v7117
    %v7145 = vpop.f32.mrf.mxu0
    %v7146 = vadd.f32 %v318, %v7145
    %7147 = vmatmul.f32.gmra.mxu0 %v7120
    %v7148 = vpop.f32.mrf.mxu0
    %v7149 = vadd.f32 %v319, %v7148
    %7150 = vdwg.mxu0
    %v7151 = vsel %vm2681, %v7146, -inf
    %7152 = vmax.xlane.f32.xlu0 %v7151
    %v7153 = vpop.xlane.xlu0 %7152
    %v7154 = vsel %vm2685, %v7149, -inf
    %7155 = vmax.xlane.f32.xlu0 %v7154
    %v7156 = vpop.xlane.xlu0 %7155
    %v7157 = vsub.f32 %v7146, %v7153
    %v7158 = vsub.f32 %v7149, %v7156
    %v7159 = vmul.f32 %v7157, 1.442695
    %v7160 = vpow.pop %v7159
    %v7161 = vmul.f32 %v7158, 1.442695
    %v7162 = vpow.pop %v7161
    %v7163 = vsel %vm2681, %v7160, 0.0
    %7164 = vadd.xlane.f32.xlu0 %v7163
    %v7165 = vpop.xlane.xlu0 %7164
    %v7166 = vsel %vm2685, %v7162, 0.0
    %7167 = vadd.xlane.f32.xlu0 %v7166
    %v7168 = vpop.xlane.xlu0 %7167
    %v7169 = vrcp.pop %v7165
    %v7170 = vmul.f32 %v7165, %v7169
    %v7171 = vsub.f32 1.0, %v7170
    %v7172 = vmul.f32 %v7169, %v7171
    %v7173 = vadd.f32 %v7169, %v7172
    %vm7174 = vweird.f32 %v7165
    %vm7175 = vweird.f32 %v7169
    %vm7176 = vmor %vm7174, %vm7175
    %v7177 = vsel %vm7176, %v7169, %v7173
    %v7178 = vand.u32 2147483647, %v7165
    %vm7179 = vcmp.eq.f32.partialorder %v7178, 8.507059e+37
    %v7180 = vand.u32 %v7165, 2147483648
    %v7181 = vor.u32 1.1754944e-38, %v7180
    %v7182 = vsel %vm7179, %v7181, %v7177
    %v7183 = vmul.f32 %v7160, %v7182
    %v7184 = vrcp.pop %v7168
    %v7185 = vmul.f32 %v7168, %v7184
    %v7186 = vsub.f32 1.0, %v7185
    %v7187 = vmul.f32 %v7184, %v7186
    %v7188 = vadd.f32 %v7184, %v7187
    %vm7189 = vweird.f32 %v7168
    %vm7190 = vweird.f32 %v7184
    %vm7191 = vmor %vm7189, %vm7190
    %v7192 = vsel %vm7191, %v7184, %v7188
    %v7193 = vand.u32 2147483647, %v7168
    %vm7194 = vcmp.eq.f32.partialorder %v7193, 8.507059e+37
    %v7195 = vand.u32 %v7168, 2147483648
    %v7196 = vor.u32 1.1754944e-38, %v7195
    %v7197 = vsel %vm7194, %v7196, %v7192
    %v7198 = vmul.f32 %v7162, %v7197
    %v7200 = vsel %vm2681, %v7183, 0
    %v7203 = vsel %vm2681, %v7198, 0
    %v7206 = vsel %vm2737, %v7114, 0
    %7208 = vmatpush.msra.mxu0 0.0
    %7209 = vmatpush.msra.mxu0 0.0
    %7210 = vmatpush.msra.mxu0 0.0
    %7211 = vmatpush.msra.mxu0 0.0
    %7212 = vmatpush.msra.mxu0 0.0
    %7213 = vmatpush.msra.mxu0 0.0
    %7214 = vmatpush.msra.mxu0 0.0
    %7215 = vmatpush.msra.mxu0 0.0
    %7216 = vmatpush.msra.mxu0 0.0
    %7217 = vmatpush.msra.mxu0 0.0
    %7218 = vmatpush.msra.mxu0 0.0
    %7219 = vmatpush.msra.mxu0 0.0
    %7220 = vmatpush.msra.mxu0 0.0
    %7221 = vmatpush.msra.mxu0 0.0
    %7222 = vmatpush.msra.mxu0 %v7206
    %7223 = vmatpush.msra.mxu0 %v7111
    %7224 = vmatmul.f32.gmra.mxu0 %v7200
    %v7225 = vpop.f32.mrf.mxu0
    %v7226 = vadd.f32 0.0, %v7225
    %7227 = vmatmul.f32.gmra.mxu0 %v7203
    %v7228 = vpop.f32.mrf.mxu0
    %v7229 = vadd.f32 0.0, %v7228
    %7230 = vdwg.mxu0
    %s7231 = scalar_lea.vmem %s103, 192
    %v7232 = vld [vmem:[%s7231] sm:$0xff]
    %v7233 = vld [vmem:[%s7231 + $0x8] sm:$0xff]
    %v7234 = vld [vmem:[%s7231 + $0x10] sm:$0xff]
    %v7235 = vld [vmem:[%s7231 + $0x18] sm:$0xff]
    %v7236 = vld [vmem:[%s7231 + $0x20] sm:$0xff]
    %v7237 = vld [vmem:[%s7231 + $0x28] sm:$0xff]
    %v7238 = vld [vmem:[%s7231 + $0x30] sm:$0xff]
    %v7239 = vld [vmem:[%s7231 + $0x38] sm:$0xff]
    %v7241 = vsel %vm2210, %v7226, 0
    %v7244 = vsel %vm2210, %v7229, 0
    %7246 = vmatpush.msra.mxu0 0.0
    %7247 = vmatpush.msra.mxu0 0.0
    %7248 = vmatpush.msra.mxu0 0.0
    %7249 = vmatpush.msra.mxu0 0.0
    %7250 = vmatpush.msra.mxu0 0.0
    %7251 = vmatpush.msra.mxu0 0.0
    %7252 = vmatpush.msra.mxu0 0.0
    %7253 = vmatpush.msra.mxu0 0.0
    %7254 = vmatpush.msra.mxu0 %v7239
    %7255 = vmatpush.msra.mxu0 %v7238
    %7256 = vmatpush.msra.mxu0 %v7237
    %7257 = vmatpush.msra.mxu0 %v7236
    %7258 = vmatpush.msra.mxu0 %v7235
    %7259 = vmatpush.msra.mxu0 %v7234
    %7260 = vmatpush.msra.mxu0 %v7233
    %7261 = vmatpush.msra.mxu0 %v7232
    %7262 = vmatmul.f32.gmra.mxu0 %v7241
    %v7263 = vpop.f32.mrf.mxu0
    %v7264 = vadd.f32 0.0, %v7263
    %7265 = vmatmul.f32.gmra.mxu0 %v7244
    %v7266 = vpop.f32.mrf.mxu0
    %v7267 = vadd.f32 0.0, %v7266
    %7268 = vdwg.mxu0
    %v7269 = vadd.f32 %v7028, %v7264
    %v7270 = vadd.f32 %v7029, %v7267
    %s7271 = scalar_lea.vmem %s101, 128
    %v7272 = vld [vmem:[%s7271] sm:$0xff]
    %v7273 = vld [vmem:[%s7271 + $0x8] sm:$0xff]
    %v7274 = vld [vmem:[%s7271 + $0x10] sm:$0xff]
    %v7275 = vld [vmem:[%s7271 + $0x18] sm:$0xff]
    %7276 = vmatpush.msra.mxu0 0.0
    %7277 = vmatpush.msra.mxu0 0.0
    %7278 = vmatpush.msra.mxu0 0.0
    %7279 = vmatpush.msra.mxu0 0.0
    %7280 = vmatpush.msra.mxu0 0.0
    %7281 = vmatpush.msra.mxu0 0.0
    %7282 = vmatpush.msra.mxu0 0.0
    %7283 = vmatpush.msra.mxu0 0.0
    %7284 = vmatpush.msra.mxu0 0.0
    %7285 = vmatpush.msra.mxu0 0.0
    %7286 = vmatpush.msra.mxu0 0.0
    %7287 = vmatpush.msra.mxu0 0.0
    %7288 = vmatpush.msra.mxu0 %v7275
    %7289 = vmatpush.msra.mxu0 %v7274
    %7290 = vmatpush.msra.mxu0 %v7273
    %7291 = vmatpush.msra.mxu0 %v7272
    %7292 = vmatmul.f32.gmra.mxu0 %v6305
    %v7293 = vpop.f32.mrf.mxu0
    %v7294 = vadd.f32 0.0, %v7293
    %7295 = vmatmul.f32.gmra.mxu0 %v6308
    %v7296 = vpop.f32.mrf.mxu0
    %v7297 = vadd.f32 0.0, %v7296
    %7298 = vdwg.mxu0
    %v7299 = vmul.f32 %v7294, 0.125
    %v7300 = vmul.f32 %v7297, 0.125
    %s7301 = scalar_lea.vmem %s101, 320
    %v7302 = vld [vmem:[%s7301] sm:$0xff]
    %v7303 = vld [vmem:[%s7301 + $0x8] sm:$0xff]
    %v7304 = vld [vmem:[%s7301 + $0x10] sm:$0xff]
    %v7305 = vld [vmem:[%s7301 + $0x18] sm:$0xff]
    %7306 = vmatpush.msra.mxu0 0.0
    %7307 = vmatpush.msra.mxu0 0.0
    %7308 = vmatpush.msra.mxu0 0.0
    %7309 = vmatpush.msra.mxu0 0.0
    %7310 = vmatpush.msra.mxu0 0.0
    %7311 = vmatpush.msra.mxu0 0.0
    %7312 = vmatpush.msra.mxu0 0.0
    %7313 = vmatpush.msra.mxu0 0.0
    %7314 = vmatpush.msra.mxu0 0.0
    %7315 = vmatpush.msra.mxu0 0.0
    %7316 = vmatpush.msra.mxu0 0.0
    %7317 = vmatpush.msra.mxu0 0.0
    %7318 = vmatpush.msra.mxu0 %v7305
    %7319 = vmatpush.msra.mxu0 %v7304
    %7320 = vmatpush.msra.mxu0 %v7303
    %7321 = vmatpush.msra.mxu0 %v7302
    %7322 = vmatmul.f32.gmra.mxu0 %v6305
    %v7323 = vpop.f32.mrf.mxu0
    %v7324 = vadd.f32 0.0, %v7323
    %7325 = vmatmul.f32.gmra.mxu0 %v6308
    %v7326 = vpop.f32.mrf.mxu0
    %v7327 = vadd.f32 0.0, %v7326
    %7328 = vdwg.mxu0
    %s7329 = scalar_lea.vmem %s101, 512
    %v7330 = vld [vmem:[%s7329] sm:$0xff]
    %v7331 = vld [vmem:[%s7329 + $0x8] sm:$0xff]
    %v7332 = vld [vmem:[%s7329 + $0x10] sm:$0xff]
    %v7333 = vld [vmem:[%s7329 + $0x18] sm:$0xff]
    %7334 = vmatpush.msra.mxu0 0.0
    %7335 = vmatpush.msra.mxu0 0.0
    %7336 = vmatpush.msra.mxu0 0.0
    %7337 = vmatpush.msra.mxu0 0.0
    %7338 = vmatpush.msra.mxu0 0.0
    %7339 = vmatpush.msra.mxu0 0.0
    %7340 = vmatpush.msra.mxu0 0.0
    %7341 = vmatpush.msra.mxu0 0.0
    %7342 = vmatpush.msra.mxu0 0.0
    %7343 = vmatpush.msra.mxu0 0.0
    %7344 = vmatpush.msra.mxu0 0.0
    %7345 = vmatpush.msra.mxu0 0.0
    %7346 = vmatpush.msra.mxu0 %v7333
    %7347 = vmatpush.msra.mxu0 %v7332
    %7348 = vmatpush.msra.mxu0 %v7331
    %7349 = vmatpush.msra.mxu0 %v7330
    %7350 = vmatmul.f32.gmra.mxu0 %v6305
    %v7351 = vpop.f32.mrf.mxu0
    %v7352 = vadd.f32 0.0, %v7351
    %7353 = vmatmul.f32.gmra.mxu0 %v6308
    %v7354 = vpop.f32.mrf.mxu0
    %v7355 = vadd.f32 0.0, %v7354
    %7356 = vdwg.mxu0
    %v7358 = vsel %vm2210, %v7299, 0
    %v7361 = vsel %vm2210, %v7300, 0
    %v7364 = vsel %vm2210, %v7324, 0
    %v7367 = vsel %vm2210, %v7327, 0
    %7369 = vmatpush.xpose.msra.mxu0 0.0
    %7370 = vmatpush.xpose.msra.mxu0 0.0
    %7371 = vmatpush.xpose.msra.mxu0 0.0
    %7372 = vmatpush.xpose.msra.mxu0 0.0
    %7373 = vmatpush.xpose.msra.mxu0 0.0
    %7374 = vmatpush.xpose.msra.mxu0 0.0
    %7375 = vmatpush.xpose.msra.mxu0 0.0
    %7376 = vmatpush.xpose.msra.mxu0 0.0
    %7377 = vmatpush.xpose.msra.mxu0 0.0
    %7378 = vmatpush.xpose.msra.mxu0 0.0
    %7379 = vmatpush.xpose.msra.mxu0 0.0
    %7380 = vmatpush.xpose.msra.mxu0 0.0
    %7381 = vmatpush.xpose.msra.mxu0 0.0
    %7382 = vmatpush.xpose.msra.mxu0 0.0
    %7383 = vmatpush.xpose.msra.mxu0 %v7367
    %7384 = vmatpush.xpose.msra.mxu0 %v7364
    %7385 = vmatmul.f32.gmra.mxu0 %v7358
    %v7386 = vpop.f32.mrf.mxu0
    %v7387 = vadd.f32 %v318, %v7386
    %7388 = vmatmul.f32.gmra.mxu0 %v7361
    %v7389 = vpop.f32.mrf.mxu0
    %v7390 = vadd.f32 %v319, %v7389
    %7391 = vdwg.mxu0
    %v7392 = vsel %vm2681, %v7387, -inf
    %7393 = vmax.xlane.f32.xlu0 %v7392
    %v7394 = vpop.xlane.xlu0 %7393
    %v7395 = vsel %vm2685, %v7390, -inf
    %7396 = vmax.xlane.f32.xlu0 %v7395
    %v7397 = vpop.xlane.xlu0 %7396
    %v7398 = vsub.f32 %v7387, %v7394
    %v7399 = vsub.f32 %v7390, %v7397
    %v7400 = vmul.f32 %v7398, 1.442695
    %v7401 = vpow.pop %v7400
    %v7402 = vmul.f32 %v7399, 1.442695
    %v7403 = vpow.pop %v7402
    %v7404 = vsel %vm2681, %v7401, 0.0
    %7405 = vadd.xlane.f32.xlu0 %v7404
    %v7406 = vpop.xlane.xlu0 %7405
    %v7407 = vsel %vm2685, %v7403, 0.0
    %7408 = vadd.xlane.f32.xlu0 %v7407
    %v7409 = vpop.xlane.xlu0 %7408
    %v7410 = vrcp.pop %v7406
    %v7411 = vmul.f32 %v7406, %v7410
    %v7412 = vsub.f32 1.0, %v7411
    %v7413 = vmul.f32 %v7410, %v7412
    %v7414 = vadd.f32 %v7410, %v7413
    %vm7415 = vweird.f32 %v7406
    %vm7416 = vweird.f32 %v7410
    %vm7417 = vmor %vm7415, %vm7416
    %v7418 = vsel %vm7417, %v7410, %v7414
    %v7419 = vand.u32 2147483647, %v7406
    %vm7420 = vcmp.eq.f32.partialorder %v7419, 8.507059e+37
    %v7421 = vand.u32 %v7406, 2147483648
    %v7422 = vor.u32 1.1754944e-38, %v7421
    %v7423 = vsel %vm7420, %v7422, %v7418
    %v7424 = vmul.f32 %v7401, %v7423
    %v7425 = vrcp.pop %v7409
    %v7426 = vmul.f32 %v7409, %v7425
    %v7427 = vsub.f32 1.0, %v7426
    %v7428 = vmul.f32 %v7425, %v7427
    %v7429 = vadd.f32 %v7425, %v7428
    %vm7430 = vweird.f32 %v7409
    %vm7431 = vweird.f32 %v7425
    %vm7432 = vmor %vm7430, %vm7431
    %v7433 = vsel %vm7432, %v7425, %v7429
    %v7434 = vand.u32 2147483647, %v7409
    %vm7435 = vcmp.eq.f32.partialorder %v7434, 8.507059e+37
    %v7436 = vand.u32 %v7409, 2147483648
    %v7437 = vor.u32 1.1754944e-38, %v7436
    %v7438 = vsel %vm7435, %v7437, %v7433
    %v7439 = vmul.f32 %v7403, %v7438
    %v7441 = vsel %vm2681, %v7424, 0
    %v7444 = vsel %vm2681, %v7439, 0
    %v7447 = vsel %vm2737, %v7355, 0
    %7449 = vmatpush.msra.mxu0 0.0
    %7450 = vmatpush.msra.mxu0 0.0
    %7451 = vmatpush.msra.mxu0 0.0
    %7452 = vmatpush.msra.mxu0 0.0
    %7453 = vmatpush.msra.mxu0 0.0
    %7454 = vmatpush.msra.mxu0 0.0
    %7455 = vmatpush.msra.mxu0 0.0
    %7456 = vmatpush.msra.mxu0 0.0
    %7457 = vmatpush.msra.mxu0 0.0
    %7458 = vmatpush.msra.mxu0 0.0
    %7459 = vmatpush.msra.mxu0 0.0
    %7460 = vmatpush.msra.mxu0 0.0
    %7461 = vmatpush.msra.mxu0 0.0
    %7462 = vmatpush.msra.mxu0 0.0
    %7463 = vmatpush.msra.mxu0 %v7447
    %7464 = vmatpush.msra.mxu0 %v7352
    %7465 = vmatmul.f32.gmra.mxu0 %v7441
    %v7466 = vpop.f32.mrf.mxu0
    %v7467 = vadd.f32 0.0, %v7466
    %7468 = vmatmul.f32.gmra.mxu0 %v7444
    %v7469 = vpop.f32.mrf.mxu0
    %v7470 = vadd.f32 0.0, %v7469
    %7471 = vdwg.mxu0
    %s7472 = scalar_lea.vmem %s103, 256
    %v7473 = vld [vmem:[%s7472] sm:$0xff]
    %v7474 = vld [vmem:[%s7472 + $0x8] sm:$0xff]
    %v7475 = vld [vmem:[%s7472 + $0x10] sm:$0xff]
    %v7476 = vld [vmem:[%s7472 + $0x18] sm:$0xff]
    %v7477 = vld [vmem:[%s7472 + $0x20] sm:$0xff]
    %v7478 = vld [vmem:[%s7472 + $0x28] sm:$0xff]
    %v7479 = vld [vmem:[%s7472 + $0x30] sm:$0xff]
    %v7480 = vld [vmem:[%s7472 + $0x38] sm:$0xff]
    %v7482 = vsel %vm2210, %v7467, 0
    %v7485 = vsel %vm2210, %v7470, 0
    %7487 = vmatpush.msra.mxu0 0.0
    %7488 = vmatpush.msra.mxu0 0.0
    %7489 = vmatpush.msra.mxu0 0.0
    %7490 = vmatpush.msra.mxu0 0.0
    %7491 = vmatpush.msra.mxu0 0.0
    %7492 = vmatpush.msra.mxu0 0.0
    %7493 = vmatpush.msra.mxu0 0.0
    %7494 = vmatpush.msra.mxu0 0.0
    %7495 = vmatpush.msra.mxu0 %v7480
    %7496 = vmatpush.msra.mxu0 %v7479
    %7497 = vmatpush.msra.mxu0 %v7478
    %7498 = vmatpush.msra.mxu0 %v7477
    %7499 = vmatpush.msra.mxu0 %v7476
    %7500 = vmatpush.msra.mxu0 %v7475
    %7501 = vmatpush.msra.mxu0 %v7474
    %7502 = vmatpush.msra.mxu0 %v7473
    %7503 = vmatmul.f32.gmra.mxu0 %v7482
    %v7504 = vpop.f32.mrf.mxu0
    %v7505 = vadd.f32 0.0, %v7504
    %7506 = vmatmul.f32.gmra.mxu0 %v7485
    %v7507 = vpop.f32.mrf.mxu0
    %v7508 = vadd.f32 0.0, %v7507
    %7509 = vdwg.mxu0
    %v7510 = vadd.f32 %v7269, %v7505
    %v7511 = vadd.f32 %v7270, %v7508
    %s7512 = scalar_lea.vmem %s101, 160
    %v7513 = vld [vmem:[%s7512] sm:$0xff]
    %v7514 = vld [vmem:[%s7512 + $0x8] sm:$0xff]
    %v7515 = vld [vmem:[%s7512 + $0x10] sm:$0xff]
    %v7516 = vld [vmem:[%s7512 + $0x18] sm:$0xff]
    %7517 = vmatpush.msra.mxu0 0.0
    %7518 = vmatpush.msra.mxu0 0.0
    %7519 = vmatpush.msra.mxu0 0.0
    %7520 = vmatpush.msra.mxu0 0.0
    %7521 = vmatpush.msra.mxu0 0.0
    %7522 = vmatpush.msra.mxu0 0.0
    %7523 = vmatpush.msra.mxu0 0.0
    %7524 = vmatpush.msra.mxu0 0.0
    %7525 = vmatpush.msra.mxu0 0.0
    %7526 = vmatpush.msra.mxu0 0.0
    %7527 = vmatpush.msra.mxu0 0.0
    %7528 = vmatpush.msra.mxu0 0.0
    %7529 = vmatpush.msra.mxu0 %v7516
    %7530 = vmatpush.msra.mxu0 %v7515
    %7531 = vmatpush.msra.mxu0 %v7514
    %7532 = vmatpush.msra.mxu0 %v7513
    %7533 = vmatmul.f32.gmra.mxu0 %v6305
    %v7534 = vpop.f32.mrf.mxu0
    %v7535 = vadd.f32 0.0, %v7534
    %7536 = vmatmul.f32.gmra.mxu0 %v6308
    %v7537 = vpop.f32.mrf.mxu0
    %v7538 = vadd.f32 0.0, %v7537
    %7539 = vdwg.mxu0
    %v7540 = vmul.f32 %v7535, 0.125
    %v7541 = vmul.f32 %v7538, 0.125
    %s7542 = scalar_lea.vmem %s101, 352
    %v7543 = vld [vmem:[%s7542] sm:$0xff]
    %v7544 = vld [vmem:[%s7542 + $0x8] sm:$0xff]
    %v7545 = vld [vmem:[%s7542 + $0x10] sm:$0xff]
    %v7546 = vld [vmem:[%s7542 + $0x18] sm:$0xff]
    %7547 = vmatpush.msra.mxu0 0.0
    %7548 = vmatpush.msra.mxu0 0.0
    %7549 = vmatpush.msra.mxu0 0.0
    %7550 = vmatpush.msra.mxu0 0.0
    %7551 = vmatpush.msra.mxu0 0.0
    %7552 = vmatpush.msra.mxu0 0.0
    %7553 = vmatpush.msra.mxu0 0.0
    %7554 = vmatpush.msra.mxu0 0.0
    %7555 = vmatpush.msra.mxu0 0.0
    %7556 = vmatpush.msra.mxu0 0.0
    %7557 = vmatpush.msra.mxu0 0.0
    %7558 = vmatpush.msra.mxu0 0.0
    %7559 = vmatpush.msra.mxu0 %v7546
    %7560 = vmatpush.msra.mxu0 %v7545
    %7561 = vmatpush.msra.mxu0 %v7544
    %7562 = vmatpush.msra.mxu0 %v7543
    %7563 = vmatmul.f32.gmra.mxu0 %v6305
    %v7564 = vpop.f32.mrf.mxu0
    %v7565 = vadd.f32 0.0, %v7564
    %7566 = vmatmul.f32.gmra.mxu0 %v6308
    %v7567 = vpop.f32.mrf.mxu0
    %v7568 = vadd.f32 0.0, %v7567
    %7569 = vdwg.mxu0
    %s7570 = scalar_lea.vmem %s101, 544
    %v7571 = vld [vmem:[%s7570] sm:$0xff]
    %v7572 = vld [vmem:[%s7570 + $0x8] sm:$0xff]
    %v7573 = vld [vmem:[%s7570 + $0x10] sm:$0xff]
    %v7574 = vld [vmem:[%s7570 + $0x18] sm:$0xff]
    %7575 = vmatpush.msra.mxu0 0.0
    %7576 = vmatpush.msra.mxu0 0.0
    %7577 = vmatpush.msra.mxu0 0.0
    %7578 = vmatpush.msra.mxu0 0.0
    %7579 = vmatpush.msra.mxu0 0.0
    %7580 = vmatpush.msra.mxu0 0.0
    %7581 = vmatpush.msra.mxu0 0.0
    %7582 = vmatpush.msra.mxu0 0.0
    %7583 = vmatpush.msra.mxu0 0.0
    %7584 = vmatpush.msra.mxu0 0.0
    %7585 = vmatpush.msra.mxu0 0.0
    %7586 = vmatpush.msra.mxu0 0.0
    %7587 = vmatpush.msra.mxu0 %v7574
    %7588 = vmatpush.msra.mxu0 %v7573
    %7589 = vmatpush.msra.mxu0 %v7572
    %7590 = vmatpush.msra.mxu0 %v7571
    %7591 = vmatmul.f32.gmra.mxu0 %v6305
    %v7592 = vpop.f32.mrf.mxu0
    %v7593 = vadd.f32 0.0, %v7592
    %7594 = vmatmul.f32.gmra.mxu0 %v6308
    %v7595 = vpop.f32.mrf.mxu0
    %v7596 = vadd.f32 0.0, %v7595
    %7597 = vdwg.mxu0
    %v7599 = vsel %vm2210, %v7540, 0
    %v7602 = vsel %vm2210, %v7541, 0
    %v7605 = vsel %vm2210, %v7565, 0
    %v7608 = vsel %vm2210, %v7568, 0
    %7610 = vmatpush.xpose.msra.mxu0 0.0
    %7611 = vmatpush.xpose.msra.mxu0 0.0
    %7612 = vmatpush.xpose.msra.mxu0 0.0
    %7613 = vmatpush.xpose.msra.mxu0 0.0
    %7614 = vmatpush.xpose.msra.mxu0 0.0
    %7615 = vmatpush.xpose.msra.mxu0 0.0
    %7616 = vmatpush.xpose.msra.mxu0 0.0
    %7617 = vmatpush.xpose.msra.mxu0 0.0
    %7618 = vmatpush.xpose.msra.mxu0 0.0
    %7619 = vmatpush.xpose.msra.mxu0 0.0
    %7620 = vmatpush.xpose.msra.mxu0 0.0
    %7621 = vmatpush.xpose.msra.mxu0 0.0
    %7622 = vmatpush.xpose.msra.mxu0 0.0
    %7623 = vmatpush.xpose.msra.mxu0 0.0
    %7624 = vmatpush.xpose.msra.mxu0 %v7608
    %7625 = vmatpush.xpose.msra.mxu0 %v7605
    %7626 = vmatmul.f32.gmra.mxu0 %v7599
    %v7627 = vpop.f32.mrf.mxu0
    %v7628 = vadd.f32 %v318, %v7627
    %7629 = vmatmul.f32.gmra.mxu0 %v7602
    %v7630 = vpop.f32.mrf.mxu0
    %v7631 = vadd.f32 %v319, %v7630
    %7632 = vdwg.mxu0
    %v7633 = vsel %vm2681, %v7628, -inf
    %7634 = vmax.xlane.f32.xlu0 %v7633
    %v7635 = vpop.xlane.xlu0 %7634
    %v7636 = vsel %vm2685, %v7631, -inf
    %7637 = vmax.xlane.f32.xlu0 %v7636
    %v7638 = vpop.xlane.xlu0 %7637
    %v7639 = vsub.f32 %v7628, %v7635
    %v7640 = vsub.f32 %v7631, %v7638
    %v7641 = vmul.f32 %v7639, 1.442695
    %v7642 = vpow.pop %v7641
    %v7643 = vmul.f32 %v7640, 1.442695
    %v7644 = vpow.pop %v7643
    %v7645 = vsel %vm2681, %v7642, 0.0
    %7646 = vadd.xlane.f32.xlu0 %v7645
    %v7647 = vpop.xlane.xlu0 %7646
    %v7648 = vsel %vm2685, %v7644, 0.0
    %7649 = vadd.xlane.f32.xlu0 %v7648
    %v7650 = vpop.xlane.xlu0 %7649
    %v7651 = vrcp.pop %v7647
    %v7652 = vmul.f32 %v7647, %v7651
    %v7653 = vsub.f32 1.0, %v7652
    %v7654 = vmul.f32 %v7651, %v7653
    %v7655 = vadd.f32 %v7651, %v7654
    %vm7656 = vweird.f32 %v7647
    %vm7657 = vweird.f32 %v7651
    %vm7658 = vmor %vm7656, %vm7657
    %v7659 = vsel %vm7658, %v7651, %v7655
    %v7660 = vand.u32 2147483647, %v7647
    %vm7661 = vcmp.eq.f32.partialorder %v7660, 8.507059e+37
    %v7662 = vand.u32 %v7647, 2147483648
    %v7663 = vor.u32 1.1754944e-38, %v7662
    %v7664 = vsel %vm7661, %v7663, %v7659
    %v7665 = vmul.f32 %v7642, %v7664
    %v7666 = vrcp.pop %v7650
    %v7667 = vmul.f32 %v7650, %v7666
    %v7668 = vsub.f32 1.0, %v7667
    %v7669 = vmul.f32 %v7666, %v7668
    %v7670 = vadd.f32 %v7666, %v7669
    %vm7671 = vweird.f32 %v7650
    %vm7672 = vweird.f32 %v7666
    %vm7673 = vmor %vm7671, %vm7672
    %v7674 = vsel %vm7673, %v7666, %v7670
    %v7675 = vand.u32 2147483647, %v7650
    %vm7676 = vcmp.eq.f32.partialorder %v7675, 8.507059e+37
    %v7677 = vand.u32 %v7650, 2147483648
    %v7678 = vor.u32 1.1754944e-38, %v7677
    %v7679 = vsel %vm7676, %v7678, %v7674
    %v7680 = vmul.f32 %v7644, %v7679
    %v7682 = vsel %vm2681, %v7665, 0
    %v7685 = vsel %vm2681, %v7680, 0
    %v7688 = vsel %vm2737, %v7596, 0
    %7690 = vmatpush.msra.mxu0 0.0
    %7691 = vmatpush.msra.mxu0 0.0
    %7692 = vmatpush.msra.mxu0 0.0
    %7693 = vmatpush.msra.mxu0 0.0
    %7694 = vmatpush.msra.mxu0 0.0
    %7695 = vmatpush.msra.mxu0 0.0
    %7696 = vmatpush.msra.mxu0 0.0
    %7697 = vmatpush.msra.mxu0 0.0
    %7698 = vmatpush.msra.mxu0 0.0
    %7699 = vmatpush.msra.mxu0 0.0
    %7700 = vmatpush.msra.mxu0 0.0
    %7701 = vmatpush.msra.mxu0 0.0
    %7702 = vmatpush.msra.mxu0 0.0
    %7703 = vmatpush.msra.mxu0 0.0
    %7704 = vmatpush.msra.mxu0 %v7688
    %7705 = vmatpush.msra.mxu0 %v7593
    %7706 = vmatmul.f32.gmra.mxu0 %v7682
    %v7707 = vpop.f32.mrf.mxu0
    %v7708 = vadd.f32 0.0, %v7707
    %7709 = vmatmul.f32.gmra.mxu0 %v7685
    %v7710 = vpop.f32.mrf.mxu0
    %v7711 = vadd.f32 0.0, %v7710
    %7712 = vdwg.mxu0
    %s7713 = scalar_lea.vmem %s103, 320
    %v7714 = vld [vmem:[%s7713] sm:$0xff]
    %v7715 = vld [vmem:[%s7713 + $0x8] sm:$0xff]
    %v7716 = vld [vmem:[%s7713 + $0x10] sm:$0xff]
    %v7717 = vld [vmem:[%s7713 + $0x18] sm:$0xff]
    %v7718 = vld [vmem:[%s7713 + $0x20] sm:$0xff]
    %v7719 = vld [vmem:[%s7713 + $0x28] sm:$0xff]
    %v7720 = vld [vmem:[%s7713 + $0x30] sm:$0xff]
    %v7721 = vld [vmem:[%s7713 + $0x38] sm:$0xff]
    %v7723 = vsel %vm2210, %v7708, 0
    %v7726 = vsel %vm2210, %v7711, 0
    %7728 = vmatpush.msra.mxu0 0.0
    %7729 = vmatpush.msra.mxu0 0.0
    %7730 = vmatpush.msra.mxu0 0.0
    %7731 = vmatpush.msra.mxu0 0.0
    %7732 = vmatpush.msra.mxu0 0.0
    %7733 = vmatpush.msra.mxu0 0.0
    %7734 = vmatpush.msra.mxu0 0.0
    %7735 = vmatpush.msra.mxu0 0.0
    %7736 = vmatpush.msra.mxu0 %v7721
    %7737 = vmatpush.msra.mxu0 %v7720
    %7738 = vmatpush.msra.mxu0 %v7719
    %7739 = vmatpush.msra.mxu0 %v7718
    %7740 = vmatpush.msra.mxu0 %v7717
    %7741 = vmatpush.msra.mxu0 %v7716
    %7742 = vmatpush.msra.mxu0 %v7715
    %7743 = vmatpush.msra.mxu0 %v7714
    %7744 = vmatmul.f32.gmra.mxu0 %v7723
    %v7745 = vpop.f32.mrf.mxu0
    %v7746 = vadd.f32 0.0, %v7745
    %7747 = vmatmul.f32.gmra.mxu0 %v7726
    %v7748 = vpop.f32.mrf.mxu0
    %v7749 = vadd.f32 0.0, %v7748
    %7750 = vdwg.mxu0
    %v7751 = vadd.f32 %v7510, %v7746
    %v7752 = vadd.f32 %v7511, %v7749
    %v7753 = vadd.f32 %v6241, %v7751
    %v7754 = vadd.f32 %v6242, %v7752
    %v7755 = vld [vmem:[%s107] sm:$0x1]
    %v7756 = vld [vmem:[%s109] sm:$0x1]
    %v7757 = vld [vmem:[%s111] sm:$0xff]
    %v7758 = vld [vmem:[%s111 + $0x8] sm:$0xff]
    %v7759 = vld [vmem:[%s111 + $0x10] sm:$0xff]
    %v7760 = vld [vmem:[%s111 + $0x18] sm:$0xff]
    %v7761 = vld [vmem:[%s113] sm:$0x1]
    %v7762 = vld [vmem:[%s115] sm:$0xff]
    %v7763 = vld [vmem:[%s115 + $0x8] sm:$0xff]
    %v7764 = vld [vmem:[%s115 + $0x10] sm:$0xff]
    %v7765 = vld [vmem:[%s115 + $0x18] sm:$0xff]
    %v7766 = vld [vmem:[%s115 + $0x20] sm:$0xff]
    %v7767 = vld [vmem:[%s115 + $0x28] sm:$0xff]
    %v7768 = vld [vmem:[%s115 + $0x30] sm:$0xff]
    %v7769 = vld [vmem:[%s115 + $0x38] sm:$0xff]
    %v7770 = vld [vmem:[%s115 + $0x40] sm:$0xff]
    %v7771 = vld [vmem:[%s115 + $0x48] sm:$0xff]
    %v7772 = vld [vmem:[%s115 + $0x50] sm:$0xff]
    %v7773 = vld [vmem:[%s115 + $0x58] sm:$0xff]
    %v7774 = vld [vmem:[%s115 + $0x60] sm:$0xff]
    %v7775 = vld [vmem:[%s115 + $0x68] sm:$0xff]
    %v7776 = vld [vmem:[%s115 + $0x70] sm:$0xff]
    %v7777 = vld [vmem:[%s115 + $0x78] sm:$0xff]
    %v7778 = vld [vmem:[#allocation2] sm:$0x1]
    %v7779 = vsel %vm664, %v7753, 0.0
    %7780 = vadd.xlane.f32.xlu0 %v7779
    %v7781 = vpop.xlane.xlu0 %7780
    %v7782 = vsel %vm2496, %v7754, 0.0
    %7783 = vadd.xlane.f32.xlu0 %v7782
    %v7784 = vpop.xlane.xlu0 %7783
    %v7785 = vmul.f32 %v7781, %v2506
    %v7786 = vmul.f32 %v7784, %v2506
    %v7787 = vsub.f32 %v7753, %v7785
    %v7788 = vsub.f32 %v7754, %v7786
    %v7789 = vmul.f32 %v7787, %v7787
    %v7790 = vmul.f32 %v7788, %v7788
    %v7791 = vsel %vm664, %v7789, 0.0
    %7792 = vadd.xlane.f32.xlu0 %v7791
    %v7793 = vpop.xlane.xlu0 %7792
    %v7794 = vsel %vm2496, %v7790, 0.0
    %7795 = vadd.xlane.f32.xlu0 %v7794
    %v7796 = vpop.xlane.xlu0 %7795
    %v7797 = vmul.f32 %v7793, %v2506
    %v7798 = vmul.f32 %v7796, %v2506
    %v7799 = vadd.f32 %v7797, 1e-05
    %v7800 = vadd.f32 %v7798, 1e-05
    %v7801 = vrsqrt.pop %v7799
    %v7802 = vmul.f32 %v7801, %v7799
    %v7803 = vmul.f32 %v7802, %v7801
    %v7804 = vmul.f32 0.5, %v7803
    %v7805 = vsub.f32 1.5, %v7804
    %v7806 = vmul.f32 %v7801, %v7805
    %vm7807 = vweird.f32 %v7799
    %vm7808 = vweird.f32 %v7801
    %vm7809 = vmor %vm7807, %vm7808
    %v7810 = vsel %vm7809, %v7801, %v7806
    %v7811 = vrsqrt.pop %v7800
    %v7812 = vmul.f32 %v7811, %v7800
    %v7813 = vmul.f32 %v7812, %v7811
    %v7814 = vmul.f32 0.5, %v7813
    %v7815 = vsub.f32 1.5, %v7814
    %v7816 = vmul.f32 %v7811, %v7815
    %vm7817 = vweird.f32 %v7800
    %vm7818 = vweird.f32 %v7811
    %vm7819 = vmor %vm7817, %vm7818
    %v7820 = vsel %vm7819, %v7811, %v7816
    %v7821 = vmul.f32 %v7787, %v7810
    %v7822 = vmul.f32 %v7788, %v7820
    %v7824 = vperm.slane %v7755, 0
    %v7826 = vmul.f32 %v7821, %v7824
    %v7827 = vmul.f32 %v7822, %v7824
    %v7829 = vperm.slane %v7756, 0
    %v7831 = vadd.f32 %v7826, %v7829
    %v7832 = vadd.f32 %v7827, %v7829
    %v7834 = vperm.slane %v7761, 0
    %v7837 = vsel %vm664, %v7831, 0
    %v7840 = vsel %vm664, %v7832, 0
    %7842 = vmatpush.msra.mxu0 0.0
    %7843 = vmatpush.msra.mxu0 0.0
    %7844 = vmatpush.msra.mxu0 0.0
    %7845 = vmatpush.msra.mxu0 0.0
    %7846 = vmatpush.msra.mxu0 0.0
    %7847 = vmatpush.msra.mxu0 0.0
    %7848 = vmatpush.msra.mxu0 0.0
    %7849 = vmatpush.msra.mxu0 0.0
    %7850 = vmatpush.msra.mxu0 0.0
    %7851 = vmatpush.msra.mxu0 0.0
    %7852 = vmatpush.msra.mxu0 0.0
    %7853 = vmatpush.msra.mxu0 0.0
    %7854 = vmatpush.msra.mxu0 %v7760
    %7855 = vmatpush.msra.mxu0 %v7759
    %7856 = vmatpush.msra.mxu0 %v7758
    %7857 = vmatpush.msra.mxu0 %v7757
    %7858 = vmatmul.f32.gmra.mxu0 %v7837
    %v7859 = vpop.f32.mrf.mxu0
    %v7860 = vadd.f32 %v7834, %v7859
    %7861 = vmatmul.f32.gmra.mxu0 %v7840
    %v7862 = vpop.f32.mrf.mxu0
    %v7863 = vadd.f32 %v7834, %v7862
    %7864 = vdwg.mxu0
    %v7865 = vmul.f32 %v7860, 0.5
    %v7866 = vmul.f32 %v7863, 0.5
    %v7867 = vmul.f32 %v7860, 0.70710677
    %v7868 = vmul.f32 %v7863, 0.70710677
    %v7869 = vmul.f32 %v7867, %v7867
    %v7870 = vmin.f32 16.0, %v7869
    %v7871 = vmul.f32 %v7870, 2.1237322e-06
    %v7872 = vadd.f32 %v7871, 0.00028619796
    %v7873 = vmul.f32 %v7870, %v7872
    %v7874 = vadd.f32 %v7873, 0.0036580483
    %v7875 = vmul.f32 %v7870, %v7874
    %v7876 = vadd.f32 %v7875, 0.05243302
    %v7877 = vmul.f32 %v7870, %v7876
    %v7878 = vadd.f32 %v7877, 0.18741608
    %v7879 = vmul.f32 %v7870, %v7878
    %v7880 = vadd.f32 %v7879, 1.1283791
    %v7881 = vmul.f32 %v7867, %v7880
    %v7882 = vmul.f32 %v7870, 3.8918573e-05
    %v7883 = vadd.f32 %v7882, 0.001143296
    %v7884 = vmul.f32 %v7870, %v7883
    %v7885 = vadd.f32 %v7884, 0.014752088
    %v7886 = vmul.f32 %v7870, %v7885
    %v7887 = vadd.f32 %v7886, 0.112945676
    %v7888 = vmul.f32 %v7870, %v7887
    %v7889 = vadd.f32 %v7888, 0.4994258
    %v7890 = vmul.f32 %v7870, %v7889
    %v7891 = vadd.f32 %v7890, 1.0
    %v7892 = vrcp.pop %v7891
    %v7893 = vmul.f32 %v7891, %v7892
    %v7894 = vsub.f32 1.0, %v7893
    %v7895 = vmul.f32 %v7892, %v7894
    %v7896 = vadd.f32 %v7892, %v7895
    %vm7897 = vweird.f32 %v7891
    %vm7898 = vweird.f32 %v7892
    %vm7899 = vmor %vm7897, %vm7898
    %v7900 = vsel %vm7899, %v7892, %v7896
    %v7901 = vand.u32 2147483647, %v7891
    %vm7902 = vcmp.eq.f32.partialorder %v7901, 8.507059e+37
    %v7903 = vand.u32 %v7891, 2147483648
    %v7904 = vor.u32 1.1754944e-38, %v7903
    %v7905 = vsel %vm7902, %v7904, %v7900
    %v7906 = vmul.f32 %v7881, %v7905
    %v7907 = vmin.f32 %v7906, 1.0
    %v7908 = vmax.f32 %v7907, -1.0
    %v7909 = vmul.f32 %v7868, %v7868
    %v7910 = vmin.f32 16.0, %v7909
    %v7911 = vmul.f32 %v7910, 2.1237322e-06
    %v7912 = vadd.f32 %v7911, 0.00028619796
    %v7913 = vmul.f32 %v7910, %v7912
    %v7914 = vadd.f32 %v7913, 0.0036580483
    %v7915 = vmul.f32 %v7910, %v7914
    %v7916 = vadd.f32 %v7915, 0.05243302
    %v7917 = vmul.f32 %v7910, %v7916
    %v7918 = vadd.f32 %v7917, 0.18741608
    %v7919 = vmul.f32 %v7910, %v7918
    %v7920 = vadd.f32 %v7919, 1.1283791
    %v7921 = vmul.f32 %v7868, %v7920
    %v7922 = vmul.f32 %v7910, 3.8918573e-05
    %v7923 = vadd.f32 %v7922, 0.001143296
    %v7924 = vmul.f32 %v7910, %v7923
    %v7925 = vadd.f32 %v7924, 0.014752088
    %v7926 = vmul.f32 %v7910, %v7925
    %v7927 = vadd.f32 %v7926, 0.112945676
    %v7928 = vmul.f32 %v7910, %v7927
    %v7929 = vadd.f32 %v7928, 0.4994258
    %v7930 = vmul.f32 %v7910, %v7929
    %v7931 = vadd.f32 %v7930, 1.0
    %v7932 = vrcp.pop %v7931
    %v7933 = vmul.f32 %v7931, %v7932
    %v7934 = vsub.f32 1.0, %v7933
    %v7935 = vmul.f32 %v7932, %v7934
    %v7936 = vadd.f32 %v7932, %v7935
    %vm7937 = vweird.f32 %v7931
    %vm7938 = vweird.f32 %v7932
    %vm7939 = vmor %vm7937, %vm7938
    %v7940 = vsel %vm7939, %v7932, %v7936
    %v7941 = vand.u32 2147483647, %v7931
    %vm7942 = vcmp.eq.f32.partialorder %v7941, 8.507059e+37
    %v7943 = vand.u32 %v7931, 2147483648
    %v7944 = vor.u32 1.1754944e-38, %v7943
    %v7945 = vsel %vm7942, %v7944, %v7940
    %v7946 = vmul.f32 %v7921, %v7945
    %v7947 = vmin.f32 %v7946, 1.0
    %v7948 = vmax.f32 %v7947, -1.0
    %v7949 = vadd.f32 %v7908, 1.0
    %v7950 = vadd.f32 %v7948, 1.0
    %v7951 = vmul.f32 %v7865, %v7949
    %v7952 = vmul.f32 %v7866, %v7950
    %7953 = vmatpush.msra.mxu0 %v7777
    %7954 = vmatpush.msra.mxu0 %v7776
    %7955 = vmatpush.msra.mxu0 %v7775
    %7956 = vmatpush.msra.mxu0 %v7774
    %7957 = vmatpush.msra.mxu0 %v7773
    %7958 = vmatpush.msra.mxu0 %v7772
    %7959 = vmatpush.msra.mxu0 %v7771
    %7960 = vmatpush.msra.mxu0 %v7770
    %7961 = vmatpush.msra.mxu0 %v7769
    %7962 = vmatpush.msra.mxu0 %v7768
    %7963 = vmatpush.msra.mxu0 %v7767
    %7964 = vmatpush.msra.mxu0 %v7766
    %7965 = vmatpush.msra.mxu0 %v7765
    %7966 = vmatpush.msra.mxu0 %v7764
    %7967 = vmatpush.msra.mxu0 %v7763
    %7968 = vmatpush.msra.mxu0 %v7762
    %7969 = vmatmul.f32.gmra.mxu0 %v7951
    %v7970 = vpop.f32.mrf.mxu0
    %v7971 = vadd.f32 0.0, %v7970
    %7972 = vmatmul.f32.gmra.mxu0 %v7952
    %v7973 = vpop.f32.mrf.mxu0
    %7974 = vdwg.mxu0
    %v7975 = vadd.f32 %v7753, %v7971
    %v7977 = vperm.slane %v7778, 0
    %v7979 = vadd.f32 %v7975, %v7977
    %v7981 = vrot.slane %v7979, 4
    %v7983 = vsel %vm2482, %v7979, %v7981
    %v7984 = vld [vmem:[#allocation5] sm:$0x1]
    %v7985 = vld [vmem:[#allocation7] sm:$0x1]
    %v7986 = vsel %vm2496, %v7983, 0.0
    %7987 = vadd.xlane.f32.xlu0 %v7986
    %v7988 = vpop.xlane.xlu0 %7987
    %v7989 = vmul.f32 %v7988, %v2506
    %v7990 = vsub.f32 %v7983, %v7989
    %v7991 = vmul.f32 %v7990, %v7990
    %v7992 = vsel %vm2496, %v7991, 0.0
    %7993 = vadd.xlane.f32.xlu0 %v7992
    %v7994 = vpop.xlane.xlu0 %7993
    %v7995 = vmul.f32 %v7994, %v2506
    %v7996 = vadd.f32 %v7995, 1e-05
    %v7997 = vrsqrt.pop %v7996
    %v7998 = vmul.f32 %v7997, %v7996
    %v7999 = vmul.f32 %v7998, %v7997
    %v8000 = vmul.f32 0.5, %v7999
    %v8001 = vsub.f32 1.5, %v8000
    %v8002 = vmul.f32 %v7997, %v8001
    %vm8003 = vweird.f32 %v7996
    %vm8004 = vweird.f32 %v7997
    %vm8005 = vmor %vm8003, %vm8004
    %v8006 = vsel %vm8005, %v7997, %v8002
    %v8007 = vmul.f32 %v7990, %v8006
    %v8009 = vperm.slane %v7984, 0
    %v8011 = vmul.f32 %v8007, %v8009
    %v8013 = vperm.slane %v7985, 0
    %v8015 = vadd.f32 %v8011, %v8013
    %v8016 = vld [vmem:[%s123] sm:$0xff]
    %v8017 = vld [vmem:[%s123 + $0x8] sm:$0xff]
    %v8018 = vld [vmem:[%s123 + $0x10] sm:$0xff]
    %v8019 = vld [vmem:[%s123 + $0x18] sm:$0xff]
    %v8020 = vld [vmem:[#allocation8] sm:$0x1]
    %v8022 = vperm.slane %v8020, 0
    %v8025 = vsel %vm664, %v8015, 0
    %8027 = vmatpush.msra.mxu0 0.0
    %8028 = vmatpush.msra.mxu0 0.0
    %8029 = vmatpush.msra.mxu0 0.0
    %8030 = vmatpush.msra.mxu0 0.0
    %8031 = vmatpush.msra.mxu0 0.0
    %8032 = vmatpush.msra.mxu0 0.0
    %8033 = vmatpush.msra.mxu0 0.0
    %8034 = vmatpush.msra.mxu0 0.0
    %8035 = vmatpush.msra.mxu0 0.0
    %8036 = vmatpush.msra.mxu0 0.0
    %8037 = vmatpush.msra.mxu0 0.0
    %8038 = vmatpush.msra.mxu0 0.0
    %8039 = vmatpush.msra.mxu0 %v8019
    %8040 = vmatpush.msra.mxu0 %v8018
    %8041 = vmatpush.msra.mxu0 %v8017
    %8042 = vmatpush.msra.mxu0 %v8016
    %8043 = vmatmul.f32.gmra.mxu0 %v8025
    %v8044 = vpop.f32.mrf.mxu0
    %v8045 = vadd.f32 %v8022, %v8044
    %8046 = vdwg.mxu0
    %8047 = vst.msk [vmem:[#allocation10] sm:$0x3] %vm2685, %v8045
    // Predicated region
    $region270: #{_lambda_.1} parent=1 // pred_check
      _
    $region271: #{_lambda_.1} parent=1 // pred_check_branch
      %8049 = sbr.rel (0) target = $region273
    $region272: #{_lambda_.1} parent=1 // pred_region
      %8051 = vsyncadd [#allocation4], 0
      %s8053 = sshll.u32 [#allocation10], 4
      %s8054 = int_to_ptr.vmem [resolvable:$true] %s8053
      %s8055 = sshll.u32 %s127, 4
      %s8056 = int_to_ptr.hbm [resolvable:$true] %s8055
      %8058 = dma.vmem_to_hbm [thread:$0]  %s8054, 32, %s8056, [#allocation4]
    $region273: #{_lambda_.1} parent=1 // pred_fallthru
      _
    // Predicated region
    $region274: #{_lambda_.1} parent=1 // pred_check
      _
    $region275: #{_lambda_.1} parent=1 // pred_check_branch
      %8060 = sbr.rel (0) target = $region277
    $region276: #{_lambda_.1} parent=1 // pred_region
      %8062 = dma.done [#allocation4], 32
    $region277: #{_lambda_.1} parent=1 // pred_fallthru
      _
    %8063 = vsyncpa [#allocation3], 1
    %8064 = vsyncpa [#allocation6], 1
    %8065 = vsyncpa [#allocation9], 1
    %8066 = vsyncpa [#allocation4], 1

</llo_original>
